<compile_context>
chip_gen: v7x
topology: tpu7x:2x2x1
jax: 0.10.0
libtpu: 0.0.40
codegen_flags: <defaults>
</compile_context>

<pallas_src>
import jax
import jax.numpy as jnp
from jax.experimental import pallas as pl
from jax.experimental.pallas import tpu as pltpu

MEAN = 0.1307
STD = 0.3081
SCALE = 1.0 / (100.0 * 255.0 * STD)   # folds avg-pool /100, /255 and /STD
SHIFT = -MEAN / STD


# ------------------------------ fused kernel -------------------------------

def fused_net_kernel(x_ref, p_ref, q3_ref, erep_ref, dmask_ref, w1k_ref,
                     b1_ref, w2k_ref, b2_ref, sel_ref, wfc1_hbm, bfc1_ref,
                     wfc2_ref, bfc2_ref, out_ref,
                     l_s, h1p_s, h1_s, lhs2_s, p2_s, h2_s, full_s,
                     wfc1_vmem, dma_sem):
    f32 = jnp.float32
    bf16 = jnp.bfloat16

    # ---- 0. kick off the fc1-weight DMA (HBM -> VMEM); overlaps all conv work.
    wfc1_copy = pltpu.make_async_copy(wfc1_hbm, wfc1_vmem, dma_sem)
    wfc1_copy.start()

    # ---- 1. 10x10 avg-pool + /255 + normalize, as two small bf16 matmuls.
    #         P sums 10-row blocks; Q3 sums 10-col blocks (pre-tiled 3x along
    #         lanes so the result already carries the 3 conv1 x-tap copies).
    rowsum = jnp.dot(p_ref[...], x_ref[...], preferred_element_type=f32)   # (28, 280)
    pooled3 = jnp.dot(rowsum.astype(bf16), q3_ref[...],
                      preferred_element_type=f32) * SCALE + SHIFT          # (28, 84)

    # ---- 2. conv1 (1->32, 3x3, valid) without any im2col loop.
    #   repl[y*32+x, kx*28+x'] = pooled[y, x']          (row-replication matmul)
    #   L    = repl * D,  D[y*32+x, kx*28+x'] = [x' == x+kx]   (x-tap select)
    #   h1p  = L @ W1k,   W1k[kx*28+x', ky*32+co] = w1[co, ky, kx]
    #   h1[y*32+x, co] = relu(sum_ky h1p[(y+ky)*32+x, ky*32+co] + b1[co])
    repl = jnp.dot(erep_ref[...], pooled3.astype(bf16),
                   preferred_element_type=f32)                             # (896, 84)
    l_s[...] = repl.astype(bf16) * dmask_ref[...]
    h1p_s[...] = jnp.dot(l_s[...], w1k_ref[...],
                         preferred_element_type=f32)                       # (896, 96)
    h1 = (h1p_s[0:832, 0:32] + h1p_s[32:864, 32:64] + h1p_s[64:896, 64:96]
          + b1_ref[...])
    h1_s[0:832, :] = jnp.maximum(h1, 0.0).astype(bf16)
    h1_s[832:840, :] = jnp.zeros((8, 32), bf16)      # padding rows, never used

    # ---- 3. conv2 (32->64, 3x3, NO ReLU) as ONE wide matmul: kx folded into K,
    #         ky folded into the output lanes, then 3 aligned shifted adds.
    lhs2_s[:, 0:32] = h1_s[0:832, :]
    lhs2_s[:, 32:64] = h1_s[1:833, :]
    lhs2_s[:, 64:96] = h1_s[2:834, :]
    p2_s[...] = jnp.dot(lhs2_s[...], w2k_ref[...],
                        preferred_element_type=f32)                        # (832, 192)
    h2_s[...] = (p2_s[0:768, 0:64] + p2_s[32:800, 64:128]
                 + p2_s[64:832, 128:192])                                  # (768, 64)

    # ---- 4. 2x2 max-pool: max of the 4 window offsets (row shifts 0,1,32,33),
    #         then a bf16 0/1 row-gather matmul picks the 144 pooled positions.
    full_s[...] = jnp.maximum(
        jnp.maximum(h2_s[0:728, :], h2_s[1:729, :]),
        jnp.maximum(h2_s[32:760, :], h2_s[33:761, :])).astype(bf16)        # (728, 64)
    m = jnp.dot(sel_ref[...], full_s[...],
                preferred_element_type=f32) + b2_ref[...]                  # (144, 64)

    # ---- 5. fc1 (9216 -> 128): lane-concat 8 channel groups -> (8, 1152) and
    #         multiply by the pre-permuted (1152, 1024) weight; the true h[j] is
    #         the sum of the 8 diagonal 128-wide blocks.
    mT = jnp.transpose(m)                                                  # (64, 144)
    m8 = jnp.concatenate([mT[8 * g:8 * g + 8, :] for g in range(8)],
                         axis=1).astype(bf16)                              # (8, 1152)
    wfc1_copy.wait()                           # weight now resident in VMEM
    pfc1 = jnp.dot(m8, wfc1_vmem[...], preferred_element_type=f32)         # (8, 1024)
    h = pfc1[0:1, 0:128]
    for r in range(1, 8):
        h = h + pfc1[r:r + 1, r * 128:(r + 1) * 128]
    h = jnp.maximum(h + bfc1_ref[...], 0.0)                                # (1, 128)

    # ---- 6. fc2 (128 -> 10) + softmax(dim=1).  Exact (non-approx) reciprocal.
    logits = jnp.dot(h.astype(bf16), wfc2_ref[...],
                     preferred_element_type=f32) + bfc2_ref[...]           # (1, 10)
    z = logits - jnp.max(logits, axis=-1, keepdims=True)
    e = jnp.exp(z)
    out_ref[...] = e * pl.reciprocal(jnp.sum(e, axis=-1, keepdims=True),
                                     approx=False)


# ------------------------------ parameters ---------------------------------

def init_params(key):
    ks = jax.random.split(key, 8)

    def u(k, shape, fan_in):
        b = 1.0 / float(fan_in) ** 0.5
        return jax.random.uniform(k, shape, jnp.float32, -b, b)

    return dict(
        w_conv1=u(ks[0], (32, 1, 3, 3), 9),      # torch Conv2d(1, 32, 3)
        b_conv1=u(ks[1], (32,), 9),
        w_conv2=u(ks[2], (64, 32, 3, 3), 288),   # torch Conv2d(32, 64, 3)
        b_conv2=u(ks[3], (64,), 288),
        w_fc1=u(ks[4], (128, 9216), 9216),       # torch Linear(9216, 128)
        b_fc1=u(ks[5], (128,), 9216),
        w_fc2=u(ks[6], (10, 128), 128),          # torch Linear(128, 10)
        b_fc2=u(ks[7], (10,), 128),
    )


def prepare_params(params):
    """One-time host-side weight permutations and 0/1 selection constants."""
    f32, bf16 = jnp.float32, jnp.bfloat16
    # 10x10 average-pool block-sum selectors (bf16 matmuls in-kernel).
    P = (jnp.arange(280)[None, :] // 10
         == jnp.arange(28)[:, None]).astype(bf16)                       # (28, 280)
    Q = (jnp.arange(280)[:, None] // 10
         == jnp.arange(28)[None, :]).astype(f32)                        # (280, 28)
    Q3 = jnp.concatenate([Q, Q, Q], axis=1).astype(bf16)                # (280, 84)
    # Row replication: Erep[y*32+x, y'] = [y' == y].
    s = jnp.arange(896)
    Erep = (s[:, None] // 32 == jnp.arange(28)[None, :]).astype(bf16)   # (896, 28)
    # conv1 x-tap lane-select mask: D[y*32+x, kx*28+x'] = [x' == x + kx].
    lane = jnp.arange(84)
    D = ((lane[None, :] % 28)
         == (s[:, None] % 32) + lane[None, :] // 28).astype(bf16)       # (896, 84)
    # conv1 weight: K = (kx, x') (value independent of x'), N = (ky, co).
    w1 = jnp.transpose(params["w_conv1"][:, 0, :, :], (2, 1, 0))        # (kx, ky, co)
    W1k = jnp.repeat(w1.reshape(3, 96), 28, axis=0).astype(bf16)        # (84, 96)
    b1 = params["b_conv1"].reshape(1, 32).astype(f32)
    # conv2 weight: K = (kx, ci), N = (ky, c2).
    W2k = (jnp.transpose(params["w_conv2"], (3, 1, 2, 0))
           .reshape(96, 192).astype(bf16))                              # (96, 192)
    b2 = params["b_conv2"].reshape(1, 64).astype(f32)
    # 2x2 max-pool row gather: sel[py*12+px, R] = [R == 64*py + 2*px].
    p = jnp.arange(144)
    sel = (jnp.arange(728)[None, :]
           == 64 * (p[:, None] // 12) + 2 * (p[:, None] % 12)).astype(bf16)
    # fc1 weight: torch flatten index is c*144 + s (c = conv2 channel,
    # s = py*12 + px).  Kernel lhs m8[r, g*144+s] holds feature (c=8g+r, s),
    # so Wbig[g*144+s, r*128+j] = W[j, (8g+r)*144 + s].
    wfc1 = (params["w_fc1"].reshape(128, 8, 8, 144)
            .transpose(1, 3, 2, 0).reshape(1152, 1024).astype(bf16))
    bfc1 = params["b_fc1"].reshape(1, 128).astype(f32)
    wfc2 = params["w_fc2"].T.astype(bf16)                               # (128, 10)
    bfc2 = params["b_fc2"].reshape(1, 10).astype(f32)
    return (P, Q3, Erep, D, W1k, b1, W2k, b2, sel, wfc1, bfc1, wfc2, bfc2)


# ------------------------------ forward pass --------------------------------

def net_forward(x, prep):
    (P, Q3, Erep, D, W1k, b1, W2k, b2, sel, wfc1, bfc1, wfc2, bfc2) = prep
    # Alpha channel only (module: reshape(280,280,4) + narrow(dim=2, start=3)),
    # sliced + cast in the wrapper so the kernel's prologue DMA is ~8x smaller.
    a = x.reshape(280, 280, 4)[:, :, 3].astype(jnp.bfloat16)            # (280, 280)
    vmem = pltpu.MemorySpace.VMEM
    # TODO(synk): batch >=2 images per call (parallel grid axis) to use v7x's
    # second TensorCore and amortize the 2.36 MB fc1 weight DMA; v5e/v6e could
    # also int8-quantize the fc1 weight (not valid on v7x's MXU).
    return pl.pallas_call(
        fused_net_kernel,
        out_shape=jax.ShapeDtypeStruct((1, 10), jnp.float32),
        in_specs=(
            [pl.BlockSpec(memory_space=vmem)] * 10      # a, P, Q3, Erep, D, W1k, b1, W2k, b2, sel
            + [pl.BlockSpec(memory_space=pl.ANY)]       # fc1 weight stays in HBM (manual DMA)
            + [pl.BlockSpec(memory_space=vmem)] * 3     # bfc1, wfc2, bfc2
        ),
        out_specs=pl.BlockSpec(memory_space=vmem),
        scratch_shapes=[
            pltpu.VMEM((896, 84), jnp.bfloat16),     # L: masked replicated pooled rows
            pltpu.VMEM((896, 96), jnp.float32),      # conv1 partial (ky on lanes)
            pltpu.VMEM((840, 32), jnp.bfloat16),     # conv1 activations (flat rows)
            pltpu.VMEM((832, 96), jnp.bfloat16),     # conv2 lhs (kx folded into K)
            pltpu.VMEM((832, 192), jnp.float32),     # conv2 partial (ky on lanes)
            pltpu.VMEM((768, 64), jnp.float32),      # conv2 output
            pltpu.VMEM((728, 64), jnp.bfloat16),     # 2x2 max-pool window maxima
            pltpu.VMEM((1152, 1024), jnp.bfloat16),  # fc1 weight landing buffer
            pltpu.SemaphoreType.DMA(()),             # fc1 weight DMA completion
        ],
    )(a, P, Q3, Erep, D, W1k, b1, W2k, b2, sel, wfc1, bfc1, wfc2, bfc2)


if __name__ == "__main__":
    key = jax.random.PRNGKey(0)
    pkey, xkey = jax.random.split(key)
    params = init_params(pkey)
    prep = prepare_params(params)   # weight permutations hoisted out of the forward
    # RGBA-style image with pixel values in [0, 255]; shape fixed by the module's
    # hard-coded x.reshape(280, 280, 4).
    x = jax.random.uniform(xkey, (280, 280, 4), jnp.float32, 0.0, 255.0)

    fwd = jax.jit(net_forward)
    out = jax.block_until_ready(fwd(x, prep))

    assert out.shape == (1, 10)
    assert bool(jnp.isfinite(out).all())
    assert abs(float(out.sum()) - 1.0) < 2e-3   # softmax row sums to ~1
    print("KERNEL_OK")
</pallas_src>

<mosaic_0001>
module attributes {stable_mosaic.version = 11 : i64} {
  func.func @fused_net_kernel(%arg0: memref<280x280xbf16, #tpu.memory_space<vmem>>, %arg1: memref<28x280xbf16, #tpu.memory_space<vmem>>, %arg2: memref<280x84xbf16, #tpu.memory_space<vmem>>, %arg3: memref<896x28xbf16, #tpu.memory_space<vmem>>, %arg4: memref<896x84xbf16, #tpu.memory_space<vmem>>, %arg5: memref<84x96xbf16, #tpu.memory_space<vmem>>, %arg6: memref<1x32xf32, #tpu.memory_space<vmem>>, %arg7: memref<96x192xbf16, #tpu.memory_space<vmem>>, %arg8: memref<1x64xf32, #tpu.memory_space<vmem>>, %arg9: memref<144x728xbf16, #tpu.memory_space<vmem>>, %arg10: memref<1152x1024xbf16, #tpu.memory_space<any>>, %arg11: memref<1x128xf32, #tpu.memory_space<vmem>>, %arg12: memref<128x10xbf16, #tpu.memory_space<vmem>>, %arg13: memref<1x10xf32, #tpu.memory_space<vmem>>, %arg14: memref<1x10xf32, #tpu.memory_space<vmem>>, %arg15: memref<896x84xbf16, #tpu.memory_space<vmem>>, %arg16: memref<896x96xf32, #tpu.memory_space<vmem>>, %arg17: memref<840x32xbf16, #tpu.memory_space<vmem>>, %arg18: memref<832x96xbf16, #tpu.memory_space<vmem>>, %arg19: memref<832x192xf32, #tpu.memory_space<vmem>>, %arg20: memref<768x64xf32, #tpu.memory_space<vmem>>, %arg21: memref<728x64xbf16, #tpu.memory_space<vmem>>, %arg22: memref<1152x1024xbf16, #tpu.memory_space<vmem>>, %arg23: memref<!tpu.dma_semaphore, #tpu.memory_space<semaphore_mem>>) attributes {dimension_semantics = [], scalar_prefetch = 0 : i64, scratch_operands = 9 : i64, tpu.core_type = #tpu.core_type<tc>} {
    tpu.enqueue_dma source(%arg10 : memref<1152x1024xbf16, #tpu.memory_space<any>>) target(%arg22 : memref<1152x1024xbf16, #tpu.memory_space<vmem>>) target_semaphore(%arg23 : memref<!tpu.dma_semaphore, #tpu.memory_space<semaphore_mem>>)
    %c0 = arith.constant 0 : index
    %c0_0 = arith.constant 0 : index
    %0 = vector.load %arg1[%c0, %c0_0] : memref<28x280xbf16, #tpu.memory_space<vmem>>, vector<28x280xbf16>
    %c0_1 = arith.constant 0 : index
    %c0_2 = arith.constant 0 : index
    %1 = vector.load %arg0[%c0_1, %c0_2] : memref<280x280xbf16, #tpu.memory_space<vmem>>, vector<280x280xbf16>
    %cst = arith.constant dense<0.000000e+00> : vector<28x280xf32>
    %2 = tpu.matmul %0, %1, %cst {dimension_numbers = #tpu.dot_dimension_numbers<[1], [0], [0], [1], [0, 0, 1, 1], [], []>} : vector<28x280xbf16>, vector<280x280xbf16>, vector<28x280xf32> -> vector<28x280xf32>
    %3 = arith.truncf %2 : vector<28x280xf32> to vector<28x280xbf16>
    %c0_3 = arith.constant 0 : index
    %c0_4 = arith.constant 0 : index
    %4 = vector.load %arg2[%c0_3, %c0_4] : memref<280x84xbf16, #tpu.memory_space<vmem>>, vector<280x84xbf16>
    %cst_5 = arith.constant dense<0.000000e+00> : vector<28x84xf32>
    %5 = tpu.matmul %3, %4, %cst_5 {dimension_numbers = #tpu.dot_dimension_numbers<[1], [0], [0], [1], [0, 0, 1, 1], [], []>} : vector<28x280xbf16>, vector<280x84xbf16>, vector<28x84xf32> -> vector<28x84xf32>
    %cst_6 = arith.constant 1.27282328E-4 : f32
    %6 = vector.broadcast %cst_6 : f32 to vector<28x84xf32>
    %7 = arith.mulf %5, %6 : vector<28x84xf32>
    %cst_7 = arith.constant -0.424212933 : f32
    %8 = vector.broadcast %cst_7 : f32 to vector<28x84xf32>
    %9 = arith.addf %7, %8 : vector<28x84xf32>
    %c0_8 = arith.constant 0 : index
    %c0_9 = arith.constant 0 : index
    %10 = vector.load %arg3[%c0_8, %c0_9] : memref<896x28xbf16, #tpu.memory_space<vmem>>, vector<896x28xbf16>
    %11 = arith.truncf %9 : vector<28x84xf32> to vector<28x84xbf16>
    %cst_10 = arith.constant dense<0.000000e+00> : vector<896x84xf32>
    %12 = tpu.matmul %10, %11, %cst_10 {dimension_numbers = #tpu.dot_dimension_numbers<[1], [0], [0], [1], [0, 0, 1, 1], [], []>} : vector<896x28xbf16>, vector<28x84xbf16>, vector<896x84xf32> -> vector<896x84xf32>
    %13 = arith.truncf %12 : vector<896x84xf32> to vector<896x84xbf16>
    %c0_11 = arith.constant 0 : index
    %c0_12 = arith.constant 0 : index
    %14 = vector.load %arg4[%c0_11, %c0_12] : memref<896x84xbf16, #tpu.memory_space<vmem>>, vector<896x84xbf16>
    %15 = arith.mulf %13, %14 : vector<896x84xbf16>
    %c0_13 = arith.constant 0 : index
    %c0_14 = arith.constant 0 : index
    %16 = vector.load %arg15[%c0_13, %c0_14] : memref<896x84xbf16, #tpu.memory_space<vmem>>, vector<896x84xbf16>
    tpu.vector_store %arg15[%c0_13, %c0_14], %15 {strides = array<i32>} : memref<896x84xbf16, #tpu.memory_space<vmem>>, vector<896x84xbf16>,
    %c0_15 = arith.constant 0 : index
    %c0_16 = arith.constant 0 : index
    %17 = vector.load %arg15[%c0_15, %c0_16] : memref<896x84xbf16, #tpu.memory_space<vmem>>, vector<896x84xbf16>
    %c0_17 = arith.constant 0 : index
    %c0_18 = arith.constant 0 : index
    %18 = vector.load %arg5[%c0_17, %c0_18] : memref<84x96xbf16, #tpu.memory_space<vmem>>, vector<84x96xbf16>
    %cst_19 = arith.constant dense<0.000000e+00> : vector<896x96xf32>
    %19 = tpu.matmul %17, %18, %cst_19 {dimension_numbers = #tpu.dot_dimension_numbers<[1], [0], [0], [1], [0, 0, 1, 1], [], []>} : vector<896x84xbf16>, vector<84x96xbf16>, vector<896x96xf32> -> vector<896x96xf32>
    %c0_20 = arith.constant 0 : index
    %c0_21 = arith.constant 0 : index
    %20 = vector.load %arg16[%c0_20, %c0_21] : memref<896x96xf32, #tpu.memory_space<vmem>>, vector<896x96xf32>
    tpu.vector_store %arg16[%c0_20, %c0_21], %19 {strides = array<i32>} : memref<896x96xf32, #tpu.memory_space<vmem>>, vector<896x96xf32>,
    %c0_22 = arith.constant 0 : index
    %c0_23 = arith.constant 0 : index
    %21 = vector.load %arg16[%c0_22, %c0_23] : memref<896x96xf32, #tpu.memory_space<vmem>>, vector<832x32xf32>
    %c32 = arith.constant 32 : index
    %c32_24 = arith.constant 32 : index
    %22 = vector.load %arg16[%c32, %c32_24] : memref<896x96xf32, #tpu.memory_space<vmem>>, vector<832x32xf32>
    %23 = arith.addf %21, %22 : vector<832x32xf32>
    %c64 = arith.constant 64 : index
    %c64_25 = arith.constant 64 : index
    %24 = vector.load %arg16[%c64, %c64_25] : memref<896x96xf32, #tpu.memory_space<vmem>>, vector<832x32xf32>
    %25 = arith.addf %23, %24 : vector<832x32xf32>
    %c0_26 = arith.constant 0 : index
    %c0_27 = arith.constant 0 : index
    %26 = vector.load %arg6[%c0_26, %c0_27] : memref<1x32xf32, #tpu.memory_space<vmem>>, vector<1x32xf32>
    %27 = vector.broadcast %26 : vector<1x32xf32> to vector<832x32xf32>
    %28 = arith.addf %25, %27 : vector<832x32xf32>
    %cst_28 = arith.constant 0.000000e+00 : f32
    %29 = vector.broadcast %cst_28 : f32 to vector<832x32xf32>
    %30 = arith.maximumf %28, %29 : vector<832x32xf32>
    %31 = arith.truncf %30 : vector<832x32xf32> to vector<832x32xbf16>
    %c0_29 = arith.constant 0 : index
    %c0_30 = arith.constant 0 : index
    %32 = vector.load %arg17[%c0_29, %c0_30] : memref<840x32xbf16, #tpu.memory_space<vmem>>, vector<832x32xbf16>
    tpu.vector_store %arg17[%c0_29, %c0_30], %31 {strides = array<i32>} : memref<840x32xbf16, #tpu.memory_space<vmem>>, vector<832x32xbf16>,
    %cst_31 = arith.constant 0.000000e+00 : bf16
    %33 = vector.broadcast %cst_31 : bf16 to vector<8x32xbf16>
    %c832 = arith.constant 832 : index
    %c0_32 = arith.constant 0 : index
    %34 = vector.load %arg17[%c832, %c0_32] : memref<840x32xbf16, #tpu.memory_space<vmem>>, vector<8x32xbf16>
    tpu.vector_store %arg17[%c832, %c0_32], %33 {strides = array<i32>} : memref<840x32xbf16, #tpu.memory_space<vmem>>, vector<8x32xbf16>,
    %c0_33 = arith.constant 0 : index
    %c0_34 = arith.constant 0 : index
    %35 = vector.load %arg17[%c0_33, %c0_34] : memref<840x32xbf16, #tpu.memory_space<vmem>>, vector<832x32xbf16>
    %c0_35 = arith.constant 0 : index
    %c0_36 = arith.constant 0 : index
    %36 = vector.load %arg18[%c0_35, %c0_36] : memref<832x96xbf16, #tpu.memory_space<vmem>>, vector<832x32xbf16>
    tpu.vector_store %arg18[%c0_35, %c0_36], %35 {strides = array<i32>} : memref<832x96xbf16, #tpu.memory_space<vmem>>, vector<832x32xbf16>,
    %c1 = arith.constant 1 : index
    %c0_37 = arith.constant 0 : index
    %37 = vector.load %arg17[%c1, %c0_37] : memref<840x32xbf16, #tpu.memory_space<vmem>>, vector<832x32xbf16>
    %c0_38 = arith.constant 0 : index
    %c32_39 = arith.constant 32 : index
    %38 = vector.load %arg18[%c0_38, %c32_39] : memref<832x96xbf16, #tpu.memory_space<vmem>>, vector<832x32xbf16>
    tpu.vector_store %arg18[%c0_38, %c32_39], %37 {strides = array<i32>} : memref<832x96xbf16, #tpu.memory_space<vmem>>, vector<832x32xbf16>,
    %c2 = arith.constant 2 : index
    %c0_40 = arith.constant 0 : index
    %39 = vector.load %arg17[%c2, %c0_40] : memref<840x32xbf16, #tpu.memory_space<vmem>>, vector<832x32xbf16>
    %c0_41 = arith.constant 0 : index
    %c64_42 = arith.constant 64 : index
    %40 = vector.load %arg18[%c0_41, %c64_42] : memref<832x96xbf16, #tpu.memory_space<vmem>>, vector<832x32xbf16>
    tpu.vector_store %arg18[%c0_41, %c64_42], %39 {strides = array<i32>} : memref<832x96xbf16, #tpu.memory_space<vmem>>, vector<832x32xbf16>,
    %c0_43 = arith.constant 0 : index
    %c0_44 = arith.constant 0 : index
    %41 = vector.load %arg18[%c0_43, %c0_44] : memref<832x96xbf16, #tpu.memory_space<vmem>>, vector<832x96xbf16>
    %c0_45 = arith.constant 0 : index
    %c0_46 = arith.constant 0 : index
    %42 = vector.load %arg7[%c0_45, %c0_46] : memref<96x192xbf16, #tpu.memory_space<vmem>>, vector<96x192xbf16>
    %cst_47 = arith.constant dense<0.000000e+00> : vector<832x192xf32>
    %43 = tpu.matmul %41, %42, %cst_47 {dimension_numbers = #tpu.dot_dimension_numbers<[1], [0], [0], [1], [0, 0, 1, 1], [], []>} : vector<832x96xbf16>, vector<96x192xbf16>, vector<832x192xf32> -> vector<832x192xf32>
    %c0_48 = arith.constant 0 : index
    %c0_49 = arith.constant 0 : index
    %44 = vector.load %arg19[%c0_48, %c0_49] : memref<832x192xf32, #tpu.memory_space<vmem>>, vector<832x192xf32>
    tpu.vector_store %arg19[%c0_48, %c0_49], %43 {strides = array<i32>} : memref<832x192xf32, #tpu.memory_space<vmem>>, vector<832x192xf32>,
    %c0_50 = arith.constant 0 : index
    %c0_51 = arith.constant 0 : index
    %45 = vector.load %arg19[%c0_50, %c0_51] : memref<832x192xf32, #tpu.memory_space<vmem>>, vector<768x64xf32>
    %c32_52 = arith.constant 32 : index
    %c64_53 = arith.constant 64 : index
    %46 = vector.load %arg19[%c32_52, %c64_53] : memref<832x192xf32, #tpu.memory_space<vmem>>, vector<768x64xf32>
    %47 = arith.addf %45, %46 : vector<768x64xf32>
    %c64_54 = arith.constant 64 : index
    %c128 = arith.constant 128 : index
    %48 = vector.load %arg19[%c64_54, %c128] : memref<832x192xf32, #tpu.memory_space<vmem>>, vector<768x64xf32>
    %49 = arith.addf %47, %48 : vector<768x64xf32>
    %c0_55 = arith.constant 0 : index
    %c0_56 = arith.constant 0 : index
    %50 = vector.load %arg20[%c0_55, %c0_56] : memref<768x64xf32, #tpu.memory_space<vmem>>, vector<768x64xf32>
    tpu.vector_store %arg20[%c0_55, %c0_56], %49 {strides = array<i32>} : memref<768x64xf32, #tpu.memory_space<vmem>>, vector<768x64xf32>,
    %c0_57 = arith.constant 0 : index
    %c0_58 = arith.constant 0 : index
    %51 = vector.load %arg20[%c0_57, %c0_58] : memref<768x64xf32, #tpu.memory_space<vmem>>, vector<728x64xf32>
    %c1_59 = arith.constant 1 : index
    %c0_60 = arith.constant 0 : index
    %52 = vector.load %arg20[%c1_59, %c0_60] : memref<768x64xf32, #tpu.memory_space<vmem>>, vector<728x64xf32>
    %53 = arith.maximumf %51, %52 : vector<728x64xf32>
    %c32_61 = arith.constant 32 : index
    %c0_62 = arith.constant 0 : index
    %54 = vector.load %arg20[%c32_61, %c0_62] : memref<768x64xf32, #tpu.memory_space<vmem>>, vector<728x64xf32>
    %c33 = arith.constant 33 : index
    %c0_63 = arith.constant 0 : index
    %55 = vector.load %arg20[%c33, %c0_63] : memref<768x64xf32, #tpu.memory_space<vmem>>, vector<728x64xf32>
    %56 = arith.maximumf %54, %55 : vector<728x64xf32>
    %57 = arith.maximumf %53, %56 : vector<728x64xf32>
    %58 = arith.truncf %57 : vector<728x64xf32> to vector<728x64xbf16>
    %c0_64 = arith.constant 0 : index
    %c0_65 = arith.constant 0 : index
    %59 = vector.load %arg21[%c0_64, %c0_65] : memref<728x64xbf16, #tpu.memory_space<vmem>>, vector<728x64xbf16>
    tpu.vector_store %arg21[%c0_64, %c0_65], %58 {strides = array<i32>} : memref<728x64xbf16, #tpu.memory_space<vmem>>, vector<728x64xbf16>,
    %c0_66 = arith.constant 0 : index
    %c0_67 = arith.constant 0 : index
    %60 = vector.load %arg9[%c0_66, %c0_67] : memref<144x728xbf16, #tpu.memory_space<vmem>>, vector<144x728xbf16>
    %c0_68 = arith.constant 0 : index
    %c0_69 = arith.constant 0 : index
    %61 = vector.load %arg21[%c0_68, %c0_69] : memref<728x64xbf16, #tpu.memory_space<vmem>>, vector<728x64xbf16>
    %cst_70 = arith.constant dense<0.000000e+00> : vector<144x64xf32>
    %62 = tpu.matmul %60, %61, %cst_70 {dimension_numbers = #tpu.dot_dimension_numbers<[1], [0], [0], [1], [0, 0, 1, 1], [], []>} : vector<144x728xbf16>, vector<728x64xbf16>, vector<144x64xf32> -> vector<144x64xf32>
    %c0_71 = arith.constant 0 : index
    %c0_72 = arith.constant 0 : index
    %63 = vector.load %arg8[%c0_71, %c0_72] : memref<1x64xf32, #tpu.memory_space<vmem>>, vector<1x64xf32>
    %64 = vector.broadcast %63 : vector<1x64xf32> to vector<144x64xf32>
    %65 = arith.addf %62, %64 : vector<144x64xf32>
    %66 = tpu.transpose %65, [1, 0] : vector<144x64xf32> -> vector<64x144xf32>
    %67 = vector.extract_strided_slice %66 {offsets = [0, 0], sizes = [8, 144], strides = [1, 1]} : vector<64x144xf32> to vector<8x144xf32>
    %68 = vector.extract_strided_slice %66 {offsets = [8, 0], sizes = [8, 144], strides = [1, 1]} : vector<64x144xf32> to vector<8x144xf32>
    %69 = vector.extract_strided_slice %66 {offsets = [16, 0], sizes = [8, 144], strides = [1, 1]} : vector<64x144xf32> to vector<8x144xf32>
    %70 = vector.extract_strided_slice %66 {offsets = [24, 0], sizes = [8, 144], strides = [1, 1]} : vector<64x144xf32> to vector<8x144xf32>
    %71 = vector.extract_strided_slice %66 {offsets = [32, 0], sizes = [8, 144], strides = [1, 1]} : vector<64x144xf32> to vector<8x144xf32>
    %72 = vector.extract_strided_slice %66 {offsets = [40, 0], sizes = [8, 144], strides = [1, 1]} : vector<64x144xf32> to vector<8x144xf32>
    %73 = vector.extract_strided_slice %66 {offsets = [48, 0], sizes = [8, 144], strides = [1, 1]} : vector<64x144xf32> to vector<8x144xf32>
    %74 = vector.extract_strided_slice %66 {offsets = [56, 0], sizes = [8, 144], strides = [1, 1]} : vector<64x144xf32> to vector<8x144xf32>
    %75 = tpu.concatenate %67, %68, %69, %70, %71, %72, %73, %74 in 1 : vector<8x144xf32>, vector<8x144xf32>, vector<8x144xf32>, vector<8x144xf32>, vector<8x144xf32>, vector<8x144xf32>, vector<8x144xf32>, vector<8x144xf32> -> vector<8x1152xf32>
    %76 = arith.truncf %75 : vector<8x1152xf32> to vector<8x1152xbf16>
    tpu.wait_dma2 semaphore(%arg23 : memref<!tpu.dma_semaphore, #tpu.memory_space<semaphore_mem>>) src(%arg10 : memref<1152x1024xbf16, #tpu.memory_space<any>>) dst(%arg22 : memref<1152x1024xbf16, #tpu.memory_space<vmem>>)
    %c0_73 = arith.constant 0 : index
    %c0_74 = arith.constant 0 : index
    %77 = vector.load %arg22[%c0_73, %c0_74] : memref<1152x1024xbf16, #tpu.memory_space<vmem>>, vector<1152x1024xbf16>
    %cst_75 = arith.constant dense<0.000000e+00> : vector<8x1024xf32>
    %78 = tpu.matmul %76, %77, %cst_75 {dimension_numbers = #tpu.dot_dimension_numbers<[1], [0], [0], [1], [0, 0, 1, 1], [], []>} : vector<8x1152xbf16>, vector<1152x1024xbf16>, vector<8x1024xf32> -> vector<8x1024xf32>
    %79 = vector.extract_strided_slice %78 {offsets = [0, 0], sizes = [1, 128], strides = [1, 1]} : vector<8x1024xf32> to vector<1x128xf32>
    %80 = vector.extract_strided_slice %78 {offsets = [1, 128], sizes = [1, 128], strides = [1, 1]} : vector<8x1024xf32> to vector<1x128xf32>
    %81 = arith.addf %79, %80 : vector<1x128xf32>
    %82 = vector.extract_strided_slice %78 {offsets = [2, 256], sizes = [1, 128], strides = [1, 1]} : vector<8x1024xf32> to vector<1x128xf32>
    %83 = arith.addf %81, %82 : vector<1x128xf32>
    %84 = vector.extract_strided_slice %78 {offsets = [3, 384], sizes = [1, 128], strides = [1, 1]} : vector<8x1024xf32> to vector<1x128xf32>
    %85 = arith.addf %83, %84 : vector<1x128xf32>
    %86 = vector.extract_strided_slice %78 {offsets = [4, 512], sizes = [1, 128], strides = [1, 1]} : vector<8x1024xf32> to vector<1x128xf32>
    %87 = arith.addf %85, %86 : vector<1x128xf32>
    %88 = vector.extract_strided_slice %78 {offsets = [5, 640], sizes = [1, 128], strides = [1, 1]} : vector<8x1024xf32> to vector<1x128xf32>
    %89 = arith.addf %87, %88 : vector<1x128xf32>
    %90 = vector.extract_strided_slice %78 {offsets = [6, 768], sizes = [1, 128], strides = [1, 1]} : vector<8x1024xf32> to vector<1x128xf32>
    %91 = arith.addf %89, %90 : vector<1x128xf32>
    %92 = vector.extract_strided_slice %78 {offsets = [7, 896], sizes = [1, 128], strides = [1, 1]} : vector<8x1024xf32> to vector<1x128xf32>
    %93 = arith.addf %91, %92 : vector<1x128xf32>
    %c0_76 = arith.constant 0 : index
    %c0_77 = arith.constant 0 : index
    %94 = vector.load %arg11[%c0_76, %c0_77] : memref<1x128xf32, #tpu.memory_space<vmem>>, vector<1x128xf32>
    %95 = arith.addf %93, %94 : vector<1x128xf32>
    %cst_78 = arith.constant 0.000000e+00 : f32
    %96 = vector.broadcast %cst_78 : f32 to vector<1x128xf32>
    %97 = arith.maximumf %95, %96 : vector<1x128xf32>
    %98 = arith.truncf %97 : vector<1x128xf32> to vector<1x128xbf16>
    %c0_79 = arith.constant 0 : index
    %c0_80 = arith.constant 0 : index
    %99 = vector.load %arg12[%c0_79, %c0_80] : memref<128x10xbf16, #tpu.memory_space<vmem>>, vector<128x10xbf16>
    %cst_81 = arith.constant dense<0.000000e+00> : vector<1x10xf32>
    %100 = tpu.matmul %98, %99, %cst_81 {dimension_numbers = #tpu.dot_dimension_numbers<[1], [0], [0], [1], [0, 0, 1, 1], [], []>} : vector<1x128xbf16>, vector<128x10xbf16>, vector<1x10xf32> -> vector<1x10xf32>
    %c0_82 = arith.constant 0 : index
    %c0_83 = arith.constant 0 : index
    %101 = vector.load %arg13[%c0_82, %c0_83] : memref<1x10xf32, #tpu.memory_space<vmem>>, vector<1x10xf32>
    %102 = arith.addf %100, %101 : vector<1x10xf32>
    %cst_84 = arith.constant dense<0xFF800000> : vector<1xf32>
    %103 = vector.multi_reduction <maximumf>, %102, %cst_84 [1] : vector<1x10xf32> to vector<1xf32>
    %104 = vector.shape_cast %103 : vector<1xf32> to vector<1x1xf32>
    %105 = vector.broadcast %104 : vector<1x1xf32> to vector<1x10xf32>
    %106 = arith.subf %102, %105 : vector<1x10xf32>
    %107 = math.exp %106 : vector<1x10xf32>
    %cst_85 = arith.constant dense<0.000000e+00> : vector<1xf32>
    %108 = vector.multi_reduction <add>, %107, %cst_85 [1] : vector<1x10xf32> to vector<1xf32>
    %109 = vector.shape_cast %108 : vector<1xf32> to vector<1x1xf32>
    %110 = tpu.reciprocal %109 : vector<1x1xf32> -> vector<1x1xf32>
    %111 = vector.broadcast %110 : vector<1x1xf32> to vector<1x10xf32>
    %112 = arith.mulf %107, %111 : vector<1x10xf32>
    %c0_86 = arith.constant 0 : index
    %c0_87 = arith.constant 0 : index
    %113 = vector.load %arg14[%c0_86, %c0_87] : memref<1x10xf32, #tpu.memory_space<vmem>>, vector<1x10xf32>
    tpu.vector_store %arg14[%c0_86, %c0_87], %112 {strides = array<i32>} : memref<1x10xf32, #tpu.memory_space<vmem>>, vector<1x10xf32>,
    return
  }
}

</mosaic_0001>

<llo_original>
// kernel: net_forward.1
$region0: #{net_forward.1}
  #allocation0 [shape = 'u32[]', space=smem, size = 0x4, offset = 0x4, fixed_abs, tag = 'smem constant byte address 0x4 - core index']
  #allocation1 [shape = 'u32[144,128]{1,0:T(1,128)}', space=vmem, size = 0x12000, scoped, tag = 'internal scratch']
  #allocation2 [shape = 'bf16[896,84]{1,0:T(16,128)(2,1)}', space=vmem, size = 0x38000, scoped, tag = 'scratch operand']
  #allocation3 [shape = 'f32[896,96]{1,0:T(8,128)}', space=vmem, size = 0x70000, scoped, tag = 'scratch operand']
  #allocation4 [shape = 'bf16[840,32]{1,0:T(8,128)(2,1)}', space=vmem, size = 0x34800, scoped, tag = 'scratch operand']
  #allocation5 [shape = 'bf16[832,96]{1,0:T(16,128)(2,1)}', space=vmem, size = 0x34000, scoped, tag = 'scratch operand']
  #allocation6 [shape = 'f32[832,192]{1,0:T(8,128)}', space=vmem, size = 0xd0000, scoped, tag = 'scratch operand']
  #allocation7 [shape = 'f32[768,64]{1,0:T(8,128)}', space=vmem, size = 0x60000, scoped, tag = 'scratch operand']
  #allocation8 [shape = 'bf16[728,64]{1,0:T(8,128)(2,1)}', space=vmem, size = 0x2d800, scoped, tag = 'scratch operand']
  #allocation9 [shape = 'bf16[1152,1024]{1,0:T(16,128)(2,1)}', space=vmem, size = 0x240000, scoped, tag = 'scratch operand']
  #allocation10 [shape = 's32[1]{0}', space=sflag, size = 0x4, scoped, tag = 'scratch operand']
  #allocation13 [shape = 's32[]', space=sflag, size = 0x4, offset = 0, fixed_abs, tag = 'sflag constant byte address 0x0 - dummy sync flag']
  %s0 = inlined_call_operand.vmem [shape: bf16[280,280], index: 0, kind: input, shape index: {}]
  %s1 = inlined_call_operand.vmem [shape: bf16[28,280], index: 1, kind: input, shape index: {}]
  %s2 = inlined_call_operand.vmem [shape: bf16[280,84], index: 2, kind: input, shape index: {}]
  %s3 = inlined_call_operand.vmem [shape: bf16[896,28], index: 3, kind: input, shape index: {}]
  %s4 = inlined_call_operand.vmem [shape: bf16[896,84], index: 4, kind: input, shape index: {}]
  %s5 = inlined_call_operand.vmem [shape: bf16[84,96], index: 5, kind: input, shape index: {}]
  %s6 = inlined_call_operand.vmem [shape: f32[1,32], index: 6, kind: input, shape index: {}]
  %s7 = inlined_call_operand.vmem [shape: bf16[96,192], index: 7, kind: input, shape index: {}]
  %s8 = inlined_call_operand.vmem [shape: f32[1,64], index: 8, kind: input, shape index: {}]
  %s9 = inlined_call_operand.vmem [shape: bf16[144,728], index: 9, kind: input, shape index: {}]
  %s10 = inlined_call_operand.hbm [shape: bf16[1152,1024], index: 10, kind: input, shape index: {}]
  %s11 = inlined_call_operand.vmem [shape: f32[1,128], index: 11, kind: input, shape index: {}]
  %s12 = inlined_call_operand.vmem [shape: bf16[128,10], index: 12, kind: input, shape index: {}]
  %s13 = inlined_call_operand.vmem [shape: f32[1,10], index: 13, kind: input, shape index: {}]
  %s14 = inlined_call_operand.hbm [shape: f32[1,10], index: 14, kind: output, shape index: {}]
  %s15 = sld [smem:[#allocation0]]
  $region62: #{net_forward.1} parent=0
    _
  %s17 = ssub.s32 1, %s15
  %s18 = scalar_select 0, %s17, %s15
  $region1: #{net_forward.1} parent=0
    #allocation11 [shape = 'u8[512]{0}', space=vmem, size = 0x400, scoped, tag = 'output window, operand 0, single buffered']
    #allocation12 [shape = 's32[1]{0}', space=sflag, size = 0x4, scoped, tag = 'scoped memory for net_forward.1']
    #allocation14 [shape = 'u32[9]{0}', space=smem, size = 0x24, scoped, tag = 'DMA stride descriptor']
    %19 = vsyncpa [#allocation12], 0
    // Predicated region
    $region2: #{net_forward.1} parent=1 // pred_check
      _
    $region3: #{net_forward.1} parent=1 // pred_check_branch
      %21 = sbr.rel (0) target = $region5
    $region4: #{net_forward.1} parent=1 // pred_region
      _
    $region5: #{net_forward.1} parent=1 // pred_fallthru
      _
    // Predicated region
    $region6: #{net_forward.1} parent=1 // pred_check
      _
    $region7: #{net_forward.1} parent=1 // pred_check_branch
      %23 = sbr.rel (0) target = $region9
    $region8: #{net_forward.1} parent=1 // pred_region
      _
    $region9: #{net_forward.1} parent=1 // pred_fallthru
      _
    // Predicated region
    $region10: #{net_forward.1} parent=1 // pred_check
      _
    $region11: #{net_forward.1} parent=1 // pred_check_branch
      %25 = sbr.rel (0) target = $region13
    $region12: #{net_forward.1} parent=1 // pred_region
      _
    $region13: #{net_forward.1} parent=1 // pred_fallthru
      _
    // Predicated region
    $region14: #{net_forward.1} parent=1 // pred_check
      _
    $region15: #{net_forward.1} parent=1 // pred_check_branch
      %27 = sbr.rel (0) target = $region17
    $region16: #{net_forward.1} parent=1 // pred_region
      _
    $region17: #{net_forward.1} parent=1 // pred_fallthru
      _
    // Predicated region
    $region18: #{net_forward.1} parent=1 // pred_check
      _
    $region19: #{net_forward.1} parent=1 // pred_check_branch
      %29 = sbr.rel (0) target = $region21
    $region20: #{net_forward.1} parent=1 // pred_region
      _
    $region21: #{net_forward.1} parent=1 // pred_fallthru
      _
    // Predicated region
    $region22: #{net_forward.1} parent=1 // pred_check
      _
    $region23: #{net_forward.1} parent=1 // pred_check_branch
      %31 = sbr.rel (0) target = $region25
    $region24: #{net_forward.1} parent=1 // pred_region
      _
    $region25: #{net_forward.1} parent=1 // pred_fallthru
      _
    // Predicated region
    $region26: #{net_forward.1} parent=1 // pred_check
      _
    $region27: #{net_forward.1} parent=1 // pred_check_branch
      %33 = sbr.rel (0) target = $region29
    $region28: #{net_forward.1} parent=1 // pred_region
      _
    $region29: #{net_forward.1} parent=1 // pred_fallthru
      _
    // Predicated region
    $region30: #{net_forward.1} parent=1 // pred_check
      _
    $region31: #{net_forward.1} parent=1 // pred_check_branch
      %35 = sbr.rel (0) target = $region33
    $region32: #{net_forward.1} parent=1 // pred_region
      _
    $region33: #{net_forward.1} parent=1 // pred_fallthru
      _
    // Predicated region
    $region34: #{net_forward.1} parent=1 // pred_check
      _
    $region35: #{net_forward.1} parent=1 // pred_check_branch
      %37 = sbr.rel (0) target = $region37
    $region36: #{net_forward.1} parent=1 // pred_region
      _
    $region37: #{net_forward.1} parent=1 // pred_fallthru
      _
    // Predicated region
    $region38: #{net_forward.1} parent=1 // pred_check
      _
    $region39: #{net_forward.1} parent=1 // pred_check_branch
      %39 = sbr.rel (0) target = $region41
    $region40: #{net_forward.1} parent=1 // pred_region
      _
    $region41: #{net_forward.1} parent=1 // pred_fallthru
      _
    // Predicated region
    $region42: #{net_forward.1} parent=1 // pred_check
      _
    $region43: #{net_forward.1} parent=1 // pred_check_branch
      %41 = sbr.rel (0) target = $region45
    $region44: #{net_forward.1} parent=1 // pred_region
      _
    $region45: #{net_forward.1} parent=1 // pred_fallthru
      _
    // Predicated region
    $region46: #{net_forward.1} parent=1 // pred_check
      _
    $region47: #{net_forward.1} parent=1 // pred_check_branch
      %43 = sbr.rel (0) target = $region49
    $region48: #{net_forward.1} parent=1 // pred_region
      _
    $region49: #{net_forward.1} parent=1 // pred_fallthru
      _
    // Predicated region
    $region50: #{net_forward.1} parent=1 // pred_check
      _
    $region51: #{net_forward.1} parent=1 // pred_check_branch
      %45 = sbr.rel (0) target = $region53
    $region52: #{net_forward.1} parent=1 // pred_region
      _
    $region53: #{net_forward.1} parent=1 // pred_fallthru
      _
    %s48 = sshll.u32 1, 14
    %s49 = sxor.u32 4294967295, %s48
    %s51 = sld [smem:[#allocation0]]
    %s52 = sadd.s32 2, %s51
    %s54 = sshll.u32 7, 26
    %s55 = sxor.u32 4294967295, %s54
    %s56 = sand.u32 0, %s55
    %s57 = sshll.u32 %s52, 26
    %s58 = sor.u32 %s56, %s57
    %s59 = sshll.u32 [#allocation9], 4
    %s60 = int_to_ptr.vmem [resolvable:$true] %s59
    %63 = sst [smem:[#allocation14]] 1024
    %s64 = scalar_lea.smem [#allocation14], 1
    %65 = sst [smem:[%s64]] 1024
    %s66 = scalar_lea.smem [#allocation14], 2
    %67 = sst [smem:[%s66]] 8
    %s68 = scalar_lea.smem [#allocation14], 3
    %69 = sst [smem:[%s68]] 64
    %s70 = scalar_lea.smem [#allocation14], 4
    %71 = sst [smem:[%s70]] 128
    %s72 = scalar_lea.smem [#allocation14], 5
    %73 = sst [smem:[%s72]] 2
    %s74 = scalar_lea.smem [#allocation14], 6
    %75 = sst [smem:[%s74]] 512
    %s76 = scalar_lea.smem [#allocation14], 7
    %77 = sst [smem:[%s76]] 64
    %s78 = scalar_lea.smem [#allocation14], 8
    %79 = sst [smem:[%s78]] 4
    %81 = dma.general %s10, 73728, %s60, [#allocation10], [#allocation13], [#allocation14], %s58, 0
    %v82 = vld [vmem:[%s1] sm:$0xff]
    %v83 = vld [vmem:[%s1 + $0x8] sm:$0xf]
    %v84 = vld [vmem:[%s1 + $0xc] sm:$0xff]
    %v85 = vld [vmem:[%s1 + $0x14] sm:$0xf]
    %v86 = vld [vmem:[%s1 + $0x18] sm:$0xff]
    %v87 = vld [vmem:[%s1 + $0x20] sm:$0xf]
    %v88 = vld [vmem:[%s1 + $0x24] sm:$0x33]
    %v89 = vld [vmem:[%s1 + $0x2c] sm:$0x3]
    %v90 = vld [vmem:[%s0] sm:$0xff]
    %v91 = vld [vmem:[%s0 + $0x8] sm:$0xf]
    %v92 = vld [vmem:[%s0 + $0xc] sm:$0xff]
    %v93 = vld [vmem:[%s0 + $0x14] sm:$0xf]
    %v94 = vld [vmem:[%s0 + $0x18] sm:$0xff]
    %v95 = vld [vmem:[%s0 + $0x20] sm:$0xf]
    %v96 = vld [vmem:[%s0 + $0x24] sm:$0xff]
    %v97 = vld [vmem:[%s0 + $0x2c] sm:$0xf]
    %v98 = vld [vmem:[%s0 + $0x30] sm:$0xff]
    %v99 = vld [vmem:[%s0 + $0x38] sm:$0xf]
    %v100 = vld [vmem:[%s0 + $0x3c] sm:$0xff]
    %v101 = vld [vmem:[%s0 + $0x44] sm:$0xf]
    %v102 = vld [vmem:[%s0 + $0x48] sm:$0xff]
    %v103 = vld [vmem:[%s0 + $0x50] sm:$0xf]
    %v104 = vld [vmem:[%s0 + $0x54] sm:$0xff]
    %v105 = vld [vmem:[%s0 + $0x5c] sm:$0xf]
    %v106 = vld [vmem:[%s0 + $0x60] sm:$0xff]
    %v107 = vld [vmem:[%s0 + $0x68] sm:$0xf]
    %v108 = vld [vmem:[%s0 + $0x6c] sm:$0xff]
    %v109 = vld [vmem:[%s0 + $0x74] sm:$0xf]
    %v110 = vld [vmem:[%s0 + $0x78] sm:$0xff]
    %v111 = vld [vmem:[%s0 + $0x80] sm:$0xf]
    %v112 = vld [vmem:[%s0 + $0x84] sm:$0xff]
    %v113 = vld [vmem:[%s0 + $0x8c] sm:$0xf]
    %v114 = vld [vmem:[%s0 + $0x90] sm:$0xff]
    %v115 = vld [vmem:[%s0 + $0x98] sm:$0xf]
    %v116 = vld [vmem:[%s0 + $0x9c] sm:$0xff]
    %v117 = vld [vmem:[%s0 + $0xa4] sm:$0xf]
    %v118 = vld [vmem:[%s0 + $0xa8] sm:$0xff]
    %v119 = vld [vmem:[%s0 + $0xb0] sm:$0xf]
    %v120 = vld [vmem:[%s0 + $0xb4] sm:$0xff]
    %v121 = vld [vmem:[%s0 + $0xbc] sm:$0xf]
    %v122 = vld [vmem:[%s0 + $0xc0] sm:$0xff]
    %v123 = vld [vmem:[%s0 + $0xc8] sm:$0xf]
    %v124 = vld [vmem:[%s0 + $0xcc] sm:$0xff]
    %v125 = vld [vmem:[%s0 + $0xd4] sm:$0xf]
    %v126 = vld [vmem:[%s0 + $0xd8] sm:$0xff]
    %v127 = vld [vmem:[%s0 + $0xe0] sm:$0xf]
    %v128 = vld [vmem:[%s0 + $0xe4] sm:$0xff]
    %v129 = vld [vmem:[%s0 + $0xec] sm:$0xf]
    %v130 = vld [vmem:[%s0 + $0xf0] sm:$0xff]
    %v131 = vld [vmem:[%s0 + $0xf8] sm:$0xf]
    %v132 = vld [vmem:[%s0 + $0xfc] sm:$0xff]
    %v133 = vld [vmem:[%s0 + $0x104] sm:$0xf]
    %v134 = vld [vmem:[%s0 + $0x108] sm:$0xff]
    %v135 = vld [vmem:[%s0 + $0x110] sm:$0xf]
    %v136 = vld [vmem:[%s0 + $0x114] sm:$0xff]
    %v137 = vld [vmem:[%s0 + $0x11c] sm:$0xf]
    %v138 = vld [vmem:[%s0 + $0x120] sm:$0xff]
    %v139 = vld [vmem:[%s0 + $0x128] sm:$0xf]
    %v140 = vld [vmem:[%s0 + $0x12c] sm:$0xff]
    %v141 = vld [vmem:[%s0 + $0x134] sm:$0xf]
    %v142 = vld [vmem:[%s0 + $0x138] sm:$0xff]
    %v143 = vld [vmem:[%s0 + $0x140] sm:$0xf]
    %v144 = vld [vmem:[%s0 + $0x144] sm:$0xff]
    %v145 = vld [vmem:[%s0 + $0x14c] sm:$0xf]
    %v146 = vld [vmem:[%s0 + $0x150] sm:$0xff]
    %v147 = vld [vmem:[%s0 + $0x158] sm:$0xf]
    %v148 = vld [vmem:[%s0 + $0x15c] sm:$0xff]
    %v149 = vld [vmem:[%s0 + $0x164] sm:$0xf]
    %v150 = vld [vmem:[%s0 + $0x168] sm:$0xff]
    %v151 = vld [vmem:[%s0 + $0x170] sm:$0xf]
    %v152 = vld [vmem:[%s0 + $0x174] sm:$0xff]
    %v153 = vld [vmem:[%s0 + $0x17c] sm:$0xf]
    %v154 = vld [vmem:[%s0 + $0x180] sm:$0xff]
    %v155 = vld [vmem:[%s0 + $0x188] sm:$0xf]
    %v156 = vld [vmem:[%s0 + $0x18c] sm:$0xff]
    %v157 = vld [vmem:[%s0 + $0x194] sm:$0xf]
    %v158 = vld [vmem:[%s0 + $0x198] sm:$0xff]
    %v159 = vld [vmem:[%s0 + $0x1a0] sm:$0xf]
    %v168 = vunpack.c.l.b16 %v82
    %v169 = vunpack.c.h.b16 %v82
    %v170 = vunpack.c.l.b16 %v83
    %v171 = vunpack.c.l.b16 %v84
    %v172 = vunpack.c.h.b16 %v84
    %v173 = vunpack.c.l.b16 %v85
    %v174 = vunpack.c.l.b16 %v86
    %v175 = vunpack.c.h.b16 %v86
    %v176 = vunpack.c.l.b16 %v87
    %v177 = vunpack.c.l.b16 %v88
    %v178 = vunpack.c.h.b16 %v88
    %v179 = vunpack.c.l.b16 %v89
    %v180 = vpack.c.b16 %v171, %v168
    %v181 = vpack.c.b16 %v172, %v169
    %v182 = vpack.c.b16 %v173, %v170
    %v183 = vpack.c.b16 %v177, %v174
    %v184 = vpack.c.b16 %v178, %v175
    %v185 = vpack.c.b16 %v179, %v176
    %v260 = vunpack.c.l.b16 %v90
    %v261 = vunpack.c.h.b16 %v90
    %v262 = vunpack.c.l.b16 %v91
    %v263 = vunpack.c.l.b16 %v92
    %v264 = vunpack.c.h.b16 %v92
    %v265 = vunpack.c.l.b16 %v93
    %v266 = vunpack.c.l.b16 %v94
    %v267 = vunpack.c.h.b16 %v94
    %v268 = vunpack.c.l.b16 %v95
    %v269 = vunpack.c.l.b16 %v96
    %v270 = vunpack.c.h.b16 %v96
    %v271 = vunpack.c.l.b16 %v97
    %v272 = vunpack.c.l.b16 %v98
    %v273 = vunpack.c.h.b16 %v98
    %v274 = vunpack.c.l.b16 %v99
    %v275 = vunpack.c.l.b16 %v100
    %v276 = vunpack.c.h.b16 %v100
    %v277 = vunpack.c.l.b16 %v101
    %v278 = vunpack.c.l.b16 %v102
    %v279 = vunpack.c.h.b16 %v102
    %v280 = vunpack.c.l.b16 %v103
    %v281 = vunpack.c.l.b16 %v104
    %v282 = vunpack.c.h.b16 %v104
    %v283 = vunpack.c.l.b16 %v105
    %v284 = vunpack.c.l.b16 %v106
    %v285 = vunpack.c.h.b16 %v106
    %v286 = vunpack.c.l.b16 %v107
    %v287 = vunpack.c.l.b16 %v108
    %v288 = vunpack.c.h.b16 %v108
    %v289 = vunpack.c.l.b16 %v109
    %v290 = vunpack.c.l.b16 %v110
    %v291 = vunpack.c.h.b16 %v110
    %v292 = vunpack.c.l.b16 %v111
    %v293 = vunpack.c.l.b16 %v112
    %v294 = vunpack.c.h.b16 %v112
    %v295 = vunpack.c.l.b16 %v113
    %v296 = vunpack.c.l.b16 %v114
    %v297 = vunpack.c.h.b16 %v114
    %v298 = vunpack.c.l.b16 %v115
    %v299 = vunpack.c.l.b16 %v116
    %v300 = vunpack.c.h.b16 %v116
    %v301 = vunpack.c.l.b16 %v117
    %v302 = vunpack.c.l.b16 %v118
    %v303 = vunpack.c.h.b16 %v118
    %v304 = vunpack.c.l.b16 %v119
    %v305 = vunpack.c.l.b16 %v120
    %v306 = vunpack.c.h.b16 %v120
    %v307 = vunpack.c.l.b16 %v121
    %v308 = vunpack.c.l.b16 %v122
    %v309 = vunpack.c.h.b16 %v122
    %v310 = vunpack.c.l.b16 %v123
    %v311 = vunpack.c.l.b16 %v124
    %v312 = vunpack.c.h.b16 %v124
    %v313 = vunpack.c.l.b16 %v125
    %v314 = vunpack.c.l.b16 %v126
    %v315 = vunpack.c.h.b16 %v126
    %v316 = vunpack.c.l.b16 %v127
    %v317 = vunpack.c.l.b16 %v128
    %v318 = vunpack.c.h.b16 %v128
    %v319 = vunpack.c.l.b16 %v129
    %v320 = vunpack.c.l.b16 %v130
    %v321 = vunpack.c.h.b16 %v130
    %v322 = vunpack.c.l.b16 %v131
    %v323 = vunpack.c.l.b16 %v132
    %v324 = vunpack.c.h.b16 %v132
    %v325 = vunpack.c.l.b16 %v133
    %v326 = vunpack.c.l.b16 %v134
    %v327 = vunpack.c.h.b16 %v134
    %v328 = vunpack.c.l.b16 %v135
    %v329 = vunpack.c.l.b16 %v136
    %v330 = vunpack.c.h.b16 %v136
    %v331 = vunpack.c.l.b16 %v137
    %v332 = vunpack.c.l.b16 %v138
    %v333 = vunpack.c.h.b16 %v138
    %v334 = vunpack.c.l.b16 %v139
    %v335 = vunpack.c.l.b16 %v140
    %v336 = vunpack.c.h.b16 %v140
    %v337 = vunpack.c.l.b16 %v141
    %v338 = vunpack.c.l.b16 %v142
    %v339 = vunpack.c.h.b16 %v142
    %v340 = vunpack.c.l.b16 %v143
    %v341 = vunpack.c.l.b16 %v144
    %v342 = vunpack.c.h.b16 %v144
    %v343 = vunpack.c.l.b16 %v145
    %v344 = vunpack.c.l.b16 %v146
    %v345 = vunpack.c.h.b16 %v146
    %v346 = vunpack.c.l.b16 %v147
    %v347 = vunpack.c.l.b16 %v148
    %v348 = vunpack.c.h.b16 %v148
    %v349 = vunpack.c.l.b16 %v149
    %v350 = vunpack.c.l.b16 %v150
    %v351 = vunpack.c.h.b16 %v150
    %v352 = vunpack.c.l.b16 %v151
    %v353 = vunpack.c.l.b16 %v152
    %v354 = vunpack.c.h.b16 %v152
    %v355 = vunpack.c.l.b16 %v153
    %v356 = vunpack.c.l.b16 %v154
    %v357 = vunpack.c.h.b16 %v154
    %v358 = vunpack.c.l.b16 %v155
    %v359 = vunpack.c.l.b16 %v156
    %v360 = vunpack.c.h.b16 %v156
    %v361 = vunpack.c.l.b16 %v157
    %v362 = vunpack.c.l.b16 %v158
    %v363 = vunpack.c.h.b16 %v158
    %v364 = vunpack.c.l.b16 %v159
    %v365 = vpack.c.b16 %v263, %v260
    %v366 = vpack.c.b16 %v264, %v261
    %v367 = vpack.c.b16 %v265, %v262
    %v368 = vpack.c.b16 %v269, %v266
    %v369 = vpack.c.b16 %v270, %v267
    %v370 = vpack.c.b16 %v271, %v268
    %v371 = vpack.c.b16 %v275, %v272
    %v372 = vpack.c.b16 %v276, %v273
    %v373 = vpack.c.b16 %v277, %v274
    %v374 = vpack.c.b16 %v281, %v278
    %v375 = vpack.c.b16 %v282, %v279
    %v376 = vpack.c.b16 %v283, %v280
    %v377 = vpack.c.b16 %v287, %v284
    %v378 = vpack.c.b16 %v288, %v285
    %v379 = vpack.c.b16 %v289, %v286
    %v380 = vpack.c.b16 %v293, %v290
    %v381 = vpack.c.b16 %v294, %v291
    %v382 = vpack.c.b16 %v295, %v292
    %v383 = vpack.c.b16 %v299, %v296
    %v384 = vpack.c.b16 %v300, %v297
    %v385 = vpack.c.b16 %v301, %v298
    %v386 = vpack.c.b16 %v305, %v302
    %v387 = vpack.c.b16 %v306, %v303
    %v388 = vpack.c.b16 %v307, %v304
    %v389 = vpack.c.b16 %v311, %v308
    %v390 = vpack.c.b16 %v312, %v309
    %v391 = vpack.c.b16 %v313, %v310
    %v392 = vpack.c.b16 %v317, %v314
    %v393 = vpack.c.b16 %v318, %v315
    %v394 = vpack.c.b16 %v319, %v316
    %v395 = vpack.c.b16 %v323, %v320
    %v396 = vpack.c.b16 %v324, %v321
    %v397 = vpack.c.b16 %v325, %v322
    %v398 = vpack.c.b16 %v329, %v326
    %v399 = vpack.c.b16 %v330, %v327
    %v400 = vpack.c.b16 %v331, %v328
    %v401 = vpack.c.b16 %v335, %v332
    %v402 = vpack.c.b16 %v336, %v333
    %v403 = vpack.c.b16 %v337, %v334
    %v404 = vpack.c.b16 %v341, %v338
    %v405 = vpack.c.b16 %v342, %v339
    %v406 = vpack.c.b16 %v343, %v340
    %v407 = vpack.c.b16 %v347, %v344
    %v408 = vpack.c.b16 %v348, %v345
    %v409 = vpack.c.b16 %v349, %v346
    %v410 = vpack.c.b16 %v353, %v350
    %v411 = vpack.c.b16 %v354, %v351
    %v412 = vpack.c.b16 %v355, %v352
    %v413 = vpack.c.b16 %v359, %v356
    %v414 = vpack.c.b16 %v360, %v357
    %v415 = vpack.c.b16 %v361, %v358
    %v416 = vpack.c.b16 %v362, %v362
    %v417 = vpack.c.b16 %v363, %v363
    %v418 = vpack.c.b16 %v364, %v364
    %vm470 = vcmask 195584
    %v472 = vsel %vm470, %v182, 0
    %v475 = vsel %vm470, %v185, 0
    %vm477 = vcmask 1043456
    %v479 = vsel %vm477, %v416, 0
    %v482 = vsel %vm477, %v417, 0
    %v485 = vsel %vm477, %v418, 0
    %487 = vmatprep.subr.bf16.mxu0 %v366
    %488 = vmatpush1.bf16.msra.mxu0 %v365
    %489 = vmatprep.subr.bf16.mxu0 %v369
    %490 = vmatpush1.bf16.msra.mxu0 %v368
    %491 = vmatprep.subr.bf16.mxu0 %v372
    %492 = vmatpush1.bf16.msra.mxu0 %v371
    %493 = vmatprep.subr.bf16.mxu0 %v375
    %494 = vmatpush1.bf16.msra.mxu0 %v374
    %495 = vmatprep.subr.bf16.mxu0 %v378
    %496 = vmatpush1.bf16.msra.mxu0 %v377
    %497 = vmatprep.subr.bf16.mxu0 %v381
    %498 = vmatpush1.bf16.msra.mxu0 %v380
    %499 = vmatprep.subr.bf16.mxu0 %v384
    %500 = vmatpush1.bf16.msra.mxu0 %v383
    %501 = vmatprep.subr.bf16.mxu0 %v387
    %502 = vmatpush1.bf16.msra.mxu0 %v386
    %503 = vmatprep.subr.bf16.mxu0 %v390
    %504 = vmatpush1.bf16.msra.mxu0 %v389
    %505 = vmatprep.subr.bf16.mxu0 %v393
    %506 = vmatpush1.bf16.msra.mxu0 %v392
    %507 = vmatprep.subr.bf16.mxu0 %v396
    %508 = vmatpush1.bf16.msra.mxu0 %v395
    %509 = vmatprep.subr.bf16.mxu0 %v399
    %510 = vmatpush1.bf16.msra.mxu0 %v398
    %511 = vmatprep.subr.bf16.mxu0 %v402
    %512 = vmatpush1.bf16.msra.mxu0 %v401
    %513 = vmatprep.subr.bf16.mxu0 %v405
    %514 = vmatpush1.bf16.msra.mxu0 %v404
    %515 = vmatprep.subr.bf16.mxu0 %v408
    %516 = vmatpush1.bf16.msra.mxu0 %v407
    %517 = vmatprep.subr.bf16.mxu0 %v411
    %518 = vmatpush1.bf16.msra.mxu0 %v410
    %519 = vmatprep.mubr.bf16.mxu0 %v181
    %520 = vmatmul.mubr.bf16.gmra.mrb[0].mxu0 %v180
    %v521 = vpop.f32.mrb[0].mxu0
    %v522 = vadd.f32 0.0, %v521
    %v523 = vpop.f32.mrb[0].mxu0
    %v524 = vadd.f32 0.0, %v523
    %v525 = vpop.f32.mrb[0].mxu0
    %v526 = vadd.f32 0.0, %v525
    %v527 = vpop.f32.mrb[0].mxu0
    %v528 = vadd.f32 0.0, %v527
    %529 = vmatprep.mubr.bf16.mxu0 %v184
    %530 = vmatmul.mubr.bf16.gmra.mrb[0].mxu0 %v183
    %v531 = vpop.f32.mrb[0].mxu0
    %v532 = vadd.f32 0.0, %v531
    %v533 = vpop.f32.mrb[0].mxu0
    %v534 = vadd.f32 0.0, %v533
    %v535 = vpop.f32.mrb[0].mxu0
    %v536 = vadd.f32 0.0, %v535
    %v537 = vpop.f32.mrb[0].mxu0
    %v538 = vadd.f32 0.0, %v537
    %539 = vdwg.mxu0
    %540 = vmatprep.subr.bf16.mxu0 %v414
    %541 = vmatpush1.bf16.msra.mxu0 %v413
    %542 = vmatprep.subr.bf16.mxu0 %v482
    %543 = vmatpush1.bf16.msra.mxu0 %v479
    %544 = vmatprep.subr.bf16.mxu0 0
    %545 = vmatpush1.bf16.msra.mxu0 0
    %546 = vmatprep.subr.bf16.mxu0 0
    %547 = vmatpush1.bf16.msra.mxu0 0
    %548 = vmatprep.subr.bf16.mxu0 0
    %549 = vmatpush1.bf16.msra.mxu0 0
    %550 = vmatprep.subr.bf16.mxu0 0
    %551 = vmatpush1.bf16.msra.mxu0 0
    %552 = vmatprep.subr.bf16.mxu0 0
    %553 = vmatpush1.bf16.msra.mxu0 0
    %554 = vmatprep.subr.bf16.mxu0 0
    %555 = vmatpush1.bf16.msra.mxu0 0
    %556 = vmatprep.subr.bf16.mxu0 0
    %557 = vmatpush1.bf16.msra.mxu0 0
    %558 = vmatprep.subr.bf16.mxu0 0
    %559 = vmatpush1.bf16.msra.mxu0 0
    %560 = vmatprep.subr.bf16.mxu0 0
    %561 = vmatpush1.bf16.msra.mxu0 0
    %562 = vmatprep.subr.bf16.mxu0 0
    %563 = vmatpush1.bf16.msra.mxu0 0
    %564 = vmatprep.subr.bf16.mxu0 0
    %565 = vmatpush1.bf16.msra.mxu0 0
    %566 = vmatprep.subr.bf16.mxu0 0
    %567 = vmatpush1.bf16.msra.mxu0 0
    %568 = vmatprep.subr.bf16.mxu0 0
    %569 = vmatpush1.bf16.msra.mxu0 0
    %570 = vmatprep.subr.bf16.mxu0 0
    %571 = vmatpush1.bf16.msra.mxu0 0
    %572 = vmatprep.mubr.bf16.mxu0 0
    %573 = vmatmul.mubr.bf16.gmra.mrb[0].mxu0 %v472
    %v574 = vpop.f32.mrb[0].mxu0
    %v575 = vadd.f32 %v522, %v574
    %v576 = vpop.f32.mrb[0].mxu0
    %v577 = vadd.f32 %v524, %v576
    %v578 = vpop.f32.mrb[0].mxu0
    %v579 = vadd.f32 %v526, %v578
    %v580 = vpop.f32.mrb[0].mxu0
    %v581 = vadd.f32 %v528, %v580
    %582 = vmatprep.mubr.bf16.mxu0 0
    %583 = vmatmul.mubr.bf16.gmra.mrb[0].mxu0 %v475
    %v584 = vpop.f32.mrb[0].mxu0
    %v585 = vadd.f32 %v532, %v584
    %v586 = vpop.f32.mrb[0].mxu0
    %v587 = vadd.f32 %v534, %v586
    %v588 = vpop.f32.mrb[0].mxu0
    %v589 = vadd.f32 %v536, %v588
    %v590 = vpop.f32.mrb[0].mxu0
    %v591 = vadd.f32 %v538, %v590
    %592 = vdwg.mxu0
    %593 = vmatprep.subr.bf16.mxu0 0
    %594 = vmatpush1.bf16.msra.mxu0 %v367
    %595 = vmatprep.subr.bf16.mxu0 0
    %596 = vmatpush1.bf16.msra.mxu0 %v370
    %597 = vmatprep.subr.bf16.mxu0 0
    %598 = vmatpush1.bf16.msra.mxu0 %v373
    %599 = vmatprep.subr.bf16.mxu0 0
    %600 = vmatpush1.bf16.msra.mxu0 %v376
    %601 = vmatprep.subr.bf16.mxu0 0
    %602 = vmatpush1.bf16.msra.mxu0 %v379
    %603 = vmatprep.subr.bf16.mxu0 0
    %604 = vmatpush1.bf16.msra.mxu0 %v382
    %605 = vmatprep.subr.bf16.mxu0 0
    %606 = vmatpush1.bf16.msra.mxu0 %v385
    %607 = vmatprep.subr.bf16.mxu0 0
    %608 = vmatpush1.bf16.msra.mxu0 %v388
    %609 = vmatprep.subr.bf16.mxu0 0
    %610 = vmatpush1.bf16.msra.mxu0 %v391
    %611 = vmatprep.subr.bf16.mxu0 0
    %612 = vmatpush1.bf16.msra.mxu0 %v394
    %613 = vmatprep.subr.bf16.mxu0 0
    %614 = vmatpush1.bf16.msra.mxu0 %v397
    %615 = vmatprep.subr.bf16.mxu0 0
    %616 = vmatpush1.bf16.msra.mxu0 %v400
    %617 = vmatprep.subr.bf16.mxu0 0
    %618 = vmatpush1.bf16.msra.mxu0 %v403
    %619 = vmatprep.subr.bf16.mxu0 0
    %620 = vmatpush1.bf16.msra.mxu0 %v406
    %621 = vmatprep.subr.bf16.mxu0 0
    %622 = vmatpush1.bf16.msra.mxu0 %v409
    %623 = vmatprep.subr.bf16.mxu0 0
    %624 = vmatpush1.bf16.msra.mxu0 %v412
    %625 = vmatprep.mubr.bf16.mxu0 %v181
    %626 = vmatmul.mubr.bf16.gmra.mrb[0].mxu0 %v180
    %v627 = vpop.f32.mrb[0].mxu0
    %v628 = vadd.f32 0.0, %v627
    %v629 = vpop.f32.mrb[0].mxu0
    %v630 = vpop.f32.mrb[0].mxu0
    %v631 = vadd.f32 0.0, %v630
    %v632 = vpop.f32.mrb[0].mxu0
    %633 = vmatprep.mubr.bf16.mxu0 %v184
    %634 = vmatmul.mubr.bf16.gmra.mrb[0].mxu0 %v183
    %v635 = vpop.f32.mrb[0].mxu0
    %v636 = vadd.f32 0.0, %v635
    %v637 = vpop.f32.mrb[0].mxu0
    %v638 = vpop.f32.mrb[0].mxu0
    %v639 = vadd.f32 0.0, %v638
    %v640 = vpop.f32.mrb[0].mxu0
    %641 = vdwg.mxu0
    %642 = vmatprep.subr.bf16.mxu0 0
    %643 = vmatpush1.bf16.msra.mxu0 %v415
    %644 = vmatprep.subr.bf16.mxu0 0
    %645 = vmatpush1.bf16.msra.mxu0 %v485
    %646 = vmatprep.subr.bf16.mxu0 0
    %647 = vmatpush1.bf16.msra.mxu0 0
    %648 = vmatprep.subr.bf16.mxu0 0
    %649 = vmatpush1.bf16.msra.mxu0 0
    %650 = vmatprep.subr.bf16.mxu0 0
    %651 = vmatpush1.bf16.msra.mxu0 0
    %652 = vmatprep.subr.bf16.mxu0 0
    %653 = vmatpush1.bf16.msra.mxu0 0
    %654 = vmatprep.subr.bf16.mxu0 0
    %655 = vmatpush1.bf16.msra.mxu0 0
    %656 = vmatprep.subr.bf16.mxu0 0
    %657 = vmatpush1.bf16.msra.mxu0 0
    %658 = vmatprep.subr.bf16.mxu0 0
    %659 = vmatpush1.bf16.msra.mxu0 0
    %660 = vmatprep.subr.bf16.mxu0 0
    %661 = vmatpush1.bf16.msra.mxu0 0
    %662 = vmatprep.subr.bf16.mxu0 0
    %663 = vmatpush1.bf16.msra.mxu0 0
    %664 = vmatprep.subr.bf16.mxu0 0
    %665 = vmatpush1.bf16.msra.mxu0 0
    %666 = vmatprep.subr.bf16.mxu0 0
    %667 = vmatpush1.bf16.msra.mxu0 0
    %668 = vmatprep.subr.bf16.mxu0 0
    %669 = vmatpush1.bf16.msra.mxu0 0
    %670 = vmatprep.subr.bf16.mxu0 0
    %671 = vmatpush1.bf16.msra.mxu0 0
    %672 = vmatprep.subr.bf16.mxu0 0
    %673 = vmatpush1.bf16.msra.mxu0 0
    %674 = vmatprep.mubr.bf16.mxu0 0
    %675 = vmatmul.mubr.bf16.gmra.mrb[0].mxu0 %v472
    %v676 = vpop.f32.mrb[0].mxu0
    %v677 = vadd.f32 %v628, %v676
    %v678 = vpop.f32.mrb[0].mxu0
    %v679 = vpop.f32.mrb[0].mxu0
    %v680 = vadd.f32 %v631, %v679
    %v681 = vpop.f32.mrb[0].mxu0
    %682 = vmatprep.mubr.bf16.mxu0 0
    %683 = vmatmul.mubr.bf16.gmra.mrb[0].mxu0 %v475
    %v684 = vpop.f32.mrb[0].mxu0
    %v685 = vadd.f32 %v636, %v684
    %v686 = vpop.f32.mrb[0].mxu0
    %v687 = vpop.f32.mrb[0].mxu0
    %v688 = vadd.f32 %v639, %v687
    %v689 = vpop.f32.mrb[0].mxu0
    %690 = vdwg.mxu0
    %v691 = vpack.c.bf16 %v579, %v575
    %v692 = vpack.c.bf16 %v581, %v577
    %v693 = vpack.c.bf16 %v680, %v677
    %v694 = vpack.c.bf16 %v589, %v585
    %v695 = vpack.c.bf16 %v591, %v587
    %v696 = vpack.c.bf16 %v688, %v685
    %v697 = vld [vmem:[%s2] sm:$0xf]
    %v698 = vld [vmem:[%s2 + $0x4] sm:$0xf]
    %v699 = vld [vmem:[%s2 + $0x8] sm:$0xf]
    %v700 = vld [vmem:[%s2 + $0xc] sm:$0xf]
    %v701 = vld [vmem:[%s2 + $0x10] sm:$0xf]
    %v702 = vld [vmem:[%s2 + $0x14] sm:$0xf]
    %v703 = vld [vmem:[%s2 + $0x18] sm:$0xf]
    %v704 = vld [vmem:[%s2 + $0x1c] sm:$0xf]
    %v705 = vld [vmem:[%s2 + $0x20] sm:$0xf]
    %v706 = vld [vmem:[%s2 + $0x24] sm:$0xf]
    %v707 = vld [vmem:[%s2 + $0x28] sm:$0xf]
    %v708 = vld [vmem:[%s2 + $0x2c] sm:$0xf]
    %v709 = vld [vmem:[%s2 + $0x30] sm:$0xf]
    %v710 = vld [vmem:[%s2 + $0x34] sm:$0xf]
    %v711 = vld [vmem:[%s2 + $0x38] sm:$0xf]
    %v712 = vld [vmem:[%s2 + $0x3c] sm:$0xf]
    %v713 = vld [vmem:[%s2 + $0x40] sm:$0xf]
    %v714 = vld [vmem:[%s2 + $0x44] sm:$0xf]
    %v715 = vld [vmem:[%s2 + $0x48] sm:$0xf]
    %v716 = vld [vmem:[%s2 + $0x4c] sm:$0xf]
    %v717 = vld [vmem:[%s2 + $0x50] sm:$0xf]
    %v718 = vld [vmem:[%s2 + $0x54] sm:$0xf]
    %v719 = vld [vmem:[%s2 + $0x58] sm:$0xf]
    %v720 = vld [vmem:[%s2 + $0x5c] sm:$0xf]
    %v721 = vld [vmem:[%s2 + $0x60] sm:$0xf]
    %v722 = vld [vmem:[%s2 + $0x64] sm:$0xf]
    %v723 = vld [vmem:[%s2 + $0x68] sm:$0xf]
    %v724 = vld [vmem:[%s2 + $0x6c] sm:$0xf]
    %v725 = vld [vmem:[%s2 + $0x70] sm:$0xf]
    %v726 = vld [vmem:[%s2 + $0x74] sm:$0xf]
    %v727 = vld [vmem:[%s2 + $0x78] sm:$0xf]
    %v728 = vld [vmem:[%s2 + $0x7c] sm:$0xf]
    %v729 = vld [vmem:[%s2 + $0x80] sm:$0xf]
    %v730 = vld [vmem:[%s2 + $0x84] sm:$0xf]
    %v731 = vld [vmem:[%s2 + $0x88] sm:$0xf]
    %v767 = vunpack.c.l.b16 %v697
    %v768 = vunpack.c.l.b16 %v698
    %v769 = vunpack.c.l.b16 %v699
    %v770 = vunpack.c.l.b16 %v700
    %v771 = vunpack.c.l.b16 %v701
    %v772 = vunpack.c.l.b16 %v702
    %v773 = vunpack.c.l.b16 %v703
    %v774 = vunpack.c.l.b16 %v704
    %v775 = vunpack.c.l.b16 %v705
    %v776 = vunpack.c.l.b16 %v706
    %v777 = vunpack.c.l.b16 %v707
    %v778 = vunpack.c.l.b16 %v708
    %v779 = vunpack.c.l.b16 %v709
    %v780 = vunpack.c.l.b16 %v710
    %v781 = vunpack.c.l.b16 %v711
    %v782 = vunpack.c.l.b16 %v712
    %v783 = vunpack.c.l.b16 %v713
    %v784 = vunpack.c.l.b16 %v714
    %v785 = vunpack.c.l.b16 %v715
    %v786 = vunpack.c.l.b16 %v716
    %v787 = vunpack.c.l.b16 %v717
    %v788 = vunpack.c.l.b16 %v718
    %v789 = vunpack.c.l.b16 %v719
    %v790 = vunpack.c.l.b16 %v720
    %v791 = vunpack.c.l.b16 %v721
    %v792 = vunpack.c.l.b16 %v722
    %v793 = vunpack.c.l.b16 %v723
    %v794 = vunpack.c.l.b16 %v724
    %v795 = vunpack.c.l.b16 %v725
    %v796 = vunpack.c.l.b16 %v726
    %v797 = vunpack.c.l.b16 %v727
    %v798 = vunpack.c.l.b16 %v728
    %v799 = vunpack.c.l.b16 %v729
    %v800 = vunpack.c.l.b16 %v730
    %v801 = vunpack.c.l.b16 %v731
    %v802 = vpack.c.b16 %v768, %v767
    %v803 = vpack.c.b16 %v770, %v769
    %v804 = vpack.c.b16 %v772, %v771
    %v805 = vpack.c.b16 %v774, %v773
    %v806 = vpack.c.b16 %v776, %v775
    %v807 = vpack.c.b16 %v778, %v777
    %v808 = vpack.c.b16 %v780, %v779
    %v809 = vpack.c.b16 %v782, %v781
    %v810 = vpack.c.b16 %v784, %v783
    %v811 = vpack.c.b16 %v786, %v785
    %v812 = vpack.c.b16 %v788, %v787
    %v813 = vpack.c.b16 %v790, %v789
    %v814 = vpack.c.b16 %v792, %v791
    %v815 = vpack.c.b16 %v794, %v793
    %v816 = vpack.c.b16 %v796, %v795
    %v817 = vpack.c.b16 %v798, %v797
    %v818 = vpack.c.b16 %v800, %v799
    %v819 = vpack.c.b16 %v801, %v801
    %v838 = vsel %vm470, %v693, 0
    %v841 = vsel %vm470, %v696, 0
    %v844 = vsel %vm477, %v819, 0
    %846 = vmatprep.subr.bf16.mxu0 0
    %847 = vmatpush1.bf16.msra.mxu0 %v802
    %848 = vmatprep.subr.bf16.mxu0 0
    %849 = vmatpush1.bf16.msra.mxu0 %v803
    %850 = vmatprep.subr.bf16.mxu0 0
    %851 = vmatpush1.bf16.msra.mxu0 %v804
    %852 = vmatprep.subr.bf16.mxu0 0
    %853 = vmatpush1.bf16.msra.mxu0 %v805
    %854 = vmatprep.subr.bf16.mxu0 0
    %855 = vmatpush1.bf16.msra.mxu0 %v806
    %856 = vmatprep.subr.bf16.mxu0 0
    %857 = vmatpush1.bf16.msra.mxu0 %v807
    %858 = vmatprep.subr.bf16.mxu0 0
    %859 = vmatpush1.bf16.msra.mxu0 %v808
    %860 = vmatprep.subr.bf16.mxu0 0
    %861 = vmatpush1.bf16.msra.mxu0 %v809
    %862 = vmatprep.subr.bf16.mxu0 0
    %863 = vmatpush1.bf16.msra.mxu0 %v810
    %864 = vmatprep.subr.bf16.mxu0 0
    %865 = vmatpush1.bf16.msra.mxu0 %v811
    %866 = vmatprep.subr.bf16.mxu0 0
    %867 = vmatpush1.bf16.msra.mxu0 %v812
    %868 = vmatprep.subr.bf16.mxu0 0
    %869 = vmatpush1.bf16.msra.mxu0 %v813
    %870 = vmatprep.subr.bf16.mxu0 0
    %871 = vmatpush1.bf16.msra.mxu0 %v814
    %872 = vmatprep.subr.bf16.mxu0 0
    %873 = vmatpush1.bf16.msra.mxu0 %v815
    %874 = vmatprep.subr.bf16.mxu0 0
    %875 = vmatpush1.bf16.msra.mxu0 %v816
    %876 = vmatprep.subr.bf16.mxu0 0
    %877 = vmatpush1.bf16.msra.mxu0 %v817
    %878 = vmatprep.mubr.bf16.mxu0 %v692
    %879 = vmatmul.mubr.bf16.gmra.mrb[0].mxu0 %v691
    %v880 = vpop.f32.mrb[0].mxu0
    %v881 = vadd.f32 0.0, %v880
    %v882 = vpop.f32.mrb[0].mxu0
    %v883 = vpop.f32.mrb[0].mxu0
    %v884 = vadd.f32 0.0, %v883
    %v885 = vpop.f32.mrb[0].mxu0
    %886 = vmatprep.mubr.bf16.mxu0 %v695
    %887 = vmatmul.mubr.bf16.gmra.mrb[0].mxu0 %v694
    %v888 = vpop.f32.mrb[0].mxu0
    %v889 = vadd.f32 0.0, %v888
    %v890 = vpop.f32.mrb[0].mxu0
    %v891 = vpop.f32.mrb[0].mxu0
    %v892 = vadd.f32 0.0, %v891
    %v893 = vpop.f32.mrb[0].mxu0
    %894 = vdwg.mxu0
    %895 = vmatprep.subr.bf16.mxu0 0
    %896 = vmatpush1.bf16.msra.mxu0 %v818
    %897 = vmatprep.subr.bf16.mxu0 0
    %898 = vmatpush1.bf16.msra.mxu0 %v844
    %899 = vmatprep.subr.bf16.mxu0 0
    %900 = vmatpush1.bf16.msra.mxu0 0
    %901 = vmatprep.subr.bf16.mxu0 0
    %902 = vmatpush1.bf16.msra.mxu0 0
    %903 = vmatprep.subr.bf16.mxu0 0
    %904 = vmatpush1.bf16.msra.mxu0 0
    %905 = vmatprep.subr.bf16.mxu0 0
    %906 = vmatpush1.bf16.msra.mxu0 0
    %907 = vmatprep.subr.bf16.mxu0 0
    %908 = vmatpush1.bf16.msra.mxu0 0
    %909 = vmatprep.subr.bf16.mxu0 0
    %910 = vmatpush1.bf16.msra.mxu0 0
    %911 = vmatprep.subr.bf16.mxu0 0
    %912 = vmatpush1.bf16.msra.mxu0 0
    %913 = vmatprep.subr.bf16.mxu0 0
    %914 = vmatpush1.bf16.msra.mxu0 0
    %915 = vmatprep.subr.bf16.mxu0 0
    %916 = vmatpush1.bf16.msra.mxu0 0
    %917 = vmatprep.subr.bf16.mxu0 0
    %918 = vmatpush1.bf16.msra.mxu0 0
    %919 = vmatprep.subr.bf16.mxu0 0
    %920 = vmatpush1.bf16.msra.mxu0 0
    %921 = vmatprep.subr.bf16.mxu0 0
    %922 = vmatpush1.bf16.msra.mxu0 0
    %923 = vmatprep.subr.bf16.mxu0 0
    %924 = vmatpush1.bf16.msra.mxu0 0
    %925 = vmatprep.subr.bf16.mxu0 0
    %926 = vmatpush1.bf16.msra.mxu0 0
    %927 = vmatprep.mubr.bf16.mxu0 0
    %928 = vmatmul.mubr.bf16.gmra.mrb[0].mxu0 %v838
    %v929 = vpop.f32.mrb[0].mxu0
    %v930 = vadd.f32 %v881, %v929
    %v931 = vpop.f32.mrb[0].mxu0
    %v932 = vpop.f32.mrb[0].mxu0
    %v933 = vadd.f32 %v884, %v932
    %v934 = vpop.f32.mrb[0].mxu0
    %935 = vmatprep.mubr.bf16.mxu0 0
    %936 = vmatmul.mubr.bf16.gmra.mrb[0].mxu0 %v841
    %v937 = vpop.f32.mrb[0].mxu0
    %v938 = vadd.f32 %v889, %v937
    %v939 = vpop.f32.mrb[0].mxu0
    %v940 = vpop.f32.mrb[0].mxu0
    %v941 = vadd.f32 %v892, %v940
    %v942 = vpop.f32.mrb[0].mxu0
    %943 = vdwg.mxu0
    %v944 = vmul.f32 %v930, 0.00012728233
    %v945 = vmul.f32 %v933, 0.00012728233
    %v946 = vmul.f32 %v938, 0.00012728233
    %v947 = vmul.f32 %v941, 0.00012728233
    %v948 = vadd.f32 %v944, -0.42421293
    %v949 = vadd.f32 %v945, -0.42421293
    %v950 = vadd.f32 %v946, -0.42421293
    %v951 = vadd.f32 %v947, -0.42421293
    %v952 = vld [vmem:[%s3] sm:$0xf]
    %v953 = vld [vmem:[%s3 + $0x4] sm:$0xf]
    %v954 = vld [vmem:[%s3 + $0x8] sm:$0xf]
    %v955 = vld [vmem:[%s3 + $0xc] sm:$0xf]
    %v956 = vld [vmem:[%s3 + $0x10] sm:$0xf]
    %v957 = vld [vmem:[%s3 + $0x14] sm:$0xf]
    %v958 = vld [vmem:[%s3 + $0x18] sm:$0xf]
    %v959 = vld [vmem:[%s3 + $0x1c] sm:$0xf]
    %v960 = vld [vmem:[%s3 + $0x20] sm:$0xf]
    %v961 = vld [vmem:[%s3 + $0x24] sm:$0xf]
    %v962 = vld [vmem:[%s3 + $0x28] sm:$0xf]
    %v963 = vld [vmem:[%s3 + $0x2c] sm:$0xf]
    %v964 = vld [vmem:[%s3 + $0x30] sm:$0xf]
    %v965 = vld [vmem:[%s3 + $0x34] sm:$0xf]
    %v966 = vld [vmem:[%s3 + $0x38] sm:$0xf]
    %v967 = vld [vmem:[%s3 + $0x3c] sm:$0xf]
    %v968 = vld [vmem:[%s3 + $0x40] sm:$0xf]
    %v969 = vld [vmem:[%s3 + $0x44] sm:$0xf]
    %v970 = vld [vmem:[%s3 + $0x48] sm:$0xf]
    %v971 = vld [vmem:[%s3 + $0x4c] sm:$0xf]
    %v972 = vld [vmem:[%s3 + $0x50] sm:$0xf]
    %v973 = vld [vmem:[%s3 + $0x54] sm:$0xf]
    %v974 = vld [vmem:[%s3 + $0x58] sm:$0xf]
    %v975 = vld [vmem:[%s3 + $0x5c] sm:$0xf]
    %v976 = vld [vmem:[%s3 + $0x60] sm:$0xf]
    %v977 = vld [vmem:[%s3 + $0x64] sm:$0xf]
    %v978 = vld [vmem:[%s3 + $0x68] sm:$0xf]
    %v979 = vld [vmem:[%s3 + $0x6c] sm:$0xf]
    %v980 = vld [vmem:[%s3 + $0x70] sm:$0xf]
    %v981 = vld [vmem:[%s3 + $0x74] sm:$0xf]
    %v982 = vld [vmem:[%s3 + $0x78] sm:$0xf]
    %v983 = vld [vmem:[%s3 + $0x7c] sm:$0xf]
    %v984 = vld [vmem:[%s3 + $0x80] sm:$0xf]
    %v985 = vld [vmem:[%s3 + $0x84] sm:$0xf]
    %v986 = vld [vmem:[%s3 + $0x88] sm:$0xf]
    %v987 = vld [vmem:[%s3 + $0x8c] sm:$0xf]
    %v988 = vld [vmem:[%s3 + $0x90] sm:$0xf]
    %v989 = vld [vmem:[%s3 + $0x94] sm:$0xf]
    %v990 = vld [vmem:[%s3 + $0x98] sm:$0xf]
    %v991 = vld [vmem:[%s3 + $0x9c] sm:$0xf]
    %v992 = vld [vmem:[%s3 + $0xa0] sm:$0xf]
    %v993 = vld [vmem:[%s3 + $0xa4] sm:$0xf]
    %v994 = vld [vmem:[%s3 + $0xa8] sm:$0xf]
    %v995 = vld [vmem:[%s3 + $0xac] sm:$0xf]
    %v996 = vld [vmem:[%s3 + $0xb0] sm:$0xf]
    %v997 = vld [vmem:[%s3 + $0xb4] sm:$0xf]
    %v998 = vld [vmem:[%s3 + $0xb8] sm:$0xf]
    %v999 = vld [vmem:[%s3 + $0xbc] sm:$0xf]
    %v1000 = vld [vmem:[%s3 + $0xc0] sm:$0xf]
    %v1001 = vld [vmem:[%s3 + $0xc4] sm:$0xf]
    %v1002 = vld [vmem:[%s3 + $0xc8] sm:$0xf]
    %v1003 = vld [vmem:[%s3 + $0xcc] sm:$0xf]
    %v1004 = vld [vmem:[%s3 + $0xd0] sm:$0xf]
    %v1005 = vld [vmem:[%s3 + $0xd4] sm:$0xf]
    %v1006 = vld [vmem:[%s3 + $0xd8] sm:$0xf]
    %v1007 = vld [vmem:[%s3 + $0xdc] sm:$0xf]
    %v1008 = vld [vmem:[%s3 + $0xe0] sm:$0xf]
    %v1009 = vld [vmem:[%s3 + $0xe4] sm:$0xf]
    %v1010 = vld [vmem:[%s3 + $0xe8] sm:$0xf]
    %v1011 = vld [vmem:[%s3 + $0xec] sm:$0xf]
    %v1012 = vld [vmem:[%s3 + $0xf0] sm:$0xf]
    %v1013 = vld [vmem:[%s3 + $0xf4] sm:$0xf]
    %v1014 = vld [vmem:[%s3 + $0xf8] sm:$0xf]
    %v1015 = vld [vmem:[%s3 + $0xfc] sm:$0xf]
    %v1016 = vld [vmem:[%s3 + $0x100] sm:$0xf]
    %v1017 = vld [vmem:[%s3 + $0x104] sm:$0xf]
    %v1018 = vld [vmem:[%s3 + $0x108] sm:$0xf]
    %v1019 = vld [vmem:[%s3 + $0x10c] sm:$0xf]
    %v1020 = vld [vmem:[%s3 + $0x110] sm:$0xf]
    %v1021 = vld [vmem:[%s3 + $0x114] sm:$0xf]
    %v1022 = vld [vmem:[%s3 + $0x118] sm:$0xf]
    %v1023 = vld [vmem:[%s3 + $0x11c] sm:$0xf]
    %v1024 = vld [vmem:[%s3 + $0x120] sm:$0xf]
    %v1025 = vld [vmem:[%s3 + $0x124] sm:$0xf]
    %v1026 = vld [vmem:[%s3 + $0x128] sm:$0xf]
    %v1027 = vld [vmem:[%s3 + $0x12c] sm:$0xf]
    %v1028 = vld [vmem:[%s3 + $0x130] sm:$0xf]
    %v1029 = vld [vmem:[%s3 + $0x134] sm:$0xf]
    %v1030 = vld [vmem:[%s3 + $0x138] sm:$0xf]
    %v1031 = vld [vmem:[%s3 + $0x13c] sm:$0xf]
    %v1032 = vld [vmem:[%s3 + $0x140] sm:$0xf]
    %v1033 = vld [vmem:[%s3 + $0x144] sm:$0xf]
    %v1034 = vld [vmem:[%s3 + $0x148] sm:$0xf]
    %v1035 = vld [vmem:[%s3 + $0x14c] sm:$0xf]
    %v1036 = vld [vmem:[%s3 + $0x150] sm:$0xf]
    %v1037 = vld [vmem:[%s3 + $0x154] sm:$0xf]
    %v1038 = vld [vmem:[%s3 + $0x158] sm:$0xf]
    %v1039 = vld [vmem:[%s3 + $0x15c] sm:$0xf]
    %v1040 = vld [vmem:[%s3 + $0x160] sm:$0xf]
    %v1041 = vld [vmem:[%s3 + $0x164] sm:$0xf]
    %v1042 = vld [vmem:[%s3 + $0x168] sm:$0xf]
    %v1043 = vld [vmem:[%s3 + $0x16c] sm:$0xf]
    %v1044 = vld [vmem:[%s3 + $0x170] sm:$0xf]
    %v1045 = vld [vmem:[%s3 + $0x174] sm:$0xf]
    %v1046 = vld [vmem:[%s3 + $0x178] sm:$0xf]
    %v1047 = vld [vmem:[%s3 + $0x17c] sm:$0xf]
    %v1048 = vld [vmem:[%s3 + $0x180] sm:$0xf]
    %v1049 = vld [vmem:[%s3 + $0x184] sm:$0xf]
    %v1050 = vld [vmem:[%s3 + $0x188] sm:$0xf]
    %v1051 = vld [vmem:[%s3 + $0x18c] sm:$0xf]
    %v1052 = vld [vmem:[%s3 + $0x190] sm:$0xf]
    %v1053 = vld [vmem:[%s3 + $0x194] sm:$0xf]
    %v1054 = vld [vmem:[%s3 + $0x198] sm:$0xf]
    %v1055 = vld [vmem:[%s3 + $0x19c] sm:$0xf]
    %v1056 = vld [vmem:[%s3 + $0x1a0] sm:$0xf]
    %v1057 = vld [vmem:[%s3 + $0x1a4] sm:$0xf]
    %v1058 = vld [vmem:[%s3 + $0x1a8] sm:$0xf]
    %v1059 = vld [vmem:[%s3 + $0x1ac] sm:$0xf]
    %v1060 = vld [vmem:[%s3 + $0x1b0] sm:$0xf]
    %v1061 = vld [vmem:[%s3 + $0x1b4] sm:$0xf]
    %v1062 = vld [vmem:[%s3 + $0x1b8] sm:$0xf]
    %v1063 = vld [vmem:[%s3 + $0x1bc] sm:$0xf]
    %v1064 = vpack.c.bf16 %v949, %v948
    %v1065 = vpack.c.bf16 %v951, %v950
    %v1178 = vunpack.c.l.b16 %v952
    %v1179 = vunpack.c.l.b16 %v953
    %v1180 = vunpack.c.l.b16 %v954
    %v1181 = vunpack.c.l.b16 %v955
    %v1182 = vunpack.c.l.b16 %v956
    %v1183 = vunpack.c.l.b16 %v957
    %v1184 = vunpack.c.l.b16 %v958
    %v1185 = vunpack.c.l.b16 %v959
    %v1186 = vunpack.c.l.b16 %v960
    %v1187 = vunpack.c.l.b16 %v961
    %v1188 = vunpack.c.l.b16 %v962
    %v1189 = vunpack.c.l.b16 %v963
    %v1190 = vunpack.c.l.b16 %v964
    %v1191 = vunpack.c.l.b16 %v965
    %v1192 = vunpack.c.l.b16 %v966
    %v1193 = vunpack.c.l.b16 %v967
    %v1194 = vunpack.c.l.b16 %v968
    %v1195 = vunpack.c.l.b16 %v969
    %v1196 = vunpack.c.l.b16 %v970
    %v1197 = vunpack.c.l.b16 %v971
    %v1198 = vunpack.c.l.b16 %v972
    %v1199 = vunpack.c.l.b16 %v973
    %v1200 = vunpack.c.l.b16 %v974
    %v1201 = vunpack.c.l.b16 %v975
    %v1202 = vunpack.c.l.b16 %v976
    %v1203 = vunpack.c.l.b16 %v977
    %v1204 = vunpack.c.l.b16 %v978
    %v1205 = vunpack.c.l.b16 %v979
    %v1206 = vunpack.c.l.b16 %v980
    %v1207 = vunpack.c.l.b16 %v981
    %v1208 = vunpack.c.l.b16 %v982
    %v1209 = vunpack.c.l.b16 %v983
    %v1210 = vunpack.c.l.b16 %v984
    %v1211 = vunpack.c.l.b16 %v985
    %v1212 = vunpack.c.l.b16 %v986
    %v1213 = vunpack.c.l.b16 %v987
    %v1214 = vunpack.c.l.b16 %v988
    %v1215 = vunpack.c.l.b16 %v989
    %v1216 = vunpack.c.l.b16 %v990
    %v1217 = vunpack.c.l.b16 %v991
    %v1218 = vunpack.c.l.b16 %v992
    %v1219 = vunpack.c.l.b16 %v993
    %v1220 = vunpack.c.l.b16 %v994
    %v1221 = vunpack.c.l.b16 %v995
    %v1222 = vunpack.c.l.b16 %v996
    %v1223 = vunpack.c.l.b16 %v997
    %v1224 = vunpack.c.l.b16 %v998
    %v1225 = vunpack.c.l.b16 %v999
    %v1226 = vunpack.c.l.b16 %v1000
    %v1227 = vunpack.c.l.b16 %v1001
    %v1228 = vunpack.c.l.b16 %v1002
    %v1229 = vunpack.c.l.b16 %v1003
    %v1230 = vunpack.c.l.b16 %v1004
    %v1231 = vunpack.c.l.b16 %v1005
    %v1232 = vunpack.c.l.b16 %v1006
    %v1233 = vunpack.c.l.b16 %v1007
    %v1234 = vunpack.c.l.b16 %v1008
    %v1235 = vunpack.c.l.b16 %v1009
    %v1236 = vunpack.c.l.b16 %v1010
    %v1237 = vunpack.c.l.b16 %v1011
    %v1238 = vunpack.c.l.b16 %v1012
    %v1239 = vunpack.c.l.b16 %v1013
    %v1240 = vunpack.c.l.b16 %v1014
    %v1241 = vunpack.c.l.b16 %v1015
    %v1242 = vunpack.c.l.b16 %v1016
    %v1243 = vunpack.c.l.b16 %v1017
    %v1244 = vunpack.c.l.b16 %v1018
    %v1245 = vunpack.c.l.b16 %v1019
    %v1246 = vunpack.c.l.b16 %v1020
    %v1247 = vunpack.c.l.b16 %v1021
    %v1248 = vunpack.c.l.b16 %v1022
    %v1249 = vunpack.c.l.b16 %v1023
    %v1250 = vunpack.c.l.b16 %v1024
    %v1251 = vunpack.c.l.b16 %v1025
    %v1252 = vunpack.c.l.b16 %v1026
    %v1253 = vunpack.c.l.b16 %v1027
    %v1254 = vunpack.c.l.b16 %v1028
    %v1255 = vunpack.c.l.b16 %v1029
    %v1256 = vunpack.c.l.b16 %v1030
    %v1257 = vunpack.c.l.b16 %v1031
    %v1258 = vunpack.c.l.b16 %v1032
    %v1259 = vunpack.c.l.b16 %v1033
    %v1260 = vunpack.c.l.b16 %v1034
    %v1261 = vunpack.c.l.b16 %v1035
    %v1262 = vunpack.c.l.b16 %v1036
    %v1263 = vunpack.c.l.b16 %v1037
    %v1264 = vunpack.c.l.b16 %v1038
    %v1265 = vunpack.c.l.b16 %v1039
    %v1266 = vunpack.c.l.b16 %v1040
    %v1267 = vunpack.c.l.b16 %v1041
    %v1268 = vunpack.c.l.b16 %v1042
    %v1269 = vunpack.c.l.b16 %v1043
    %v1270 = vunpack.c.l.b16 %v1044
    %v1271 = vunpack.c.l.b16 %v1045
    %v1272 = vunpack.c.l.b16 %v1046
    %v1273 = vunpack.c.l.b16 %v1047
    %v1274 = vunpack.c.l.b16 %v1048
    %v1275 = vunpack.c.l.b16 %v1049
    %v1276 = vunpack.c.l.b16 %v1050
    %v1277 = vunpack.c.l.b16 %v1051
    %v1278 = vunpack.c.l.b16 %v1052
    %v1279 = vunpack.c.l.b16 %v1053
    %v1280 = vunpack.c.l.b16 %v1054
    %v1281 = vunpack.c.l.b16 %v1055
    %v1282 = vunpack.c.l.b16 %v1056
    %v1283 = vunpack.c.l.b16 %v1057
    %v1284 = vunpack.c.l.b16 %v1058
    %v1285 = vunpack.c.l.b16 %v1059
    %v1286 = vunpack.c.l.b16 %v1060
    %v1287 = vunpack.c.l.b16 %v1061
    %v1288 = vunpack.c.l.b16 %v1062
    %v1289 = vunpack.c.l.b16 %v1063
    %v1290 = vpack.c.b16 %v1179, %v1178
    %v1291 = vpack.c.b16 %v1181, %v1180
    %v1292 = vpack.c.b16 %v1183, %v1182
    %v1293 = vpack.c.b16 %v1185, %v1184
    %v1294 = vpack.c.b16 %v1187, %v1186
    %v1295 = vpack.c.b16 %v1189, %v1188
    %v1296 = vpack.c.b16 %v1191, %v1190
    %v1297 = vpack.c.b16 %v1193, %v1192
    %v1298 = vpack.c.b16 %v1195, %v1194
    %v1299 = vpack.c.b16 %v1197, %v1196
    %v1300 = vpack.c.b16 %v1199, %v1198
    %v1301 = vpack.c.b16 %v1201, %v1200
    %v1302 = vpack.c.b16 %v1203, %v1202
    %v1303 = vpack.c.b16 %v1205, %v1204
    %v1304 = vpack.c.b16 %v1207, %v1206
    %v1305 = vpack.c.b16 %v1209, %v1208
    %v1306 = vpack.c.b16 %v1211, %v1210
    %v1307 = vpack.c.b16 %v1213, %v1212
    %v1308 = vpack.c.b16 %v1215, %v1214
    %v1309 = vpack.c.b16 %v1217, %v1216
    %v1310 = vpack.c.b16 %v1219, %v1218
    %v1311 = vpack.c.b16 %v1221, %v1220
    %v1312 = vpack.c.b16 %v1223, %v1222
    %v1313 = vpack.c.b16 %v1225, %v1224
    %v1314 = vpack.c.b16 %v1227, %v1226
    %v1315 = vpack.c.b16 %v1229, %v1228
    %v1316 = vpack.c.b16 %v1231, %v1230
    %v1317 = vpack.c.b16 %v1233, %v1232
    %v1318 = vpack.c.b16 %v1235, %v1234
    %v1319 = vpack.c.b16 %v1237, %v1236
    %v1320 = vpack.c.b16 %v1239, %v1238
    %v1321 = vpack.c.b16 %v1241, %v1240
    %v1322 = vpack.c.b16 %v1243, %v1242
    %v1323 = vpack.c.b16 %v1245, %v1244
    %v1324 = vpack.c.b16 %v1247, %v1246
    %v1325 = vpack.c.b16 %v1249, %v1248
    %v1326 = vpack.c.b16 %v1251, %v1250
    %v1327 = vpack.c.b16 %v1253, %v1252
    %v1328 = vpack.c.b16 %v1255, %v1254
    %v1329 = vpack.c.b16 %v1257, %v1256
    %v1330 = vpack.c.b16 %v1259, %v1258
    %v1331 = vpack.c.b16 %v1261, %v1260
    %v1332 = vpack.c.b16 %v1263, %v1262
    %v1333 = vpack.c.b16 %v1265, %v1264
    %v1334 = vpack.c.b16 %v1267, %v1266
    %v1335 = vpack.c.b16 %v1269, %v1268
    %v1336 = vpack.c.b16 %v1271, %v1270
    %v1337 = vpack.c.b16 %v1273, %v1272
    %v1338 = vpack.c.b16 %v1275, %v1274
    %v1339 = vpack.c.b16 %v1277, %v1276
    %v1340 = vpack.c.b16 %v1279, %v1278
    %v1341 = vpack.c.b16 %v1281, %v1280
    %v1342 = vpack.c.b16 %v1283, %v1282
    %v1343 = vpack.c.b16 %v1285, %v1284
    %v1344 = vpack.c.b16 %v1287, %v1286
    %v1345 = vpack.c.b16 %v1289, %v1288
    %vm1346 = vcmask 228352
    %v1348 = vsel %vm1346, %v1290, 0
    %v1351 = vsel %vm1346, %v1291, 0
    %v1354 = vsel %vm1346, %v1292, 0
    %v1357 = vsel %vm1346, %v1293, 0
    %v1360 = vsel %vm1346, %v1294, 0
    %v1363 = vsel %vm1346, %v1295, 0
    %v1366 = vsel %vm1346, %v1296, 0
    %v1369 = vsel %vm1346, %v1297, 0
    %v1372 = vsel %vm1346, %v1298, 0
    %v1375 = vsel %vm1346, %v1299, 0
    %v1378 = vsel %vm1346, %v1300, 0
    %v1381 = vsel %vm1346, %v1301, 0
    %v1384 = vsel %vm1346, %v1302, 0
    %v1387 = vsel %vm1346, %v1303, 0
    %v1390 = vsel %vm1346, %v1304, 0
    %v1393 = vsel %vm1346, %v1305, 0
    %v1396 = vsel %vm1346, %v1306, 0
    %v1399 = vsel %vm1346, %v1307, 0
    %v1402 = vsel %vm1346, %v1308, 0
    %v1405 = vsel %vm1346, %v1309, 0
    %v1408 = vsel %vm1346, %v1310, 0
    %v1411 = vsel %vm1346, %v1311, 0
    %v1414 = vsel %vm1346, %v1312, 0
    %v1417 = vsel %vm1346, %v1313, 0
    %v1420 = vsel %vm1346, %v1314, 0
    %v1423 = vsel %vm1346, %v1315, 0
    %v1426 = vsel %vm1346, %v1316, 0
    %v1429 = vsel %vm1346, %v1317, 0
    %v1432 = vsel %vm1346, %v1318, 0
    %v1435 = vsel %vm1346, %v1319, 0
    %v1438 = vsel %vm1346, %v1320, 0
    %v1441 = vsel %vm1346, %v1321, 0
    %v1444 = vsel %vm1346, %v1322, 0
    %v1447 = vsel %vm1346, %v1323, 0
    %v1450 = vsel %vm1346, %v1324, 0
    %v1453 = vsel %vm1346, %v1325, 0
    %v1456 = vsel %vm1346, %v1326, 0
    %v1459 = vsel %vm1346, %v1327, 0
    %v1462 = vsel %vm1346, %v1328, 0
    %v1465 = vsel %vm1346, %v1329, 0
    %v1468 = vsel %vm1346, %v1330, 0
    %v1471 = vsel %vm1346, %v1331, 0
    %v1474 = vsel %vm1346, %v1332, 0
    %v1477 = vsel %vm1346, %v1333, 0
    %v1480 = vsel %vm1346, %v1334, 0
    %v1483 = vsel %vm1346, %v1335, 0
    %v1486 = vsel %vm1346, %v1336, 0
    %v1489 = vsel %vm1346, %v1337, 0
    %v1492 = vsel %vm1346, %v1338, 0
    %v1495 = vsel %vm1346, %v1339, 0
    %v1498 = vsel %vm1346, %v1340, 0
    %v1501 = vsel %vm1346, %v1341, 0
    %v1504 = vsel %vm1346, %v1342, 0
    %v1507 = vsel %vm1346, %v1343, 0
    %v1510 = vsel %vm1346, %v1344, 0
    %v1513 = vsel %vm1346, %v1345, 0
    %vm1515 = vcmask 1045504
    %v1517 = vsel %vm1515, %v1065, 0
    %1519 = vmatprep.subr.bf16.mxu0 0
    %1520 = vmatpush1.bf16.msra.mxu0 %v1064
    %1521 = vmatprep.subr.bf16.mxu0 0
    %1522 = vmatpush1.bf16.msra.mxu0 %v1517
    %1523 = vmatprep.subr.bf16.mxu0 0
    %1524 = vmatpush1.bf16.msra.mxu0 0
    %1525 = vmatprep.subr.bf16.mxu0 0
    %1526 = vmatpush1.bf16.msra.mxu0 0
    %1527 = vmatprep.subr.bf16.mxu0 0
    %1528 = vmatpush1.bf16.msra.mxu0 0
    %1529 = vmatprep.subr.bf16.mxu0 0
    %1530 = vmatpush1.bf16.msra.mxu0 0
    %1531 = vmatprep.subr.bf16.mxu0 0
    %1532 = vmatpush1.bf16.msra.mxu0 0
    %1533 = vmatprep.subr.bf16.mxu0 0
    %1534 = vmatpush1.bf16.msra.mxu0 0
    %1535 = vmatprep.subr.bf16.mxu0 0
    %1536 = vmatpush1.bf16.msra.mxu0 0
    %1537 = vmatprep.subr.bf16.mxu0 0
    %1538 = vmatpush1.bf16.msra.mxu0 0
    %1539 = vmatprep.subr.bf16.mxu0 0
    %1540 = vmatpush1.bf16.msra.mxu0 0
    %1541 = vmatprep.subr.bf16.mxu0 0
    %1542 = vmatpush1.bf16.msra.mxu0 0
    %1543 = vmatprep.subr.bf16.mxu0 0
    %1544 = vmatpush1.bf16.msra.mxu0 0
    %1545 = vmatprep.subr.bf16.mxu0 0
    %1546 = vmatpush1.bf16.msra.mxu0 0
    %1547 = vmatprep.subr.bf16.mxu0 0
    %1548 = vmatpush1.bf16.msra.mxu0 0
    %1549 = vmatprep.subr.bf16.mxu0 0
    %1550 = vmatpush1.bf16.msra.mxu0 0
    %1551 = vmatprep.mubr.bf16.mxu0 0
    %1552 = vmatmul.mubr.bf16.gmra.mrb[0].mxu0 %v1348
    %v1553 = vpop.f32.mrb[0].mxu0
    %v1554 = vadd.f32 0.0, %v1553
    %v1555 = vpop.f32.mrb[0].mxu0
    %v1556 = vpop.f32.mrb[0].mxu0
    %v1557 = vadd.f32 0.0, %v1556
    %v1558 = vpop.f32.mrb[0].mxu0
    %1559 = vmatprep.mubr.bf16.mxu0 0
    %1560 = vmatmul.mubr.bf16.gmra.mrb[0].mxu0 %v1351
    %v1561 = vpop.f32.mrb[0].mxu0
    %v1562 = vadd.f32 0.0, %v1561
    %v1563 = vpop.f32.mrb[0].mxu0
    %v1564 = vpop.f32.mrb[0].mxu0
    %v1565 = vadd.f32 0.0, %v1564
    %v1566 = vpop.f32.mrb[0].mxu0
    %1567 = vmatprep.mubr.bf16.mxu0 0
    %1568 = vmatmul.mubr.bf16.gmra.mrb[0].mxu0 %v1354
    %v1569 = vpop.f32.mrb[0].mxu0
    %v1570 = vadd.f32 0.0, %v1569
    %v1571 = vpop.f32.mrb[0].mxu0
    %v1572 = vpop.f32.mrb[0].mxu0
    %v1573 = vadd.f32 0.0, %v1572
    %v1574 = vpop.f32.mrb[0].mxu0
    %1575 = vmatprep.mubr.bf16.mxu0 0
    %1576 = vmatmul.mubr.bf16.gmra.mrb[0].mxu0 %v1357
    %v1577 = vpop.f32.mrb[0].mxu0
    %v1578 = vadd.f32 0.0, %v1577
    %v1579 = vpop.f32.mrb[0].mxu0
    %v1580 = vpop.f32.mrb[0].mxu0
    %v1581 = vadd.f32 0.0, %v1580
    %v1582 = vpop.f32.mrb[0].mxu0
    %1583 = vmatprep.mubr.bf16.mxu0 0
    %1584 = vmatmul.mubr.bf16.gmra.mrb[0].mxu0 %v1360
    %v1585 = vpop.f32.mrb[0].mxu0
    %v1586 = vadd.f32 0.0, %v1585
    %v1587 = vpop.f32.mrb[0].mxu0
    %v1588 = vpop.f32.mrb[0].mxu0
    %v1589 = vadd.f32 0.0, %v1588
    %v1590 = vpop.f32.mrb[0].mxu0
    %1591 = vmatprep.mubr.bf16.mxu0 0
    %1592 = vmatmul.mubr.bf16.gmra.mrb[0].mxu0 %v1363
    %v1593 = vpop.f32.mrb[0].mxu0
    %v1594 = vadd.f32 0.0, %v1593
    %v1595 = vpop.f32.mrb[0].mxu0
    %v1596 = vpop.f32.mrb[0].mxu0
    %v1597 = vadd.f32 0.0, %v1596
    %v1598 = vpop.f32.mrb[0].mxu0
    %1599 = vmatprep.mubr.bf16.mxu0 0
    %1600 = vmatmul.mubr.bf16.gmra.mrb[0].mxu0 %v1366
    %v1601 = vpop.f32.mrb[0].mxu0
    %v1602 = vadd.f32 0.0, %v1601
    %v1603 = vpop.f32.mrb[0].mxu0
    %v1604 = vpop.f32.mrb[0].mxu0
    %v1605 = vadd.f32 0.0, %v1604
    %v1606 = vpop.f32.mrb[0].mxu0
    %1607 = vmatprep.mubr.bf16.mxu0 0
    %1608 = vmatmul.mubr.bf16.gmra.mrb[0].mxu0 %v1369
    %v1609 = vpop.f32.mrb[0].mxu0
    %v1610 = vadd.f32 0.0, %v1609
    %v1611 = vpop.f32.mrb[0].mxu0
    %v1612 = vpop.f32.mrb[0].mxu0
    %v1613 = vadd.f32 0.0, %v1612
    %v1614 = vpop.f32.mrb[0].mxu0
    %1615 = vmatprep.mubr.bf16.mxu0 0
    %1616 = vmatmul.mubr.bf16.gmra.mrb[0].mxu0 %v1372
    %v1617 = vpop.f32.mrb[0].mxu0
    %v1618 = vadd.f32 0.0, %v1617
    %v1619 = vpop.f32.mrb[0].mxu0
    %v1620 = vpop.f32.mrb[0].mxu0
    %v1621 = vadd.f32 0.0, %v1620
    %v1622 = vpop.f32.mrb[0].mxu0
    %1623 = vmatprep.mubr.bf16.mxu0 0
    %1624 = vmatmul.mubr.bf16.gmra.mrb[0].mxu0 %v1375
    %v1625 = vpop.f32.mrb[0].mxu0
    %v1626 = vadd.f32 0.0, %v1625
    %v1627 = vpop.f32.mrb[0].mxu0
    %v1628 = vpop.f32.mrb[0].mxu0
    %v1629 = vadd.f32 0.0, %v1628
    %v1630 = vpop.f32.mrb[0].mxu0
    %1631 = vmatprep.mubr.bf16.mxu0 0
    %1632 = vmatmul.mubr.bf16.gmra.mrb[0].mxu0 %v1378
    %v1633 = vpop.f32.mrb[0].mxu0
    %v1634 = vadd.f32 0.0, %v1633
    %v1635 = vpop.f32.mrb[0].mxu0
    %v1636 = vpop.f32.mrb[0].mxu0
    %v1637 = vadd.f32 0.0, %v1636
    %v1638 = vpop.f32.mrb[0].mxu0
    %1639 = vmatprep.mubr.bf16.mxu0 0
    %1640 = vmatmul.mubr.bf16.gmra.mrb[0].mxu0 %v1381
    %v1641 = vpop.f32.mrb[0].mxu0
    %v1642 = vadd.f32 0.0, %v1641
    %v1643 = vpop.f32.mrb[0].mxu0
    %v1644 = vpop.f32.mrb[0].mxu0
    %v1645 = vadd.f32 0.0, %v1644
    %v1646 = vpop.f32.mrb[0].mxu0
    %1647 = vmatprep.mubr.bf16.mxu0 0
    %1648 = vmatmul.mubr.bf16.gmra.mrb[0].mxu0 %v1384
    %v1649 = vpop.f32.mrb[0].mxu0
    %v1650 = vadd.f32 0.0, %v1649
    %v1651 = vpop.f32.mrb[0].mxu0
    %v1652 = vpop.f32.mrb[0].mxu0
    %v1653 = vadd.f32 0.0, %v1652
    %v1654 = vpop.f32.mrb[0].mxu0
    %1655 = vmatprep.mubr.bf16.mxu0 0
    %1656 = vmatmul.mubr.bf16.gmra.mrb[0].mxu0 %v1387
    %v1657 = vpop.f32.mrb[0].mxu0
    %v1658 = vadd.f32 0.0, %v1657
    %v1659 = vpop.f32.mrb[0].mxu0
    %v1660 = vpop.f32.mrb[0].mxu0
    %v1661 = vadd.f32 0.0, %v1660
    %v1662 = vpop.f32.mrb[0].mxu0
    %1663 = vmatprep.mubr.bf16.mxu0 0
    %1664 = vmatmul.mubr.bf16.gmra.mrb[0].mxu0 %v1390
    %v1665 = vpop.f32.mrb[0].mxu0
    %v1666 = vadd.f32 0.0, %v1665
    %v1667 = vpop.f32.mrb[0].mxu0
    %v1668 = vpop.f32.mrb[0].mxu0
    %v1669 = vadd.f32 0.0, %v1668
    %v1670 = vpop.f32.mrb[0].mxu0
    %1671 = vmatprep.mubr.bf16.mxu0 0
    %1672 = vmatmul.mubr.bf16.gmra.mrb[0].mxu0 %v1393
    %v1673 = vpop.f32.mrb[0].mxu0
    %v1674 = vadd.f32 0.0, %v1673
    %v1675 = vpop.f32.mrb[0].mxu0
    %v1676 = vpop.f32.mrb[0].mxu0
    %v1677 = vadd.f32 0.0, %v1676
    %v1678 = vpop.f32.mrb[0].mxu0
    %1679 = vmatprep.mubr.bf16.mxu0 0
    %1680 = vmatmul.mubr.bf16.gmra.mrb[0].mxu0 %v1396
    %v1681 = vpop.f32.mrb[0].mxu0
    %v1682 = vadd.f32 0.0, %v1681
    %v1683 = vpop.f32.mrb[0].mxu0
    %v1684 = vpop.f32.mrb[0].mxu0
    %v1685 = vadd.f32 0.0, %v1684
    %v1686 = vpop.f32.mrb[0].mxu0
    %1687 = vmatprep.mubr.bf16.mxu0 0
    %1688 = vmatmul.mubr.bf16.gmra.mrb[0].mxu0 %v1399
    %v1689 = vpop.f32.mrb[0].mxu0
    %v1690 = vadd.f32 0.0, %v1689
    %v1691 = vpop.f32.mrb[0].mxu0
    %v1692 = vpop.f32.mrb[0].mxu0
    %v1693 = vadd.f32 0.0, %v1692
    %v1694 = vpop.f32.mrb[0].mxu0
    %1695 = vmatprep.mubr.bf16.mxu0 0
    %1696 = vmatmul.mubr.bf16.gmra.mrb[0].mxu0 %v1402
    %v1697 = vpop.f32.mrb[0].mxu0
    %v1698 = vadd.f32 0.0, %v1697
    %v1699 = vpop.f32.mrb[0].mxu0
    %v1700 = vpop.f32.mrb[0].mxu0
    %v1701 = vadd.f32 0.0, %v1700
    %v1702 = vpop.f32.mrb[0].mxu0
    %1703 = vmatprep.mubr.bf16.mxu0 0
    %1704 = vmatmul.mubr.bf16.gmra.mrb[0].mxu0 %v1405
    %v1705 = vpop.f32.mrb[0].mxu0
    %v1706 = vadd.f32 0.0, %v1705
    %v1707 = vpop.f32.mrb[0].mxu0
    %v1708 = vpop.f32.mrb[0].mxu0
    %v1709 = vadd.f32 0.0, %v1708
    %v1710 = vpop.f32.mrb[0].mxu0
    %1711 = vmatprep.mubr.bf16.mxu0 0
    %1712 = vmatmul.mubr.bf16.gmra.mrb[0].mxu0 %v1408
    %v1713 = vpop.f32.mrb[0].mxu0
    %v1714 = vadd.f32 0.0, %v1713
    %v1715 = vpop.f32.mrb[0].mxu0
    %v1716 = vpop.f32.mrb[0].mxu0
    %v1717 = vadd.f32 0.0, %v1716
    %v1718 = vpop.f32.mrb[0].mxu0
    %1719 = vmatprep.mubr.bf16.mxu0 0
    %1720 = vmatmul.mubr.bf16.gmra.mrb[0].mxu0 %v1411
    %v1721 = vpop.f32.mrb[0].mxu0
    %v1722 = vadd.f32 0.0, %v1721
    %v1723 = vpop.f32.mrb[0].mxu0
    %v1724 = vpop.f32.mrb[0].mxu0
    %v1725 = vadd.f32 0.0, %v1724
    %v1726 = vpop.f32.mrb[0].mxu0
    %1727 = vmatprep.mubr.bf16.mxu0 0
    %1728 = vmatmul.mubr.bf16.gmra.mrb[0].mxu0 %v1414
    %v1729 = vpop.f32.mrb[0].mxu0
    %v1730 = vadd.f32 0.0, %v1729
    %v1731 = vpop.f32.mrb[0].mxu0
    %v1732 = vpop.f32.mrb[0].mxu0
    %v1733 = vadd.f32 0.0, %v1732
    %v1734 = vpop.f32.mrb[0].mxu0
    %1735 = vmatprep.mubr.bf16.mxu0 0
    %1736 = vmatmul.mubr.bf16.gmra.mrb[0].mxu0 %v1417
    %v1737 = vpop.f32.mrb[0].mxu0
    %v1738 = vadd.f32 0.0, %v1737
    %v1739 = vpop.f32.mrb[0].mxu0
    %v1740 = vpop.f32.mrb[0].mxu0
    %v1741 = vadd.f32 0.0, %v1740
    %v1742 = vpop.f32.mrb[0].mxu0
    %1743 = vmatprep.mubr.bf16.mxu0 0
    %1744 = vmatmul.mubr.bf16.gmra.mrb[0].mxu0 %v1420
    %v1745 = vpop.f32.mrb[0].mxu0
    %v1746 = vadd.f32 0.0, %v1745
    %v1747 = vpop.f32.mrb[0].mxu0
    %v1748 = vpop.f32.mrb[0].mxu0
    %v1749 = vadd.f32 0.0, %v1748
    %v1750 = vpop.f32.mrb[0].mxu0
    %1751 = vmatprep.mubr.bf16.mxu0 0
    %1752 = vmatmul.mubr.bf16.gmra.mrb[0].mxu0 %v1423
    %v1753 = vpop.f32.mrb[0].mxu0
    %v1754 = vadd.f32 0.0, %v1753
    %v1755 = vpop.f32.mrb[0].mxu0
    %v1756 = vpop.f32.mrb[0].mxu0
    %v1757 = vadd.f32 0.0, %v1756
    %v1758 = vpop.f32.mrb[0].mxu0
    %1759 = vmatprep.mubr.bf16.mxu0 0
    %1760 = vmatmul.mubr.bf16.gmra.mrb[0].mxu0 %v1426
    %v1761 = vpop.f32.mrb[0].mxu0
    %v1762 = vadd.f32 0.0, %v1761
    %v1763 = vpop.f32.mrb[0].mxu0
    %v1764 = vpop.f32.mrb[0].mxu0
    %v1765 = vadd.f32 0.0, %v1764
    %v1766 = vpop.f32.mrb[0].mxu0
    %1767 = vmatprep.mubr.bf16.mxu0 0
    %1768 = vmatmul.mubr.bf16.gmra.mrb[0].mxu0 %v1429
    %v1769 = vpop.f32.mrb[0].mxu0
    %v1770 = vadd.f32 0.0, %v1769
    %v1771 = vpop.f32.mrb[0].mxu0
    %v1772 = vpop.f32.mrb[0].mxu0
    %v1773 = vadd.f32 0.0, %v1772
    %v1774 = vpop.f32.mrb[0].mxu0
    %1775 = vmatprep.mubr.bf16.mxu0 0
    %1776 = vmatmul.mubr.bf16.gmra.mrb[0].mxu0 %v1432
    %v1777 = vpop.f32.mrb[0].mxu0
    %v1778 = vadd.f32 0.0, %v1777
    %v1779 = vpop.f32.mrb[0].mxu0
    %v1780 = vpop.f32.mrb[0].mxu0
    %v1781 = vadd.f32 0.0, %v1780
    %v1782 = vpop.f32.mrb[0].mxu0
    %1783 = vmatprep.mubr.bf16.mxu0 0
    %1784 = vmatmul.mubr.bf16.gmra.mrb[0].mxu0 %v1435
    %v1785 = vpop.f32.mrb[0].mxu0
    %v1786 = vadd.f32 0.0, %v1785
    %v1787 = vpop.f32.mrb[0].mxu0
    %v1788 = vpop.f32.mrb[0].mxu0
    %v1789 = vadd.f32 0.0, %v1788
    %v1790 = vpop.f32.mrb[0].mxu0
    %1791 = vmatprep.mubr.bf16.mxu0 0
    %1792 = vmatmul.mubr.bf16.gmra.mrb[0].mxu0 %v1438
    %v1793 = vpop.f32.mrb[0].mxu0
    %v1794 = vadd.f32 0.0, %v1793
    %v1795 = vpop.f32.mrb[0].mxu0
    %v1796 = vpop.f32.mrb[0].mxu0
    %v1797 = vadd.f32 0.0, %v1796
    %v1798 = vpop.f32.mrb[0].mxu0
    %1799 = vmatprep.mubr.bf16.mxu0 0
    %1800 = vmatmul.mubr.bf16.gmra.mrb[0].mxu0 %v1441
    %v1801 = vpop.f32.mrb[0].mxu0
    %v1802 = vadd.f32 0.0, %v1801
    %v1803 = vpop.f32.mrb[0].mxu0
    %v1804 = vpop.f32.mrb[0].mxu0
    %v1805 = vadd.f32 0.0, %v1804
    %v1806 = vpop.f32.mrb[0].mxu0
    %1807 = vmatprep.mubr.bf16.mxu0 0
    %1808 = vmatmul.mubr.bf16.gmra.mrb[0].mxu0 %v1444
    %v1809 = vpop.f32.mrb[0].mxu0
    %v1810 = vadd.f32 0.0, %v1809
    %v1811 = vpop.f32.mrb[0].mxu0
    %v1812 = vpop.f32.mrb[0].mxu0
    %v1813 = vadd.f32 0.0, %v1812
    %v1814 = vpop.f32.mrb[0].mxu0
    %1815 = vmatprep.mubr.bf16.mxu0 0
    %1816 = vmatmul.mubr.bf16.gmra.mrb[0].mxu0 %v1447
    %v1817 = vpop.f32.mrb[0].mxu0
    %v1818 = vadd.f32 0.0, %v1817
    %v1819 = vpop.f32.mrb[0].mxu0
    %v1820 = vpop.f32.mrb[0].mxu0
    %v1821 = vadd.f32 0.0, %v1820
    %v1822 = vpop.f32.mrb[0].mxu0
    %1823 = vmatprep.mubr.bf16.mxu0 0
    %1824 = vmatmul.mubr.bf16.gmra.mrb[0].mxu0 %v1450
    %v1825 = vpop.f32.mrb[0].mxu0
    %v1826 = vadd.f32 0.0, %v1825
    %v1827 = vpop.f32.mrb[0].mxu0
    %v1828 = vpop.f32.mrb[0].mxu0
    %v1829 = vadd.f32 0.0, %v1828
    %v1830 = vpop.f32.mrb[0].mxu0
    %1831 = vmatprep.mubr.bf16.mxu0 0
    %1832 = vmatmul.mubr.bf16.gmra.mrb[0].mxu0 %v1453
    %v1833 = vpop.f32.mrb[0].mxu0
    %v1834 = vadd.f32 0.0, %v1833
    %v1835 = vpop.f32.mrb[0].mxu0
    %v1836 = vpop.f32.mrb[0].mxu0
    %v1837 = vadd.f32 0.0, %v1836
    %v1838 = vpop.f32.mrb[0].mxu0
    %1839 = vmatprep.mubr.bf16.mxu0 0
    %1840 = vmatmul.mubr.bf16.gmra.mrb[0].mxu0 %v1456
    %v1841 = vpop.f32.mrb[0].mxu0
    %v1842 = vadd.f32 0.0, %v1841
    %v1843 = vpop.f32.mrb[0].mxu0
    %v1844 = vpop.f32.mrb[0].mxu0
    %v1845 = vadd.f32 0.0, %v1844
    %v1846 = vpop.f32.mrb[0].mxu0
    %1847 = vmatprep.mubr.bf16.mxu0 0
    %1848 = vmatmul.mubr.bf16.gmra.mrb[0].mxu0 %v1459
    %v1849 = vpop.f32.mrb[0].mxu0
    %v1850 = vadd.f32 0.0, %v1849
    %v1851 = vpop.f32.mrb[0].mxu0
    %v1852 = vpop.f32.mrb[0].mxu0
    %v1853 = vadd.f32 0.0, %v1852
    %v1854 = vpop.f32.mrb[0].mxu0
    %1855 = vmatprep.mubr.bf16.mxu0 0
    %1856 = vmatmul.mubr.bf16.gmra.mrb[0].mxu0 %v1462
    %v1857 = vpop.f32.mrb[0].mxu0
    %v1858 = vadd.f32 0.0, %v1857
    %v1859 = vpop.f32.mrb[0].mxu0
    %v1860 = vpop.f32.mrb[0].mxu0
    %v1861 = vadd.f32 0.0, %v1860
    %v1862 = vpop.f32.mrb[0].mxu0
    %1863 = vmatprep.mubr.bf16.mxu0 0
    %1864 = vmatmul.mubr.bf16.gmra.mrb[0].mxu0 %v1465
    %v1865 = vpop.f32.mrb[0].mxu0
    %v1866 = vadd.f32 0.0, %v1865
    %v1867 = vpop.f32.mrb[0].mxu0
    %v1868 = vpop.f32.mrb[0].mxu0
    %v1869 = vadd.f32 0.0, %v1868
    %v1870 = vpop.f32.mrb[0].mxu0
    %1871 = vmatprep.mubr.bf16.mxu0 0
    %1872 = vmatmul.mubr.bf16.gmra.mrb[0].mxu0 %v1468
    %v1873 = vpop.f32.mrb[0].mxu0
    %v1874 = vadd.f32 0.0, %v1873
    %v1875 = vpop.f32.mrb[0].mxu0
    %v1876 = vpop.f32.mrb[0].mxu0
    %v1877 = vadd.f32 0.0, %v1876
    %v1878 = vpop.f32.mrb[0].mxu0
    %1879 = vmatprep.mubr.bf16.mxu0 0
    %1880 = vmatmul.mubr.bf16.gmra.mrb[0].mxu0 %v1471
    %v1881 = vpop.f32.mrb[0].mxu0
    %v1882 = vadd.f32 0.0, %v1881
    %v1883 = vpop.f32.mrb[0].mxu0
    %v1884 = vpop.f32.mrb[0].mxu0
    %v1885 = vadd.f32 0.0, %v1884
    %v1886 = vpop.f32.mrb[0].mxu0
    %1887 = vmatprep.mubr.bf16.mxu0 0
    %1888 = vmatmul.mubr.bf16.gmra.mrb[0].mxu0 %v1474
    %v1889 = vpop.f32.mrb[0].mxu0
    %v1890 = vadd.f32 0.0, %v1889
    %v1891 = vpop.f32.mrb[0].mxu0
    %v1892 = vpop.f32.mrb[0].mxu0
    %v1893 = vadd.f32 0.0, %v1892
    %v1894 = vpop.f32.mrb[0].mxu0
    %1895 = vmatprep.mubr.bf16.mxu0 0
    %1896 = vmatmul.mubr.bf16.gmra.mrb[0].mxu0 %v1477
    %v1897 = vpop.f32.mrb[0].mxu0
    %v1898 = vadd.f32 0.0, %v1897
    %v1899 = vpop.f32.mrb[0].mxu0
    %v1900 = vpop.f32.mrb[0].mxu0
    %v1901 = vadd.f32 0.0, %v1900
    %v1902 = vpop.f32.mrb[0].mxu0
    %1903 = vmatprep.mubr.bf16.mxu0 0
    %1904 = vmatmul.mubr.bf16.gmra.mrb[0].mxu0 %v1480
    %v1905 = vpop.f32.mrb[0].mxu0
    %v1906 = vadd.f32 0.0, %v1905
    %v1907 = vpop.f32.mrb[0].mxu0
    %v1908 = vpop.f32.mrb[0].mxu0
    %v1909 = vadd.f32 0.0, %v1908
    %v1910 = vpop.f32.mrb[0].mxu0
    %1911 = vmatprep.mubr.bf16.mxu0 0
    %1912 = vmatmul.mubr.bf16.gmra.mrb[0].mxu0 %v1483
    %v1913 = vpop.f32.mrb[0].mxu0
    %v1914 = vadd.f32 0.0, %v1913
    %v1915 = vpop.f32.mrb[0].mxu0
    %v1916 = vpop.f32.mrb[0].mxu0
    %v1917 = vadd.f32 0.0, %v1916
    %v1918 = vpop.f32.mrb[0].mxu0
    %1919 = vmatprep.mubr.bf16.mxu0 0
    %1920 = vmatmul.mubr.bf16.gmra.mrb[0].mxu0 %v1486
    %v1921 = vpop.f32.mrb[0].mxu0
    %v1922 = vadd.f32 0.0, %v1921
    %v1923 = vpop.f32.mrb[0].mxu0
    %v1924 = vpop.f32.mrb[0].mxu0
    %v1925 = vadd.f32 0.0, %v1924
    %v1926 = vpop.f32.mrb[0].mxu0
    %1927 = vmatprep.mubr.bf16.mxu0 0
    %1928 = vmatmul.mubr.bf16.gmra.mrb[0].mxu0 %v1489
    %v1929 = vpop.f32.mrb[0].mxu0
    %v1930 = vadd.f32 0.0, %v1929
    %v1931 = vpop.f32.mrb[0].mxu0
    %v1932 = vpop.f32.mrb[0].mxu0
    %v1933 = vadd.f32 0.0, %v1932
    %v1934 = vpop.f32.mrb[0].mxu0
    %1935 = vmatprep.mubr.bf16.mxu0 0
    %1936 = vmatmul.mubr.bf16.gmra.mrb[0].mxu0 %v1492
    %v1937 = vpop.f32.mrb[0].mxu0
    %v1938 = vadd.f32 0.0, %v1937
    %v1939 = vpop.f32.mrb[0].mxu0
    %v1940 = vpop.f32.mrb[0].mxu0
    %v1941 = vadd.f32 0.0, %v1940
    %v1942 = vpop.f32.mrb[0].mxu0
    %1943 = vmatprep.mubr.bf16.mxu0 0
    %1944 = vmatmul.mubr.bf16.gmra.mrb[0].mxu0 %v1495
    %v1945 = vpop.f32.mrb[0].mxu0
    %v1946 = vadd.f32 0.0, %v1945
    %v1947 = vpop.f32.mrb[0].mxu0
    %v1948 = vpop.f32.mrb[0].mxu0
    %v1949 = vadd.f32 0.0, %v1948
    %v1950 = vpop.f32.mrb[0].mxu0
    %1951 = vmatprep.mubr.bf16.mxu0 0
    %1952 = vmatmul.mubr.bf16.gmra.mrb[0].mxu0 %v1498
    %v1953 = vpop.f32.mrb[0].mxu0
    %v1954 = vadd.f32 0.0, %v1953
    %v1955 = vpop.f32.mrb[0].mxu0
    %v1956 = vpop.f32.mrb[0].mxu0
    %v1957 = vadd.f32 0.0, %v1956
    %v1958 = vpop.f32.mrb[0].mxu0
    %1959 = vmatprep.mubr.bf16.mxu0 0
    %1960 = vmatmul.mubr.bf16.gmra.mrb[0].mxu0 %v1501
    %v1961 = vpop.f32.mrb[0].mxu0
    %v1962 = vadd.f32 0.0, %v1961
    %v1963 = vpop.f32.mrb[0].mxu0
    %v1964 = vpop.f32.mrb[0].mxu0
    %v1965 = vadd.f32 0.0, %v1964
    %v1966 = vpop.f32.mrb[0].mxu0
    %1967 = vmatprep.mubr.bf16.mxu0 0
    %1968 = vmatmul.mubr.bf16.gmra.mrb[0].mxu0 %v1504
    %v1969 = vpop.f32.mrb[0].mxu0
    %v1970 = vadd.f32 0.0, %v1969
    %v1971 = vpop.f32.mrb[0].mxu0
    %v1972 = vpop.f32.mrb[0].mxu0
    %v1973 = vadd.f32 0.0, %v1972
    %v1974 = vpop.f32.mrb[0].mxu0
    %1975 = vmatprep.mubr.bf16.mxu0 0
    %1976 = vmatmul.mubr.bf16.gmra.mrb[0].mxu0 %v1507
    %v1977 = vpop.f32.mrb[0].mxu0
    %v1978 = vadd.f32 0.0, %v1977
    %v1979 = vpop.f32.mrb[0].mxu0
    %v1980 = vpop.f32.mrb[0].mxu0
    %v1981 = vadd.f32 0.0, %v1980
    %v1982 = vpop.f32.mrb[0].mxu0
    %1983 = vmatprep.mubr.bf16.mxu0 0
    %1984 = vmatmul.mubr.bf16.gmra.mrb[0].mxu0 %v1510
    %v1985 = vpop.f32.mrb[0].mxu0
    %v1986 = vadd.f32 0.0, %v1985
    %v1987 = vpop.f32.mrb[0].mxu0
    %v1988 = vpop.f32.mrb[0].mxu0
    %v1989 = vadd.f32 0.0, %v1988
    %v1990 = vpop.f32.mrb[0].mxu0
    %1991 = vmatprep.mubr.bf16.mxu0 0
    %1992 = vmatmul.mubr.bf16.gmra.mrb[0].mxu0 %v1513
    %v1993 = vpop.f32.mrb[0].mxu0
    %v1994 = vadd.f32 0.0, %v1993
    %v1995 = vpop.f32.mrb[0].mxu0
    %v1996 = vpop.f32.mrb[0].mxu0
    %v1997 = vadd.f32 0.0, %v1996
    %v1998 = vpop.f32.mrb[0].mxu0
    %1999 = vdwg.mxu0
    %v2000 = vpack.c.bf16 %v1557, %v1554
    %v2001 = vpack.c.bf16 %v1565, %v1562
    %v2002 = vpack.c.bf16 %v1573, %v1570
    %v2003 = vpack.c.bf16 %v1581, %v1578
    %v2004 = vpack.c.bf16 %v1589, %v1586
    %v2005 = vpack.c.bf16 %v1597, %v1594
    %v2006 = vpack.c.bf16 %v1605, %v1602
    %v2007 = vpack.c.bf16 %v1613, %v1610
    %v2008 = vpack.c.bf16 %v1621, %v1618
    %v2009 = vpack.c.bf16 %v1629, %v1626
    %v2010 = vpack.c.bf16 %v1637, %v1634
    %v2011 = vpack.c.bf16 %v1645, %v1642
    %v2012 = vpack.c.bf16 %v1653, %v1650
    %v2013 = vpack.c.bf16 %v1661, %v1658
    %v2014 = vpack.c.bf16 %v1669, %v1666
    %v2015 = vpack.c.bf16 %v1677, %v1674
    %v2016 = vpack.c.bf16 %v1685, %v1682
    %v2017 = vpack.c.bf16 %v1693, %v1690
    %v2018 = vpack.c.bf16 %v1701, %v1698
    %v2019 = vpack.c.bf16 %v1709, %v1706
    %v2020 = vpack.c.bf16 %v1717, %v1714
    %v2021 = vpack.c.bf16 %v1725, %v1722
    %v2022 = vpack.c.bf16 %v1733, %v1730
    %v2023 = vpack.c.bf16 %v1741, %v1738
    %v2024 = vpack.c.bf16 %v1749, %v1746
    %v2025 = vpack.c.bf16 %v1757, %v1754
    %v2026 = vpack.c.bf16 %v1765, %v1762
    %v2027 = vpack.c.bf16 %v1773, %v1770
    %v2028 = vpack.c.bf16 %v1781, %v1778
    %v2029 = vpack.c.bf16 %v1789, %v1786
    %v2030 = vpack.c.bf16 %v1797, %v1794
    %v2031 = vpack.c.bf16 %v1805, %v1802
    %v2032 = vpack.c.bf16 %v1813, %v1810
    %v2033 = vpack.c.bf16 %v1821, %v1818
    %v2034 = vpack.c.bf16 %v1829, %v1826
    %v2035 = vpack.c.bf16 %v1837, %v1834
    %v2036 = vpack.c.bf16 %v1845, %v1842
    %v2037 = vpack.c.bf16 %v1853, %v1850
    %v2038 = vpack.c.bf16 %v1861, %v1858
    %v2039 = vpack.c.bf16 %v1869, %v1866
    %v2040 = vpack.c.bf16 %v1877, %v1874
    %v2041 = vpack.c.bf16 %v1885, %v1882
    %v2042 = vpack.c.bf16 %v1893, %v1890
    %v2043 = vpack.c.bf16 %v1901, %v1898
    %v2044 = vpack.c.bf16 %v1909, %v1906
    %v2045 = vpack.c.bf16 %v1917, %v1914
    %v2046 = vpack.c.bf16 %v1925, %v1922
    %v2047 = vpack.c.bf16 %v1933, %v1930
    %v2048 = vpack.c.bf16 %v1941, %v1938
    %v2049 = vpack.c.bf16 %v1949, %v1946
    %v2050 = vpack.c.bf16 %v1957, %v1954
    %v2051 = vpack.c.bf16 %v1965, %v1962
    %v2052 = vpack.c.bf16 %v1973, %v1970
    %v2053 = vpack.c.bf16 %v1981, %v1978
    %v2054 = vpack.c.bf16 %v1989, %v1986
    %v2055 = vpack.c.bf16 %v1997, %v1994
    %v2056 = vld [vmem:[%s4] sm:$0xf]
    %v2057 = vld [vmem:[%s4 + $0x4] sm:$0xf]
    %v2058 = vld [vmem:[%s4 + $0x8] sm:$0xf]
    %v2059 = vld [vmem:[%s4 + $0xc] sm:$0xf]
    %v2060 = vld [vmem:[%s4 + $0x10] sm:$0xf]
    %v2061 = vld [vmem:[%s4 + $0x14] sm:$0xf]
    %v2062 = vld [vmem:[%s4 + $0x18] sm:$0xf]
    %v2063 = vld [vmem:[%s4 + $0x1c] sm:$0xf]
    %v2064 = vld [vmem:[%s4 + $0x20] sm:$0xf]
    %v2065 = vld [vmem:[%s4 + $0x24] sm:$0xf]
    %v2066 = vld [vmem:[%s4 + $0x28] sm:$0xf]
    %v2067 = vld [vmem:[%s4 + $0x2c] sm:$0xf]
    %v2068 = vld [vmem:[%s4 + $0x30] sm:$0xf]
    %v2069 = vld [vmem:[%s4 + $0x34] sm:$0xf]
    %v2070 = vld [vmem:[%s4 + $0x38] sm:$0xf]
    %v2071 = vld [vmem:[%s4 + $0x3c] sm:$0xf]
    %v2072 = vld [vmem:[%s4 + $0x40] sm:$0xf]
    %v2073 = vld [vmem:[%s4 + $0x44] sm:$0xf]
    %v2074 = vld [vmem:[%s4 + $0x48] sm:$0xf]
    %v2075 = vld [vmem:[%s4 + $0x4c] sm:$0xf]
    %v2076 = vld [vmem:[%s4 + $0x50] sm:$0xf]
    %v2077 = vld [vmem:[%s4 + $0x54] sm:$0xf]
    %v2078 = vld [vmem:[%s4 + $0x58] sm:$0xf]
    %v2079 = vld [vmem:[%s4 + $0x5c] sm:$0xf]
    %v2080 = vld [vmem:[%s4 + $0x60] sm:$0xf]
    %v2081 = vld [vmem:[%s4 + $0x64] sm:$0xf]
    %v2082 = vld [vmem:[%s4 + $0x68] sm:$0xf]
    %v2083 = vld [vmem:[%s4 + $0x6c] sm:$0xf]
    %v2084 = vld [vmem:[%s4 + $0x70] sm:$0xf]
    %v2085 = vld [vmem:[%s4 + $0x74] sm:$0xf]
    %v2086 = vld [vmem:[%s4 + $0x78] sm:$0xf]
    %v2087 = vld [vmem:[%s4 + $0x7c] sm:$0xf]
    %v2088 = vld [vmem:[%s4 + $0x80] sm:$0xf]
    %v2089 = vld [vmem:[%s4 + $0x84] sm:$0xf]
    %v2090 = vld [vmem:[%s4 + $0x88] sm:$0xf]
    %v2091 = vld [vmem:[%s4 + $0x8c] sm:$0xf]
    %v2092 = vld [vmem:[%s4 + $0x90] sm:$0xf]
    %v2093 = vld [vmem:[%s4 + $0x94] sm:$0xf]
    %v2094 = vld [vmem:[%s4 + $0x98] sm:$0xf]
    %v2095 = vld [vmem:[%s4 + $0x9c] sm:$0xf]
    %v2096 = vld [vmem:[%s4 + $0xa0] sm:$0xf]
    %v2097 = vld [vmem:[%s4 + $0xa4] sm:$0xf]
    %v2098 = vld [vmem:[%s4 + $0xa8] sm:$0xf]
    %v2099 = vld [vmem:[%s4 + $0xac] sm:$0xf]
    %v2100 = vld [vmem:[%s4 + $0xb0] sm:$0xf]
    %v2101 = vld [vmem:[%s4 + $0xb4] sm:$0xf]
    %v2102 = vld [vmem:[%s4 + $0xb8] sm:$0xf]
    %v2103 = vld [vmem:[%s4 + $0xbc] sm:$0xf]
    %v2104 = vld [vmem:[%s4 + $0xc0] sm:$0xf]
    %v2105 = vld [vmem:[%s4 + $0xc4] sm:$0xf]
    %v2106 = vld [vmem:[%s4 + $0xc8] sm:$0xf]
    %v2107 = vld [vmem:[%s4 + $0xcc] sm:$0xf]
    %v2108 = vld [vmem:[%s4 + $0xd0] sm:$0xf]
    %v2109 = vld [vmem:[%s4 + $0xd4] sm:$0xf]
    %v2110 = vld [vmem:[%s4 + $0xd8] sm:$0xf]
    %v2111 = vld [vmem:[%s4 + $0xdc] sm:$0xf]
    %v2112 = vld [vmem:[%s4 + $0xe0] sm:$0xf]
    %v2113 = vld [vmem:[%s4 + $0xe4] sm:$0xf]
    %v2114 = vld [vmem:[%s4 + $0xe8] sm:$0xf]
    %v2115 = vld [vmem:[%s4 + $0xec] sm:$0xf]
    %v2116 = vld [vmem:[%s4 + $0xf0] sm:$0xf]
    %v2117 = vld [vmem:[%s4 + $0xf4] sm:$0xf]
    %v2118 = vld [vmem:[%s4 + $0xf8] sm:$0xf]
    %v2119 = vld [vmem:[%s4 + $0xfc] sm:$0xf]
    %v2120 = vld [vmem:[%s4 + $0x100] sm:$0xf]
    %v2121 = vld [vmem:[%s4 + $0x104] sm:$0xf]
    %v2122 = vld [vmem:[%s4 + $0x108] sm:$0xf]
    %v2123 = vld [vmem:[%s4 + $0x10c] sm:$0xf]
    %v2124 = vld [vmem:[%s4 + $0x110] sm:$0xf]
    %v2125 = vld [vmem:[%s4 + $0x114] sm:$0xf]
    %v2126 = vld [vmem:[%s4 + $0x118] sm:$0xf]
    %v2127 = vld [vmem:[%s4 + $0x11c] sm:$0xf]
    %v2128 = vld [vmem:[%s4 + $0x120] sm:$0xf]
    %v2129 = vld [vmem:[%s4 + $0x124] sm:$0xf]
    %v2130 = vld [vmem:[%s4 + $0x128] sm:$0xf]
    %v2131 = vld [vmem:[%s4 + $0x12c] sm:$0xf]
    %v2132 = vld [vmem:[%s4 + $0x130] sm:$0xf]
    %v2133 = vld [vmem:[%s4 + $0x134] sm:$0xf]
    %v2134 = vld [vmem:[%s4 + $0x138] sm:$0xf]
    %v2135 = vld [vmem:[%s4 + $0x13c] sm:$0xf]
    %v2136 = vld [vmem:[%s4 + $0x140] sm:$0xf]
    %v2137 = vld [vmem:[%s4 + $0x144] sm:$0xf]
    %v2138 = vld [vmem:[%s4 + $0x148] sm:$0xf]
    %v2139 = vld [vmem:[%s4 + $0x14c] sm:$0xf]
    %v2140 = vld [vmem:[%s4 + $0x150] sm:$0xf]
    %v2141 = vld [vmem:[%s4 + $0x154] sm:$0xf]
    %v2142 = vld [vmem:[%s4 + $0x158] sm:$0xf]
    %v2143 = vld [vmem:[%s4 + $0x15c] sm:$0xf]
    %v2144 = vld [vmem:[%s4 + $0x160] sm:$0xf]
    %v2145 = vld [vmem:[%s4 + $0x164] sm:$0xf]
    %v2146 = vld [vmem:[%s4 + $0x168] sm:$0xf]
    %v2147 = vld [vmem:[%s4 + $0x16c] sm:$0xf]
    %v2148 = vld [vmem:[%s4 + $0x170] sm:$0xf]
    %v2149 = vld [vmem:[%s4 + $0x174] sm:$0xf]
    %v2150 = vld [vmem:[%s4 + $0x178] sm:$0xf]
    %v2151 = vld [vmem:[%s4 + $0x17c] sm:$0xf]
    %v2152 = vld [vmem:[%s4 + $0x180] sm:$0xf]
    %v2153 = vld [vmem:[%s4 + $0x184] sm:$0xf]
    %v2154 = vld [vmem:[%s4 + $0x188] sm:$0xf]
    %v2155 = vld [vmem:[%s4 + $0x18c] sm:$0xf]
    %v2156 = vld [vmem:[%s4 + $0x190] sm:$0xf]
    %v2157 = vld [vmem:[%s4 + $0x194] sm:$0xf]
    %v2158 = vld [vmem:[%s4 + $0x198] sm:$0xf]
    %v2159 = vld [vmem:[%s4 + $0x19c] sm:$0xf]
    %v2160 = vld [vmem:[%s4 + $0x1a0] sm:$0xf]
    %v2161 = vld [vmem:[%s4 + $0x1a4] sm:$0xf]
    %v2162 = vld [vmem:[%s4 + $0x1a8] sm:$0xf]
    %v2163 = vld [vmem:[%s4 + $0x1ac] sm:$0xf]
    %v2164 = vld [vmem:[%s4 + $0x1b0] sm:$0xf]
    %v2165 = vld [vmem:[%s4 + $0x1b4] sm:$0xf]
    %v2166 = vld [vmem:[%s4 + $0x1b8] sm:$0xf]
    %v2167 = vld [vmem:[%s4 + $0x1bc] sm:$0xf]
    %v2280 = vunpack.c.l.b16 %v2056
    %v2281 = vunpack.c.l.b16 %v2057
    %v2282 = vunpack.c.l.b16 %v2058
    %v2283 = vunpack.c.l.b16 %v2059
    %v2284 = vunpack.c.l.b16 %v2060
    %v2285 = vunpack.c.l.b16 %v2061
    %v2286 = vunpack.c.l.b16 %v2062
    %v2287 = vunpack.c.l.b16 %v2063
    %v2288 = vunpack.c.l.b16 %v2064
    %v2289 = vunpack.c.l.b16 %v2065
    %v2290 = vunpack.c.l.b16 %v2066
    %v2291 = vunpack.c.l.b16 %v2067
    %v2292 = vunpack.c.l.b16 %v2068
    %v2293 = vunpack.c.l.b16 %v2069
    %v2294 = vunpack.c.l.b16 %v2070
    %v2295 = vunpack.c.l.b16 %v2071
    %v2296 = vunpack.c.l.b16 %v2072
    %v2297 = vunpack.c.l.b16 %v2073
    %v2298 = vunpack.c.l.b16 %v2074
    %v2299 = vunpack.c.l.b16 %v2075
    %v2300 = vunpack.c.l.b16 %v2076
    %v2301 = vunpack.c.l.b16 %v2077
    %v2302 = vunpack.c.l.b16 %v2078
    %v2303 = vunpack.c.l.b16 %v2079
    %v2304 = vunpack.c.l.b16 %v2080
    %v2305 = vunpack.c.l.b16 %v2081
    %v2306 = vunpack.c.l.b16 %v2082
    %v2307 = vunpack.c.l.b16 %v2083
    %v2308 = vunpack.c.l.b16 %v2084
    %v2309 = vunpack.c.l.b16 %v2085
    %v2310 = vunpack.c.l.b16 %v2086
    %v2311 = vunpack.c.l.b16 %v2087
    %v2312 = vunpack.c.l.b16 %v2088
    %v2313 = vunpack.c.l.b16 %v2089
    %v2314 = vunpack.c.l.b16 %v2090
    %v2315 = vunpack.c.l.b16 %v2091
    %v2316 = vunpack.c.l.b16 %v2092
    %v2317 = vunpack.c.l.b16 %v2093
    %v2318 = vunpack.c.l.b16 %v2094
    %v2319 = vunpack.c.l.b16 %v2095
    %v2320 = vunpack.c.l.b16 %v2096
    %v2321 = vunpack.c.l.b16 %v2097
    %v2322 = vunpack.c.l.b16 %v2098
    %v2323 = vunpack.c.l.b16 %v2099
    %v2324 = vunpack.c.l.b16 %v2100
    %v2325 = vunpack.c.l.b16 %v2101
    %v2326 = vunpack.c.l.b16 %v2102
    %v2327 = vunpack.c.l.b16 %v2103
    %v2328 = vunpack.c.l.b16 %v2104
    %v2329 = vunpack.c.l.b16 %v2105
    %v2330 = vunpack.c.l.b16 %v2106
    %v2331 = vunpack.c.l.b16 %v2107
    %v2332 = vunpack.c.l.b16 %v2108
    %v2333 = vunpack.c.l.b16 %v2109
    %v2334 = vunpack.c.l.b16 %v2110
    %v2335 = vunpack.c.l.b16 %v2111
    %v2336 = vunpack.c.l.b16 %v2112
    %v2337 = vunpack.c.l.b16 %v2113
    %v2338 = vunpack.c.l.b16 %v2114
    %v2339 = vunpack.c.l.b16 %v2115
    %v2340 = vunpack.c.l.b16 %v2116
    %v2341 = vunpack.c.l.b16 %v2117
    %v2342 = vunpack.c.l.b16 %v2118
    %v2343 = vunpack.c.l.b16 %v2119
    %v2344 = vunpack.c.l.b16 %v2120
    %v2345 = vunpack.c.l.b16 %v2121
    %v2346 = vunpack.c.l.b16 %v2122
    %v2347 = vunpack.c.l.b16 %v2123
    %v2348 = vunpack.c.l.b16 %v2124
    %v2349 = vunpack.c.l.b16 %v2125
    %v2350 = vunpack.c.l.b16 %v2126
    %v2351 = vunpack.c.l.b16 %v2127
    %v2352 = vunpack.c.l.b16 %v2128
    %v2353 = vunpack.c.l.b16 %v2129
    %v2354 = vunpack.c.l.b16 %v2130
    %v2355 = vunpack.c.l.b16 %v2131
    %v2356 = vunpack.c.l.b16 %v2132
    %v2357 = vunpack.c.l.b16 %v2133
    %v2358 = vunpack.c.l.b16 %v2134
    %v2359 = vunpack.c.l.b16 %v2135
    %v2360 = vunpack.c.l.b16 %v2136
    %v2361 = vunpack.c.l.b16 %v2137
    %v2362 = vunpack.c.l.b16 %v2138
    %v2363 = vunpack.c.l.b16 %v2139
    %v2364 = vunpack.c.l.b16 %v2140
    %v2365 = vunpack.c.l.b16 %v2141
    %v2366 = vunpack.c.l.b16 %v2142
    %v2367 = vunpack.c.l.b16 %v2143
    %v2368 = vunpack.c.l.b16 %v2144
    %v2369 = vunpack.c.l.b16 %v2145
    %v2370 = vunpack.c.l.b16 %v2146
    %v2371 = vunpack.c.l.b16 %v2147
    %v2372 = vunpack.c.l.b16 %v2148
    %v2373 = vunpack.c.l.b16 %v2149
    %v2374 = vunpack.c.l.b16 %v2150
    %v2375 = vunpack.c.l.b16 %v2151
    %v2376 = vunpack.c.l.b16 %v2152
    %v2377 = vunpack.c.l.b16 %v2153
    %v2378 = vunpack.c.l.b16 %v2154
    %v2379 = vunpack.c.l.b16 %v2155
    %v2380 = vunpack.c.l.b16 %v2156
    %v2381 = vunpack.c.l.b16 %v2157
    %v2382 = vunpack.c.l.b16 %v2158
    %v2383 = vunpack.c.l.b16 %v2159
    %v2384 = vunpack.c.l.b16 %v2160
    %v2385 = vunpack.c.l.b16 %v2161
    %v2386 = vunpack.c.l.b16 %v2162
    %v2387 = vunpack.c.l.b16 %v2163
    %v2388 = vunpack.c.l.b16 %v2164
    %v2389 = vunpack.c.l.b16 %v2165
    %v2390 = vunpack.c.l.b16 %v2166
    %v2391 = vunpack.c.l.b16 %v2167
    %v2392 = vpack.c.b16 %v2281, %v2280
    %v2393 = vpack.c.b16 %v2283, %v2282
    %v2394 = vpack.c.b16 %v2285, %v2284
    %v2395 = vpack.c.b16 %v2287, %v2286
    %v2396 = vpack.c.b16 %v2289, %v2288
    %v2397 = vpack.c.b16 %v2291, %v2290
    %v2398 = vpack.c.b16 %v2293, %v2292
    %v2399 = vpack.c.b16 %v2295, %v2294
    %v2400 = vpack.c.b16 %v2297, %v2296
    %v2401 = vpack.c.b16 %v2299, %v2298
    %v2402 = vpack.c.b16 %v2301, %v2300
    %v2403 = vpack.c.b16 %v2303, %v2302
    %v2404 = vpack.c.b16 %v2305, %v2304
    %v2405 = vpack.c.b16 %v2307, %v2306
    %v2406 = vpack.c.b16 %v2309, %v2308
    %v2407 = vpack.c.b16 %v2311, %v2310
    %v2408 = vpack.c.b16 %v2313, %v2312
    %v2409 = vpack.c.b16 %v2315, %v2314
    %v2410 = vpack.c.b16 %v2317, %v2316
    %v2411 = vpack.c.b16 %v2319, %v2318
    %v2412 = vpack.c.b16 %v2321, %v2320
    %v2413 = vpack.c.b16 %v2323, %v2322
    %v2414 = vpack.c.b16 %v2325, %v2324
    %v2415 = vpack.c.b16 %v2327, %v2326
    %v2416 = vpack.c.b16 %v2329, %v2328
    %v2417 = vpack.c.b16 %v2331, %v2330
    %v2418 = vpack.c.b16 %v2333, %v2332
    %v2419 = vpack.c.b16 %v2335, %v2334
    %v2420 = vpack.c.b16 %v2337, %v2336
    %v2421 = vpack.c.b16 %v2339, %v2338
    %v2422 = vpack.c.b16 %v2341, %v2340
    %v2423 = vpack.c.b16 %v2343, %v2342
    %v2424 = vpack.c.b16 %v2345, %v2344
    %v2425 = vpack.c.b16 %v2347, %v2346
    %v2426 = vpack.c.b16 %v2349, %v2348
    %v2427 = vpack.c.b16 %v2351, %v2350
    %v2428 = vpack.c.b16 %v2353, %v2352
    %v2429 = vpack.c.b16 %v2355, %v2354
    %v2430 = vpack.c.b16 %v2357, %v2356
    %v2431 = vpack.c.b16 %v2359, %v2358
    %v2432 = vpack.c.b16 %v2361, %v2360
    %v2433 = vpack.c.b16 %v2363, %v2362
    %v2434 = vpack.c.b16 %v2365, %v2364
    %v2435 = vpack.c.b16 %v2367, %v2366
    %v2436 = vpack.c.b16 %v2369, %v2368
    %v2437 = vpack.c.b16 %v2371, %v2370
    %v2438 = vpack.c.b16 %v2373, %v2372
    %v2439 = vpack.c.b16 %v2375, %v2374
    %v2440 = vpack.c.b16 %v2377, %v2376
    %v2441 = vpack.c.b16 %v2379, %v2378
    %v2442 = vpack.c.b16 %v2381, %v2380
    %v2443 = vpack.c.b16 %v2383, %v2382
    %v2444 = vpack.c.b16 %v2385, %v2384
    %v2445 = vpack.c.b16 %v2387, %v2386
    %v2446 = vpack.c.b16 %v2389, %v2388
    %v2447 = vpack.c.b16 %v2391, %v2390
    %v2504 = vmul.bf16 %v2000, %v2392
    %v2505 = vmul.bf16 %v2001, %v2393
    %v2506 = vmul.bf16 %v2002, %v2394
    %v2507 = vmul.bf16 %v2003, %v2395
    %v2508 = vmul.bf16 %v2004, %v2396
    %v2509 = vmul.bf16 %v2005, %v2397
    %v2510 = vmul.bf16 %v2006, %v2398
    %v2511 = vmul.bf16 %v2007, %v2399
    %v2512 = vmul.bf16 %v2008, %v2400
    %v2513 = vmul.bf16 %v2009, %v2401
    %v2514 = vmul.bf16 %v2010, %v2402
    %v2515 = vmul.bf16 %v2011, %v2403
    %v2516 = vmul.bf16 %v2012, %v2404
    %v2517 = vmul.bf16 %v2013, %v2405
    %v2518 = vmul.bf16 %v2014, %v2406
    %v2519 = vmul.bf16 %v2015, %v2407
    %v2520 = vmul.bf16 %v2016, %v2408
    %v2521 = vmul.bf16 %v2017, %v2409
    %v2522 = vmul.bf16 %v2018, %v2410
    %v2523 = vmul.bf16 %v2019, %v2411
    %v2524 = vmul.bf16 %v2020, %v2412
    %v2525 = vmul.bf16 %v2021, %v2413
    %v2526 = vmul.bf16 %v2022, %v2414
    %v2527 = vmul.bf16 %v2023, %v2415
    %v2528 = vmul.bf16 %v2024, %v2416
    %v2529 = vmul.bf16 %v2025, %v2417
    %v2530 = vmul.bf16 %v2026, %v2418
    %v2531 = vmul.bf16 %v2027, %v2419
    %v2532 = vmul.bf16 %v2028, %v2420
    %v2533 = vmul.bf16 %v2029, %v2421
    %v2534 = vmul.bf16 %v2030, %v2422
    %v2535 = vmul.bf16 %v2031, %v2423
    %v2536 = vmul.bf16 %v2032, %v2424
    %v2537 = vmul.bf16 %v2033, %v2425
    %v2538 = vmul.bf16 %v2034, %v2426
    %v2539 = vmul.bf16 %v2035, %v2427
    %v2540 = vmul.bf16 %v2036, %v2428
    %v2541 = vmul.bf16 %v2037, %v2429
    %v2542 = vmul.bf16 %v2038, %v2430
    %v2543 = vmul.bf16 %v2039, %v2431
    %v2544 = vmul.bf16 %v2040, %v2432
    %v2545 = vmul.bf16 %v2041, %v2433
    %v2546 = vmul.bf16 %v2042, %v2434
    %v2547 = vmul.bf16 %v2043, %v2435
    %v2548 = vmul.bf16 %v2044, %v2436
    %v2549 = vmul.bf16 %v2045, %v2437
    %v2550 = vmul.bf16 %v2046, %v2438
    %v2551 = vmul.bf16 %v2047, %v2439
    %v2552 = vmul.bf16 %v2048, %v2440
    %v2553 = vmul.bf16 %v2049, %v2441
    %v2554 = vmul.bf16 %v2050, %v2442
    %v2555 = vmul.bf16 %v2051, %v2443
    %v2556 = vmul.bf16 %v2052, %v2444
    %v2557 = vmul.bf16 %v2053, %v2445
    %v2558 = vmul.bf16 %v2054, %v2446
    %v2559 = vmul.bf16 %v2055, %v2447
    %vm2560 = vcmask 687104
    %2561 = vst.msk [vmem:[#allocation2] sm:$0xff] %vm2560, %v2504
    %2562 = vst.msk [vmem:[#allocation2 + $0x8] sm:$0xff] %vm2560, %v2505
    %2563 = vst.msk [vmem:[#allocation2 + $0x10] sm:$0xff] %vm2560, %v2506
    %2564 = vst.msk [vmem:[#allocation2 + $0x18] sm:$0xff] %vm2560, %v2507
    %2565 = vst.msk [vmem:[#allocation2 + $0x20] sm:$0xff] %vm2560, %v2508
    %2566 = vst.msk [vmem:[#allocation2 + $0x28] sm:$0xff] %vm2560, %v2509
    %2567 = vst.msk [vmem:[#allocation2 + $0x30] sm:$0xff] %vm2560, %v2510
    %2568 = vst.msk [vmem:[#allocation2 + $0x38] sm:$0xff] %vm2560, %v2511
    %2569 = vst.msk [vmem:[#allocation2 + $0x40] sm:$0xff] %vm2560, %v2512
    %2570 = vst.msk [vmem:[#allocation2 + $0x48] sm:$0xff] %vm2560, %v2513
    %2571 = vst.msk [vmem:[#allocation2 + $0x50] sm:$0xff] %vm2560, %v2514
    %2572 = vst.msk [vmem:[#allocation2 + $0x58] sm:$0xff] %vm2560, %v2515
    %2573 = vst.msk [vmem:[#allocation2 + $0x60] sm:$0xff] %vm2560, %v2516
    %2574 = vst.msk [vmem:[#allocation2 + $0x68] sm:$0xff] %vm2560, %v2517
    %2575 = vst.msk [vmem:[#allocation2 + $0x70] sm:$0xff] %vm2560, %v2518
    %2576 = vst.msk [vmem:[#allocation2 + $0x78] sm:$0xff] %vm2560, %v2519
    %2577 = vst.msk [vmem:[#allocation2 + $0x80] sm:$0xff] %vm2560, %v2520
    %2578 = vst.msk [vmem:[#allocation2 + $0x88] sm:$0xff] %vm2560, %v2521
    %2579 = vst.msk [vmem:[#allocation2 + $0x90] sm:$0xff] %vm2560, %v2522
    %2580 = vst.msk [vmem:[#allocation2 + $0x98] sm:$0xff] %vm2560, %v2523
    %2581 = vst.msk [vmem:[#allocation2 + $0xa0] sm:$0xff] %vm2560, %v2524
    %2582 = vst.msk [vmem:[#allocation2 + $0xa8] sm:$0xff] %vm2560, %v2525
    %2583 = vst.msk [vmem:[#allocation2 + $0xb0] sm:$0xff] %vm2560, %v2526
    %2584 = vst.msk [vmem:[#allocation2 + $0xb8] sm:$0xff] %vm2560, %v2527
    %2585 = vst.msk [vmem:[#allocation2 + $0xc0] sm:$0xff] %vm2560, %v2528
    %2586 = vst.msk [vmem:[#allocation2 + $0xc8] sm:$0xff] %vm2560, %v2529
    %2587 = vst.msk [vmem:[#allocation2 + $0xd0] sm:$0xff] %vm2560, %v2530
    %2588 = vst.msk [vmem:[#allocation2 + $0xd8] sm:$0xff] %vm2560, %v2531
    %2589 = vst.msk [vmem:[#allocation2 + $0xe0] sm:$0xff] %vm2560, %v2532
    %2590 = vst.msk [vmem:[#allocation2 + $0xe8] sm:$0xff] %vm2560, %v2533
    %2591 = vst.msk [vmem:[#allocation2 + $0xf0] sm:$0xff] %vm2560, %v2534
    %2592 = vst.msk [vmem:[#allocation2 + $0xf8] sm:$0xff] %vm2560, %v2535
    %2593 = vst.msk [vmem:[#allocation2 + $0x100] sm:$0xff] %vm2560, %v2536
    %2594 = vst.msk [vmem:[#allocation2 + $0x108] sm:$0xff] %vm2560, %v2537
    %2595 = vst.msk [vmem:[#allocation2 + $0x110] sm:$0xff] %vm2560, %v2538
    %2596 = vst.msk [vmem:[#allocation2 + $0x118] sm:$0xff] %vm2560, %v2539
    %2597 = vst.msk [vmem:[#allocation2 + $0x120] sm:$0xff] %vm2560, %v2540
    %2598 = vst.msk [vmem:[#allocation2 + $0x128] sm:$0xff] %vm2560, %v2541
    %2599 = vst.msk [vmem:[#allocation2 + $0x130] sm:$0xff] %vm2560, %v2542
    %2600 = vst.msk [vmem:[#allocation2 + $0x138] sm:$0xff] %vm2560, %v2543
    %2601 = vst.msk [vmem:[#allocation2 + $0x140] sm:$0xff] %vm2560, %v2544
    %2602 = vst.msk [vmem:[#allocation2 + $0x148] sm:$0xff] %vm2560, %v2545
    %2603 = vst.msk [vmem:[#allocation2 + $0x150] sm:$0xff] %vm2560, %v2546
    %2604 = vst.msk [vmem:[#allocation2 + $0x158] sm:$0xff] %vm2560, %v2547
    %2605 = vst.msk [vmem:[#allocation2 + $0x160] sm:$0xff] %vm2560, %v2548
    %2606 = vst.msk [vmem:[#allocation2 + $0x168] sm:$0xff] %vm2560, %v2549
    %2607 = vst.msk [vmem:[#allocation2 + $0x170] sm:$0xff] %vm2560, %v2550
    %2608 = vst.msk [vmem:[#allocation2 + $0x178] sm:$0xff] %vm2560, %v2551
    %2609 = vst.msk [vmem:[#allocation2 + $0x180] sm:$0xff] %vm2560, %v2552
    %2610 = vst.msk [vmem:[#allocation2 + $0x188] sm:$0xff] %vm2560, %v2553
    %2611 = vst.msk [vmem:[#allocation2 + $0x190] sm:$0xff] %vm2560, %v2554
    %2612 = vst.msk [vmem:[#allocation2 + $0x198] sm:$0xff] %vm2560, %v2555
    %2613 = vst.msk [vmem:[#allocation2 + $0x1a0] sm:$0xff] %vm2560, %v2556
    %2614 = vst.msk [vmem:[#allocation2 + $0x1a8] sm:$0xff] %vm2560, %v2557
    %2615 = vst.msk [vmem:[#allocation2 + $0x1b0] sm:$0xff] %vm2560, %v2558
    %2616 = vst.msk [vmem:[#allocation2 + $0x1b8] sm:$0xff] %vm2560, %v2559
    %v2617 = vld [vmem:[#allocation2] sm:$0xff]
    %v2618 = vld [vmem:[#allocation2 + $0x8] sm:$0xff]
    %v2619 = vld [vmem:[#allocation2 + $0x10] sm:$0xff]
    %v2620 = vld [vmem:[#allocation2 + $0x18] sm:$0xff]
    %v2621 = vld [vmem:[#allocation2 + $0x20] sm:$0xff]
    %v2622 = vld [vmem:[#allocation2 + $0x28] sm:$0xff]
    %v2623 = vld [vmem:[#allocation2 + $0x30] sm:$0xff]
    %v2624 = vld [vmem:[#allocation2 + $0x38] sm:$0xff]
    %v2625 = vld [vmem:[#allocation2 + $0x40] sm:$0xff]
    %v2626 = vld [vmem:[#allocation2 + $0x48] sm:$0xff]
    %v2627 = vld [vmem:[#allocation2 + $0x50] sm:$0xff]
    %v2628 = vld [vmem:[#allocation2 + $0x58] sm:$0xff]
    %v2629 = vld [vmem:[#allocation2 + $0x60] sm:$0xff]
    %v2630 = vld [vmem:[#allocation2 + $0x68] sm:$0xff]
    %v2631 = vld [vmem:[#allocation2 + $0x70] sm:$0xff]
    %v2632 = vld [vmem:[#allocation2 + $0x78] sm:$0xff]
    %v2633 = vld [vmem:[#allocation2 + $0x80] sm:$0xff]
    %v2634 = vld [vmem:[#allocation2 + $0x88] sm:$0xff]
    %v2635 = vld [vmem:[#allocation2 + $0x90] sm:$0xff]
    %v2636 = vld [vmem:[#allocation2 + $0x98] sm:$0xff]
    %v2637 = vld [vmem:[#allocation2 + $0xa0] sm:$0xff]
    %v2638 = vld [vmem:[#allocation2 + $0xa8] sm:$0xff]
    %v2639 = vld [vmem:[#allocation2 + $0xb0] sm:$0xff]
    %v2640 = vld [vmem:[#allocation2 + $0xb8] sm:$0xff]
    %v2641 = vld [vmem:[#allocation2 + $0xc0] sm:$0xff]
    %v2642 = vld [vmem:[#allocation2 + $0xc8] sm:$0xff]
    %v2643 = vld [vmem:[#allocation2 + $0xd0] sm:$0xff]
    %v2644 = vld [vmem:[#allocation2 + $0xd8] sm:$0xff]
    %v2645 = vld [vmem:[#allocation2 + $0xe0] sm:$0xff]
    %v2646 = vld [vmem:[#allocation2 + $0xe8] sm:$0xff]
    %v2647 = vld [vmem:[#allocation2 + $0xf0] sm:$0xff]
    %v2648 = vld [vmem:[#allocation2 + $0xf8] sm:$0xff]
    %v2649 = vld [vmem:[#allocation2 + $0x100] sm:$0xff]
    %v2650 = vld [vmem:[#allocation2 + $0x108] sm:$0xff]
    %v2651 = vld [vmem:[#allocation2 + $0x110] sm:$0xff]
    %v2652 = vld [vmem:[#allocation2 + $0x118] sm:$0xff]
    %v2653 = vld [vmem:[#allocation2 + $0x120] sm:$0xff]
    %v2654 = vld [vmem:[#allocation2 + $0x128] sm:$0xff]
    %v2655 = vld [vmem:[#allocation2 + $0x130] sm:$0xff]
    %v2656 = vld [vmem:[#allocation2 + $0x138] sm:$0xff]
    %v2657 = vld [vmem:[#allocation2 + $0x140] sm:$0xff]
    %v2658 = vld [vmem:[#allocation2 + $0x148] sm:$0xff]
    %v2659 = vld [vmem:[#allocation2 + $0x150] sm:$0xff]
    %v2660 = vld [vmem:[#allocation2 + $0x158] sm:$0xff]
    %v2661 = vld [vmem:[#allocation2 + $0x160] sm:$0xff]
    %v2662 = vld [vmem:[#allocation2 + $0x168] sm:$0xff]
    %v2663 = vld [vmem:[#allocation2 + $0x170] sm:$0xff]
    %v2664 = vld [vmem:[#allocation2 + $0x178] sm:$0xff]
    %v2665 = vld [vmem:[#allocation2 + $0x180] sm:$0xff]
    %v2666 = vld [vmem:[#allocation2 + $0x188] sm:$0xff]
    %v2667 = vld [vmem:[#allocation2 + $0x190] sm:$0xff]
    %v2668 = vld [vmem:[#allocation2 + $0x198] sm:$0xff]
    %v2669 = vld [vmem:[#allocation2 + $0x1a0] sm:$0xff]
    %v2670 = vld [vmem:[#allocation2 + $0x1a8] sm:$0xff]
    %v2671 = vld [vmem:[#allocation2 + $0x1b0] sm:$0xff]
    %v2672 = vld [vmem:[#allocation2 + $0x1b8] sm:$0xff]
    %v2673 = vld [vmem:[%s5] sm:$0xf]
    %v2674 = vld [vmem:[%s5 + $0x4] sm:$0xf]
    %v2675 = vld [vmem:[%s5 + $0x8] sm:$0xf]
    %v2676 = vld [vmem:[%s5 + $0xc] sm:$0xf]
    %v2677 = vld [vmem:[%s5 + $0x10] sm:$0xf]
    %v2678 = vld [vmem:[%s5 + $0x14] sm:$0xf]
    %v2679 = vld [vmem:[%s5 + $0x18] sm:$0xf]
    %v2680 = vld [vmem:[%s5 + $0x1c] sm:$0xf]
    %v2681 = vld [vmem:[%s5 + $0x20] sm:$0xf]
    %v2682 = vld [vmem:[%s5 + $0x24] sm:$0xf]
    %v2683 = vld [vmem:[%s5 + $0x28] sm:$0x3]
    %v2695 = vunpack.c.l.b16 %v2673
    %v2696 = vunpack.c.l.b16 %v2674
    %v2697 = vunpack.c.l.b16 %v2675
    %v2698 = vunpack.c.l.b16 %v2676
    %v2699 = vunpack.c.l.b16 %v2677
    %v2700 = vunpack.c.l.b16 %v2678
    %v2701 = vunpack.c.l.b16 %v2679
    %v2702 = vunpack.c.l.b16 %v2680
    %v2703 = vunpack.c.l.b16 %v2681
    %v2704 = vunpack.c.l.b16 %v2682
    %v2705 = vunpack.c.l.b16 %v2683
    %v2706 = vpack.c.b16 %v2696, %v2695
    %v2707 = vpack.c.b16 %v2698, %v2697
    %v2708 = vpack.c.b16 %v2700, %v2699
    %v2709 = vpack.c.b16 %v2702, %v2701
    %v2710 = vpack.c.b16 %v2704, %v2703
    %v2711 = vpack.c.b16 %v2705, %v2705
    %v2718 = vsel %vm2560, %v2617, 0
    %v2721 = vsel %vm2560, %v2618, 0
    %v2724 = vsel %vm2560, %v2619, 0
    %v2727 = vsel %vm2560, %v2620, 0
    %v2730 = vsel %vm2560, %v2621, 0
    %v2733 = vsel %vm2560, %v2622, 0
    %v2736 = vsel %vm2560, %v2623, 0
    %v2739 = vsel %vm2560, %v2624, 0
    %v2742 = vsel %vm2560, %v2625, 0
    %v2745 = vsel %vm2560, %v2626, 0
    %v2748 = vsel %vm2560, %v2627, 0
    %v2751 = vsel %vm2560, %v2628, 0
    %v2754 = vsel %vm2560, %v2629, 0
    %v2757 = vsel %vm2560, %v2630, 0
    %v2760 = vsel %vm2560, %v2631, 0
    %v2763 = vsel %vm2560, %v2632, 0
    %v2766 = vsel %vm2560, %v2633, 0
    %v2769 = vsel %vm2560, %v2634, 0
    %v2772 = vsel %vm2560, %v2635, 0
    %v2775 = vsel %vm2560, %v2636, 0
    %v2778 = vsel %vm2560, %v2637, 0
    %v2781 = vsel %vm2560, %v2638, 0
    %v2784 = vsel %vm2560, %v2639, 0
    %v2787 = vsel %vm2560, %v2640, 0
    %v2790 = vsel %vm2560, %v2641, 0
    %v2793 = vsel %vm2560, %v2642, 0
    %v2796 = vsel %vm2560, %v2643, 0
    %v2799 = vsel %vm2560, %v2644, 0
    %v2802 = vsel %vm2560, %v2645, 0
    %v2805 = vsel %vm2560, %v2646, 0
    %v2808 = vsel %vm2560, %v2647, 0
    %v2811 = vsel %vm2560, %v2648, 0
    %v2814 = vsel %vm2560, %v2649, 0
    %v2817 = vsel %vm2560, %v2650, 0
    %v2820 = vsel %vm2560, %v2651, 0
    %v2823 = vsel %vm2560, %v2652, 0
    %v2826 = vsel %vm2560, %v2653, 0
    %v2829 = vsel %vm2560, %v2654, 0
    %v2832 = vsel %vm2560, %v2655, 0
    %v2835 = vsel %vm2560, %v2656, 0
    %v2838 = vsel %vm2560, %v2657, 0
    %v2841 = vsel %vm2560, %v2658, 0
    %v2844 = vsel %vm2560, %v2659, 0
    %v2847 = vsel %vm2560, %v2660, 0
    %v2850 = vsel %vm2560, %v2661, 0
    %v2853 = vsel %vm2560, %v2662, 0
    %v2856 = vsel %vm2560, %v2663, 0
    %v2859 = vsel %vm2560, %v2664, 0
    %v2862 = vsel %vm2560, %v2665, 0
    %v2865 = vsel %vm2560, %v2666, 0
    %v2868 = vsel %vm2560, %v2667, 0
    %v2871 = vsel %vm2560, %v2668, 0
    %v2874 = vsel %vm2560, %v2669, 0
    %v2877 = vsel %vm2560, %v2670, 0
    %v2880 = vsel %vm2560, %v2671, 0
    %v2883 = vsel %vm2560, %v2672, 0
    %vm2885 = vcmask 1041408
    %v2887 = vsel %vm2885, %v2711, 0
    %2889 = vmatprep.subr.bf16.mxu0 0
    %2890 = vmatpush1.bf16.msra.mxu0 %v2706
    %2891 = vmatprep.subr.bf16.mxu0 0
    %2892 = vmatpush1.bf16.msra.mxu0 %v2707
    %2893 = vmatprep.subr.bf16.mxu0 0
    %2894 = vmatpush1.bf16.msra.mxu0 %v2708
    %2895 = vmatprep.subr.bf16.mxu0 0
    %2896 = vmatpush1.bf16.msra.mxu0 %v2709
    %2897 = vmatprep.subr.bf16.mxu0 0
    %2898 = vmatpush1.bf16.msra.mxu0 %v2710
    %2899 = vmatprep.subr.bf16.mxu0 0
    %2900 = vmatpush1.bf16.msra.mxu0 %v2887
    %2901 = vmatprep.subr.bf16.mxu0 0
    %2902 = vmatpush1.bf16.msra.mxu0 0
    %2903 = vmatprep.subr.bf16.mxu0 0
    %2904 = vmatpush1.bf16.msra.mxu0 0
    %2905 = vmatprep.subr.bf16.mxu0 0
    %2906 = vmatpush1.bf16.msra.mxu0 0
    %2907 = vmatprep.subr.bf16.mxu0 0
    %2908 = vmatpush1.bf16.msra.mxu0 0
    %2909 = vmatprep.subr.bf16.mxu0 0
    %2910 = vmatpush1.bf16.msra.mxu0 0
    %2911 = vmatprep.subr.bf16.mxu0 0
    %2912 = vmatpush1.bf16.msra.mxu0 0
    %2913 = vmatprep.subr.bf16.mxu0 0
    %2914 = vmatpush1.bf16.msra.mxu0 0
    %2915 = vmatprep.subr.bf16.mxu0 0
    %2916 = vmatpush1.bf16.msra.mxu0 0
    %2917 = vmatprep.subr.bf16.mxu0 0
    %2918 = vmatpush1.bf16.msra.mxu0 0
    %2919 = vmatprep.subr.bf16.mxu0 0
    %2920 = vmatpush1.bf16.msra.mxu0 0
    %2921 = vmatprep.mubr.bf16.mxu0 0
    %2922 = vmatmul.mubr.bf16.gmra.mrb[0].mxu0 %v2718
    %v2923 = vpop.f32.mrb[0].mxu0
    %v2924 = vadd.f32 0.0, %v2923
    %v2925 = vpop.f32.mrb[0].mxu0
    %v2926 = vpop.f32.mrb[0].mxu0
    %v2927 = vadd.f32 0.0, %v2926
    %v2928 = vpop.f32.mrb[0].mxu0
    %2929 = vmatprep.mubr.bf16.mxu0 0
    %2930 = vmatmul.mubr.bf16.gmra.mrb[0].mxu0 %v2721
    %v2931 = vpop.f32.mrb[0].mxu0
    %v2932 = vadd.f32 0.0, %v2931
    %v2933 = vpop.f32.mrb[0].mxu0
    %v2934 = vpop.f32.mrb[0].mxu0
    %v2935 = vadd.f32 0.0, %v2934
    %v2936 = vpop.f32.mrb[0].mxu0
    %2937 = vmatprep.mubr.bf16.mxu0 0
    %2938 = vmatmul.mubr.bf16.gmra.mrb[0].mxu0 %v2724
    %v2939 = vpop.f32.mrb[0].mxu0
    %v2940 = vadd.f32 0.0, %v2939
    %v2941 = vpop.f32.mrb[0].mxu0
    %v2942 = vpop.f32.mrb[0].mxu0
    %v2943 = vadd.f32 0.0, %v2942
    %v2944 = vpop.f32.mrb[0].mxu0
    %2945 = vmatprep.mubr.bf16.mxu0 0
    %2946 = vmatmul.mubr.bf16.gmra.mrb[0].mxu0 %v2727
    %v2947 = vpop.f32.mrb[0].mxu0
    %v2948 = vadd.f32 0.0, %v2947
    %v2949 = vpop.f32.mrb[0].mxu0
    %v2950 = vpop.f32.mrb[0].mxu0
    %v2951 = vadd.f32 0.0, %v2950
    %v2952 = vpop.f32.mrb[0].mxu0
    %2953 = vmatprep.mubr.bf16.mxu0 0
    %2954 = vmatmul.mubr.bf16.gmra.mrb[0].mxu0 %v2730
    %v2955 = vpop.f32.mrb[0].mxu0
    %v2956 = vadd.f32 0.0, %v2955
    %v2957 = vpop.f32.mrb[0].mxu0
    %v2958 = vpop.f32.mrb[0].mxu0
    %v2959 = vadd.f32 0.0, %v2958
    %v2960 = vpop.f32.mrb[0].mxu0
    %2961 = vmatprep.mubr.bf16.mxu0 0
    %2962 = vmatmul.mubr.bf16.gmra.mrb[0].mxu0 %v2733
    %v2963 = vpop.f32.mrb[0].mxu0
    %v2964 = vadd.f32 0.0, %v2963
    %v2965 = vpop.f32.mrb[0].mxu0
    %v2966 = vpop.f32.mrb[0].mxu0
    %v2967 = vadd.f32 0.0, %v2966
    %v2968 = vpop.f32.mrb[0].mxu0
    %2969 = vmatprep.mubr.bf16.mxu0 0
    %2970 = vmatmul.mubr.bf16.gmra.mrb[0].mxu0 %v2736
    %v2971 = vpop.f32.mrb[0].mxu0
    %v2972 = vadd.f32 0.0, %v2971
    %v2973 = vpop.f32.mrb[0].mxu0
    %v2974 = vpop.f32.mrb[0].mxu0
    %v2975 = vadd.f32 0.0, %v2974
    %v2976 = vpop.f32.mrb[0].mxu0
    %2977 = vmatprep.mubr.bf16.mxu0 0
    %2978 = vmatmul.mubr.bf16.gmra.mrb[0].mxu0 %v2739
    %v2979 = vpop.f32.mrb[0].mxu0
    %v2980 = vadd.f32 0.0, %v2979
    %v2981 = vpop.f32.mrb[0].mxu0
    %v2982 = vpop.f32.mrb[0].mxu0
    %v2983 = vadd.f32 0.0, %v2982
    %v2984 = vpop.f32.mrb[0].mxu0
    %2985 = vmatprep.mubr.bf16.mxu0 0
    %2986 = vmatmul.mubr.bf16.gmra.mrb[0].mxu0 %v2742
    %v2987 = vpop.f32.mrb[0].mxu0
    %v2988 = vadd.f32 0.0, %v2987
    %v2989 = vpop.f32.mrb[0].mxu0
    %v2990 = vpop.f32.mrb[0].mxu0
    %v2991 = vadd.f32 0.0, %v2990
    %v2992 = vpop.f32.mrb[0].mxu0
    %2993 = vmatprep.mubr.bf16.mxu0 0
    %2994 = vmatmul.mubr.bf16.gmra.mrb[0].mxu0 %v2745
    %v2995 = vpop.f32.mrb[0].mxu0
    %v2996 = vadd.f32 0.0, %v2995
    %v2997 = vpop.f32.mrb[0].mxu0
    %v2998 = vpop.f32.mrb[0].mxu0
    %v2999 = vadd.f32 0.0, %v2998
    %v3000 = vpop.f32.mrb[0].mxu0
    %3001 = vmatprep.mubr.bf16.mxu0 0
    %3002 = vmatmul.mubr.bf16.gmra.mrb[0].mxu0 %v2748
    %v3003 = vpop.f32.mrb[0].mxu0
    %v3004 = vadd.f32 0.0, %v3003
    %v3005 = vpop.f32.mrb[0].mxu0
    %v3006 = vpop.f32.mrb[0].mxu0
    %v3007 = vadd.f32 0.0, %v3006
    %v3008 = vpop.f32.mrb[0].mxu0
    %3009 = vmatprep.mubr.bf16.mxu0 0
    %3010 = vmatmul.mubr.bf16.gmra.mrb[0].mxu0 %v2751
    %v3011 = vpop.f32.mrb[0].mxu0
    %v3012 = vadd.f32 0.0, %v3011
    %v3013 = vpop.f32.mrb[0].mxu0
    %v3014 = vpop.f32.mrb[0].mxu0
    %v3015 = vadd.f32 0.0, %v3014
    %v3016 = vpop.f32.mrb[0].mxu0
    %3017 = vmatprep.mubr.bf16.mxu0 0
    %3018 = vmatmul.mubr.bf16.gmra.mrb[0].mxu0 %v2754
    %v3019 = vpop.f32.mrb[0].mxu0
    %v3020 = vadd.f32 0.0, %v3019
    %v3021 = vpop.f32.mrb[0].mxu0
    %v3022 = vpop.f32.mrb[0].mxu0
    %v3023 = vadd.f32 0.0, %v3022
    %v3024 = vpop.f32.mrb[0].mxu0
    %3025 = vmatprep.mubr.bf16.mxu0 0
    %3026 = vmatmul.mubr.bf16.gmra.mrb[0].mxu0 %v2757
    %v3027 = vpop.f32.mrb[0].mxu0
    %v3028 = vadd.f32 0.0, %v3027
    %v3029 = vpop.f32.mrb[0].mxu0
    %v3030 = vpop.f32.mrb[0].mxu0
    %v3031 = vadd.f32 0.0, %v3030
    %v3032 = vpop.f32.mrb[0].mxu0
    %3033 = vmatprep.mubr.bf16.mxu0 0
    %3034 = vmatmul.mubr.bf16.gmra.mrb[0].mxu0 %v2760
    %v3035 = vpop.f32.mrb[0].mxu0
    %v3036 = vadd.f32 0.0, %v3035
    %v3037 = vpop.f32.mrb[0].mxu0
    %v3038 = vpop.f32.mrb[0].mxu0
    %v3039 = vadd.f32 0.0, %v3038
    %v3040 = vpop.f32.mrb[0].mxu0
    %3041 = vmatprep.mubr.bf16.mxu0 0
    %3042 = vmatmul.mubr.bf16.gmra.mrb[0].mxu0 %v2763
    %v3043 = vpop.f32.mrb[0].mxu0
    %v3044 = vadd.f32 0.0, %v3043
    %v3045 = vpop.f32.mrb[0].mxu0
    %v3046 = vpop.f32.mrb[0].mxu0
    %v3047 = vadd.f32 0.0, %v3046
    %v3048 = vpop.f32.mrb[0].mxu0
    %3049 = vmatprep.mubr.bf16.mxu0 0
    %3050 = vmatmul.mubr.bf16.gmra.mrb[0].mxu0 %v2766
    %v3051 = vpop.f32.mrb[0].mxu0
    %v3052 = vadd.f32 0.0, %v3051
    %v3053 = vpop.f32.mrb[0].mxu0
    %v3054 = vpop.f32.mrb[0].mxu0
    %v3055 = vadd.f32 0.0, %v3054
    %v3056 = vpop.f32.mrb[0].mxu0
    %3057 = vmatprep.mubr.bf16.mxu0 0
    %3058 = vmatmul.mubr.bf16.gmra.mrb[0].mxu0 %v2769
    %v3059 = vpop.f32.mrb[0].mxu0
    %v3060 = vadd.f32 0.0, %v3059
    %v3061 = vpop.f32.mrb[0].mxu0
    %v3062 = vpop.f32.mrb[0].mxu0
    %v3063 = vadd.f32 0.0, %v3062
    %v3064 = vpop.f32.mrb[0].mxu0
    %3065 = vmatprep.mubr.bf16.mxu0 0
    %3066 = vmatmul.mubr.bf16.gmra.mrb[0].mxu0 %v2772
    %v3067 = vpop.f32.mrb[0].mxu0
    %v3068 = vadd.f32 0.0, %v3067
    %v3069 = vpop.f32.mrb[0].mxu0
    %v3070 = vpop.f32.mrb[0].mxu0
    %v3071 = vadd.f32 0.0, %v3070
    %v3072 = vpop.f32.mrb[0].mxu0
    %3073 = vmatprep.mubr.bf16.mxu0 0
    %3074 = vmatmul.mubr.bf16.gmra.mrb[0].mxu0 %v2775
    %v3075 = vpop.f32.mrb[0].mxu0
    %v3076 = vadd.f32 0.0, %v3075
    %v3077 = vpop.f32.mrb[0].mxu0
    %v3078 = vpop.f32.mrb[0].mxu0
    %v3079 = vadd.f32 0.0, %v3078
    %v3080 = vpop.f32.mrb[0].mxu0
    %3081 = vmatprep.mubr.bf16.mxu0 0
    %3082 = vmatmul.mubr.bf16.gmra.mrb[0].mxu0 %v2778
    %v3083 = vpop.f32.mrb[0].mxu0
    %v3084 = vadd.f32 0.0, %v3083
    %v3085 = vpop.f32.mrb[0].mxu0
    %v3086 = vpop.f32.mrb[0].mxu0
    %v3087 = vadd.f32 0.0, %v3086
    %v3088 = vpop.f32.mrb[0].mxu0
    %3089 = vmatprep.mubr.bf16.mxu0 0
    %3090 = vmatmul.mubr.bf16.gmra.mrb[0].mxu0 %v2781
    %v3091 = vpop.f32.mrb[0].mxu0
    %v3092 = vadd.f32 0.0, %v3091
    %v3093 = vpop.f32.mrb[0].mxu0
    %v3094 = vpop.f32.mrb[0].mxu0
    %v3095 = vadd.f32 0.0, %v3094
    %v3096 = vpop.f32.mrb[0].mxu0
    %3097 = vmatprep.mubr.bf16.mxu0 0
    %3098 = vmatmul.mubr.bf16.gmra.mrb[0].mxu0 %v2784
    %v3099 = vpop.f32.mrb[0].mxu0
    %v3100 = vadd.f32 0.0, %v3099
    %v3101 = vpop.f32.mrb[0].mxu0
    %v3102 = vpop.f32.mrb[0].mxu0
    %v3103 = vadd.f32 0.0, %v3102
    %v3104 = vpop.f32.mrb[0].mxu0
    %3105 = vmatprep.mubr.bf16.mxu0 0
    %3106 = vmatmul.mubr.bf16.gmra.mrb[0].mxu0 %v2787
    %v3107 = vpop.f32.mrb[0].mxu0
    %v3108 = vadd.f32 0.0, %v3107
    %v3109 = vpop.f32.mrb[0].mxu0
    %v3110 = vpop.f32.mrb[0].mxu0
    %v3111 = vadd.f32 0.0, %v3110
    %v3112 = vpop.f32.mrb[0].mxu0
    %3113 = vmatprep.mubr.bf16.mxu0 0
    %3114 = vmatmul.mubr.bf16.gmra.mrb[0].mxu0 %v2790
    %v3115 = vpop.f32.mrb[0].mxu0
    %v3116 = vadd.f32 0.0, %v3115
    %v3117 = vpop.f32.mrb[0].mxu0
    %v3118 = vpop.f32.mrb[0].mxu0
    %v3119 = vadd.f32 0.0, %v3118
    %v3120 = vpop.f32.mrb[0].mxu0
    %3121 = vmatprep.mubr.bf16.mxu0 0
    %3122 = vmatmul.mubr.bf16.gmra.mrb[0].mxu0 %v2793
    %v3123 = vpop.f32.mrb[0].mxu0
    %v3124 = vadd.f32 0.0, %v3123
    %v3125 = vpop.f32.mrb[0].mxu0
    %v3126 = vpop.f32.mrb[0].mxu0
    %v3127 = vadd.f32 0.0, %v3126
    %v3128 = vpop.f32.mrb[0].mxu0
    %3129 = vmatprep.mubr.bf16.mxu0 0
    %3130 = vmatmul.mubr.bf16.gmra.mrb[0].mxu0 %v2796
    %v3131 = vpop.f32.mrb[0].mxu0
    %v3132 = vadd.f32 0.0, %v3131
    %v3133 = vpop.f32.mrb[0].mxu0
    %v3134 = vpop.f32.mrb[0].mxu0
    %v3135 = vadd.f32 0.0, %v3134
    %v3136 = vpop.f32.mrb[0].mxu0
    %3137 = vmatprep.mubr.bf16.mxu0 0
    %3138 = vmatmul.mubr.bf16.gmra.mrb[0].mxu0 %v2799
    %v3139 = vpop.f32.mrb[0].mxu0
    %v3140 = vadd.f32 0.0, %v3139
    %v3141 = vpop.f32.mrb[0].mxu0
    %v3142 = vpop.f32.mrb[0].mxu0
    %v3143 = vadd.f32 0.0, %v3142
    %v3144 = vpop.f32.mrb[0].mxu0
    %3145 = vmatprep.mubr.bf16.mxu0 0
    %3146 = vmatmul.mubr.bf16.gmra.mrb[0].mxu0 %v2802
    %v3147 = vpop.f32.mrb[0].mxu0
    %v3148 = vadd.f32 0.0, %v3147
    %v3149 = vpop.f32.mrb[0].mxu0
    %v3150 = vpop.f32.mrb[0].mxu0
    %v3151 = vadd.f32 0.0, %v3150
    %v3152 = vpop.f32.mrb[0].mxu0
    %3153 = vmatprep.mubr.bf16.mxu0 0
    %3154 = vmatmul.mubr.bf16.gmra.mrb[0].mxu0 %v2805
    %v3155 = vpop.f32.mrb[0].mxu0
    %v3156 = vadd.f32 0.0, %v3155
    %v3157 = vpop.f32.mrb[0].mxu0
    %v3158 = vpop.f32.mrb[0].mxu0
    %v3159 = vadd.f32 0.0, %v3158
    %v3160 = vpop.f32.mrb[0].mxu0
    %3161 = vmatprep.mubr.bf16.mxu0 0
    %3162 = vmatmul.mubr.bf16.gmra.mrb[0].mxu0 %v2808
    %v3163 = vpop.f32.mrb[0].mxu0
    %v3164 = vadd.f32 0.0, %v3163
    %v3165 = vpop.f32.mrb[0].mxu0
    %v3166 = vpop.f32.mrb[0].mxu0
    %v3167 = vadd.f32 0.0, %v3166
    %v3168 = vpop.f32.mrb[0].mxu0
    %3169 = vmatprep.mubr.bf16.mxu0 0
    %3170 = vmatmul.mubr.bf16.gmra.mrb[0].mxu0 %v2811
    %v3171 = vpop.f32.mrb[0].mxu0
    %v3172 = vadd.f32 0.0, %v3171
    %v3173 = vpop.f32.mrb[0].mxu0
    %v3174 = vpop.f32.mrb[0].mxu0
    %v3175 = vadd.f32 0.0, %v3174
    %v3176 = vpop.f32.mrb[0].mxu0
    %3177 = vmatprep.mubr.bf16.mxu0 0
    %3178 = vmatmul.mubr.bf16.gmra.mrb[0].mxu0 %v2814
    %v3179 = vpop.f32.mrb[0].mxu0
    %v3180 = vadd.f32 0.0, %v3179
    %v3181 = vpop.f32.mrb[0].mxu0
    %v3182 = vpop.f32.mrb[0].mxu0
    %v3183 = vadd.f32 0.0, %v3182
    %v3184 = vpop.f32.mrb[0].mxu0
    %3185 = vmatprep.mubr.bf16.mxu0 0
    %3186 = vmatmul.mubr.bf16.gmra.mrb[0].mxu0 %v2817
    %v3187 = vpop.f32.mrb[0].mxu0
    %v3188 = vadd.f32 0.0, %v3187
    %v3189 = vpop.f32.mrb[0].mxu0
    %v3190 = vpop.f32.mrb[0].mxu0
    %v3191 = vadd.f32 0.0, %v3190
    %v3192 = vpop.f32.mrb[0].mxu0
    %3193 = vmatprep.mubr.bf16.mxu0 0
    %3194 = vmatmul.mubr.bf16.gmra.mrb[0].mxu0 %v2820
    %v3195 = vpop.f32.mrb[0].mxu0
    %v3196 = vadd.f32 0.0, %v3195
    %v3197 = vpop.f32.mrb[0].mxu0
    %v3198 = vpop.f32.mrb[0].mxu0
    %v3199 = vadd.f32 0.0, %v3198
    %v3200 = vpop.f32.mrb[0].mxu0
    %3201 = vmatprep.mubr.bf16.mxu0 0
    %3202 = vmatmul.mubr.bf16.gmra.mrb[0].mxu0 %v2823
    %v3203 = vpop.f32.mrb[0].mxu0
    %v3204 = vadd.f32 0.0, %v3203
    %v3205 = vpop.f32.mrb[0].mxu0
    %v3206 = vpop.f32.mrb[0].mxu0
    %v3207 = vadd.f32 0.0, %v3206
    %v3208 = vpop.f32.mrb[0].mxu0
    %3209 = vmatprep.mubr.bf16.mxu0 0
    %3210 = vmatmul.mubr.bf16.gmra.mrb[0].mxu0 %v2826
    %v3211 = vpop.f32.mrb[0].mxu0
    %v3212 = vadd.f32 0.0, %v3211
    %v3213 = vpop.f32.mrb[0].mxu0
    %v3214 = vpop.f32.mrb[0].mxu0
    %v3215 = vadd.f32 0.0, %v3214
    %v3216 = vpop.f32.mrb[0].mxu0
    %3217 = vmatprep.mubr.bf16.mxu0 0
    %3218 = vmatmul.mubr.bf16.gmra.mrb[0].mxu0 %v2829
    %v3219 = vpop.f32.mrb[0].mxu0
    %v3220 = vadd.f32 0.0, %v3219
    %v3221 = vpop.f32.mrb[0].mxu0
    %v3222 = vpop.f32.mrb[0].mxu0
    %v3223 = vadd.f32 0.0, %v3222
    %v3224 = vpop.f32.mrb[0].mxu0
    %3225 = vmatprep.mubr.bf16.mxu0 0
    %3226 = vmatmul.mubr.bf16.gmra.mrb[0].mxu0 %v2832
    %v3227 = vpop.f32.mrb[0].mxu0
    %v3228 = vadd.f32 0.0, %v3227
    %v3229 = vpop.f32.mrb[0].mxu0
    %v3230 = vpop.f32.mrb[0].mxu0
    %v3231 = vadd.f32 0.0, %v3230
    %v3232 = vpop.f32.mrb[0].mxu0
    %3233 = vmatprep.mubr.bf16.mxu0 0
    %3234 = vmatmul.mubr.bf16.gmra.mrb[0].mxu0 %v2835
    %v3235 = vpop.f32.mrb[0].mxu0
    %v3236 = vadd.f32 0.0, %v3235
    %v3237 = vpop.f32.mrb[0].mxu0
    %v3238 = vpop.f32.mrb[0].mxu0
    %v3239 = vadd.f32 0.0, %v3238
    %v3240 = vpop.f32.mrb[0].mxu0
    %3241 = vmatprep.mubr.bf16.mxu0 0
    %3242 = vmatmul.mubr.bf16.gmra.mrb[0].mxu0 %v2838
    %v3243 = vpop.f32.mrb[0].mxu0
    %v3244 = vadd.f32 0.0, %v3243
    %v3245 = vpop.f32.mrb[0].mxu0
    %v3246 = vpop.f32.mrb[0].mxu0
    %v3247 = vadd.f32 0.0, %v3246
    %v3248 = vpop.f32.mrb[0].mxu0
    %3249 = vmatprep.mubr.bf16.mxu0 0
    %3250 = vmatmul.mubr.bf16.gmra.mrb[0].mxu0 %v2841
    %v3251 = vpop.f32.mrb[0].mxu0
    %v3252 = vadd.f32 0.0, %v3251
    %v3253 = vpop.f32.mrb[0].mxu0
    %v3254 = vpop.f32.mrb[0].mxu0
    %v3255 = vadd.f32 0.0, %v3254
    %v3256 = vpop.f32.mrb[0].mxu0
    %3257 = vmatprep.mubr.bf16.mxu0 0
    %3258 = vmatmul.mubr.bf16.gmra.mrb[0].mxu0 %v2844
    %v3259 = vpop.f32.mrb[0].mxu0
    %v3260 = vadd.f32 0.0, %v3259
    %v3261 = vpop.f32.mrb[0].mxu0
    %v3262 = vpop.f32.mrb[0].mxu0
    %v3263 = vadd.f32 0.0, %v3262
    %v3264 = vpop.f32.mrb[0].mxu0
    %3265 = vmatprep.mubr.bf16.mxu0 0
    %3266 = vmatmul.mubr.bf16.gmra.mrb[0].mxu0 %v2847
    %v3267 = vpop.f32.mrb[0].mxu0
    %v3268 = vadd.f32 0.0, %v3267
    %v3269 = vpop.f32.mrb[0].mxu0
    %v3270 = vpop.f32.mrb[0].mxu0
    %v3271 = vadd.f32 0.0, %v3270
    %v3272 = vpop.f32.mrb[0].mxu0
    %3273 = vmatprep.mubr.bf16.mxu0 0
    %3274 = vmatmul.mubr.bf16.gmra.mrb[0].mxu0 %v2850
    %v3275 = vpop.f32.mrb[0].mxu0
    %v3276 = vadd.f32 0.0, %v3275
    %v3277 = vpop.f32.mrb[0].mxu0
    %v3278 = vpop.f32.mrb[0].mxu0
    %v3279 = vadd.f32 0.0, %v3278
    %v3280 = vpop.f32.mrb[0].mxu0
    %3281 = vmatprep.mubr.bf16.mxu0 0
    %3282 = vmatmul.mubr.bf16.gmra.mrb[0].mxu0 %v2853
    %v3283 = vpop.f32.mrb[0].mxu0
    %v3284 = vadd.f32 0.0, %v3283
    %v3285 = vpop.f32.mrb[0].mxu0
    %v3286 = vpop.f32.mrb[0].mxu0
    %v3287 = vadd.f32 0.0, %v3286
    %v3288 = vpop.f32.mrb[0].mxu0
    %3289 = vmatprep.mubr.bf16.mxu0 0
    %3290 = vmatmul.mubr.bf16.gmra.mrb[0].mxu0 %v2856
    %v3291 = vpop.f32.mrb[0].mxu0
    %v3292 = vadd.f32 0.0, %v3291
    %v3293 = vpop.f32.mrb[0].mxu0
    %v3294 = vpop.f32.mrb[0].mxu0
    %v3295 = vadd.f32 0.0, %v3294
    %v3296 = vpop.f32.mrb[0].mxu0
    %3297 = vmatprep.mubr.bf16.mxu0 0
    %3298 = vmatmul.mubr.bf16.gmra.mrb[0].mxu0 %v2859
    %v3299 = vpop.f32.mrb[0].mxu0
    %v3300 = vadd.f32 0.0, %v3299
    %v3301 = vpop.f32.mrb[0].mxu0
    %v3302 = vpop.f32.mrb[0].mxu0
    %v3303 = vadd.f32 0.0, %v3302
    %v3304 = vpop.f32.mrb[0].mxu0
    %3305 = vmatprep.mubr.bf16.mxu0 0
    %3306 = vmatmul.mubr.bf16.gmra.mrb[0].mxu0 %v2862
    %v3307 = vpop.f32.mrb[0].mxu0
    %v3308 = vadd.f32 0.0, %v3307
    %v3309 = vpop.f32.mrb[0].mxu0
    %v3310 = vpop.f32.mrb[0].mxu0
    %v3311 = vadd.f32 0.0, %v3310
    %v3312 = vpop.f32.mrb[0].mxu0
    %3313 = vmatprep.mubr.bf16.mxu0 0
    %3314 = vmatmul.mubr.bf16.gmra.mrb[0].mxu0 %v2865
    %v3315 = vpop.f32.mrb[0].mxu0
    %v3316 = vadd.f32 0.0, %v3315
    %v3317 = vpop.f32.mrb[0].mxu0
    %v3318 = vpop.f32.mrb[0].mxu0
    %v3319 = vadd.f32 0.0, %v3318
    %v3320 = vpop.f32.mrb[0].mxu0
    %3321 = vmatprep.mubr.bf16.mxu0 0
    %3322 = vmatmul.mubr.bf16.gmra.mrb[0].mxu0 %v2868
    %v3323 = vpop.f32.mrb[0].mxu0
    %v3324 = vadd.f32 0.0, %v3323
    %v3325 = vpop.f32.mrb[0].mxu0
    %v3326 = vpop.f32.mrb[0].mxu0
    %v3327 = vadd.f32 0.0, %v3326
    %v3328 = vpop.f32.mrb[0].mxu0
    %3329 = vmatprep.mubr.bf16.mxu0 0
    %3330 = vmatmul.mubr.bf16.gmra.mrb[0].mxu0 %v2871
    %v3331 = vpop.f32.mrb[0].mxu0
    %v3332 = vadd.f32 0.0, %v3331
    %v3333 = vpop.f32.mrb[0].mxu0
    %v3334 = vpop.f32.mrb[0].mxu0
    %v3335 = vadd.f32 0.0, %v3334
    %v3336 = vpop.f32.mrb[0].mxu0
    %3337 = vmatprep.mubr.bf16.mxu0 0
    %3338 = vmatmul.mubr.bf16.gmra.mrb[0].mxu0 %v2874
    %v3339 = vpop.f32.mrb[0].mxu0
    %v3340 = vadd.f32 0.0, %v3339
    %v3341 = vpop.f32.mrb[0].mxu0
    %v3342 = vpop.f32.mrb[0].mxu0
    %v3343 = vadd.f32 0.0, %v3342
    %v3344 = vpop.f32.mrb[0].mxu0
    %3345 = vmatprep.mubr.bf16.mxu0 0
    %3346 = vmatmul.mubr.bf16.gmra.mrb[0].mxu0 %v2877
    %v3347 = vpop.f32.mrb[0].mxu0
    %v3348 = vadd.f32 0.0, %v3347
    %v3349 = vpop.f32.mrb[0].mxu0
    %v3350 = vpop.f32.mrb[0].mxu0
    %v3351 = vadd.f32 0.0, %v3350
    %v3352 = vpop.f32.mrb[0].mxu0
    %3353 = vmatprep.mubr.bf16.mxu0 0
    %3354 = vmatmul.mubr.bf16.gmra.mrb[0].mxu0 %v2880
    %v3355 = vpop.f32.mrb[0].mxu0
    %v3356 = vadd.f32 0.0, %v3355
    %v3357 = vpop.f32.mrb[0].mxu0
    %v3358 = vpop.f32.mrb[0].mxu0
    %v3359 = vadd.f32 0.0, %v3358
    %v3360 = vpop.f32.mrb[0].mxu0
    %3361 = vmatprep.mubr.bf16.mxu0 0
    %3362 = vmatmul.mubr.bf16.gmra.mrb[0].mxu0 %v2883
    %v3363 = vpop.f32.mrb[0].mxu0
    %v3364 = vadd.f32 0.0, %v3363
    %v3365 = vpop.f32.mrb[0].mxu0
    %v3366 = vpop.f32.mrb[0].mxu0
    %v3367 = vadd.f32 0.0, %v3366
    %v3368 = vpop.f32.mrb[0].mxu0
    %3369 = vdwg.mxu0
    %vm3370 = vcmask 785408
    %3371 = vst.msk [vmem:[#allocation3] sm:$0xff] %vm3370, %v2924
    %3372 = vst.msk [vmem:[#allocation3 + $0x8] sm:$0xff] %vm3370, %v2927
    %3373 = vst.msk [vmem:[#allocation3 + $0x10] sm:$0xff] %vm3370, %v2932
    %3374 = vst.msk [vmem:[#allocation3 + $0x18] sm:$0xff] %vm3370, %v2935
    %3375 = vst.msk [vmem:[#allocation3 + $0x20] sm:$0xff] %vm3370, %v2940
    %3376 = vst.msk [vmem:[#allocation3 + $0x28] sm:$0xff] %vm3370, %v2943
    %3377 = vst.msk [vmem:[#allocation3 + $0x30] sm:$0xff] %vm3370, %v2948
    %3378 = vst.msk [vmem:[#allocation3 + $0x38] sm:$0xff] %vm3370, %v2951
    %3379 = vst.msk [vmem:[#allocation3 + $0x40] sm:$0xff] %vm3370, %v2956
    %3380 = vst.msk [vmem:[#allocation3 + $0x48] sm:$0xff] %vm3370, %v2959
    %3381 = vst.msk [vmem:[#allocation3 + $0x50] sm:$0xff] %vm3370, %v2964
    %3382 = vst.msk [vmem:[#allocation3 + $0x58] sm:$0xff] %vm3370, %v2967
    %3383 = vst.msk [vmem:[#allocation3 + $0x60] sm:$0xff] %vm3370, %v2972
    %3384 = vst.msk [vmem:[#allocation3 + $0x68] sm:$0xff] %vm3370, %v2975
    %3385 = vst.msk [vmem:[#allocation3 + $0x70] sm:$0xff] %vm3370, %v2980
    %3386 = vst.msk [vmem:[#allocation3 + $0x78] sm:$0xff] %vm3370, %v2983
    %3387 = vst.msk [vmem:[#allocation3 + $0x80] sm:$0xff] %vm3370, %v2988
    %3388 = vst.msk [vmem:[#allocation3 + $0x88] sm:$0xff] %vm3370, %v2991
    %3389 = vst.msk [vmem:[#allocation3 + $0x90] sm:$0xff] %vm3370, %v2996
    %3390 = vst.msk [vmem:[#allocation3 + $0x98] sm:$0xff] %vm3370, %v2999
    %3391 = vst.msk [vmem:[#allocation3 + $0xa0] sm:$0xff] %vm3370, %v3004
    %3392 = vst.msk [vmem:[#allocation3 + $0xa8] sm:$0xff] %vm3370, %v3007
    %3393 = vst.msk [vmem:[#allocation3 + $0xb0] sm:$0xff] %vm3370, %v3012
    %3394 = vst.msk [vmem:[#allocation3 + $0xb8] sm:$0xff] %vm3370, %v3015
    %3395 = vst.msk [vmem:[#allocation3 + $0xc0] sm:$0xff] %vm3370, %v3020
    %3396 = vst.msk [vmem:[#allocation3 + $0xc8] sm:$0xff] %vm3370, %v3023
    %3397 = vst.msk [vmem:[#allocation3 + $0xd0] sm:$0xff] %vm3370, %v3028
    %3398 = vst.msk [vmem:[#allocation3 + $0xd8] sm:$0xff] %vm3370, %v3031
    %3399 = vst.msk [vmem:[#allocation3 + $0xe0] sm:$0xff] %vm3370, %v3036
    %3400 = vst.msk [vmem:[#allocation3 + $0xe8] sm:$0xff] %vm3370, %v3039
    %3401 = vst.msk [vmem:[#allocation3 + $0xf0] sm:$0xff] %vm3370, %v3044
    %3402 = vst.msk [vmem:[#allocation3 + $0xf8] sm:$0xff] %vm3370, %v3047
    %3403 = vst.msk [vmem:[#allocation3 + $0x100] sm:$0xff] %vm3370, %v3052
    %3404 = vst.msk [vmem:[#allocation3 + $0x108] sm:$0xff] %vm3370, %v3055
    %3405 = vst.msk [vmem:[#allocation3 + $0x110] sm:$0xff] %vm3370, %v3060
    %3406 = vst.msk [vmem:[#allocation3 + $0x118] sm:$0xff] %vm3370, %v3063
    %3407 = vst.msk [vmem:[#allocation3 + $0x120] sm:$0xff] %vm3370, %v3068
    %3408 = vst.msk [vmem:[#allocation3 + $0x128] sm:$0xff] %vm3370, %v3071
    %3409 = vst.msk [vmem:[#allocation3 + $0x130] sm:$0xff] %vm3370, %v3076
    %3410 = vst.msk [vmem:[#allocation3 + $0x138] sm:$0xff] %vm3370, %v3079
    %3411 = vst.msk [vmem:[#allocation3 + $0x140] sm:$0xff] %vm3370, %v3084
    %3412 = vst.msk [vmem:[#allocation3 + $0x148] sm:$0xff] %vm3370, %v3087
    %3413 = vst.msk [vmem:[#allocation3 + $0x150] sm:$0xff] %vm3370, %v3092
    %3414 = vst.msk [vmem:[#allocation3 + $0x158] sm:$0xff] %vm3370, %v3095
    %3415 = vst.msk [vmem:[#allocation3 + $0x160] sm:$0xff] %vm3370, %v3100
    %3416 = vst.msk [vmem:[#allocation3 + $0x168] sm:$0xff] %vm3370, %v3103
    %3417 = vst.msk [vmem:[#allocation3 + $0x170] sm:$0xff] %vm3370, %v3108
    %3418 = vst.msk [vmem:[#allocation3 + $0x178] sm:$0xff] %vm3370, %v3111
    %3419 = vst.msk [vmem:[#allocation3 + $0x180] sm:$0xff] %vm3370, %v3116
    %3420 = vst.msk [vmem:[#allocation3 + $0x188] sm:$0xff] %vm3370, %v3119
    %3421 = vst.msk [vmem:[#allocation3 + $0x190] sm:$0xff] %vm3370, %v3124
    %3422 = vst.msk [vmem:[#allocation3 + $0x198] sm:$0xff] %vm3370, %v3127
    %3423 = vst.msk [vmem:[#allocation3 + $0x1a0] sm:$0xff] %vm3370, %v3132
    %3424 = vst.msk [vmem:[#allocation3 + $0x1a8] sm:$0xff] %vm3370, %v3135
    %3425 = vst.msk [vmem:[#allocation3 + $0x1b0] sm:$0xff] %vm3370, %v3140
    %3426 = vst.msk [vmem:[#allocation3 + $0x1b8] sm:$0xff] %vm3370, %v3143
    %3427 = vst.msk [vmem:[#allocation3 + $0x1c0] sm:$0xff] %vm3370, %v3148
    %3428 = vst.msk [vmem:[#allocation3 + $0x1c8] sm:$0xff] %vm3370, %v3151
    %3429 = vst.msk [vmem:[#allocation3 + $0x1d0] sm:$0xff] %vm3370, %v3156
    %3430 = vst.msk [vmem:[#allocation3 + $0x1d8] sm:$0xff] %vm3370, %v3159
    %3431 = vst.msk [vmem:[#allocation3 + $0x1e0] sm:$0xff] %vm3370, %v3164
    %3432 = vst.msk [vmem:[#allocation3 + $0x1e8] sm:$0xff] %vm3370, %v3167
    %3433 = vst.msk [vmem:[#allocation3 + $0x1f0] sm:$0xff] %vm3370, %v3172
    %3434 = vst.msk [vmem:[#allocation3 + $0x1f8] sm:$0xff] %vm3370, %v3175
    %3435 = vst.msk [vmem:[#allocation3 + $0x200] sm:$0xff] %vm3370, %v3180
    %3436 = vst.msk [vmem:[#allocation3 + $0x208] sm:$0xff] %vm3370, %v3183
    %3437 = vst.msk [vmem:[#allocation3 + $0x210] sm:$0xff] %vm3370, %v3188
    %3438 = vst.msk [vmem:[#allocation3 + $0x218] sm:$0xff] %vm3370, %v3191
    %3439 = vst.msk [vmem:[#allocation3 + $0x220] sm:$0xff] %vm3370, %v3196
    %3440 = vst.msk [vmem:[#allocation3 + $0x228] sm:$0xff] %vm3370, %v3199
    %3441 = vst.msk [vmem:[#allocation3 + $0x230] sm:$0xff] %vm3370, %v3204
    %3442 = vst.msk [vmem:[#allocation3 + $0x238] sm:$0xff] %vm3370, %v3207
    %3443 = vst.msk [vmem:[#allocation3 + $0x240] sm:$0xff] %vm3370, %v3212
    %3444 = vst.msk [vmem:[#allocation3 + $0x248] sm:$0xff] %vm3370, %v3215
    %3445 = vst.msk [vmem:[#allocation3 + $0x250] sm:$0xff] %vm3370, %v3220
    %3446 = vst.msk [vmem:[#allocation3 + $0x258] sm:$0xff] %vm3370, %v3223
    %3447 = vst.msk [vmem:[#allocation3 + $0x260] sm:$0xff] %vm3370, %v3228
    %3448 = vst.msk [vmem:[#allocation3 + $0x268] sm:$0xff] %vm3370, %v3231
    %3449 = vst.msk [vmem:[#allocation3 + $0x270] sm:$0xff] %vm3370, %v3236
    %3450 = vst.msk [vmem:[#allocation3 + $0x278] sm:$0xff] %vm3370, %v3239
    %3451 = vst.msk [vmem:[#allocation3 + $0x280] sm:$0xff] %vm3370, %v3244
    %3452 = vst.msk [vmem:[#allocation3 + $0x288] sm:$0xff] %vm3370, %v3247
    %3453 = vst.msk [vmem:[#allocation3 + $0x290] sm:$0xff] %vm3370, %v3252
    %3454 = vst.msk [vmem:[#allocation3 + $0x298] sm:$0xff] %vm3370, %v3255
    %3455 = vst.msk [vmem:[#allocation3 + $0x2a0] sm:$0xff] %vm3370, %v3260
    %3456 = vst.msk [vmem:[#allocation3 + $0x2a8] sm:$0xff] %vm3370, %v3263
    %3457 = vst.msk [vmem:[#allocation3 + $0x2b0] sm:$0xff] %vm3370, %v3268
    %3458 = vst.msk [vmem:[#allocation3 + $0x2b8] sm:$0xff] %vm3370, %v3271
    %3459 = vst.msk [vmem:[#allocation3 + $0x2c0] sm:$0xff] %vm3370, %v3276
    %3460 = vst.msk [vmem:[#allocation3 + $0x2c8] sm:$0xff] %vm3370, %v3279
    %3461 = vst.msk [vmem:[#allocation3 + $0x2d0] sm:$0xff] %vm3370, %v3284
    %3462 = vst.msk [vmem:[#allocation3 + $0x2d8] sm:$0xff] %vm3370, %v3287
    %3463 = vst.msk [vmem:[#allocation3 + $0x2e0] sm:$0xff] %vm3370, %v3292
    %3464 = vst.msk [vmem:[#allocation3 + $0x2e8] sm:$0xff] %vm3370, %v3295
    %3465 = vst.msk [vmem:[#allocation3 + $0x2f0] sm:$0xff] %vm3370, %v3300
    %3466 = vst.msk [vmem:[#allocation3 + $0x2f8] sm:$0xff] %vm3370, %v3303
    %3467 = vst.msk [vmem:[#allocation3 + $0x300] sm:$0xff] %vm3370, %v3308
    %3468 = vst.msk [vmem:[#allocation3 + $0x308] sm:$0xff] %vm3370, %v3311
    %3469 = vst.msk [vmem:[#allocation3 + $0x310] sm:$0xff] %vm3370, %v3316
    %3470 = vst.msk [vmem:[#allocation3 + $0x318] sm:$0xff] %vm3370, %v3319
    %3471 = vst.msk [vmem:[#allocation3 + $0x320] sm:$0xff] %vm3370, %v3324
    %3472 = vst.msk [vmem:[#allocation3 + $0x328] sm:$0xff] %vm3370, %v3327
    %3473 = vst.msk [vmem:[#allocation3 + $0x330] sm:$0xff] %vm3370, %v3332
    %3474 = vst.msk [vmem:[#allocation3 + $0x338] sm:$0xff] %vm3370, %v3335
    %3475 = vst.msk [vmem:[#allocation3 + $0x340] sm:$0xff] %vm3370, %v3340
    %3476 = vst.msk [vmem:[#allocation3 + $0x348] sm:$0xff] %vm3370, %v3343
    %3477 = vst.msk [vmem:[#allocation3 + $0x350] sm:$0xff] %vm3370, %v3348
    %3478 = vst.msk [vmem:[#allocation3 + $0x358] sm:$0xff] %vm3370, %v3351
    %3479 = vst.msk [vmem:[#allocation3 + $0x360] sm:$0xff] %vm3370, %v3356
    %3480 = vst.msk [vmem:[#allocation3 + $0x368] sm:$0xff] %vm3370, %v3359
    %3481 = vst.msk [vmem:[#allocation3 + $0x370] sm:$0xff] %vm3370, %v3364
    %3482 = vst.msk [vmem:[#allocation3 + $0x378] sm:$0xff] %vm3370, %v3367
    %v3483 = vld [vmem:[#allocation3] sm:$0xff]
    %v3484 = vld [vmem:[#allocation3 + $0x8] sm:$0xff]
    %v3485 = vld [vmem:[#allocation3 + $0x10] sm:$0xff]
    %v3486 = vld [vmem:[#allocation3 + $0x18] sm:$0xff]
    %v3487 = vld [vmem:[#allocation3 + $0x20] sm:$0xff]
    %v3488 = vld [vmem:[#allocation3 + $0x28] sm:$0xff]
    %v3489 = vld [vmem:[#allocation3 + $0x30] sm:$0xff]
    %v3490 = vld [vmem:[#allocation3 + $0x38] sm:$0xff]
    %v3491 = vld [vmem:[#allocation3 + $0x40] sm:$0xff]
    %v3492 = vld [vmem:[#allocation3 + $0x48] sm:$0xff]
    %v3493 = vld [vmem:[#allocation3 + $0x50] sm:$0xff]
    %v3494 = vld [vmem:[#allocation3 + $0x58] sm:$0xff]
    %v3495 = vld [vmem:[#allocation3 + $0x60] sm:$0xff]
    %v3496 = vld [vmem:[#allocation3 + $0x68] sm:$0xff]
    %v3497 = vld [vmem:[#allocation3 + $0x70] sm:$0xff]
    %v3498 = vld [vmem:[#allocation3 + $0x78] sm:$0xff]
    %v3499 = vld [vmem:[#allocation3 + $0x80] sm:$0xff]
    %v3500 = vld [vmem:[#allocation3 + $0x88] sm:$0xff]
    %v3501 = vld [vmem:[#allocation3 + $0x90] sm:$0xff]
    %v3502 = vld [vmem:[#allocation3 + $0x98] sm:$0xff]
    %v3503 = vld [vmem:[#allocation3 + $0xa0] sm:$0xff]
    %v3504 = vld [vmem:[#allocation3 + $0xa8] sm:$0xff]
    %v3505 = vld [vmem:[#allocation3 + $0xb0] sm:$0xff]
    %v3506 = vld [vmem:[#allocation3 + $0xb8] sm:$0xff]
    %v3507 = vld [vmem:[#allocation3 + $0xc0] sm:$0xff]
    %v3508 = vld [vmem:[#allocation3 + $0xc8] sm:$0xff]
    %v3509 = vld [vmem:[#allocation3 + $0xd0] sm:$0xff]
    %v3510 = vld [vmem:[#allocation3 + $0xd8] sm:$0xff]
    %v3511 = vld [vmem:[#allocation3 + $0xe0] sm:$0xff]
    %v3512 = vld [vmem:[#allocation3 + $0xe8] sm:$0xff]
    %v3513 = vld [vmem:[#allocation3 + $0xf0] sm:$0xff]
    %v3514 = vld [vmem:[#allocation3 + $0xf8] sm:$0xff]
    %v3515 = vld [vmem:[#allocation3 + $0x100] sm:$0xff]
    %v3516 = vld [vmem:[#allocation3 + $0x108] sm:$0xff]
    %v3517 = vld [vmem:[#allocation3 + $0x110] sm:$0xff]
    %v3518 = vld [vmem:[#allocation3 + $0x118] sm:$0xff]
    %v3519 = vld [vmem:[#allocation3 + $0x120] sm:$0xff]
    %v3520 = vld [vmem:[#allocation3 + $0x128] sm:$0xff]
    %v3521 = vld [vmem:[#allocation3 + $0x130] sm:$0xff]
    %v3522 = vld [vmem:[#allocation3 + $0x138] sm:$0xff]
    %v3523 = vld [vmem:[#allocation3 + $0x140] sm:$0xff]
    %v3524 = vld [vmem:[#allocation3 + $0x148] sm:$0xff]
    %v3525 = vld [vmem:[#allocation3 + $0x150] sm:$0xff]
    %v3526 = vld [vmem:[#allocation3 + $0x158] sm:$0xff]
    %v3527 = vld [vmem:[#allocation3 + $0x160] sm:$0xff]
    %v3528 = vld [vmem:[#allocation3 + $0x168] sm:$0xff]
    %v3529 = vld [vmem:[#allocation3 + $0x170] sm:$0xff]
    %v3530 = vld [vmem:[#allocation3 + $0x178] sm:$0xff]
    %v3531 = vld [vmem:[#allocation3 + $0x180] sm:$0xff]
    %v3532 = vld [vmem:[#allocation3 + $0x188] sm:$0xff]
    %v3533 = vld [vmem:[#allocation3 + $0x190] sm:$0xff]
    %v3534 = vld [vmem:[#allocation3 + $0x198] sm:$0xff]
    %v3535 = vld [vmem:[#allocation3 + $0x1a0] sm:$0xff]
    %v3536 = vld [vmem:[#allocation3 + $0x1a8] sm:$0xff]
    %v3537 = vld [vmem:[#allocation3 + $0x1b0] sm:$0xff]
    %v3538 = vld [vmem:[#allocation3 + $0x1b8] sm:$0xff]
    %v3539 = vld [vmem:[#allocation3 + $0x1c0] sm:$0xff]
    %v3540 = vld [vmem:[#allocation3 + $0x1c8] sm:$0xff]
    %v3541 = vld [vmem:[#allocation3 + $0x1d0] sm:$0xff]
    %v3542 = vld [vmem:[#allocation3 + $0x1d8] sm:$0xff]
    %v3543 = vld [vmem:[#allocation3 + $0x1e0] sm:$0xff]
    %v3544 = vld [vmem:[#allocation3 + $0x1e8] sm:$0xff]
    %v3545 = vld [vmem:[#allocation3 + $0x1f0] sm:$0xff]
    %v3546 = vld [vmem:[#allocation3 + $0x1f8] sm:$0xff]
    %v3547 = vld [vmem:[#allocation3 + $0x200] sm:$0xff]
    %v3548 = vld [vmem:[#allocation3 + $0x208] sm:$0xff]
    %v3549 = vld [vmem:[#allocation3 + $0x210] sm:$0xff]
    %v3550 = vld [vmem:[#allocation3 + $0x218] sm:$0xff]
    %v3551 = vld [vmem:[#allocation3 + $0x220] sm:$0xff]
    %v3552 = vld [vmem:[#allocation3 + $0x228] sm:$0xff]
    %v3553 = vld [vmem:[#allocation3 + $0x230] sm:$0xff]
    %v3554 = vld [vmem:[#allocation3 + $0x238] sm:$0xff]
    %v3555 = vld [vmem:[#allocation3 + $0x240] sm:$0xff]
    %v3556 = vld [vmem:[#allocation3 + $0x248] sm:$0xff]
    %v3557 = vld [vmem:[#allocation3 + $0x250] sm:$0xff]
    %v3558 = vld [vmem:[#allocation3 + $0x258] sm:$0xff]
    %v3559 = vld [vmem:[#allocation3 + $0x260] sm:$0xff]
    %v3560 = vld [vmem:[#allocation3 + $0x268] sm:$0xff]
    %v3561 = vld [vmem:[#allocation3 + $0x270] sm:$0xff]
    %v3562 = vld [vmem:[#allocation3 + $0x278] sm:$0xff]
    %v3563 = vld [vmem:[#allocation3 + $0x280] sm:$0xff]
    %v3564 = vld [vmem:[#allocation3 + $0x288] sm:$0xff]
    %v3565 = vld [vmem:[#allocation3 + $0x290] sm:$0xff]
    %v3566 = vld [vmem:[#allocation3 + $0x298] sm:$0xff]
    %v3567 = vld [vmem:[#allocation3 + $0x2a0] sm:$0xff]
    %v3568 = vld [vmem:[#allocation3 + $0x2a8] sm:$0xff]
    %v3569 = vld [vmem:[#allocation3 + $0x2b0] sm:$0xff]
    %v3570 = vld [vmem:[#allocation3 + $0x2b8] sm:$0xff]
    %v3571 = vld [vmem:[#allocation3 + $0x2c0] sm:$0xff]
    %v3572 = vld [vmem:[#allocation3 + $0x2c8] sm:$0xff]
    %v3573 = vld [vmem:[#allocation3 + $0x2d0] sm:$0xff]
    %v3574 = vld [vmem:[#allocation3 + $0x2d8] sm:$0xff]
    %v3575 = vld [vmem:[#allocation3 + $0x2e0] sm:$0xff]
    %v3576 = vld [vmem:[#allocation3 + $0x2e8] sm:$0xff]
    %v3577 = vld [vmem:[#allocation3 + $0x2f0] sm:$0xff]
    %v3578 = vld [vmem:[#allocation3 + $0x2f8] sm:$0xff]
    %v3579 = vld [vmem:[#allocation3 + $0x300] sm:$0xff]
    %v3580 = vld [vmem:[#allocation3 + $0x308] sm:$0xff]
    %v3581 = vld [vmem:[#allocation3 + $0x310] sm:$0xff]
    %v3582 = vld [vmem:[#allocation3 + $0x318] sm:$0xff]
    %v3583 = vld [vmem:[#allocation3 + $0x320] sm:$0xff]
    %v3584 = vld [vmem:[#allocation3 + $0x328] sm:$0xff]
    %v3585 = vld [vmem:[#allocation3 + $0x330] sm:$0xff]
    %v3586 = vld [vmem:[#allocation3 + $0x338] sm:$0xff]
    %v3587 = vld [vmem:[#allocation3 + $0x340] sm:$0xff]
    %v3588 = vld [vmem:[#allocation3 + $0x348] sm:$0xff]
    %v3589 = vld [vmem:[#allocation3 + $0x350] sm:$0xff]
    %v3590 = vld [vmem:[#allocation3 + $0x358] sm:$0xff]
    %3695 = vrot.lane.b32.xlu0 %v3487, 96
    %v3696 = vpop.permute.xlu0 %3695
    %3697 = vrot.lane.b32.xlu0 %v3488, 96
    %v3698 = vpop.permute.xlu0 %3697
    %3699 = vrot.lane.b32.xlu0 %v3489, 96
    %v3700 = vpop.permute.xlu0 %3699
    %3701 = vrot.lane.b32.xlu0 %v3490, 96
    %v3702 = vpop.permute.xlu0 %3701
    %3703 = vrot.lane.b32.xlu0 %v3491, 96
    %v3704 = vpop.permute.xlu0 %3703
    %3705 = vrot.lane.b32.xlu0 %v3492, 96
    %v3706 = vpop.permute.xlu0 %3705
    %3707 = vrot.lane.b32.xlu0 %v3493, 96
    %v3708 = vpop.permute.xlu0 %3707
    %3709 = vrot.lane.b32.xlu0 %v3494, 96
    %v3710 = vpop.permute.xlu0 %3709
    %3711 = vrot.lane.b32.xlu0 %v3495, 96
    %v3712 = vpop.permute.xlu0 %3711
    %3713 = vrot.lane.b32.xlu0 %v3496, 96
    %v3714 = vpop.permute.xlu0 %3713
    %3715 = vrot.lane.b32.xlu0 %v3497, 96
    %v3716 = vpop.permute.xlu0 %3715
    %3717 = vrot.lane.b32.xlu0 %v3498, 96
    %v3718 = vpop.permute.xlu0 %3717
    %3719 = vrot.lane.b32.xlu0 %v3499, 96
    %v3720 = vpop.permute.xlu0 %3719
    %3721 = vrot.lane.b32.xlu0 %v3500, 96
    %v3722 = vpop.permute.xlu0 %3721
    %3723 = vrot.lane.b32.xlu0 %v3501, 96
    %v3724 = vpop.permute.xlu0 %3723
    %3725 = vrot.lane.b32.xlu0 %v3502, 96
    %v3726 = vpop.permute.xlu0 %3725
    %3727 = vrot.lane.b32.xlu0 %v3503, 96
    %v3728 = vpop.permute.xlu0 %3727
    %3729 = vrot.lane.b32.xlu0 %v3504, 96
    %v3730 = vpop.permute.xlu0 %3729
    %3731 = vrot.lane.b32.xlu0 %v3505, 96
    %v3732 = vpop.permute.xlu0 %3731
    %3733 = vrot.lane.b32.xlu0 %v3506, 96
    %v3734 = vpop.permute.xlu0 %3733
    %3735 = vrot.lane.b32.xlu0 %v3507, 96
    %v3736 = vpop.permute.xlu0 %3735
    %3737 = vrot.lane.b32.xlu0 %v3508, 96
    %v3738 = vpop.permute.xlu0 %3737
    %3739 = vrot.lane.b32.xlu0 %v3509, 96
    %v3740 = vpop.permute.xlu0 %3739
    %3741 = vrot.lane.b32.xlu0 %v3510, 96
    %v3742 = vpop.permute.xlu0 %3741
    %3743 = vrot.lane.b32.xlu0 %v3511, 96
    %v3744 = vpop.permute.xlu0 %3743
    %3745 = vrot.lane.b32.xlu0 %v3512, 96
    %v3746 = vpop.permute.xlu0 %3745
    %3747 = vrot.lane.b32.xlu0 %v3513, 96
    %v3748 = vpop.permute.xlu0 %3747
    %3749 = vrot.lane.b32.xlu0 %v3514, 96
    %v3750 = vpop.permute.xlu0 %3749
    %3751 = vrot.lane.b32.xlu0 %v3515, 96
    %v3752 = vpop.permute.xlu0 %3751
    %3753 = vrot.lane.b32.xlu0 %v3516, 96
    %v3754 = vpop.permute.xlu0 %3753
    %3755 = vrot.lane.b32.xlu0 %v3517, 96
    %v3756 = vpop.permute.xlu0 %3755
    %3757 = vrot.lane.b32.xlu0 %v3518, 96
    %v3758 = vpop.permute.xlu0 %3757
    %3759 = vrot.lane.b32.xlu0 %v3519, 96
    %v3760 = vpop.permute.xlu0 %3759
    %3761 = vrot.lane.b32.xlu0 %v3520, 96
    %v3762 = vpop.permute.xlu0 %3761
    %3763 = vrot.lane.b32.xlu0 %v3521, 96
    %v3764 = vpop.permute.xlu0 %3763
    %3765 = vrot.lane.b32.xlu0 %v3522, 96
    %v3766 = vpop.permute.xlu0 %3765
    %3767 = vrot.lane.b32.xlu0 %v3523, 96
    %v3768 = vpop.permute.xlu0 %3767
    %3769 = vrot.lane.b32.xlu0 %v3524, 96
    %v3770 = vpop.permute.xlu0 %3769
    %3771 = vrot.lane.b32.xlu0 %v3525, 96
    %v3772 = vpop.permute.xlu0 %3771
    %3773 = vrot.lane.b32.xlu0 %v3526, 96
    %v3774 = vpop.permute.xlu0 %3773
    %3775 = vrot.lane.b32.xlu0 %v3527, 96
    %v3776 = vpop.permute.xlu0 %3775
    %3777 = vrot.lane.b32.xlu0 %v3528, 96
    %v3778 = vpop.permute.xlu0 %3777
    %3779 = vrot.lane.b32.xlu0 %v3529, 96
    %v3780 = vpop.permute.xlu0 %3779
    %3781 = vrot.lane.b32.xlu0 %v3530, 96
    %v3782 = vpop.permute.xlu0 %3781
    %3783 = vrot.lane.b32.xlu0 %v3531, 96
    %v3784 = vpop.permute.xlu0 %3783
    %3785 = vrot.lane.b32.xlu0 %v3532, 96
    %v3786 = vpop.permute.xlu0 %3785
    %3787 = vrot.lane.b32.xlu0 %v3533, 96
    %v3788 = vpop.permute.xlu0 %3787
    %3789 = vrot.lane.b32.xlu0 %v3534, 96
    %v3790 = vpop.permute.xlu0 %3789
    %3791 = vrot.lane.b32.xlu0 %v3535, 96
    %v3792 = vpop.permute.xlu0 %3791
    %3793 = vrot.lane.b32.xlu0 %v3536, 96
    %v3794 = vpop.permute.xlu0 %3793
    %3795 = vrot.lane.b32.xlu0 %v3537, 96
    %v3796 = vpop.permute.xlu0 %3795
    %3797 = vrot.lane.b32.xlu0 %v3538, 96
    %v3798 = vpop.permute.xlu0 %3797
    %3799 = vrot.lane.b32.xlu0 %v3539, 96
    %v3800 = vpop.permute.xlu0 %3799
    %3801 = vrot.lane.b32.xlu0 %v3540, 96
    %v3802 = vpop.permute.xlu0 %3801
    %3803 = vrot.lane.b32.xlu0 %v3541, 96
    %v3804 = vpop.permute.xlu0 %3803
    %3805 = vrot.lane.b32.xlu0 %v3542, 96
    %v3806 = vpop.permute.xlu0 %3805
    %3807 = vrot.lane.b32.xlu0 %v3543, 96
    %v3808 = vpop.permute.xlu0 %3807
    %3809 = vrot.lane.b32.xlu0 %v3544, 96
    %v3810 = vpop.permute.xlu0 %3809
    %3811 = vrot.lane.b32.xlu0 %v3545, 96
    %v3812 = vpop.permute.xlu0 %3811
    %3813 = vrot.lane.b32.xlu0 %v3546, 96
    %v3814 = vpop.permute.xlu0 %3813
    %3815 = vrot.lane.b32.xlu0 %v3547, 96
    %v3816 = vpop.permute.xlu0 %3815
    %3817 = vrot.lane.b32.xlu0 %v3548, 96
    %v3818 = vpop.permute.xlu0 %3817
    %3819 = vrot.lane.b32.xlu0 %v3549, 96
    %v3820 = vpop.permute.xlu0 %3819
    %3821 = vrot.lane.b32.xlu0 %v3550, 96
    %v3822 = vpop.permute.xlu0 %3821
    %3823 = vrot.lane.b32.xlu0 %v3551, 96
    %v3824 = vpop.permute.xlu0 %3823
    %3825 = vrot.lane.b32.xlu0 %v3552, 96
    %v3826 = vpop.permute.xlu0 %3825
    %3827 = vrot.lane.b32.xlu0 %v3553, 96
    %v3828 = vpop.permute.xlu0 %3827
    %3829 = vrot.lane.b32.xlu0 %v3554, 96
    %v3830 = vpop.permute.xlu0 %3829
    %3831 = vrot.lane.b32.xlu0 %v3555, 96
    %v3832 = vpop.permute.xlu0 %3831
    %3833 = vrot.lane.b32.xlu0 %v3556, 96
    %v3834 = vpop.permute.xlu0 %3833
    %3835 = vrot.lane.b32.xlu0 %v3557, 96
    %v3836 = vpop.permute.xlu0 %3835
    %3837 = vrot.lane.b32.xlu0 %v3558, 96
    %v3838 = vpop.permute.xlu0 %3837
    %3839 = vrot.lane.b32.xlu0 %v3559, 96
    %v3840 = vpop.permute.xlu0 %3839
    %3841 = vrot.lane.b32.xlu0 %v3560, 96
    %v3842 = vpop.permute.xlu0 %3841
    %3843 = vrot.lane.b32.xlu0 %v3561, 96
    %v3844 = vpop.permute.xlu0 %3843
    %3845 = vrot.lane.b32.xlu0 %v3562, 96
    %v3846 = vpop.permute.xlu0 %3845
    %3847 = vrot.lane.b32.xlu0 %v3563, 96
    %v3848 = vpop.permute.xlu0 %3847
    %3849 = vrot.lane.b32.xlu0 %v3564, 96
    %v3850 = vpop.permute.xlu0 %3849
    %3851 = vrot.lane.b32.xlu0 %v3565, 96
    %v3852 = vpop.permute.xlu0 %3851
    %3853 = vrot.lane.b32.xlu0 %v3566, 96
    %v3854 = vpop.permute.xlu0 %3853
    %3855 = vrot.lane.b32.xlu0 %v3567, 96
    %v3856 = vpop.permute.xlu0 %3855
    %3857 = vrot.lane.b32.xlu0 %v3568, 96
    %v3858 = vpop.permute.xlu0 %3857
    %3859 = vrot.lane.b32.xlu0 %v3569, 96
    %v3860 = vpop.permute.xlu0 %3859
    %3861 = vrot.lane.b32.xlu0 %v3570, 96
    %v3862 = vpop.permute.xlu0 %3861
    %3863 = vrot.lane.b32.xlu0 %v3571, 96
    %v3864 = vpop.permute.xlu0 %3863
    %3865 = vrot.lane.b32.xlu0 %v3572, 96
    %v3866 = vpop.permute.xlu0 %3865
    %3867 = vrot.lane.b32.xlu0 %v3573, 96
    %v3868 = vpop.permute.xlu0 %3867
    %3869 = vrot.lane.b32.xlu0 %v3574, 96
    %v3870 = vpop.permute.xlu0 %3869
    %3871 = vrot.lane.b32.xlu0 %v3575, 96
    %v3872 = vpop.permute.xlu0 %3871
    %3873 = vrot.lane.b32.xlu0 %v3576, 96
    %v3874 = vpop.permute.xlu0 %3873
    %3875 = vrot.lane.b32.xlu0 %v3577, 96
    %v3876 = vpop.permute.xlu0 %3875
    %3877 = vrot.lane.b32.xlu0 %v3578, 96
    %v3878 = vpop.permute.xlu0 %3877
    %3879 = vrot.lane.b32.xlu0 %v3579, 96
    %v3880 = vpop.permute.xlu0 %3879
    %3881 = vrot.lane.b32.xlu0 %v3580, 96
    %v3882 = vpop.permute.xlu0 %3881
    %3883 = vrot.lane.b32.xlu0 %v3581, 96
    %v3884 = vpop.permute.xlu0 %3883
    %3885 = vrot.lane.b32.xlu0 %v3582, 96
    %v3886 = vpop.permute.xlu0 %3885
    %3887 = vrot.lane.b32.xlu0 %v3583, 96
    %v3888 = vpop.permute.xlu0 %3887
    %3889 = vrot.lane.b32.xlu0 %v3584, 96
    %v3890 = vpop.permute.xlu0 %3889
    %3891 = vrot.lane.b32.xlu0 %v3585, 96
    %v3892 = vpop.permute.xlu0 %3891
    %3893 = vrot.lane.b32.xlu0 %v3586, 96
    %v3894 = vpop.permute.xlu0 %3893
    %3895 = vrot.lane.b32.xlu0 %v3587, 96
    %v3896 = vpop.permute.xlu0 %3895
    %3897 = vrot.lane.b32.xlu0 %v3588, 96
    %v3898 = vpop.permute.xlu0 %3897
    %3899 = vrot.lane.b32.xlu0 %v3589, 96
    %v3900 = vpop.permute.xlu0 %3899
    %3901 = vrot.lane.b32.xlu0 %v3590, 96
    %v3902 = vpop.permute.xlu0 %3901
    %v4007 = vadd.f32 %v3483, %v3696
    %v4008 = vadd.f32 %v3484, %v3698
    %v4009 = vadd.f32 %v3485, %v3700
    %v4010 = vadd.f32 %v3486, %v3702
    %v4011 = vadd.f32 %v3487, %v3704
    %v4012 = vadd.f32 %v3488, %v3706
    %v4013 = vadd.f32 %v3489, %v3708
    %v4014 = vadd.f32 %v3490, %v3710
    %v4015 = vadd.f32 %v3491, %v3712
    %v4016 = vadd.f32 %v3492, %v3714
    %v4017 = vadd.f32 %v3493, %v3716
    %v4018 = vadd.f32 %v3494, %v3718
    %v4019 = vadd.f32 %v3495, %v3720
    %v4020 = vadd.f32 %v3496, %v3722
    %v4021 = vadd.f32 %v3497, %v3724
    %v4022 = vadd.f32 %v3498, %v3726
    %v4023 = vadd.f32 %v3499, %v3728
    %v4024 = vadd.f32 %v3500, %v3730
    %v4025 = vadd.f32 %v3501, %v3732
    %v4026 = vadd.f32 %v3502, %v3734
    %v4027 = vadd.f32 %v3503, %v3736
    %v4028 = vadd.f32 %v3504, %v3738
    %v4029 = vadd.f32 %v3505, %v3740
    %v4030 = vadd.f32 %v3506, %v3742
    %v4031 = vadd.f32 %v3507, %v3744
    %v4032 = vadd.f32 %v3508, %v3746
    %v4033 = vadd.f32 %v3509, %v3748
    %v4034 = vadd.f32 %v3510, %v3750
    %v4035 = vadd.f32 %v3511, %v3752
    %v4036 = vadd.f32 %v3512, %v3754
    %v4037 = vadd.f32 %v3513, %v3756
    %v4038 = vadd.f32 %v3514, %v3758
    %v4039 = vadd.f32 %v3515, %v3760
    %v4040 = vadd.f32 %v3516, %v3762
    %v4041 = vadd.f32 %v3517, %v3764
    %v4042 = vadd.f32 %v3518, %v3766
    %v4043 = vadd.f32 %v3519, %v3768
    %v4044 = vadd.f32 %v3520, %v3770
    %v4045 = vadd.f32 %v3521, %v3772
    %v4046 = vadd.f32 %v3522, %v3774
    %v4047 = vadd.f32 %v3523, %v3776
    %v4048 = vadd.f32 %v3524, %v3778
    %v4049 = vadd.f32 %v3525, %v3780
    %v4050 = vadd.f32 %v3526, %v3782
    %v4051 = vadd.f32 %v3527, %v3784
    %v4052 = vadd.f32 %v3528, %v3786
    %v4053 = vadd.f32 %v3529, %v3788
    %v4054 = vadd.f32 %v3530, %v3790
    %v4055 = vadd.f32 %v3531, %v3792
    %v4056 = vadd.f32 %v3532, %v3794
    %v4057 = vadd.f32 %v3533, %v3796
    %v4058 = vadd.f32 %v3534, %v3798
    %v4059 = vadd.f32 %v3535, %v3800
    %v4060 = vadd.f32 %v3536, %v3802
    %v4061 = vadd.f32 %v3537, %v3804
    %v4062 = vadd.f32 %v3538, %v3806
    %v4063 = vadd.f32 %v3539, %v3808
    %v4064 = vadd.f32 %v3540, %v3810
    %v4065 = vadd.f32 %v3541, %v3812
    %v4066 = vadd.f32 %v3542, %v3814
    %v4067 = vadd.f32 %v3543, %v3816
    %v4068 = vadd.f32 %v3544, %v3818
    %v4069 = vadd.f32 %v3545, %v3820
    %v4070 = vadd.f32 %v3546, %v3822
    %v4071 = vadd.f32 %v3547, %v3824
    %v4072 = vadd.f32 %v3548, %v3826
    %v4073 = vadd.f32 %v3549, %v3828
    %v4074 = vadd.f32 %v3550, %v3830
    %v4075 = vadd.f32 %v3551, %v3832
    %v4076 = vadd.f32 %v3552, %v3834
    %v4077 = vadd.f32 %v3553, %v3836
    %v4078 = vadd.f32 %v3554, %v3838
    %v4079 = vadd.f32 %v3555, %v3840
    %v4080 = vadd.f32 %v3556, %v3842
    %v4081 = vadd.f32 %v3557, %v3844
    %v4082 = vadd.f32 %v3558, %v3846
    %v4083 = vadd.f32 %v3559, %v3848
    %v4084 = vadd.f32 %v3560, %v3850
    %v4085 = vadd.f32 %v3561, %v3852
    %v4086 = vadd.f32 %v3562, %v3854
    %v4087 = vadd.f32 %v3563, %v3856
    %v4088 = vadd.f32 %v3564, %v3858
    %v4089 = vadd.f32 %v3565, %v3860
    %v4090 = vadd.f32 %v3566, %v3862
    %v4091 = vadd.f32 %v3567, %v3864
    %v4092 = vadd.f32 %v3568, %v3866
    %v4093 = vadd.f32 %v3569, %v3868
    %v4094 = vadd.f32 %v3570, %v3870
    %v4095 = vadd.f32 %v3571, %v3872
    %v4096 = vadd.f32 %v3572, %v3874
    %v4097 = vadd.f32 %v3573, %v3876
    %v4098 = vadd.f32 %v3574, %v3878
    %v4099 = vadd.f32 %v3575, %v3880
    %v4100 = vadd.f32 %v3576, %v3882
    %v4101 = vadd.f32 %v3577, %v3884
    %v4102 = vadd.f32 %v3578, %v3886
    %v4103 = vadd.f32 %v3579, %v3888
    %v4104 = vadd.f32 %v3580, %v3890
    %v4105 = vadd.f32 %v3581, %v3892
    %v4106 = vadd.f32 %v3582, %v3894
    %v4107 = vadd.f32 %v3583, %v3896
    %v4108 = vadd.f32 %v3584, %v3898
    %v4109 = vadd.f32 %v3585, %v3900
    %v4110 = vadd.f32 %v3586, %v3902
    %v4111 = vld [vmem:[#allocation3 + $0x360] sm:$0xff]
    %v4112 = vld [vmem:[#allocation3 + $0x368] sm:$0xff]
    %v4113 = vld [vmem:[#allocation3 + $0x370] sm:$0xff]
    %v4114 = vld [vmem:[#allocation3 + $0x378] sm:$0xff]
    %4119 = vrot.lane.b32.xlu0 %v3491, 64
    %v4120 = vpop.permute.xlu0 %4119
    %4121 = vrot.lane.b32.xlu0 %v3492, 64
    %v4122 = vpop.permute.xlu0 %4121
    %4123 = vrot.lane.b32.xlu0 %v3493, 64
    %v4124 = vpop.permute.xlu0 %4123
    %4125 = vrot.lane.b32.xlu0 %v3494, 64
    %v4126 = vpop.permute.xlu0 %4125
    %4127 = vrot.lane.b32.xlu0 %v3495, 64
    %v4128 = vpop.permute.xlu0 %4127
    %4129 = vrot.lane.b32.xlu0 %v3496, 64
    %v4130 = vpop.permute.xlu0 %4129
    %4131 = vrot.lane.b32.xlu0 %v3497, 64
    %v4132 = vpop.permute.xlu0 %4131
    %4133 = vrot.lane.b32.xlu0 %v3498, 64
    %v4134 = vpop.permute.xlu0 %4133
    %4135 = vrot.lane.b32.xlu0 %v3499, 64
    %v4136 = vpop.permute.xlu0 %4135
    %4137 = vrot.lane.b32.xlu0 %v3500, 64
    %v4138 = vpop.permute.xlu0 %4137
    %4139 = vrot.lane.b32.xlu0 %v3501, 64
    %v4140 = vpop.permute.xlu0 %4139
    %4141 = vrot.lane.b32.xlu0 %v3502, 64
    %v4142 = vpop.permute.xlu0 %4141
    %4143 = vrot.lane.b32.xlu0 %v3503, 64
    %v4144 = vpop.permute.xlu0 %4143
    %4145 = vrot.lane.b32.xlu0 %v3504, 64
    %v4146 = vpop.permute.xlu0 %4145
    %4147 = vrot.lane.b32.xlu0 %v3505, 64
    %v4148 = vpop.permute.xlu0 %4147
    %4149 = vrot.lane.b32.xlu0 %v3506, 64
    %v4150 = vpop.permute.xlu0 %4149
    %4151 = vrot.lane.b32.xlu0 %v3507, 64
    %v4152 = vpop.permute.xlu0 %4151
    %4153 = vrot.lane.b32.xlu0 %v3508, 64
    %v4154 = vpop.permute.xlu0 %4153
    %4155 = vrot.lane.b32.xlu0 %v3509, 64
    %v4156 = vpop.permute.xlu0 %4155
    %4157 = vrot.lane.b32.xlu0 %v3510, 64
    %v4158 = vpop.permute.xlu0 %4157
    %4159 = vrot.lane.b32.xlu0 %v3511, 64
    %v4160 = vpop.permute.xlu0 %4159
    %4161 = vrot.lane.b32.xlu0 %v3512, 64
    %v4162 = vpop.permute.xlu0 %4161
    %4163 = vrot.lane.b32.xlu0 %v3513, 64
    %v4164 = vpop.permute.xlu0 %4163
    %4165 = vrot.lane.b32.xlu0 %v3514, 64
    %v4166 = vpop.permute.xlu0 %4165
    %4167 = vrot.lane.b32.xlu0 %v3515, 64
    %v4168 = vpop.permute.xlu0 %4167
    %4169 = vrot.lane.b32.xlu0 %v3516, 64
    %v4170 = vpop.permute.xlu0 %4169
    %4171 = vrot.lane.b32.xlu0 %v3517, 64
    %v4172 = vpop.permute.xlu0 %4171
    %4173 = vrot.lane.b32.xlu0 %v3518, 64
    %v4174 = vpop.permute.xlu0 %4173
    %4175 = vrot.lane.b32.xlu0 %v3519, 64
    %v4176 = vpop.permute.xlu0 %4175
    %4177 = vrot.lane.b32.xlu0 %v3520, 64
    %v4178 = vpop.permute.xlu0 %4177
    %4179 = vrot.lane.b32.xlu0 %v3521, 64
    %v4180 = vpop.permute.xlu0 %4179
    %4181 = vrot.lane.b32.xlu0 %v3522, 64
    %v4182 = vpop.permute.xlu0 %4181
    %4183 = vrot.lane.b32.xlu0 %v3523, 64
    %v4184 = vpop.permute.xlu0 %4183
    %4185 = vrot.lane.b32.xlu0 %v3524, 64
    %v4186 = vpop.permute.xlu0 %4185
    %4187 = vrot.lane.b32.xlu0 %v3525, 64
    %v4188 = vpop.permute.xlu0 %4187
    %4189 = vrot.lane.b32.xlu0 %v3526, 64
    %v4190 = vpop.permute.xlu0 %4189
    %4191 = vrot.lane.b32.xlu0 %v3527, 64
    %v4192 = vpop.permute.xlu0 %4191
    %4193 = vrot.lane.b32.xlu0 %v3528, 64
    %v4194 = vpop.permute.xlu0 %4193
    %4195 = vrot.lane.b32.xlu0 %v3529, 64
    %v4196 = vpop.permute.xlu0 %4195
    %4197 = vrot.lane.b32.xlu0 %v3530, 64
    %v4198 = vpop.permute.xlu0 %4197
    %4199 = vrot.lane.b32.xlu0 %v3531, 64
    %v4200 = vpop.permute.xlu0 %4199
    %4201 = vrot.lane.b32.xlu0 %v3532, 64
    %v4202 = vpop.permute.xlu0 %4201
    %4203 = vrot.lane.b32.xlu0 %v3533, 64
    %v4204 = vpop.permute.xlu0 %4203
    %4205 = vrot.lane.b32.xlu0 %v3534, 64
    %v4206 = vpop.permute.xlu0 %4205
    %4207 = vrot.lane.b32.xlu0 %v3535, 64
    %v4208 = vpop.permute.xlu0 %4207
    %4209 = vrot.lane.b32.xlu0 %v3536, 64
    %v4210 = vpop.permute.xlu0 %4209
    %4211 = vrot.lane.b32.xlu0 %v3537, 64
    %v4212 = vpop.permute.xlu0 %4211
    %4213 = vrot.lane.b32.xlu0 %v3538, 64
    %v4214 = vpop.permute.xlu0 %4213
    %4215 = vrot.lane.b32.xlu0 %v3539, 64
    %v4216 = vpop.permute.xlu0 %4215
    %4217 = vrot.lane.b32.xlu0 %v3540, 64
    %v4218 = vpop.permute.xlu0 %4217
    %4219 = vrot.lane.b32.xlu0 %v3541, 64
    %v4220 = vpop.permute.xlu0 %4219
    %4221 = vrot.lane.b32.xlu0 %v3542, 64
    %v4222 = vpop.permute.xlu0 %4221
    %4223 = vrot.lane.b32.xlu0 %v3543, 64
    %v4224 = vpop.permute.xlu0 %4223
    %4225 = vrot.lane.b32.xlu0 %v3544, 64
    %v4226 = vpop.permute.xlu0 %4225
    %4227 = vrot.lane.b32.xlu0 %v3545, 64
    %v4228 = vpop.permute.xlu0 %4227
    %4229 = vrot.lane.b32.xlu0 %v3546, 64
    %v4230 = vpop.permute.xlu0 %4229
    %4231 = vrot.lane.b32.xlu0 %v3547, 64
    %v4232 = vpop.permute.xlu0 %4231
    %4233 = vrot.lane.b32.xlu0 %v3548, 64
    %v4234 = vpop.permute.xlu0 %4233
    %4235 = vrot.lane.b32.xlu0 %v3549, 64
    %v4236 = vpop.permute.xlu0 %4235
    %4237 = vrot.lane.b32.xlu0 %v3550, 64
    %v4238 = vpop.permute.xlu0 %4237
    %4239 = vrot.lane.b32.xlu0 %v3551, 64
    %v4240 = vpop.permute.xlu0 %4239
    %4241 = vrot.lane.b32.xlu0 %v3552, 64
    %v4242 = vpop.permute.xlu0 %4241
    %4243 = vrot.lane.b32.xlu0 %v3553, 64
    %v4244 = vpop.permute.xlu0 %4243
    %4245 = vrot.lane.b32.xlu0 %v3554, 64
    %v4246 = vpop.permute.xlu0 %4245
    %4247 = vrot.lane.b32.xlu0 %v3555, 64
    %v4248 = vpop.permute.xlu0 %4247
    %4249 = vrot.lane.b32.xlu0 %v3556, 64
    %v4250 = vpop.permute.xlu0 %4249
    %4251 = vrot.lane.b32.xlu0 %v3557, 64
    %v4252 = vpop.permute.xlu0 %4251
    %4253 = vrot.lane.b32.xlu0 %v3558, 64
    %v4254 = vpop.permute.xlu0 %4253
    %4255 = vrot.lane.b32.xlu0 %v3559, 64
    %v4256 = vpop.permute.xlu0 %4255
    %4257 = vrot.lane.b32.xlu0 %v3560, 64
    %v4258 = vpop.permute.xlu0 %4257
    %4259 = vrot.lane.b32.xlu0 %v3561, 64
    %v4260 = vpop.permute.xlu0 %4259
    %4261 = vrot.lane.b32.xlu0 %v3562, 64
    %v4262 = vpop.permute.xlu0 %4261
    %4263 = vrot.lane.b32.xlu0 %v3563, 64
    %v4264 = vpop.permute.xlu0 %4263
    %4265 = vrot.lane.b32.xlu0 %v3564, 64
    %v4266 = vpop.permute.xlu0 %4265
    %4267 = vrot.lane.b32.xlu0 %v3565, 64
    %v4268 = vpop.permute.xlu0 %4267
    %4269 = vrot.lane.b32.xlu0 %v3566, 64
    %v4270 = vpop.permute.xlu0 %4269
    %4271 = vrot.lane.b32.xlu0 %v3567, 64
    %v4272 = vpop.permute.xlu0 %4271
    %4273 = vrot.lane.b32.xlu0 %v3568, 64
    %v4274 = vpop.permute.xlu0 %4273
    %4275 = vrot.lane.b32.xlu0 %v3569, 64
    %v4276 = vpop.permute.xlu0 %4275
    %4277 = vrot.lane.b32.xlu0 %v3570, 64
    %v4278 = vpop.permute.xlu0 %4277
    %4279 = vrot.lane.b32.xlu0 %v3571, 64
    %v4280 = vpop.permute.xlu0 %4279
    %4281 = vrot.lane.b32.xlu0 %v3572, 64
    %v4282 = vpop.permute.xlu0 %4281
    %4283 = vrot.lane.b32.xlu0 %v3573, 64
    %v4284 = vpop.permute.xlu0 %4283
    %4285 = vrot.lane.b32.xlu0 %v3574, 64
    %v4286 = vpop.permute.xlu0 %4285
    %4287 = vrot.lane.b32.xlu0 %v3575, 64
    %v4288 = vpop.permute.xlu0 %4287
    %4289 = vrot.lane.b32.xlu0 %v3576, 64
    %v4290 = vpop.permute.xlu0 %4289
    %4291 = vrot.lane.b32.xlu0 %v3577, 64
    %v4292 = vpop.permute.xlu0 %4291
    %4293 = vrot.lane.b32.xlu0 %v3578, 64
    %v4294 = vpop.permute.xlu0 %4293
    %4295 = vrot.lane.b32.xlu0 %v3579, 64
    %v4296 = vpop.permute.xlu0 %4295
    %4297 = vrot.lane.b32.xlu0 %v3580, 64
    %v4298 = vpop.permute.xlu0 %4297
    %4299 = vrot.lane.b32.xlu0 %v3581, 64
    %v4300 = vpop.permute.xlu0 %4299
    %4301 = vrot.lane.b32.xlu0 %v3582, 64
    %v4302 = vpop.permute.xlu0 %4301
    %4303 = vrot.lane.b32.xlu0 %v3583, 64
    %v4304 = vpop.permute.xlu0 %4303
    %4305 = vrot.lane.b32.xlu0 %v3584, 64
    %v4306 = vpop.permute.xlu0 %4305
    %4307 = vrot.lane.b32.xlu0 %v3585, 64
    %v4308 = vpop.permute.xlu0 %4307
    %4309 = vrot.lane.b32.xlu0 %v3586, 64
    %v4310 = vpop.permute.xlu0 %4309
    %4311 = vrot.lane.b32.xlu0 %v3587, 64
    %v4312 = vpop.permute.xlu0 %4311
    %4313 = vrot.lane.b32.xlu0 %v3588, 64
    %v4314 = vpop.permute.xlu0 %4313
    %4315 = vrot.lane.b32.xlu0 %v3589, 64
    %v4316 = vpop.permute.xlu0 %4315
    %4317 = vrot.lane.b32.xlu0 %v3590, 64
    %v4318 = vpop.permute.xlu0 %4317
    %4319 = vrot.lane.b32.xlu0 %v4111, 64
    %v4320 = vpop.permute.xlu0 %4319
    %4321 = vrot.lane.b32.xlu0 %v4112, 64
    %v4322 = vpop.permute.xlu0 %4321
    %4323 = vrot.lane.b32.xlu0 %v4113, 64
    %v4324 = vpop.permute.xlu0 %4323
    %4325 = vrot.lane.b32.xlu0 %v4114, 64
    %v4326 = vpop.permute.xlu0 %4325
    %v4431 = vadd.f32 %v4007, %v4120
    %v4432 = vadd.f32 %v4008, %v4122
    %v4433 = vadd.f32 %v4009, %v4124
    %v4434 = vadd.f32 %v4010, %v4126
    %v4435 = vadd.f32 %v4011, %v4128
    %v4436 = vadd.f32 %v4012, %v4130
    %v4437 = vadd.f32 %v4013, %v4132
    %v4438 = vadd.f32 %v4014, %v4134
    %v4439 = vadd.f32 %v4015, %v4136
    %v4440 = vadd.f32 %v4016, %v4138
    %v4441 = vadd.f32 %v4017, %v4140
    %v4442 = vadd.f32 %v4018, %v4142
    %v4443 = vadd.f32 %v4019, %v4144
    %v4444 = vadd.f32 %v4020, %v4146
    %v4445 = vadd.f32 %v4021, %v4148
    %v4446 = vadd.f32 %v4022, %v4150
    %v4447 = vadd.f32 %v4023, %v4152
    %v4448 = vadd.f32 %v4024, %v4154
    %v4449 = vadd.f32 %v4025, %v4156
    %v4450 = vadd.f32 %v4026, %v4158
    %v4451 = vadd.f32 %v4027, %v4160
    %v4452 = vadd.f32 %v4028, %v4162
    %v4453 = vadd.f32 %v4029, %v4164
    %v4454 = vadd.f32 %v4030, %v4166
    %v4455 = vadd.f32 %v4031, %v4168
    %v4456 = vadd.f32 %v4032, %v4170
    %v4457 = vadd.f32 %v4033, %v4172
    %v4458 = vadd.f32 %v4034, %v4174
    %v4459 = vadd.f32 %v4035, %v4176
    %v4460 = vadd.f32 %v4036, %v4178
    %v4461 = vadd.f32 %v4037, %v4180
    %v4462 = vadd.f32 %v4038, %v4182
    %v4463 = vadd.f32 %v4039, %v4184
    %v4464 = vadd.f32 %v4040, %v4186
    %v4465 = vadd.f32 %v4041, %v4188
    %v4466 = vadd.f32 %v4042, %v4190
    %v4467 = vadd.f32 %v4043, %v4192
    %v4468 = vadd.f32 %v4044, %v4194
    %v4469 = vadd.f32 %v4045, %v4196
    %v4470 = vadd.f32 %v4046, %v4198
    %v4471 = vadd.f32 %v4047, %v4200
    %v4472 = vadd.f32 %v4048, %v4202
    %v4473 = vadd.f32 %v4049, %v4204
    %v4474 = vadd.f32 %v4050, %v4206
    %v4475 = vadd.f32 %v4051, %v4208
    %v4476 = vadd.f32 %v4052, %v4210
    %v4477 = vadd.f32 %v4053, %v4212
    %v4478 = vadd.f32 %v4054, %v4214
    %v4479 = vadd.f32 %v4055, %v4216
    %v4480 = vadd.f32 %v4056, %v4218
    %v4481 = vadd.f32 %v4057, %v4220
    %v4482 = vadd.f32 %v4058, %v4222
    %v4483 = vadd.f32 %v4059, %v4224
    %v4484 = vadd.f32 %v4060, %v4226
    %v4485 = vadd.f32 %v4061, %v4228
    %v4486 = vadd.f32 %v4062, %v4230
    %v4487 = vadd.f32 %v4063, %v4232
    %v4488 = vadd.f32 %v4064, %v4234
    %v4489 = vadd.f32 %v4065, %v4236
    %v4490 = vadd.f32 %v4066, %v4238
    %v4491 = vadd.f32 %v4067, %v4240
    %v4492 = vadd.f32 %v4068, %v4242
    %v4493 = vadd.f32 %v4069, %v4244
    %v4494 = vadd.f32 %v4070, %v4246
    %v4495 = vadd.f32 %v4071, %v4248
    %v4496 = vadd.f32 %v4072, %v4250
    %v4497 = vadd.f32 %v4073, %v4252
    %v4498 = vadd.f32 %v4074, %v4254
    %v4499 = vadd.f32 %v4075, %v4256
    %v4500 = vadd.f32 %v4076, %v4258
    %v4501 = vadd.f32 %v4077, %v4260
    %v4502 = vadd.f32 %v4078, %v4262
    %v4503 = vadd.f32 %v4079, %v4264
    %v4504 = vadd.f32 %v4080, %v4266
    %v4505 = vadd.f32 %v4081, %v4268
    %v4506 = vadd.f32 %v4082, %v4270
    %v4507 = vadd.f32 %v4083, %v4272
    %v4508 = vadd.f32 %v4084, %v4274
    %v4509 = vadd.f32 %v4085, %v4276
    %v4510 = vadd.f32 %v4086, %v4278
    %v4511 = vadd.f32 %v4087, %v4280
    %v4512 = vadd.f32 %v4088, %v4282
    %v4513 = vadd.f32 %v4089, %v4284
    %v4514 = vadd.f32 %v4090, %v4286
    %v4515 = vadd.f32 %v4091, %v4288
    %v4516 = vadd.f32 %v4092, %v4290
    %v4517 = vadd.f32 %v4093, %v4292
    %v4518 = vadd.f32 %v4094, %v4294
    %v4519 = vadd.f32 %v4095, %v4296
    %v4520 = vadd.f32 %v4096, %v4298
    %v4521 = vadd.f32 %v4097, %v4300
    %v4522 = vadd.f32 %v4098, %v4302
    %v4523 = vadd.f32 %v4099, %v4304
    %v4524 = vadd.f32 %v4100, %v4306
    %v4525 = vadd.f32 %v4101, %v4308
    %v4526 = vadd.f32 %v4102, %v4310
    %v4527 = vadd.f32 %v4103, %v4312
    %v4528 = vadd.f32 %v4104, %v4314
    %v4529 = vadd.f32 %v4105, %v4316
    %v4530 = vadd.f32 %v4106, %v4318
    %v4531 = vadd.f32 %v4107, %v4320
    %v4532 = vadd.f32 %v4108, %v4322
    %v4533 = vadd.f32 %v4109, %v4324
    %v4534 = vadd.f32 %v4110, %v4326
    %v4535 = vld [vmem:[%s6] sm:$0x1]
    %v4537 = vlaneseq
    %v4538 = vshrl.u32 %v4537, 7
    %v4539 = vsub.s32 0, %v4538
    %v4540 = vrot.slane %v4535, %v4539
    %v4542 = vadd.f32 %v4431, %v4540
    %v4543 = vadd.f32 %v4432, %v4540
    %v4544 = vadd.f32 %v4433, %v4540
    %v4545 = vadd.f32 %v4434, %v4540
    %v4546 = vadd.f32 %v4435, %v4540
    %v4547 = vadd.f32 %v4436, %v4540
    %v4548 = vadd.f32 %v4437, %v4540
    %v4549 = vadd.f32 %v4438, %v4540
    %v4550 = vadd.f32 %v4439, %v4540
    %v4551 = vadd.f32 %v4440, %v4540
    %v4552 = vadd.f32 %v4441, %v4540
    %v4553 = vadd.f32 %v4442, %v4540
    %v4554 = vadd.f32 %v4443, %v4540
    %v4555 = vadd.f32 %v4444, %v4540
    %v4556 = vadd.f32 %v4445, %v4540
    %v4557 = vadd.f32 %v4446, %v4540
    %v4558 = vadd.f32 %v4447, %v4540
    %v4559 = vadd.f32 %v4448, %v4540
    %v4560 = vadd.f32 %v4449, %v4540
    %v4561 = vadd.f32 %v4450, %v4540
    %v4562 = vadd.f32 %v4451, %v4540
    %v4563 = vadd.f32 %v4452, %v4540
    %v4564 = vadd.f32 %v4453, %v4540
    %v4565 = vadd.f32 %v4454, %v4540
    %v4566 = vadd.f32 %v4455, %v4540
    %v4567 = vadd.f32 %v4456, %v4540
    %v4568 = vadd.f32 %v4457, %v4540
    %v4569 = vadd.f32 %v4458, %v4540
    %v4570 = vadd.f32 %v4459, %v4540
    %v4571 = vadd.f32 %v4460, %v4540
    %v4572 = vadd.f32 %v4461, %v4540
    %v4573 = vadd.f32 %v4462, %v4540
    %v4574 = vadd.f32 %v4463, %v4540
    %v4575 = vadd.f32 %v4464, %v4540
    %v4576 = vadd.f32 %v4465, %v4540
    %v4577 = vadd.f32 %v4466, %v4540
    %v4578 = vadd.f32 %v4467, %v4540
    %v4579 = vadd.f32 %v4468, %v4540
    %v4580 = vadd.f32 %v4469, %v4540
    %v4581 = vadd.f32 %v4470, %v4540
    %v4582 = vadd.f32 %v4471, %v4540
    %v4583 = vadd.f32 %v4472, %v4540
    %v4584 = vadd.f32 %v4473, %v4540
    %v4585 = vadd.f32 %v4474, %v4540
    %v4586 = vadd.f32 %v4475, %v4540
    %v4587 = vadd.f32 %v4476, %v4540
    %v4588 = vadd.f32 %v4477, %v4540
    %v4589 = vadd.f32 %v4478, %v4540
    %v4590 = vadd.f32 %v4479, %v4540
    %v4591 = vadd.f32 %v4480, %v4540
    %v4592 = vadd.f32 %v4481, %v4540
    %v4593 = vadd.f32 %v4482, %v4540
    %v4594 = vadd.f32 %v4483, %v4540
    %v4595 = vadd.f32 %v4484, %v4540
    %v4596 = vadd.f32 %v4485, %v4540
    %v4597 = vadd.f32 %v4486, %v4540
    %v4598 = vadd.f32 %v4487, %v4540
    %v4599 = vadd.f32 %v4488, %v4540
    %v4600 = vadd.f32 %v4489, %v4540
    %v4601 = vadd.f32 %v4490, %v4540
    %v4602 = vadd.f32 %v4491, %v4540
    %v4603 = vadd.f32 %v4492, %v4540
    %v4604 = vadd.f32 %v4493, %v4540
    %v4605 = vadd.f32 %v4494, %v4540
    %v4606 = vadd.f32 %v4495, %v4540
    %v4607 = vadd.f32 %v4496, %v4540
    %v4608 = vadd.f32 %v4497, %v4540
    %v4609 = vadd.f32 %v4498, %v4540
    %v4610 = vadd.f32 %v4499, %v4540
    %v4611 = vadd.f32 %v4500, %v4540
    %v4612 = vadd.f32 %v4501, %v4540
    %v4613 = vadd.f32 %v4502, %v4540
    %v4614 = vadd.f32 %v4503, %v4540
    %v4615 = vadd.f32 %v4504, %v4540
    %v4616 = vadd.f32 %v4505, %v4540
    %v4617 = vadd.f32 %v4506, %v4540
    %v4618 = vadd.f32 %v4507, %v4540
    %v4619 = vadd.f32 %v4508, %v4540
    %v4620 = vadd.f32 %v4509, %v4540
    %v4621 = vadd.f32 %v4510, %v4540
    %v4622 = vadd.f32 %v4511, %v4540
    %v4623 = vadd.f32 %v4512, %v4540
    %v4624 = vadd.f32 %v4513, %v4540
    %v4625 = vadd.f32 %v4514, %v4540
    %v4626 = vadd.f32 %v4515, %v4540
    %v4627 = vadd.f32 %v4516, %v4540
    %v4628 = vadd.f32 %v4517, %v4540
    %v4629 = vadd.f32 %v4518, %v4540
    %v4630 = vadd.f32 %v4519, %v4540
    %v4631 = vadd.f32 %v4520, %v4540
    %v4632 = vadd.f32 %v4521, %v4540
    %v4633 = vadd.f32 %v4522, %v4540
    %v4634 = vadd.f32 %v4523, %v4540
    %v4635 = vadd.f32 %v4524, %v4540
    %v4636 = vadd.f32 %v4525, %v4540
    %v4637 = vadd.f32 %v4526, %v4540
    %v4638 = vadd.f32 %v4527, %v4540
    %v4639 = vadd.f32 %v4528, %v4540
    %v4640 = vadd.f32 %v4529, %v4540
    %v4641 = vadd.f32 %v4530, %v4540
    %v4642 = vadd.f32 %v4531, %v4540
    %v4643 = vadd.f32 %v4532, %v4540
    %v4644 = vadd.f32 %v4533, %v4540
    %v4645 = vadd.f32 %v4534, %v4540
    %v4646 = vmax.f32 %v4542, 0.0
    %v4647 = vmax.f32 %v4543, 0.0
    %v4648 = vmax.f32 %v4544, 0.0
    %v4649 = vmax.f32 %v4545, 0.0
    %v4650 = vmax.f32 %v4546, 0.0
    %v4651 = vmax.f32 %v4547, 0.0
    %v4652 = vmax.f32 %v4548, 0.0
    %v4653 = vmax.f32 %v4549, 0.0
    %v4654 = vmax.f32 %v4550, 0.0
    %v4655 = vmax.f32 %v4551, 0.0
    %v4656 = vmax.f32 %v4552, 0.0
    %v4657 = vmax.f32 %v4553, 0.0
    %v4658 = vmax.f32 %v4554, 0.0
    %v4659 = vmax.f32 %v4555, 0.0
    %v4660 = vmax.f32 %v4556, 0.0
    %v4661 = vmax.f32 %v4557, 0.0
    %v4662 = vmax.f32 %v4558, 0.0
    %v4663 = vmax.f32 %v4559, 0.0
    %v4664 = vmax.f32 %v4560, 0.0
    %v4665 = vmax.f32 %v4561, 0.0
    %v4666 = vmax.f32 %v4562, 0.0
    %v4667 = vmax.f32 %v4563, 0.0
    %v4668 = vmax.f32 %v4564, 0.0
    %v4669 = vmax.f32 %v4565, 0.0
    %v4670 = vmax.f32 %v4566, 0.0
    %v4671 = vmax.f32 %v4567, 0.0
    %v4672 = vmax.f32 %v4568, 0.0
    %v4673 = vmax.f32 %v4569, 0.0
    %v4674 = vmax.f32 %v4570, 0.0
    %v4675 = vmax.f32 %v4571, 0.0
    %v4676 = vmax.f32 %v4572, 0.0
    %v4677 = vmax.f32 %v4573, 0.0
    %v4678 = vmax.f32 %v4574, 0.0
    %v4679 = vmax.f32 %v4575, 0.0
    %v4680 = vmax.f32 %v4576, 0.0
    %v4681 = vmax.f32 %v4577, 0.0
    %v4682 = vmax.f32 %v4578, 0.0
    %v4683 = vmax.f32 %v4579, 0.0
    %v4684 = vmax.f32 %v4580, 0.0
    %v4685 = vmax.f32 %v4581, 0.0
    %v4686 = vmax.f32 %v4582, 0.0
    %v4687 = vmax.f32 %v4583, 0.0
    %v4688 = vmax.f32 %v4584, 0.0
    %v4689 = vmax.f32 %v4585, 0.0
    %v4690 = vmax.f32 %v4586, 0.0
    %v4691 = vmax.f32 %v4587, 0.0
    %v4692 = vmax.f32 %v4588, 0.0
    %v4693 = vmax.f32 %v4589, 0.0
    %v4694 = vmax.f32 %v4590, 0.0
    %v4695 = vmax.f32 %v4591, 0.0
    %v4696 = vmax.f32 %v4592, 0.0
    %v4697 = vmax.f32 %v4593, 0.0
    %v4698 = vmax.f32 %v4594, 0.0
    %v4699 = vmax.f32 %v4595, 0.0
    %v4700 = vmax.f32 %v4596, 0.0
    %v4701 = vmax.f32 %v4597, 0.0
    %v4702 = vmax.f32 %v4598, 0.0
    %v4703 = vmax.f32 %v4599, 0.0
    %v4704 = vmax.f32 %v4600, 0.0
    %v4705 = vmax.f32 %v4601, 0.0
    %v4706 = vmax.f32 %v4602, 0.0
    %v4707 = vmax.f32 %v4603, 0.0
    %v4708 = vmax.f32 %v4604, 0.0
    %v4709 = vmax.f32 %v4605, 0.0
    %v4710 = vmax.f32 %v4606, 0.0
    %v4711 = vmax.f32 %v4607, 0.0
    %v4712 = vmax.f32 %v4608, 0.0
    %v4713 = vmax.f32 %v4609, 0.0
    %v4714 = vmax.f32 %v4610, 0.0
    %v4715 = vmax.f32 %v4611, 0.0
    %v4716 = vmax.f32 %v4612, 0.0
    %v4717 = vmax.f32 %v4613, 0.0
    %v4718 = vmax.f32 %v4614, 0.0
    %v4719 = vmax.f32 %v4615, 0.0
    %v4720 = vmax.f32 %v4616, 0.0
    %v4721 = vmax.f32 %v4617, 0.0
    %v4722 = vmax.f32 %v4618, 0.0
    %v4723 = vmax.f32 %v4619, 0.0
    %v4724 = vmax.f32 %v4620, 0.0
    %v4725 = vmax.f32 %v4621, 0.0
    %v4726 = vmax.f32 %v4622, 0.0
    %v4727 = vmax.f32 %v4623, 0.0
    %v4728 = vmax.f32 %v4624, 0.0
    %v4729 = vmax.f32 %v4625, 0.0
    %v4730 = vmax.f32 %v4626, 0.0
    %v4731 = vmax.f32 %v4627, 0.0
    %v4732 = vmax.f32 %v4628, 0.0
    %v4733 = vmax.f32 %v4629, 0.0
    %v4734 = vmax.f32 %v4630, 0.0
    %v4735 = vmax.f32 %v4631, 0.0
    %v4736 = vmax.f32 %v4632, 0.0
    %v4737 = vmax.f32 %v4633, 0.0
    %v4738 = vmax.f32 %v4634, 0.0
    %v4739 = vmax.f32 %v4635, 0.0
    %v4740 = vmax.f32 %v4636, 0.0
    %v4741 = vmax.f32 %v4637, 0.0
    %v4742 = vmax.f32 %v4638, 0.0
    %v4743 = vmax.f32 %v4639, 0.0
    %v4744 = vmax.f32 %v4640, 0.0
    %v4745 = vmax.f32 %v4641, 0.0
    %v4746 = vmax.f32 %v4642, 0.0
    %v4747 = vmax.f32 %v4643, 0.0
    %v4748 = vmax.f32 %v4644, 0.0
    %v4749 = vmax.f32 %v4645, 0.0
    %v4750 = vpack.c.bf16 %v4647, %v4646
    %v4751 = vpack.c.bf16 %v4649, %v4648
    %v4752 = vpack.c.bf16 %v4651, %v4650
    %v4753 = vpack.c.bf16 %v4653, %v4652
    %v4754 = vpack.c.bf16 %v4655, %v4654
    %v4755 = vpack.c.bf16 %v4657, %v4656
    %v4756 = vpack.c.bf16 %v4659, %v4658
    %v4757 = vpack.c.bf16 %v4661, %v4660
    %v4758 = vpack.c.bf16 %v4663, %v4662
    %v4759 = vpack.c.bf16 %v4665, %v4664
    %v4760 = vpack.c.bf16 %v4667, %v4666
    %v4761 = vpack.c.bf16 %v4669, %v4668
    %v4762 = vpack.c.bf16 %v4671, %v4670
    %v4763 = vpack.c.bf16 %v4673, %v4672
    %v4764 = vpack.c.bf16 %v4675, %v4674
    %v4765 = vpack.c.bf16 %v4677, %v4676
    %v4766 = vpack.c.bf16 %v4679, %v4678
    %v4767 = vpack.c.bf16 %v4681, %v4680
    %v4768 = vpack.c.bf16 %v4683, %v4682
    %v4769 = vpack.c.bf16 %v4685, %v4684
    %v4770 = vpack.c.bf16 %v4687, %v4686
    %v4771 = vpack.c.bf16 %v4689, %v4688
    %v4772 = vpack.c.bf16 %v4691, %v4690
    %v4773 = vpack.c.bf16 %v4693, %v4692
    %v4774 = vpack.c.bf16 %v4695, %v4694
    %v4775 = vpack.c.bf16 %v4697, %v4696
    %v4776 = vpack.c.bf16 %v4699, %v4698
    %v4777 = vpack.c.bf16 %v4701, %v4700
    %v4778 = vpack.c.bf16 %v4703, %v4702
    %v4779 = vpack.c.bf16 %v4705, %v4704
    %v4780 = vpack.c.bf16 %v4707, %v4706
    %v4781 = vpack.c.bf16 %v4709, %v4708
    %v4782 = vpack.c.bf16 %v4711, %v4710
    %v4783 = vpack.c.bf16 %v4713, %v4712
    %v4784 = vpack.c.bf16 %v4715, %v4714
    %v4785 = vpack.c.bf16 %v4717, %v4716
    %v4786 = vpack.c.bf16 %v4719, %v4718
    %v4787 = vpack.c.bf16 %v4721, %v4720
    %v4788 = vpack.c.bf16 %v4723, %v4722
    %v4789 = vpack.c.bf16 %v4725, %v4724
    %v4790 = vpack.c.bf16 %v4727, %v4726
    %v4791 = vpack.c.bf16 %v4729, %v4728
    %v4792 = vpack.c.bf16 %v4731, %v4730
    %v4793 = vpack.c.bf16 %v4733, %v4732
    %v4794 = vpack.c.bf16 %v4735, %v4734
    %v4795 = vpack.c.bf16 %v4737, %v4736
    %v4796 = vpack.c.bf16 %v4739, %v4738
    %v4797 = vpack.c.bf16 %v4741, %v4740
    %v4798 = vpack.c.bf16 %v4743, %v4742
    %v4799 = vpack.c.bf16 %v4745, %v4744
    %v4800 = vpack.c.bf16 %v4747, %v4746
    %v4801 = vpack.c.bf16 %v4749, %v4748
    %v4854 = vunpack.c.l.b16 %v4750
    %v4855 = vunpack.c.h.b16 %v4750
    %v4856 = vunpack.c.l.b16 %v4751
    %v4857 = vunpack.c.h.b16 %v4751
    %v4858 = vunpack.c.l.b16 %v4752
    %v4859 = vunpack.c.h.b16 %v4752
    %v4860 = vunpack.c.l.b16 %v4753
    %v4861 = vunpack.c.h.b16 %v4753
    %v4862 = vunpack.c.l.b16 %v4754
    %v4863 = vunpack.c.h.b16 %v4754
    %v4864 = vunpack.c.l.b16 %v4755
    %v4865 = vunpack.c.h.b16 %v4755
    %v4866 = vunpack.c.l.b16 %v4756
    %v4867 = vunpack.c.h.b16 %v4756
    %v4868 = vunpack.c.l.b16 %v4757
    %v4869 = vunpack.c.h.b16 %v4757
    %v4870 = vunpack.c.l.b16 %v4758
    %v4871 = vunpack.c.h.b16 %v4758
    %v4872 = vunpack.c.l.b16 %v4759
    %v4873 = vunpack.c.h.b16 %v4759
    %v4874 = vunpack.c.l.b16 %v4760
    %v4875 = vunpack.c.h.b16 %v4760
    %v4876 = vunpack.c.l.b16 %v4761
    %v4877 = vunpack.c.h.b16 %v4761
    %v4878 = vunpack.c.l.b16 %v4762
    %v4879 = vunpack.c.h.b16 %v4762
    %v4880 = vunpack.c.l.b16 %v4763
    %v4881 = vunpack.c.h.b16 %v4763
    %v4882 = vunpack.c.l.b16 %v4764
    %v4883 = vunpack.c.h.b16 %v4764
    %v4884 = vunpack.c.l.b16 %v4765
    %v4885 = vunpack.c.h.b16 %v4765
    %v4886 = vunpack.c.l.b16 %v4766
    %v4887 = vunpack.c.h.b16 %v4766
    %v4888 = vunpack.c.l.b16 %v4767
    %v4889 = vunpack.c.h.b16 %v4767
    %v4890 = vunpack.c.l.b16 %v4768
    %v4891 = vunpack.c.h.b16 %v4768
    %v4892 = vunpack.c.l.b16 %v4769
    %v4893 = vunpack.c.h.b16 %v4769
    %v4894 = vunpack.c.l.b16 %v4770
    %v4895 = vunpack.c.h.b16 %v4770
    %v4896 = vunpack.c.l.b16 %v4771
    %v4897 = vunpack.c.h.b16 %v4771
    %v4898 = vunpack.c.l.b16 %v4772
    %v4899 = vunpack.c.h.b16 %v4772
    %v4900 = vunpack.c.l.b16 %v4773
    %v4901 = vunpack.c.h.b16 %v4773
    %v4902 = vunpack.c.l.b16 %v4774
    %v4903 = vunpack.c.h.b16 %v4774
    %v4904 = vunpack.c.l.b16 %v4775
    %v4905 = vunpack.c.h.b16 %v4775
    %v4906 = vunpack.c.l.b16 %v4776
    %v4907 = vunpack.c.h.b16 %v4776
    %v4908 = vunpack.c.l.b16 %v4777
    %v4909 = vunpack.c.h.b16 %v4777
    %v4910 = vunpack.c.l.b16 %v4778
    %v4911 = vunpack.c.h.b16 %v4778
    %v4912 = vunpack.c.l.b16 %v4779
    %v4913 = vunpack.c.h.b16 %v4779
    %v4914 = vunpack.c.l.b16 %v4780
    %v4915 = vunpack.c.h.b16 %v4780
    %v4916 = vunpack.c.l.b16 %v4781
    %v4917 = vunpack.c.h.b16 %v4781
    %v4918 = vunpack.c.l.b16 %v4782
    %v4919 = vunpack.c.h.b16 %v4782
    %v4920 = vunpack.c.l.b16 %v4783
    %v4921 = vunpack.c.h.b16 %v4783
    %v4922 = vunpack.c.l.b16 %v4784
    %v4923 = vunpack.c.h.b16 %v4784
    %v4924 = vunpack.c.l.b16 %v4785
    %v4925 = vunpack.c.h.b16 %v4785
    %v4926 = vunpack.c.l.b16 %v4786
    %v4927 = vunpack.c.h.b16 %v4786
    %v4928 = vunpack.c.l.b16 %v4787
    %v4929 = vunpack.c.h.b16 %v4787
    %v4930 = vunpack.c.l.b16 %v4788
    %v4931 = vunpack.c.h.b16 %v4788
    %v4932 = vunpack.c.l.b16 %v4789
    %v4933 = vunpack.c.h.b16 %v4789
    %v4934 = vunpack.c.l.b16 %v4790
    %v4935 = vunpack.c.h.b16 %v4790
    %v4936 = vunpack.c.l.b16 %v4791
    %v4937 = vunpack.c.h.b16 %v4791
    %v4938 = vunpack.c.l.b16 %v4792
    %v4939 = vunpack.c.h.b16 %v4792
    %v4940 = vunpack.c.l.b16 %v4793
    %v4941 = vunpack.c.h.b16 %v4793
    %v4942 = vunpack.c.l.b16 %v4794
    %v4943 = vunpack.c.h.b16 %v4794
    %v4944 = vunpack.c.l.b16 %v4795
    %v4945 = vunpack.c.h.b16 %v4795
    %v4946 = vunpack.c.l.b16 %v4796
    %v4947 = vunpack.c.h.b16 %v4796
    %v4948 = vunpack.c.l.b16 %v4797
    %v4949 = vunpack.c.h.b16 %v4797
    %v4950 = vunpack.c.l.b16 %v4798
    %v4951 = vunpack.c.h.b16 %v4798
    %v4952 = vunpack.c.l.b16 %v4799
    %v4953 = vunpack.c.h.b16 %v4799
    %v4954 = vunpack.c.l.b16 %v4800
    %v4955 = vunpack.c.h.b16 %v4800
    %v4956 = vunpack.c.l.b16 %v4801
    %v4957 = vunpack.c.h.b16 %v4801
    %v4958 = vpack.c.b16 %v4854, %v4854
    %v4959 = vpack.c.b16 %v4855, %v4855
    %v4960 = vpack.c.b16 %v4856, %v4856
    %v4961 = vpack.c.b16 %v4857, %v4857
    %v4962 = vpack.c.b16 %v4858, %v4858
    %v4963 = vpack.c.b16 %v4859, %v4859
    %v4964 = vpack.c.b16 %v4860, %v4860
    %v4965 = vpack.c.b16 %v4861, %v4861
    %v4966 = vpack.c.b16 %v4862, %v4862
    %v4967 = vpack.c.b16 %v4863, %v4863
    %v4968 = vpack.c.b16 %v4864, %v4864
    %v4969 = vpack.c.b16 %v4865, %v4865
    %v4970 = vpack.c.b16 %v4866, %v4866
    %v4971 = vpack.c.b16 %v4867, %v4867
    %v4972 = vpack.c.b16 %v4868, %v4868
    %v4973 = vpack.c.b16 %v4869, %v4869
    %v4974 = vpack.c.b16 %v4870, %v4870
    %v4975 = vpack.c.b16 %v4871, %v4871
    %v4976 = vpack.c.b16 %v4872, %v4872
    %v4977 = vpack.c.b16 %v4873, %v4873
    %v4978 = vpack.c.b16 %v4874, %v4874
    %v4979 = vpack.c.b16 %v4875, %v4875
    %v4980 = vpack.c.b16 %v4876, %v4876
    %v4981 = vpack.c.b16 %v4877, %v4877
    %v4982 = vpack.c.b16 %v4878, %v4878
    %v4983 = vpack.c.b16 %v4879, %v4879
    %v4984 = vpack.c.b16 %v4880, %v4880
    %v4985 = vpack.c.b16 %v4881, %v4881
    %v4986 = vpack.c.b16 %v4882, %v4882
    %v4987 = vpack.c.b16 %v4883, %v4883
    %v4988 = vpack.c.b16 %v4884, %v4884
    %v4989 = vpack.c.b16 %v4885, %v4885
    %v4990 = vpack.c.b16 %v4886, %v4886
    %v4991 = vpack.c.b16 %v4887, %v4887
    %v4992 = vpack.c.b16 %v4888, %v4888
    %v4993 = vpack.c.b16 %v4889, %v4889
    %v4994 = vpack.c.b16 %v4890, %v4890
    %v4995 = vpack.c.b16 %v4891, %v4891
    %v4996 = vpack.c.b16 %v4892, %v4892
    %v4997 = vpack.c.b16 %v4893, %v4893
    %v4998 = vpack.c.b16 %v4894, %v4894
    %v4999 = vpack.c.b16 %v4895, %v4895
    %v5000 = vpack.c.b16 %v4896, %v4896
    %v5001 = vpack.c.b16 %v4897, %v4897
    %v5002 = vpack.c.b16 %v4898, %v4898
    %v5003 = vpack.c.b16 %v4899, %v4899
    %v5004 = vpack.c.b16 %v4900, %v4900
    %v5005 = vpack.c.b16 %v4901, %v4901
    %v5006 = vpack.c.b16 %v4902, %v4902
    %v5007 = vpack.c.b16 %v4903, %v4903
    %v5008 = vpack.c.b16 %v4904, %v4904
    %v5009 = vpack.c.b16 %v4905, %v4905
    %v5010 = vpack.c.b16 %v4906, %v4906
    %v5011 = vpack.c.b16 %v4907, %v4907
    %v5012 = vpack.c.b16 %v4908, %v4908
    %v5013 = vpack.c.b16 %v4909, %v4909
    %v5014 = vpack.c.b16 %v4910, %v4910
    %v5015 = vpack.c.b16 %v4911, %v4911
    %v5016 = vpack.c.b16 %v4912, %v4912
    %v5017 = vpack.c.b16 %v4913, %v4913
    %v5018 = vpack.c.b16 %v4914, %v4914
    %v5019 = vpack.c.b16 %v4915, %v4915
    %v5020 = vpack.c.b16 %v4916, %v4916
    %v5021 = vpack.c.b16 %v4917, %v4917
    %v5022 = vpack.c.b16 %v4918, %v4918
    %v5023 = vpack.c.b16 %v4919, %v4919
    %v5024 = vpack.c.b16 %v4920, %v4920
    %v5025 = vpack.c.b16 %v4921, %v4921
    %v5026 = vpack.c.b16 %v4922, %v4922
    %v5027 = vpack.c.b16 %v4923, %v4923
    %v5028 = vpack.c.b16 %v4924, %v4924
    %v5029 = vpack.c.b16 %v4925, %v4925
    %v5030 = vpack.c.b16 %v4926, %v4926
    %v5031 = vpack.c.b16 %v4927, %v4927
    %v5032 = vpack.c.b16 %v4928, %v4928
    %v5033 = vpack.c.b16 %v4929, %v4929
    %v5034 = vpack.c.b16 %v4930, %v4930
    %v5035 = vpack.c.b16 %v4931, %v4931
    %v5036 = vpack.c.b16 %v4932, %v4932
    %v5037 = vpack.c.b16 %v4933, %v4933
    %v5038 = vpack.c.b16 %v4934, %v4934
    %v5039 = vpack.c.b16 %v4935, %v4935
    %v5040 = vpack.c.b16 %v4936, %v4936
    %v5041 = vpack.c.b16 %v4937, %v4937
    %v5042 = vpack.c.b16 %v4938, %v4938
    %v5043 = vpack.c.b16 %v4939, %v4939
    %v5044 = vpack.c.b16 %v4940, %v4940
    %v5045 = vpack.c.b16 %v4941, %v4941
    %v5046 = vpack.c.b16 %v4942, %v4942
    %v5047 = vpack.c.b16 %v4943, %v4943
    %v5048 = vpack.c.b16 %v4944, %v4944
    %v5049 = vpack.c.b16 %v4945, %v4945
    %v5050 = vpack.c.b16 %v4946, %v4946
    %v5051 = vpack.c.b16 %v4947, %v4947
    %v5052 = vpack.c.b16 %v4948, %v4948
    %v5053 = vpack.c.b16 %v4949, %v4949
    %v5054 = vpack.c.b16 %v4950, %v4950
    %v5055 = vpack.c.b16 %v4951, %v4951
    %v5056 = vpack.c.b16 %v4952, %v4952
    %v5057 = vpack.c.b16 %v4953, %v4953
    %v5058 = vpack.c.b16 %v4954, %v4954
    %v5059 = vpack.c.b16 %v4955, %v4955
    %v5060 = vpack.c.b16 %v4956, %v4956
    %v5061 = vpack.c.b16 %v4957, %v4957
    %vm5166 = vcmask 257024
    %5167 = vst.msk [vmem:[#allocation4] sm:$0xf] %vm5166, %v4958
    %5168 = vst.msk [vmem:[#allocation4 + $0x4] sm:$0xf] %vm5166, %v4959
    %5169 = vst.msk [vmem:[#allocation4 + $0x8] sm:$0xf] %vm5166, %v4960
    %5170 = vst.msk [vmem:[#allocation4 + $0xc] sm:$0xf] %vm5166, %v4961
    %5171 = vst.msk [vmem:[#allocation4 + $0x10] sm:$0xf] %vm5166, %v4962
    %5172 = vst.msk [vmem:[#allocation4 + $0x14] sm:$0xf] %vm5166, %v4963
    %5173 = vst.msk [vmem:[#allocation4 + $0x18] sm:$0xf] %vm5166, %v4964
    %5174 = vst.msk [vmem:[#allocation4 + $0x1c] sm:$0xf] %vm5166, %v4965
    %5175 = vst.msk [vmem:[#allocation4 + $0x20] sm:$0xf] %vm5166, %v4966
    %5176 = vst.msk [vmem:[#allocation4 + $0x24] sm:$0xf] %vm5166, %v4967
    %5177 = vst.msk [vmem:[#allocation4 + $0x28] sm:$0xf] %vm5166, %v4968
    %5178 = vst.msk [vmem:[#allocation4 + $0x2c] sm:$0xf] %vm5166, %v4969
    %5179 = vst.msk [vmem:[#allocation4 + $0x30] sm:$0xf] %vm5166, %v4970
    %5180 = vst.msk [vmem:[#allocation4 + $0x34] sm:$0xf] %vm5166, %v4971
    %5181 = vst.msk [vmem:[#allocation4 + $0x38] sm:$0xf] %vm5166, %v4972
    %5182 = vst.msk [vmem:[#allocation4 + $0x3c] sm:$0xf] %vm5166, %v4973
    %5183 = vst.msk [vmem:[#allocation4 + $0x40] sm:$0xf] %vm5166, %v4974
    %5184 = vst.msk [vmem:[#allocation4 + $0x44] sm:$0xf] %vm5166, %v4975
    %5185 = vst.msk [vmem:[#allocation4 + $0x48] sm:$0xf] %vm5166, %v4976
    %5186 = vst.msk [vmem:[#allocation4 + $0x4c] sm:$0xf] %vm5166, %v4977
    %5187 = vst.msk [vmem:[#allocation4 + $0x50] sm:$0xf] %vm5166, %v4978
    %5188 = vst.msk [vmem:[#allocation4 + $0x54] sm:$0xf] %vm5166, %v4979
    %5189 = vst.msk [vmem:[#allocation4 + $0x58] sm:$0xf] %vm5166, %v4980
    %5190 = vst.msk [vmem:[#allocation4 + $0x5c] sm:$0xf] %vm5166, %v4981
    %5191 = vst.msk [vmem:[#allocation4 + $0x60] sm:$0xf] %vm5166, %v4982
    %5192 = vst.msk [vmem:[#allocation4 + $0x64] sm:$0xf] %vm5166, %v4983
    %5193 = vst.msk [vmem:[#allocation4 + $0x68] sm:$0xf] %vm5166, %v4984
    %5194 = vst.msk [vmem:[#allocation4 + $0x6c] sm:$0xf] %vm5166, %v4985
    %5195 = vst.msk [vmem:[#allocation4 + $0x70] sm:$0xf] %vm5166, %v4986
    %5196 = vst.msk [vmem:[#allocation4 + $0x74] sm:$0xf] %vm5166, %v4987
    %5197 = vst.msk [vmem:[#allocation4 + $0x78] sm:$0xf] %vm5166, %v4988
    %5198 = vst.msk [vmem:[#allocation4 + $0x7c] sm:$0xf] %vm5166, %v4989
    %5199 = vst.msk [vmem:[#allocation4 + $0x80] sm:$0xf] %vm5166, %v4990
    %5200 = vst.msk [vmem:[#allocation4 + $0x84] sm:$0xf] %vm5166, %v4991
    %5201 = vst.msk [vmem:[#allocation4 + $0x88] sm:$0xf] %vm5166, %v4992
    %5202 = vst.msk [vmem:[#allocation4 + $0x8c] sm:$0xf] %vm5166, %v4993
    %5203 = vst.msk [vmem:[#allocation4 + $0x90] sm:$0xf] %vm5166, %v4994
    %5204 = vst.msk [vmem:[#allocation4 + $0x94] sm:$0xf] %vm5166, %v4995
    %5205 = vst.msk [vmem:[#allocation4 + $0x98] sm:$0xf] %vm5166, %v4996
    %5206 = vst.msk [vmem:[#allocation4 + $0x9c] sm:$0xf] %vm5166, %v4997
    %5207 = vst.msk [vmem:[#allocation4 + $0xa0] sm:$0xf] %vm5166, %v4998
    %5208 = vst.msk [vmem:[#allocation4 + $0xa4] sm:$0xf] %vm5166, %v4999
    %5209 = vst.msk [vmem:[#allocation4 + $0xa8] sm:$0xf] %vm5166, %v5000
    %5210 = vst.msk [vmem:[#allocation4 + $0xac] sm:$0xf] %vm5166, %v5001
    %5211 = vst.msk [vmem:[#allocation4 + $0xb0] sm:$0xf] %vm5166, %v5002
    %5212 = vst.msk [vmem:[#allocation4 + $0xb4] sm:$0xf] %vm5166, %v5003
    %5213 = vst.msk [vmem:[#allocation4 + $0xb8] sm:$0xf] %vm5166, %v5004
    %5214 = vst.msk [vmem:[#allocation4 + $0xbc] sm:$0xf] %vm5166, %v5005
    %5215 = vst.msk [vmem:[#allocation4 + $0xc0] sm:$0xf] %vm5166, %v5006
    %5216 = vst.msk [vmem:[#allocation4 + $0xc4] sm:$0xf] %vm5166, %v5007
    %5217 = vst.msk [vmem:[#allocation4 + $0xc8] sm:$0xf] %vm5166, %v5008
    %5218 = vst.msk [vmem:[#allocation4 + $0xcc] sm:$0xf] %vm5166, %v5009
    %5219 = vst.msk [vmem:[#allocation4 + $0xd0] sm:$0xf] %vm5166, %v5010
    %5220 = vst.msk [vmem:[#allocation4 + $0xd4] sm:$0xf] %vm5166, %v5011
    %5221 = vst.msk [vmem:[#allocation4 + $0xd8] sm:$0xf] %vm5166, %v5012
    %5222 = vst.msk [vmem:[#allocation4 + $0xdc] sm:$0xf] %vm5166, %v5013
    %5223 = vst.msk [vmem:[#allocation4 + $0xe0] sm:$0xf] %vm5166, %v5014
    %5224 = vst.msk [vmem:[#allocation4 + $0xe4] sm:$0xf] %vm5166, %v5015
    %5225 = vst.msk [vmem:[#allocation4 + $0xe8] sm:$0xf] %vm5166, %v5016
    %5226 = vst.msk [vmem:[#allocation4 + $0xec] sm:$0xf] %vm5166, %v5017
    %5227 = vst.msk [vmem:[#allocation4 + $0xf0] sm:$0xf] %vm5166, %v5018
    %5228 = vst.msk [vmem:[#allocation4 + $0xf4] sm:$0xf] %vm5166, %v5019
    %5229 = vst.msk [vmem:[#allocation4 + $0xf8] sm:$0xf] %vm5166, %v5020
    %5230 = vst.msk [vmem:[#allocation4 + $0xfc] sm:$0xf] %vm5166, %v5021
    %5231 = vst.msk [vmem:[#allocation4 + $0x100] sm:$0xf] %vm5166, %v5022
    %5232 = vst.msk [vmem:[#allocation4 + $0x104] sm:$0xf] %vm5166, %v5023
    %5233 = vst.msk [vmem:[#allocation4 + $0x108] sm:$0xf] %vm5166, %v5024
    %5234 = vst.msk [vmem:[#allocation4 + $0x10c] sm:$0xf] %vm5166, %v5025
    %5235 = vst.msk [vmem:[#allocation4 + $0x110] sm:$0xf] %vm5166, %v5026
    %5236 = vst.msk [vmem:[#allocation4 + $0x114] sm:$0xf] %vm5166, %v5027
    %5237 = vst.msk [vmem:[#allocation4 + $0x118] sm:$0xf] %vm5166, %v5028
    %5238 = vst.msk [vmem:[#allocation4 + $0x11c] sm:$0xf] %vm5166, %v5029
    %5239 = vst.msk [vmem:[#allocation4 + $0x120] sm:$0xf] %vm5166, %v5030
    %5240 = vst.msk [vmem:[#allocation4 + $0x124] sm:$0xf] %vm5166, %v5031
    %5241 = vst.msk [vmem:[#allocation4 + $0x128] sm:$0xf] %vm5166, %v5032
    %5242 = vst.msk [vmem:[#allocation4 + $0x12c] sm:$0xf] %vm5166, %v5033
    %5243 = vst.msk [vmem:[#allocation4 + $0x130] sm:$0xf] %vm5166, %v5034
    %5244 = vst.msk [vmem:[#allocation4 + $0x134] sm:$0xf] %vm5166, %v5035
    %5245 = vst.msk [vmem:[#allocation4 + $0x138] sm:$0xf] %vm5166, %v5036
    %5246 = vst.msk [vmem:[#allocation4 + $0x13c] sm:$0xf] %vm5166, %v5037
    %5247 = vst.msk [vmem:[#allocation4 + $0x140] sm:$0xf] %vm5166, %v5038
    %5248 = vst.msk [vmem:[#allocation4 + $0x144] sm:$0xf] %vm5166, %v5039
    %5249 = vst.msk [vmem:[#allocation4 + $0x148] sm:$0xf] %vm5166, %v5040
    %5250 = vst.msk [vmem:[#allocation4 + $0x14c] sm:$0xf] %vm5166, %v5041
    %5251 = vst.msk [vmem:[#allocation4 + $0x150] sm:$0xf] %vm5166, %v5042
    %5252 = vst.msk [vmem:[#allocation4 + $0x154] sm:$0xf] %vm5166, %v5043
    %5253 = vst.msk [vmem:[#allocation4 + $0x158] sm:$0xf] %vm5166, %v5044
    %5254 = vst.msk [vmem:[#allocation4 + $0x15c] sm:$0xf] %vm5166, %v5045
    %5255 = vst.msk [vmem:[#allocation4 + $0x160] sm:$0xf] %vm5166, %v5046
    %5256 = vst.msk [vmem:[#allocation4 + $0x164] sm:$0xf] %vm5166, %v5047
    %5257 = vst.msk [vmem:[#allocation4 + $0x168] sm:$0xf] %vm5166, %v5048
    %5258 = vst.msk [vmem:[#allocation4 + $0x16c] sm:$0xf] %vm5166, %v5049
    %5259 = vst.msk [vmem:[#allocation4 + $0x170] sm:$0xf] %vm5166, %v5050
    %5260 = vst.msk [vmem:[#allocation4 + $0x174] sm:$0xf] %vm5166, %v5051
    %5261 = vst.msk [vmem:[#allocation4 + $0x178] sm:$0xf] %vm5166, %v5052
    %5262 = vst.msk [vmem:[#allocation4 + $0x17c] sm:$0xf] %vm5166, %v5053
    %5263 = vst.msk [vmem:[#allocation4 + $0x180] sm:$0xf] %vm5166, %v5054
    %5264 = vst.msk [vmem:[#allocation4 + $0x184] sm:$0xf] %vm5166, %v5055
    %5265 = vst.msk [vmem:[#allocation4 + $0x188] sm:$0xf] %vm5166, %v5056
    %5266 = vst.msk [vmem:[#allocation4 + $0x18c] sm:$0xf] %vm5166, %v5057
    %5267 = vst.msk [vmem:[#allocation4 + $0x190] sm:$0xf] %vm5166, %v5058
    %5268 = vst.msk [vmem:[#allocation4 + $0x194] sm:$0xf] %vm5166, %v5059
    %5269 = vst.msk [vmem:[#allocation4 + $0x198] sm:$0xf] %vm5166, %v5060
    %5270 = vst.msk [vmem:[#allocation4 + $0x19c] sm:$0xf] %vm5166, %v5061
    %5271 = vst.msk [vmem:[#allocation4 + $0x1a0] sm:$0xf] %vm5166, 0
    %v5272 = vld [vmem:[#allocation4] sm:$0xf]
    %v5273 = vld [vmem:[#allocation4 + $0x4] sm:$0xf]
    %v5274 = vld [vmem:[#allocation4 + $0x8] sm:$0xf]
    %v5275 = vld [vmem:[#allocation4 + $0xc] sm:$0xf]
    %v5276 = vld [vmem:[#allocation4 + $0x10] sm:$0xf]
    %v5277 = vld [vmem:[#allocation4 + $0x14] sm:$0xf]
    %v5278 = vld [vmem:[#allocation4 + $0x18] sm:$0xf]
    %v5279 = vld [vmem:[#allocation4 + $0x1c] sm:$0xf]
    %v5280 = vld [vmem:[#allocation4 + $0x20] sm:$0xf]
    %v5281 = vld [vmem:[#allocation4 + $0x24] sm:$0xf]
    %v5282 = vld [vmem:[#allocation4 + $0x28] sm:$0xf]
    %v5283 = vld [vmem:[#allocation4 + $0x2c] sm:$0xf]
    %v5284 = vld [vmem:[#allocation4 + $0x30] sm:$0xf]
    %v5285 = vld [vmem:[#allocation4 + $0x34] sm:$0xf]
    %v5286 = vld [vmem:[#allocation4 + $0x38] sm:$0xf]
    %v5287 = vld [vmem:[#allocation4 + $0x3c] sm:$0xf]
    %v5288 = vld [vmem:[#allocation4 + $0x40] sm:$0xf]
    %v5289 = vld [vmem:[#allocation4 + $0x44] sm:$0xf]
    %v5290 = vld [vmem:[#allocation4 + $0x48] sm:$0xf]
    %v5291 = vld [vmem:[#allocation4 + $0x4c] sm:$0xf]
    %v5292 = vld [vmem:[#allocation4 + $0x50] sm:$0xf]
    %v5293 = vld [vmem:[#allocation4 + $0x54] sm:$0xf]
    %v5294 = vld [vmem:[#allocation4 + $0x58] sm:$0xf]
    %v5295 = vld [vmem:[#allocation4 + $0x5c] sm:$0xf]
    %v5296 = vld [vmem:[#allocation4 + $0x60] sm:$0xf]
    %v5297 = vld [vmem:[#allocation4 + $0x64] sm:$0xf]
    %v5298 = vld [vmem:[#allocation4 + $0x68] sm:$0xf]
    %v5299 = vld [vmem:[#allocation4 + $0x6c] sm:$0xf]
    %v5300 = vld [vmem:[#allocation4 + $0x70] sm:$0xf]
    %v5301 = vld [vmem:[#allocation4 + $0x74] sm:$0xf]
    %v5302 = vld [vmem:[#allocation4 + $0x78] sm:$0xf]
    %v5303 = vld [vmem:[#allocation4 + $0x7c] sm:$0xf]
    %v5304 = vld [vmem:[#allocation4 + $0x80] sm:$0xf]
    %v5305 = vld [vmem:[#allocation4 + $0x84] sm:$0xf]
    %v5306 = vld [vmem:[#allocation4 + $0x88] sm:$0xf]
    %v5307 = vld [vmem:[#allocation4 + $0x8c] sm:$0xf]
    %v5308 = vld [vmem:[#allocation4 + $0x90] sm:$0xf]
    %v5309 = vld [vmem:[#allocation4 + $0x94] sm:$0xf]
    %v5310 = vld [vmem:[#allocation4 + $0x98] sm:$0xf]
    %v5311 = vld [vmem:[#allocation4 + $0x9c] sm:$0xf]
    %v5312 = vld [vmem:[#allocation4 + $0xa0] sm:$0xf]
    %v5313 = vld [vmem:[#allocation4 + $0xa4] sm:$0xf]
    %v5314 = vld [vmem:[#allocation4 + $0xa8] sm:$0xf]
    %v5315 = vld [vmem:[#allocation4 + $0xac] sm:$0xf]
    %v5316 = vld [vmem:[#allocation4 + $0xb0] sm:$0xf]
    %v5317 = vld [vmem:[#allocation4 + $0xb4] sm:$0xf]
    %v5318 = vld [vmem:[#allocation4 + $0xb8] sm:$0xf]
    %v5319 = vld [vmem:[#allocation4 + $0xbc] sm:$0xf]
    %v5320 = vld [vmem:[#allocation4 + $0xc0] sm:$0xf]
    %v5321 = vld [vmem:[#allocation4 + $0xc4] sm:$0xf]
    %v5322 = vld [vmem:[#allocation4 + $0xc8] sm:$0xf]
    %v5323 = vld [vmem:[#allocation4 + $0xcc] sm:$0xf]
    %v5324 = vld [vmem:[#allocation4 + $0xd0] sm:$0xf]
    %v5325 = vld [vmem:[#allocation4 + $0xd4] sm:$0xf]
    %v5326 = vld [vmem:[#allocation4 + $0xd8] sm:$0xf]
    %v5327 = vld [vmem:[#allocation4 + $0xdc] sm:$0xf]
    %v5328 = vld [vmem:[#allocation4 + $0xe0] sm:$0xf]
    %v5329 = vld [vmem:[#allocation4 + $0xe4] sm:$0xf]
    %v5330 = vld [vmem:[#allocation4 + $0xe8] sm:$0xf]
    %v5331 = vld [vmem:[#allocation4 + $0xec] sm:$0xf]
    %v5332 = vld [vmem:[#allocation4 + $0xf0] sm:$0xf]
    %v5333 = vld [vmem:[#allocation4 + $0xf4] sm:$0xf]
    %v5334 = vld [vmem:[#allocation4 + $0xf8] sm:$0xf]
    %v5335 = vld [vmem:[#allocation4 + $0xfc] sm:$0xf]
    %v5336 = vld [vmem:[#allocation4 + $0x100] sm:$0xf]
    %v5337 = vld [vmem:[#allocation4 + $0x104] sm:$0xf]
    %v5338 = vld [vmem:[#allocation4 + $0x108] sm:$0xf]
    %v5339 = vld [vmem:[#allocation4 + $0x10c] sm:$0xf]
    %v5340 = vld [vmem:[#allocation4 + $0x110] sm:$0xf]
    %v5341 = vld [vmem:[#allocation4 + $0x114] sm:$0xf]
    %v5342 = vld [vmem:[#allocation4 + $0x118] sm:$0xf]
    %v5343 = vld [vmem:[#allocation4 + $0x11c] sm:$0xf]
    %v5344 = vld [vmem:[#allocation4 + $0x120] sm:$0xf]
    %v5345 = vld [vmem:[#allocation4 + $0x124] sm:$0xf]
    %v5346 = vld [vmem:[#allocation4 + $0x128] sm:$0xf]
    %v5347 = vld [vmem:[#allocation4 + $0x12c] sm:$0xf]
    %v5348 = vld [vmem:[#allocation4 + $0x130] sm:$0xf]
    %v5349 = vld [vmem:[#allocation4 + $0x134] sm:$0xf]
    %v5350 = vld [vmem:[#allocation4 + $0x138] sm:$0xf]
    %v5351 = vld [vmem:[#allocation4 + $0x13c] sm:$0xf]
    %v5352 = vld [vmem:[#allocation4 + $0x140] sm:$0xf]
    %v5353 = vld [vmem:[#allocation4 + $0x144] sm:$0xf]
    %v5354 = vld [vmem:[#allocation4 + $0x148] sm:$0xf]
    %v5355 = vld [vmem:[#allocation4 + $0x14c] sm:$0xf]
    %v5356 = vld [vmem:[#allocation4 + $0x150] sm:$0xf]
    %v5357 = vld [vmem:[#allocation4 + $0x154] sm:$0xf]
    %v5358 = vld [vmem:[#allocation4 + $0x158] sm:$0xf]
    %v5359 = vld [vmem:[#allocation4 + $0x15c] sm:$0xf]
    %v5360 = vld [vmem:[#allocation4 + $0x160] sm:$0xf]
    %v5361 = vld [vmem:[#allocation4 + $0x164] sm:$0xf]
    %v5362 = vld [vmem:[#allocation4 + $0x168] sm:$0xf]
    %v5363 = vld [vmem:[#allocation4 + $0x16c] sm:$0xf]
    %v5364 = vld [vmem:[#allocation4 + $0x170] sm:$0xf]
    %v5365 = vld [vmem:[#allocation4 + $0x174] sm:$0xf]
    %v5366 = vld [vmem:[#allocation4 + $0x178] sm:$0xf]
    %v5367 = vld [vmem:[#allocation4 + $0x17c] sm:$0xf]
    %v5368 = vld [vmem:[#allocation4 + $0x180] sm:$0xf]
    %v5369 = vld [vmem:[#allocation4 + $0x184] sm:$0xf]
    %v5370 = vld [vmem:[#allocation4 + $0x188] sm:$0xf]
    %v5371 = vld [vmem:[#allocation4 + $0x18c] sm:$0xf]
    %v5372 = vld [vmem:[#allocation4 + $0x190] sm:$0xf]
    %v5373 = vld [vmem:[#allocation4 + $0x194] sm:$0xf]
    %v5374 = vld [vmem:[#allocation4 + $0x198] sm:$0xf]
    %v5375 = vld [vmem:[#allocation4 + $0x19c] sm:$0xf]
    %v5480 = vunpack.c.l.b16 %v5272
    %v5481 = vunpack.c.l.b16 %v5273
    %v5482 = vunpack.c.l.b16 %v5274
    %v5483 = vunpack.c.l.b16 %v5275
    %v5484 = vunpack.c.l.b16 %v5276
    %v5485 = vunpack.c.l.b16 %v5277
    %v5486 = vunpack.c.l.b16 %v5278
    %v5487 = vunpack.c.l.b16 %v5279
    %v5488 = vunpack.c.l.b16 %v5280
    %v5489 = vunpack.c.l.b16 %v5281
    %v5490 = vunpack.c.l.b16 %v5282
    %v5491 = vunpack.c.l.b16 %v5283
    %v5492 = vunpack.c.l.b16 %v5284
    %v5493 = vunpack.c.l.b16 %v5285
    %v5494 = vunpack.c.l.b16 %v5286
    %v5495 = vunpack.c.l.b16 %v5287
    %v5496 = vunpack.c.l.b16 %v5288
    %v5497 = vunpack.c.l.b16 %v5289
    %v5498 = vunpack.c.l.b16 %v5290
    %v5499 = vunpack.c.l.b16 %v5291
    %v5500 = vunpack.c.l.b16 %v5292
    %v5501 = vunpack.c.l.b16 %v5293
    %v5502 = vunpack.c.l.b16 %v5294
    %v5503 = vunpack.c.l.b16 %v5295
    %v5504 = vunpack.c.l.b16 %v5296
    %v5505 = vunpack.c.l.b16 %v5297
    %v5506 = vunpack.c.l.b16 %v5298
    %v5507 = vunpack.c.l.b16 %v5299
    %v5508 = vunpack.c.l.b16 %v5300
    %v5509 = vunpack.c.l.b16 %v5301
    %v5510 = vunpack.c.l.b16 %v5302
    %v5511 = vunpack.c.l.b16 %v5303
    %v5512 = vunpack.c.l.b16 %v5304
    %v5513 = vunpack.c.l.b16 %v5305
    %v5514 = vunpack.c.l.b16 %v5306
    %v5515 = vunpack.c.l.b16 %v5307
    %v5516 = vunpack.c.l.b16 %v5308
    %v5517 = vunpack.c.l.b16 %v5309
    %v5518 = vunpack.c.l.b16 %v5310
    %v5519 = vunpack.c.l.b16 %v5311
    %v5520 = vunpack.c.l.b16 %v5312
    %v5521 = vunpack.c.l.b16 %v5313
    %v5522 = vunpack.c.l.b16 %v5314
    %v5523 = vunpack.c.l.b16 %v5315
    %v5524 = vunpack.c.l.b16 %v5316
    %v5525 = vunpack.c.l.b16 %v5317
    %v5526 = vunpack.c.l.b16 %v5318
    %v5527 = vunpack.c.l.b16 %v5319
    %v5528 = vunpack.c.l.b16 %v5320
    %v5529 = vunpack.c.l.b16 %v5321
    %v5530 = vunpack.c.l.b16 %v5322
    %v5531 = vunpack.c.l.b16 %v5323
    %v5532 = vunpack.c.l.b16 %v5324
    %v5533 = vunpack.c.l.b16 %v5325
    %v5534 = vunpack.c.l.b16 %v5326
    %v5535 = vunpack.c.l.b16 %v5327
    %v5536 = vunpack.c.l.b16 %v5328
    %v5537 = vunpack.c.l.b16 %v5329
    %v5538 = vunpack.c.l.b16 %v5330
    %v5539 = vunpack.c.l.b16 %v5331
    %v5540 = vunpack.c.l.b16 %v5332
    %v5541 = vunpack.c.l.b16 %v5333
    %v5542 = vunpack.c.l.b16 %v5334
    %v5543 = vunpack.c.l.b16 %v5335
    %v5544 = vunpack.c.l.b16 %v5336
    %v5545 = vunpack.c.l.b16 %v5337
    %v5546 = vunpack.c.l.b16 %v5338
    %v5547 = vunpack.c.l.b16 %v5339
    %v5548 = vunpack.c.l.b16 %v5340
    %v5549 = vunpack.c.l.b16 %v5341
    %v5550 = vunpack.c.l.b16 %v5342
    %v5551 = vunpack.c.l.b16 %v5343
    %v5552 = vunpack.c.l.b16 %v5344
    %v5553 = vunpack.c.l.b16 %v5345
    %v5554 = vunpack.c.l.b16 %v5346
    %v5555 = vunpack.c.l.b16 %v5347
    %v5556 = vunpack.c.l.b16 %v5348
    %v5557 = vunpack.c.l.b16 %v5349
    %v5558 = vunpack.c.l.b16 %v5350
    %v5559 = vunpack.c.l.b16 %v5351
    %v5560 = vunpack.c.l.b16 %v5352
    %v5561 = vunpack.c.l.b16 %v5353
    %v5562 = vunpack.c.l.b16 %v5354
    %v5563 = vunpack.c.l.b16 %v5355
    %v5564 = vunpack.c.l.b16 %v5356
    %v5565 = vunpack.c.l.b16 %v5357
    %v5566 = vunpack.c.l.b16 %v5358
    %v5567 = vunpack.c.l.b16 %v5359
    %v5568 = vunpack.c.l.b16 %v5360
    %v5569 = vunpack.c.l.b16 %v5361
    %v5570 = vunpack.c.l.b16 %v5362
    %v5571 = vunpack.c.l.b16 %v5363
    %v5572 = vunpack.c.l.b16 %v5364
    %v5573 = vunpack.c.l.b16 %v5365
    %v5574 = vunpack.c.l.b16 %v5366
    %v5575 = vunpack.c.l.b16 %v5367
    %v5576 = vunpack.c.l.b16 %v5368
    %v5577 = vunpack.c.l.b16 %v5369
    %v5578 = vunpack.c.l.b16 %v5370
    %v5579 = vunpack.c.l.b16 %v5371
    %v5580 = vunpack.c.l.b16 %v5372
    %v5581 = vunpack.c.l.b16 %v5373
    %v5582 = vunpack.c.l.b16 %v5374
    %v5583 = vunpack.c.l.b16 %v5375
    %v5584 = vpack.c.b16 %v5481, %v5480
    %v5585 = vpack.c.b16 %v5483, %v5482
    %v5586 = vpack.c.b16 %v5485, %v5484
    %v5587 = vpack.c.b16 %v5487, %v5486
    %v5588 = vpack.c.b16 %v5489, %v5488
    %v5589 = vpack.c.b16 %v5491, %v5490
    %v5590 = vpack.c.b16 %v5493, %v5492
    %v5591 = vpack.c.b16 %v5495, %v5494
    %v5592 = vpack.c.b16 %v5497, %v5496
    %v5593 = vpack.c.b16 %v5499, %v5498
    %v5594 = vpack.c.b16 %v5501, %v5500
    %v5595 = vpack.c.b16 %v5503, %v5502
    %v5596 = vpack.c.b16 %v5505, %v5504
    %v5597 = vpack.c.b16 %v5507, %v5506
    %v5598 = vpack.c.b16 %v5509, %v5508
    %v5599 = vpack.c.b16 %v5511, %v5510
    %v5600 = vpack.c.b16 %v5513, %v5512
    %v5601 = vpack.c.b16 %v5515, %v5514
    %v5602 = vpack.c.b16 %v5517, %v5516
    %v5603 = vpack.c.b16 %v5519, %v5518
    %v5604 = vpack.c.b16 %v5521, %v5520
    %v5605 = vpack.c.b16 %v5523, %v5522
    %v5606 = vpack.c.b16 %v5525, %v5524
    %v5607 = vpack.c.b16 %v5527, %v5526
    %v5608 = vpack.c.b16 %v5529, %v5528
    %v5609 = vpack.c.b16 %v5531, %v5530
    %v5610 = vpack.c.b16 %v5533, %v5532
    %v5611 = vpack.c.b16 %v5535, %v5534
    %v5612 = vpack.c.b16 %v5537, %v5536
    %v5613 = vpack.c.b16 %v5539, %v5538
    %v5614 = vpack.c.b16 %v5541, %v5540
    %v5615 = vpack.c.b16 %v5543, %v5542
    %v5616 = vpack.c.b16 %v5545, %v5544
    %v5617 = vpack.c.b16 %v5547, %v5546
    %v5618 = vpack.c.b16 %v5549, %v5548
    %v5619 = vpack.c.b16 %v5551, %v5550
    %v5620 = vpack.c.b16 %v5553, %v5552
    %v5621 = vpack.c.b16 %v5555, %v5554
    %v5622 = vpack.c.b16 %v5557, %v5556
    %v5623 = vpack.c.b16 %v5559, %v5558
    %v5624 = vpack.c.b16 %v5561, %v5560
    %v5625 = vpack.c.b16 %v5563, %v5562
    %v5626 = vpack.c.b16 %v5565, %v5564
    %v5627 = vpack.c.b16 %v5567, %v5566
    %v5628 = vpack.c.b16 %v5569, %v5568
    %v5629 = vpack.c.b16 %v5571, %v5570
    %v5630 = vpack.c.b16 %v5573, %v5572
    %v5631 = vpack.c.b16 %v5575, %v5574
    %v5632 = vpack.c.b16 %v5577, %v5576
    %v5633 = vpack.c.b16 %v5579, %v5578
    %v5634 = vpack.c.b16 %v5581, %v5580
    %v5635 = vpack.c.b16 %v5583, %v5582
    %vm5688 = vcmask 261120
    %5689 = vst.msk [vmem:[#allocation5] sm:$0xff] %vm5688, %v5584
    %5690 = vst.msk [vmem:[#allocation5 + $0x8] sm:$0xff] %vm5688, %v5585
    %5691 = vst.msk [vmem:[#allocation5 + $0x10] sm:$0xff] %vm5688, %v5586
    %5692 = vst.msk [vmem:[#allocation5 + $0x18] sm:$0xff] %vm5688, %v5587
    %5693 = vst.msk [vmem:[#allocation5 + $0x20] sm:$0xff] %vm5688, %v5588
    %5694 = vst.msk [vmem:[#allocation5 + $0x28] sm:$0xff] %vm5688, %v5589
    %5695 = vst.msk [vmem:[#allocation5 + $0x30] sm:$0xff] %vm5688, %v5590
    %5696 = vst.msk [vmem:[#allocation5 + $0x38] sm:$0xff] %vm5688, %v5591
    %5697 = vst.msk [vmem:[#allocation5 + $0x40] sm:$0xff] %vm5688, %v5592
    %5698 = vst.msk [vmem:[#allocation5 + $0x48] sm:$0xff] %vm5688, %v5593
    %5699 = vst.msk [vmem:[#allocation5 + $0x50] sm:$0xff] %vm5688, %v5594
    %5700 = vst.msk [vmem:[#allocation5 + $0x58] sm:$0xff] %vm5688, %v5595
    %5701 = vst.msk [vmem:[#allocation5 + $0x60] sm:$0xff] %vm5688, %v5596
    %5702 = vst.msk [vmem:[#allocation5 + $0x68] sm:$0xff] %vm5688, %v5597
    %5703 = vst.msk [vmem:[#allocation5 + $0x70] sm:$0xff] %vm5688, %v5598
    %5704 = vst.msk [vmem:[#allocation5 + $0x78] sm:$0xff] %vm5688, %v5599
    %5705 = vst.msk [vmem:[#allocation5 + $0x80] sm:$0xff] %vm5688, %v5600
    %5706 = vst.msk [vmem:[#allocation5 + $0x88] sm:$0xff] %vm5688, %v5601
    %5707 = vst.msk [vmem:[#allocation5 + $0x90] sm:$0xff] %vm5688, %v5602
    %5708 = vst.msk [vmem:[#allocation5 + $0x98] sm:$0xff] %vm5688, %v5603
    %5709 = vst.msk [vmem:[#allocation5 + $0xa0] sm:$0xff] %vm5688, %v5604
    %5710 = vst.msk [vmem:[#allocation5 + $0xa8] sm:$0xff] %vm5688, %v5605
    %5711 = vst.msk [vmem:[#allocation5 + $0xb0] sm:$0xff] %vm5688, %v5606
    %5712 = vst.msk [vmem:[#allocation5 + $0xb8] sm:$0xff] %vm5688, %v5607
    %5713 = vst.msk [vmem:[#allocation5 + $0xc0] sm:$0xff] %vm5688, %v5608
    %5714 = vst.msk [vmem:[#allocation5 + $0xc8] sm:$0xff] %vm5688, %v5609
    %5715 = vst.msk [vmem:[#allocation5 + $0xd0] sm:$0xff] %vm5688, %v5610
    %5716 = vst.msk [vmem:[#allocation5 + $0xd8] sm:$0xff] %vm5688, %v5611
    %5717 = vst.msk [vmem:[#allocation5 + $0xe0] sm:$0xff] %vm5688, %v5612
    %5718 = vst.msk [vmem:[#allocation5 + $0xe8] sm:$0xff] %vm5688, %v5613
    %5719 = vst.msk [vmem:[#allocation5 + $0xf0] sm:$0xff] %vm5688, %v5614
    %5720 = vst.msk [vmem:[#allocation5 + $0xf8] sm:$0xff] %vm5688, %v5615
    %5721 = vst.msk [vmem:[#allocation5 + $0x100] sm:$0xff] %vm5688, %v5616
    %5722 = vst.msk [vmem:[#allocation5 + $0x108] sm:$0xff] %vm5688, %v5617
    %5723 = vst.msk [vmem:[#allocation5 + $0x110] sm:$0xff] %vm5688, %v5618
    %5724 = vst.msk [vmem:[#allocation5 + $0x118] sm:$0xff] %vm5688, %v5619
    %5725 = vst.msk [vmem:[#allocation5 + $0x120] sm:$0xff] %vm5688, %v5620
    %5726 = vst.msk [vmem:[#allocation5 + $0x128] sm:$0xff] %vm5688, %v5621
    %5727 = vst.msk [vmem:[#allocation5 + $0x130] sm:$0xff] %vm5688, %v5622
    %5728 = vst.msk [vmem:[#allocation5 + $0x138] sm:$0xff] %vm5688, %v5623
    %5729 = vst.msk [vmem:[#allocation5 + $0x140] sm:$0xff] %vm5688, %v5624
    %5730 = vst.msk [vmem:[#allocation5 + $0x148] sm:$0xff] %vm5688, %v5625
    %5731 = vst.msk [vmem:[#allocation5 + $0x150] sm:$0xff] %vm5688, %v5626
    %5732 = vst.msk [vmem:[#allocation5 + $0x158] sm:$0xff] %vm5688, %v5627
    %5733 = vst.msk [vmem:[#allocation5 + $0x160] sm:$0xff] %vm5688, %v5628
    %5734 = vst.msk [vmem:[#allocation5 + $0x168] sm:$0xff] %vm5688, %v5629
    %5735 = vst.msk [vmem:[#allocation5 + $0x170] sm:$0xff] %vm5688, %v5630
    %5736 = vst.msk [vmem:[#allocation5 + $0x178] sm:$0xff] %vm5688, %v5631
    %5737 = vst.msk [vmem:[#allocation5 + $0x180] sm:$0xff] %vm5688, %v5632
    %5738 = vst.msk [vmem:[#allocation5 + $0x188] sm:$0xff] %vm5688, %v5633
    %5739 = vst.msk [vmem:[#allocation5 + $0x190] sm:$0xff] %vm5688, %v5634
    %5740 = vst.msk [vmem:[#allocation5 + $0x198] sm:$0xff] %vm5688, %v5635
    %v5741 = vld [vmem:[#allocation4] sm:$0xf]
    %v5742 = vld [vmem:[#allocation4 + $0x4] sm:$0xf]
    %v5743 = vld [vmem:[#allocation4 + $0x8] sm:$0xf]
    %v5744 = vld [vmem:[#allocation4 + $0xc] sm:$0xf]
    %v5745 = vld [vmem:[#allocation4 + $0x10] sm:$0xf]
    %v5746 = vld [vmem:[#allocation4 + $0x14] sm:$0xf]
    %v5747 = vld [vmem:[#allocation4 + $0x18] sm:$0xf]
    %v5748 = vld [vmem:[#allocation4 + $0x1c] sm:$0xf]
    %v5749 = vld [vmem:[#allocation4 + $0x20] sm:$0xf]
    %v5750 = vld [vmem:[#allocation4 + $0x24] sm:$0xf]
    %v5751 = vld [vmem:[#allocation4 + $0x28] sm:$0xf]
    %v5752 = vld [vmem:[#allocation4 + $0x2c] sm:$0xf]
    %v5753 = vld [vmem:[#allocation4 + $0x30] sm:$0xf]
    %v5754 = vld [vmem:[#allocation4 + $0x34] sm:$0xf]
    %v5755 = vld [vmem:[#allocation4 + $0x38] sm:$0xf]
    %v5756 = vld [vmem:[#allocation4 + $0x3c] sm:$0xf]
    %v5757 = vld [vmem:[#allocation4 + $0x40] sm:$0xf]
    %v5758 = vld [vmem:[#allocation4 + $0x44] sm:$0xf]
    %v5759 = vld [vmem:[#allocation4 + $0x48] sm:$0xf]
    %v5760 = vld [vmem:[#allocation4 + $0x4c] sm:$0xf]
    %v5761 = vld [vmem:[#allocation4 + $0x50] sm:$0xf]
    %v5762 = vld [vmem:[#allocation4 + $0x54] sm:$0xf]
    %v5763 = vld [vmem:[#allocation4 + $0x58] sm:$0xf]
    %v5764 = vld [vmem:[#allocation4 + $0x5c] sm:$0xf]
    %v5765 = vld [vmem:[#allocation4 + $0x60] sm:$0xf]
    %v5766 = vld [vmem:[#allocation4 + $0x64] sm:$0xf]
    %v5767 = vld [vmem:[#allocation4 + $0x68] sm:$0xf]
    %v5768 = vld [vmem:[#allocation4 + $0x6c] sm:$0xf]
    %v5769 = vld [vmem:[#allocation4 + $0x70] sm:$0xf]
    %v5770 = vld [vmem:[#allocation4 + $0x74] sm:$0xf]
    %v5771 = vld [vmem:[#allocation4 + $0x78] sm:$0xf]
    %v5772 = vld [vmem:[#allocation4 + $0x7c] sm:$0xf]
    %v5773 = vld [vmem:[#allocation4 + $0x80] sm:$0xf]
    %v5774 = vld [vmem:[#allocation4 + $0x84] sm:$0xf]
    %v5775 = vld [vmem:[#allocation4 + $0x88] sm:$0xf]
    %v5776 = vld [vmem:[#allocation4 + $0x8c] sm:$0xf]
    %v5777 = vld [vmem:[#allocation4 + $0x90] sm:$0xf]
    %v5778 = vld [vmem:[#allocation4 + $0x94] sm:$0xf]
    %v5779 = vld [vmem:[#allocation4 + $0x98] sm:$0xf]
    %v5780 = vld [vmem:[#allocation4 + $0x9c] sm:$0xf]
    %v5781 = vld [vmem:[#allocation4 + $0xa0] sm:$0xf]
    %v5782 = vld [vmem:[#allocation4 + $0xa4] sm:$0xf]
    %v5783 = vld [vmem:[#allocation4 + $0xa8] sm:$0xf]
    %v5784 = vld [vmem:[#allocation4 + $0xac] sm:$0xf]
    %v5785 = vld [vmem:[#allocation4 + $0xb0] sm:$0xf]
    %v5786 = vld [vmem:[#allocation4 + $0xb4] sm:$0xf]
    %v5787 = vld [vmem:[#allocation4 + $0xb8] sm:$0xf]
    %v5788 = vld [vmem:[#allocation4 + $0xbc] sm:$0xf]
    %v5789 = vld [vmem:[#allocation4 + $0xc0] sm:$0xf]
    %v5790 = vld [vmem:[#allocation4 + $0xc4] sm:$0xf]
    %v5791 = vld [vmem:[#allocation4 + $0xc8] sm:$0xf]
    %v5792 = vld [vmem:[#allocation4 + $0xcc] sm:$0xf]
    %v5793 = vld [vmem:[#allocation4 + $0xd0] sm:$0xf]
    %v5794 = vld [vmem:[#allocation4 + $0xd4] sm:$0xf]
    %v5795 = vld [vmem:[#allocation4 + $0xd8] sm:$0xf]
    %v5796 = vld [vmem:[#allocation4 + $0xdc] sm:$0xf]
    %v5797 = vld [vmem:[#allocation4 + $0xe0] sm:$0xf]
    %v5798 = vld [vmem:[#allocation4 + $0xe4] sm:$0xf]
    %v5799 = vld [vmem:[#allocation4 + $0xe8] sm:$0xf]
    %v5800 = vld [vmem:[#allocation4 + $0xec] sm:$0xf]
    %v5801 = vld [vmem:[#allocation4 + $0xf0] sm:$0xf]
    %v5802 = vld [vmem:[#allocation4 + $0xf4] sm:$0xf]
    %v5803 = vld [vmem:[#allocation4 + $0xf8] sm:$0xf]
    %v5804 = vld [vmem:[#allocation4 + $0xfc] sm:$0xf]
    %v5805 = vld [vmem:[#allocation4 + $0x100] sm:$0xf]
    %v5806 = vld [vmem:[#allocation4 + $0x104] sm:$0xf]
    %v5807 = vld [vmem:[#allocation4 + $0x108] sm:$0xf]
    %v5808 = vld [vmem:[#allocation4 + $0x10c] sm:$0xf]
    %v5809 = vld [vmem:[#allocation4 + $0x110] sm:$0xf]
    %v5810 = vld [vmem:[#allocation4 + $0x114] sm:$0xf]
    %v5811 = vld [vmem:[#allocation4 + $0x118] sm:$0xf]
    %v5812 = vld [vmem:[#allocation4 + $0x11c] sm:$0xf]
    %v5813 = vld [vmem:[#allocation4 + $0x120] sm:$0xf]
    %v5814 = vld [vmem:[#allocation4 + $0x124] sm:$0xf]
    %v5815 = vld [vmem:[#allocation4 + $0x128] sm:$0xf]
    %v5816 = vld [vmem:[#allocation4 + $0x12c] sm:$0xf]
    %v5817 = vld [vmem:[#allocation4 + $0x130] sm:$0xf]
    %v5818 = vld [vmem:[#allocation4 + $0x134] sm:$0xf]
    %v5819 = vld [vmem:[#allocation4 + $0x138] sm:$0xf]
    %v5820 = vld [vmem:[#allocation4 + $0x13c] sm:$0xf]
    %v5821 = vld [vmem:[#allocation4 + $0x140] sm:$0xf]
    %v5822 = vld [vmem:[#allocation4 + $0x144] sm:$0xf]
    %v5823 = vld [vmem:[#allocation4 + $0x148] sm:$0xf]
    %v5824 = vld [vmem:[#allocation4 + $0x14c] sm:$0xf]
    %v5825 = vld [vmem:[#allocation4 + $0x150] sm:$0xf]
    %v5826 = vld [vmem:[#allocation4 + $0x154] sm:$0xf]
    %v5827 = vld [vmem:[#allocation4 + $0x158] sm:$0xf]
    %v5828 = vld [vmem:[#allocation4 + $0x15c] sm:$0xf]
    %v5829 = vld [vmem:[#allocation4 + $0x160] sm:$0xf]
    %v5830 = vld [vmem:[#allocation4 + $0x164] sm:$0xf]
    %v5831 = vld [vmem:[#allocation4 + $0x168] sm:$0xf]
    %v5832 = vld [vmem:[#allocation4 + $0x16c] sm:$0xf]
    %v5833 = vld [vmem:[#allocation4 + $0x170] sm:$0xf]
    %v5834 = vld [vmem:[#allocation4 + $0x174] sm:$0xf]
    %v5835 = vld [vmem:[#allocation4 + $0x178] sm:$0xf]
    %v5836 = vld [vmem:[#allocation4 + $0x17c] sm:$0xf]
    %v5837 = vld [vmem:[#allocation4 + $0x180] sm:$0xf]
    %v5838 = vld [vmem:[#allocation4 + $0x184] sm:$0xf]
    %v5839 = vld [vmem:[#allocation4 + $0x188] sm:$0xf]
    %v5840 = vld [vmem:[#allocation4 + $0x18c] sm:$0xf]
    %v5841 = vld [vmem:[#allocation4 + $0x190] sm:$0xf]
    %v5842 = vld [vmem:[#allocation4 + $0x194] sm:$0xf]
    %v5843 = vld [vmem:[#allocation4 + $0x198] sm:$0xf]
    %v5844 = vld [vmem:[#allocation4 + $0x19c] sm:$0xf]
    %v5845 = vld [vmem:[#allocation4 + $0x1a0] sm:$0x1]
    %v5951 = vunpack.c.l.b16 %v5741
    %v5952 = vunpack.c.l.b16 %v5742
    %v5953 = vunpack.c.l.b16 %v5743
    %v5954 = vunpack.c.l.b16 %v5744
    %v5955 = vunpack.c.l.b16 %v5745
    %v5956 = vunpack.c.l.b16 %v5746
    %v5957 = vunpack.c.l.b16 %v5747
    %v5958 = vunpack.c.l.b16 %v5748
    %v5959 = vunpack.c.l.b16 %v5749
    %v5960 = vunpack.c.l.b16 %v5750
    %v5961 = vunpack.c.l.b16 %v5751
    %v5962 = vunpack.c.l.b16 %v5752
    %v5963 = vunpack.c.l.b16 %v5753
    %v5964 = vunpack.c.l.b16 %v5754
    %v5965 = vunpack.c.l.b16 %v5755
    %v5966 = vunpack.c.l.b16 %v5756
    %v5967 = vunpack.c.l.b16 %v5757
    %v5968 = vunpack.c.l.b16 %v5758
    %v5969 = vunpack.c.l.b16 %v5759
    %v5970 = vunpack.c.l.b16 %v5760
    %v5971 = vunpack.c.l.b16 %v5761
    %v5972 = vunpack.c.l.b16 %v5762
    %v5973 = vunpack.c.l.b16 %v5763
    %v5974 = vunpack.c.l.b16 %v5764
    %v5975 = vunpack.c.l.b16 %v5765
    %v5976 = vunpack.c.l.b16 %v5766
    %v5977 = vunpack.c.l.b16 %v5767
    %v5978 = vunpack.c.l.b16 %v5768
    %v5979 = vunpack.c.l.b16 %v5769
    %v5980 = vunpack.c.l.b16 %v5770
    %v5981 = vunpack.c.l.b16 %v5771
    %v5982 = vunpack.c.l.b16 %v5772
    %v5983 = vunpack.c.l.b16 %v5773
    %v5984 = vunpack.c.l.b16 %v5774
    %v5985 = vunpack.c.l.b16 %v5775
    %v5986 = vunpack.c.l.b16 %v5776
    %v5987 = vunpack.c.l.b16 %v5777
    %v5988 = vunpack.c.l.b16 %v5778
    %v5989 = vunpack.c.l.b16 %v5779
    %v5990 = vunpack.c.l.b16 %v5780
    %v5991 = vunpack.c.l.b16 %v5781
    %v5992 = vunpack.c.l.b16 %v5782
    %v5993 = vunpack.c.l.b16 %v5783
    %v5994 = vunpack.c.l.b16 %v5784
    %v5995 = vunpack.c.l.b16 %v5785
    %v5996 = vunpack.c.l.b16 %v5786
    %v5997 = vunpack.c.l.b16 %v5787
    %v5998 = vunpack.c.l.b16 %v5788
    %v5999 = vunpack.c.l.b16 %v5789
    %v6000 = vunpack.c.l.b16 %v5790
    %v6001 = vunpack.c.l.b16 %v5791
    %v6002 = vunpack.c.l.b16 %v5792
    %v6003 = vunpack.c.l.b16 %v5793
    %v6004 = vunpack.c.l.b16 %v5794
    %v6005 = vunpack.c.l.b16 %v5795
    %v6006 = vunpack.c.l.b16 %v5796
    %v6007 = vunpack.c.l.b16 %v5797
    %v6008 = vunpack.c.l.b16 %v5798
    %v6009 = vunpack.c.l.b16 %v5799
    %v6010 = vunpack.c.l.b16 %v5800
    %v6011 = vunpack.c.l.b16 %v5801
    %v6012 = vunpack.c.l.b16 %v5802
    %v6013 = vunpack.c.l.b16 %v5803
    %v6014 = vunpack.c.l.b16 %v5804
    %v6015 = vunpack.c.l.b16 %v5805
    %v6016 = vunpack.c.l.b16 %v5806
    %v6017 = vunpack.c.l.b16 %v5807
    %v6018 = vunpack.c.l.b16 %v5808
    %v6019 = vunpack.c.l.b16 %v5809
    %v6020 = vunpack.c.l.b16 %v5810
    %v6021 = vunpack.c.l.b16 %v5811
    %v6022 = vunpack.c.l.b16 %v5812
    %v6023 = vunpack.c.l.b16 %v5813
    %v6024 = vunpack.c.l.b16 %v5814
    %v6025 = vunpack.c.l.b16 %v5815
    %v6026 = vunpack.c.l.b16 %v5816
    %v6027 = vunpack.c.l.b16 %v5817
    %v6028 = vunpack.c.l.b16 %v5818
    %v6029 = vunpack.c.l.b16 %v5819
    %v6030 = vunpack.c.l.b16 %v5820
    %v6031 = vunpack.c.l.b16 %v5821
    %v6032 = vunpack.c.l.b16 %v5822
    %v6033 = vunpack.c.l.b16 %v5823
    %v6034 = vunpack.c.l.b16 %v5824
    %v6035 = vunpack.c.l.b16 %v5825
    %v6036 = vunpack.c.l.b16 %v5826
    %v6037 = vunpack.c.l.b16 %v5827
    %v6038 = vunpack.c.l.b16 %v5828
    %v6039 = vunpack.c.l.b16 %v5829
    %v6040 = vunpack.c.l.b16 %v5830
    %v6041 = vunpack.c.l.b16 %v5831
    %v6042 = vunpack.c.l.b16 %v5832
    %v6043 = vunpack.c.l.b16 %v5833
    %v6044 = vunpack.c.l.b16 %v5834
    %v6045 = vunpack.c.l.b16 %v5835
    %v6046 = vunpack.c.l.b16 %v5836
    %v6047 = vunpack.c.l.b16 %v5837
    %v6048 = vunpack.c.l.b16 %v5838
    %v6049 = vunpack.c.l.b16 %v5839
    %v6050 = vunpack.c.l.b16 %v5840
    %v6051 = vunpack.c.l.b16 %v5841
    %v6052 = vunpack.c.l.b16 %v5842
    %v6053 = vunpack.c.l.b16 %v5843
    %v6054 = vunpack.c.l.b16 %v5844
    %v6055 = vunpack.c.l.b16 %v5845
    %v6056 = vpack.c.b16 %v5952, %v5951
    %v6057 = vpack.c.b16 %v5954, %v5953
    %v6058 = vpack.c.b16 %v5956, %v5955
    %v6059 = vpack.c.b16 %v5958, %v5957
    %v6060 = vpack.c.b16 %v5960, %v5959
    %v6061 = vpack.c.b16 %v5962, %v5961
    %v6062 = vpack.c.b16 %v5964, %v5963
    %v6063 = vpack.c.b16 %v5966, %v5965
    %v6064 = vpack.c.b16 %v5968, %v5967
    %v6065 = vpack.c.b16 %v5970, %v5969
    %v6066 = vpack.c.b16 %v5972, %v5971
    %v6067 = vpack.c.b16 %v5974, %v5973
    %v6068 = vpack.c.b16 %v5976, %v5975
    %v6069 = vpack.c.b16 %v5978, %v5977
    %v6070 = vpack.c.b16 %v5980, %v5979
    %v6071 = vpack.c.b16 %v5982, %v5981
    %v6072 = vpack.c.b16 %v5984, %v5983
    %v6073 = vpack.c.b16 %v5986, %v5985
    %v6074 = vpack.c.b16 %v5988, %v5987
    %v6075 = vpack.c.b16 %v5990, %v5989
    %v6076 = vpack.c.b16 %v5992, %v5991
    %v6077 = vpack.c.b16 %v5994, %v5993
    %v6078 = vpack.c.b16 %v5996, %v5995
    %v6079 = vpack.c.b16 %v5998, %v5997
    %v6080 = vpack.c.b16 %v6000, %v5999
    %v6081 = vpack.c.b16 %v6002, %v6001
    %v6082 = vpack.c.b16 %v6004, %v6003
    %v6083 = vpack.c.b16 %v6006, %v6005
    %v6084 = vpack.c.b16 %v6008, %v6007
    %v6085 = vpack.c.b16 %v6010, %v6009
    %v6086 = vpack.c.b16 %v6012, %v6011
    %v6087 = vpack.c.b16 %v6014, %v6013
    %v6088 = vpack.c.b16 %v6016, %v6015
    %v6089 = vpack.c.b16 %v6018, %v6017
    %v6090 = vpack.c.b16 %v6020, %v6019
    %v6091 = vpack.c.b16 %v6022, %v6021
    %v6092 = vpack.c.b16 %v6024, %v6023
    %v6093 = vpack.c.b16 %v6026, %v6025
    %v6094 = vpack.c.b16 %v6028, %v6027
    %v6095 = vpack.c.b16 %v6030, %v6029
    %v6096 = vpack.c.b16 %v6032, %v6031
    %v6097 = vpack.c.b16 %v6034, %v6033
    %v6098 = vpack.c.b16 %v6036, %v6035
    %v6099 = vpack.c.b16 %v6038, %v6037
    %v6100 = vpack.c.b16 %v6040, %v6039
    %v6101 = vpack.c.b16 %v6042, %v6041
    %v6102 = vpack.c.b16 %v6044, %v6043
    %v6103 = vpack.c.b16 %v6046, %v6045
    %v6104 = vpack.c.b16 %v6048, %v6047
    %v6105 = vpack.c.b16 %v6050, %v6049
    %v6106 = vpack.c.b16 %v6052, %v6051
    %v6107 = vpack.c.b16 %v6054, %v6053
    %v6108 = vpack.c.b16 %v6055, %v6055
    %vm6109 = vsmask.f32 7424
    %v6111 = vshrl.u32 %v6056, 16
    %v6113 = vshll.u32 %v6056, 16
    %v6115 = vrot.slane %v6113, 1
    %v6116 = vor.u32 %v6111, %v6115
    %v6118 = vshll.u32 %v6057, 16
    %v6120 = vrot.slane %v6118, 1
    %v6121 = vsel %vm6109, %v6116, %v6120
    %v6122 = vshrl.u32 %v6057, 16
    %v6124 = vor.u32 %v6122, %v6120
    %v6126 = vshll.u32 %v6058, 16
    %v6128 = vrot.slane %v6126, 1
    %v6129 = vsel %vm6109, %v6124, %v6128
    %v6130 = vshrl.u32 %v6058, 16
    %v6132 = vor.u32 %v6130, %v6128
    %v6134 = vshll.u32 %v6059, 16
    %v6136 = vrot.slane %v6134, 1
    %v6137 = vsel %vm6109, %v6132, %v6136
    %v6138 = vshrl.u32 %v6059, 16
    %v6140 = vor.u32 %v6138, %v6136
    %v6142 = vshll.u32 %v6060, 16
    %v6144 = vrot.slane %v6142, 1
    %v6145 = vsel %vm6109, %v6140, %v6144
    %v6146 = vshrl.u32 %v6060, 16
    %v6148 = vor.u32 %v6146, %v6144
    %v6150 = vshll.u32 %v6061, 16
    %v6152 = vrot.slane %v6150, 1
    %v6153 = vsel %vm6109, %v6148, %v6152
    %v6154 = vshrl.u32 %v6061, 16
    %v6156 = vor.u32 %v6154, %v6152
    %v6158 = vshll.u32 %v6062, 16
    %v6160 = vrot.slane %v6158, 1
    %v6161 = vsel %vm6109, %v6156, %v6160
    %v6162 = vshrl.u32 %v6062, 16
    %v6164 = vor.u32 %v6162, %v6160
    %v6166 = vshll.u32 %v6063, 16
    %v6168 = vrot.slane %v6166, 1
    %v6169 = vsel %vm6109, %v6164, %v6168
    %v6170 = vshrl.u32 %v6063, 16
    %v6172 = vor.u32 %v6170, %v6168
    %v6174 = vshll.u32 %v6064, 16
    %v6176 = vrot.slane %v6174, 1
    %v6177 = vsel %vm6109, %v6172, %v6176
    %v6178 = vshrl.u32 %v6064, 16
    %v6180 = vor.u32 %v6178, %v6176
    %v6182 = vshll.u32 %v6065, 16
    %v6184 = vrot.slane %v6182, 1
    %v6185 = vsel %vm6109, %v6180, %v6184
    %v6186 = vshrl.u32 %v6065, 16
    %v6188 = vor.u32 %v6186, %v6184
    %v6190 = vshll.u32 %v6066, 16
    %v6192 = vrot.slane %v6190, 1
    %v6193 = vsel %vm6109, %v6188, %v6192
    %v6194 = vshrl.u32 %v6066, 16
    %v6196 = vor.u32 %v6194, %v6192
    %v6198 = vshll.u32 %v6067, 16
    %v6200 = vrot.slane %v6198, 1
    %v6201 = vsel %vm6109, %v6196, %v6200
    %v6202 = vshrl.u32 %v6067, 16
    %v6204 = vor.u32 %v6202, %v6200
    %v6206 = vshll.u32 %v6068, 16
    %v6208 = vrot.slane %v6206, 1
    %v6209 = vsel %vm6109, %v6204, %v6208
    %v6210 = vshrl.u32 %v6068, 16
    %v6212 = vor.u32 %v6210, %v6208
    %v6214 = vshll.u32 %v6069, 16
    %v6216 = vrot.slane %v6214, 1
    %v6217 = vsel %vm6109, %v6212, %v6216
    %v6218 = vshrl.u32 %v6069, 16
    %v6220 = vor.u32 %v6218, %v6216
    %v6222 = vshll.u32 %v6070, 16
    %v6224 = vrot.slane %v6222, 1
    %v6225 = vsel %vm6109, %v6220, %v6224
    %v6226 = vshrl.u32 %v6070, 16
    %v6228 = vor.u32 %v6226, %v6224
    %v6230 = vshll.u32 %v6071, 16
    %v6232 = vrot.slane %v6230, 1
    %v6233 = vsel %vm6109, %v6228, %v6232
    %v6234 = vshrl.u32 %v6071, 16
    %v6236 = vor.u32 %v6234, %v6232
    %v6238 = vshll.u32 %v6072, 16
    %v6240 = vrot.slane %v6238, 1
    %v6241 = vsel %vm6109, %v6236, %v6240
    %v6242 = vshrl.u32 %v6072, 16
    %v6244 = vor.u32 %v6242, %v6240
    %v6246 = vshll.u32 %v6073, 16
    %v6248 = vrot.slane %v6246, 1
    %v6249 = vsel %vm6109, %v6244, %v6248
    %v6250 = vshrl.u32 %v6073, 16
    %v6252 = vor.u32 %v6250, %v6248
    %v6254 = vshll.u32 %v6074, 16
    %v6256 = vrot.slane %v6254, 1
    %v6257 = vsel %vm6109, %v6252, %v6256
    %v6258 = vshrl.u32 %v6074, 16
    %v6260 = vor.u32 %v6258, %v6256
    %v6262 = vshll.u32 %v6075, 16
    %v6264 = vrot.slane %v6262, 1
    %v6265 = vsel %vm6109, %v6260, %v6264
    %v6266 = vshrl.u32 %v6075, 16
    %v6268 = vor.u32 %v6266, %v6264
    %v6270 = vshll.u32 %v6076, 16
    %v6272 = vrot.slane %v6270, 1
    %v6273 = vsel %vm6109, %v6268, %v6272
    %v6274 = vshrl.u32 %v6076, 16
    %v6276 = vor.u32 %v6274, %v6272
    %v6278 = vshll.u32 %v6077, 16
    %v6280 = vrot.slane %v6278, 1
    %v6281 = vsel %vm6109, %v6276, %v6280
    %v6282 = vshrl.u32 %v6077, 16
    %v6284 = vor.u32 %v6282, %v6280
    %v6286 = vshll.u32 %v6078, 16
    %v6288 = vrot.slane %v6286, 1
    %v6289 = vsel %vm6109, %v6284, %v6288
    %v6290 = vshrl.u32 %v6078, 16
    %v6292 = vor.u32 %v6290, %v6288
    %v6294 = vshll.u32 %v6079, 16
    %v6296 = vrot.slane %v6294, 1
    %v6297 = vsel %vm6109, %v6292, %v6296
    %v6298 = vshrl.u32 %v6079, 16
    %v6300 = vor.u32 %v6298, %v6296
    %v6302 = vshll.u32 %v6080, 16
    %v6304 = vrot.slane %v6302, 1
    %v6305 = vsel %vm6109, %v6300, %v6304
    %v6306 = vshrl.u32 %v6080, 16
    %v6308 = vor.u32 %v6306, %v6304
    %v6310 = vshll.u32 %v6081, 16
    %v6312 = vrot.slane %v6310, 1
    %v6313 = vsel %vm6109, %v6308, %v6312
    %v6314 = vshrl.u32 %v6081, 16
    %v6316 = vor.u32 %v6314, %v6312
    %v6318 = vshll.u32 %v6082, 16
    %v6320 = vrot.slane %v6318, 1
    %v6321 = vsel %vm6109, %v6316, %v6320
    %v6322 = vshrl.u32 %v6082, 16
    %v6324 = vor.u32 %v6322, %v6320
    %v6326 = vshll.u32 %v6083, 16
    %v6328 = vrot.slane %v6326, 1
    %v6329 = vsel %vm6109, %v6324, %v6328
    %v6330 = vshrl.u32 %v6083, 16
    %v6332 = vor.u32 %v6330, %v6328
    %v6334 = vshll.u32 %v6084, 16
    %v6336 = vrot.slane %v6334, 1
    %v6337 = vsel %vm6109, %v6332, %v6336
    %v6338 = vshrl.u32 %v6084, 16
    %v6340 = vor.u32 %v6338, %v6336
    %v6342 = vshll.u32 %v6085, 16
    %v6344 = vrot.slane %v6342, 1
    %v6345 = vsel %vm6109, %v6340, %v6344
    %v6346 = vshrl.u32 %v6085, 16
    %v6348 = vor.u32 %v6346, %v6344
    %v6350 = vshll.u32 %v6086, 16
    %v6352 = vrot.slane %v6350, 1
    %v6353 = vsel %vm6109, %v6348, %v6352
    %v6354 = vshrl.u32 %v6086, 16
    %v6356 = vor.u32 %v6354, %v6352
    %v6358 = vshll.u32 %v6087, 16
    %v6360 = vrot.slane %v6358, 1
    %v6361 = vsel %vm6109, %v6356, %v6360
    %v6362 = vshrl.u32 %v6087, 16
    %v6364 = vor.u32 %v6362, %v6360
    %v6366 = vshll.u32 %v6088, 16
    %v6368 = vrot.slane %v6366, 1
    %v6369 = vsel %vm6109, %v6364, %v6368
    %v6370 = vshrl.u32 %v6088, 16
    %v6372 = vor.u32 %v6370, %v6368
    %v6374 = vshll.u32 %v6089, 16
    %v6376 = vrot.slane %v6374, 1
    %v6377 = vsel %vm6109, %v6372, %v6376
    %v6378 = vshrl.u32 %v6089, 16
    %v6380 = vor.u32 %v6378, %v6376
    %v6382 = vshll.u32 %v6090, 16
    %v6384 = vrot.slane %v6382, 1
    %v6385 = vsel %vm6109, %v6380, %v6384
    %v6386 = vshrl.u32 %v6090, 16
    %v6388 = vor.u32 %v6386, %v6384
    %v6390 = vshll.u32 %v6091, 16
    %v6392 = vrot.slane %v6390, 1
    %v6393 = vsel %vm6109, %v6388, %v6392
    %v6394 = vshrl.u32 %v6091, 16
    %v6396 = vor.u32 %v6394, %v6392
    %v6398 = vshll.u32 %v6092, 16
    %v6400 = vrot.slane %v6398, 1
    %v6401 = vsel %vm6109, %v6396, %v6400
    %v6402 = vshrl.u32 %v6092, 16
    %v6404 = vor.u32 %v6402, %v6400
    %v6406 = vshll.u32 %v6093, 16
    %v6408 = vrot.slane %v6406, 1
    %v6409 = vsel %vm6109, %v6404, %v6408
    %v6410 = vshrl.u32 %v6093, 16
    %v6412 = vor.u32 %v6410, %v6408
    %v6414 = vshll.u32 %v6094, 16
    %v6416 = vrot.slane %v6414, 1
    %v6417 = vsel %vm6109, %v6412, %v6416
    %v6418 = vshrl.u32 %v6094, 16
    %v6420 = vor.u32 %v6418, %v6416
    %v6422 = vshll.u32 %v6095, 16
    %v6424 = vrot.slane %v6422, 1
    %v6425 = vsel %vm6109, %v6420, %v6424
    %v6426 = vshrl.u32 %v6095, 16
    %v6428 = vor.u32 %v6426, %v6424
    %v6430 = vshll.u32 %v6096, 16
    %v6432 = vrot.slane %v6430, 1
    %v6433 = vsel %vm6109, %v6428, %v6432
    %v6434 = vshrl.u32 %v6096, 16
    %v6436 = vor.u32 %v6434, %v6432
    %v6438 = vshll.u32 %v6097, 16
    %v6440 = vrot.slane %v6438, 1
    %v6441 = vsel %vm6109, %v6436, %v6440
    %v6442 = vshrl.u32 %v6097, 16
    %v6444 = vor.u32 %v6442, %v6440
    %v6446 = vshll.u32 %v6098, 16
    %v6448 = vrot.slane %v6446, 1
    %v6449 = vsel %vm6109, %v6444, %v6448
    %v6450 = vshrl.u32 %v6098, 16
    %v6452 = vor.u32 %v6450, %v6448
    %v6454 = vshll.u32 %v6099, 16
    %v6456 = vrot.slane %v6454, 1
    %v6457 = vsel %vm6109, %v6452, %v6456
    %v6458 = vshrl.u32 %v6099, 16
    %v6460 = vor.u32 %v6458, %v6456
    %v6462 = vshll.u32 %v6100, 16
    %v6464 = vrot.slane %v6462, 1
    %v6465 = vsel %vm6109, %v6460, %v6464
    %v6466 = vshrl.u32 %v6100, 16
    %v6468 = vor.u32 %v6466, %v6464
    %v6470 = vshll.u32 %v6101, 16
    %v6472 = vrot.slane %v6470, 1
    %v6473 = vsel %vm6109, %v6468, %v6472
    %v6474 = vshrl.u32 %v6101, 16
    %v6476 = vor.u32 %v6474, %v6472
    %v6478 = vshll.u32 %v6102, 16
    %v6480 = vrot.slane %v6478, 1
    %v6481 = vsel %vm6109, %v6476, %v6480
    %v6482 = vshrl.u32 %v6102, 16
    %v6484 = vor.u32 %v6482, %v6480
    %v6486 = vshll.u32 %v6103, 16
    %v6488 = vrot.slane %v6486, 1
    %v6489 = vsel %vm6109, %v6484, %v6488
    %v6490 = vshrl.u32 %v6103, 16
    %v6492 = vor.u32 %v6490, %v6488
    %v6494 = vshll.u32 %v6104, 16
    %v6496 = vrot.slane %v6494, 1
    %v6497 = vsel %vm6109, %v6492, %v6496
    %v6498 = vshrl.u32 %v6104, 16
    %v6500 = vor.u32 %v6498, %v6496
    %v6502 = vshll.u32 %v6105, 16
    %v6504 = vrot.slane %v6502, 1
    %v6505 = vsel %vm6109, %v6500, %v6504
    %v6506 = vshrl.u32 %v6105, 16
    %v6508 = vor.u32 %v6506, %v6504
    %v6510 = vshll.u32 %v6106, 16
    %v6512 = vrot.slane %v6510, 1
    %v6513 = vsel %vm6109, %v6508, %v6512
    %v6514 = vshrl.u32 %v6106, 16
    %v6516 = vor.u32 %v6514, %v6512
    %v6518 = vshll.u32 %v6107, 16
    %v6520 = vrot.slane %v6518, 1
    %v6521 = vsel %vm6109, %v6516, %v6520
    %v6522 = vshrl.u32 %v6107, 16
    %v6524 = vor.u32 %v6522, %v6520
    %v6526 = vshll.u32 %v6108, 16
    %v6528 = vrot.slane %v6526, 1
    %v6529 = vsel %vm6109, %v6524, %v6528
    %6530 = vrot.lane.b32.xlu0 %v6121, 32
    %v6531 = vpop.permute.xlu0 %6530
    %6532 = vrot.lane.b32.xlu0 %v6129, 32
    %v6533 = vpop.permute.xlu0 %6532
    %6534 = vrot.lane.b32.xlu0 %v6137, 32
    %v6535 = vpop.permute.xlu0 %6534
    %6536 = vrot.lane.b32.xlu0 %v6145, 32
    %v6537 = vpop.permute.xlu0 %6536
    %6538 = vrot.lane.b32.xlu0 %v6153, 32
    %v6539 = vpop.permute.xlu0 %6538
    %6540 = vrot.lane.b32.xlu0 %v6161, 32
    %v6541 = vpop.permute.xlu0 %6540
    %6542 = vrot.lane.b32.xlu0 %v6169, 32
    %v6543 = vpop.permute.xlu0 %6542
    %6544 = vrot.lane.b32.xlu0 %v6177, 32
    %v6545 = vpop.permute.xlu0 %6544
    %6546 = vrot.lane.b32.xlu0 %v6185, 32
    %v6547 = vpop.permute.xlu0 %6546
    %6548 = vrot.lane.b32.xlu0 %v6193, 32
    %v6549 = vpop.permute.xlu0 %6548
    %6550 = vrot.lane.b32.xlu0 %v6201, 32
    %v6551 = vpop.permute.xlu0 %6550
    %6552 = vrot.lane.b32.xlu0 %v6209, 32
    %v6553 = vpop.permute.xlu0 %6552
    %6554 = vrot.lane.b32.xlu0 %v6217, 32
    %v6555 = vpop.permute.xlu0 %6554
    %6556 = vrot.lane.b32.xlu0 %v6225, 32
    %v6557 = vpop.permute.xlu0 %6556
    %6558 = vrot.lane.b32.xlu0 %v6233, 32
    %v6559 = vpop.permute.xlu0 %6558
    %6560 = vrot.lane.b32.xlu0 %v6241, 32
    %v6561 = vpop.permute.xlu0 %6560
    %6562 = vrot.lane.b32.xlu0 %v6249, 32
    %v6563 = vpop.permute.xlu0 %6562
    %6564 = vrot.lane.b32.xlu0 %v6257, 32
    %v6565 = vpop.permute.xlu0 %6564
    %6566 = vrot.lane.b32.xlu0 %v6265, 32
    %v6567 = vpop.permute.xlu0 %6566
    %6568 = vrot.lane.b32.xlu0 %v6273, 32
    %v6569 = vpop.permute.xlu0 %6568
    %6570 = vrot.lane.b32.xlu0 %v6281, 32
    %v6571 = vpop.permute.xlu0 %6570
    %6572 = vrot.lane.b32.xlu0 %v6289, 32
    %v6573 = vpop.permute.xlu0 %6572
    %6574 = vrot.lane.b32.xlu0 %v6297, 32
    %v6575 = vpop.permute.xlu0 %6574
    %6576 = vrot.lane.b32.xlu0 %v6305, 32
    %v6577 = vpop.permute.xlu0 %6576
    %6578 = vrot.lane.b32.xlu0 %v6313, 32
    %v6579 = vpop.permute.xlu0 %6578
    %6580 = vrot.lane.b32.xlu0 %v6321, 32
    %v6581 = vpop.permute.xlu0 %6580
    %6582 = vrot.lane.b32.xlu0 %v6329, 32
    %v6583 = vpop.permute.xlu0 %6582
    %6584 = vrot.lane.b32.xlu0 %v6337, 32
    %v6585 = vpop.permute.xlu0 %6584
    %6586 = vrot.lane.b32.xlu0 %v6345, 32
    %v6587 = vpop.permute.xlu0 %6586
    %6588 = vrot.lane.b32.xlu0 %v6353, 32
    %v6589 = vpop.permute.xlu0 %6588
    %6590 = vrot.lane.b32.xlu0 %v6361, 32
    %v6591 = vpop.permute.xlu0 %6590
    %6592 = vrot.lane.b32.xlu0 %v6369, 32
    %v6593 = vpop.permute.xlu0 %6592
    %6594 = vrot.lane.b32.xlu0 %v6377, 32
    %v6595 = vpop.permute.xlu0 %6594
    %6596 = vrot.lane.b32.xlu0 %v6385, 32
    %v6597 = vpop.permute.xlu0 %6596
    %6598 = vrot.lane.b32.xlu0 %v6393, 32
    %v6599 = vpop.permute.xlu0 %6598
    %6600 = vrot.lane.b32.xlu0 %v6401, 32
    %v6601 = vpop.permute.xlu0 %6600
    %6602 = vrot.lane.b32.xlu0 %v6409, 32
    %v6603 = vpop.permute.xlu0 %6602
    %6604 = vrot.lane.b32.xlu0 %v6417, 32
    %v6605 = vpop.permute.xlu0 %6604
    %6606 = vrot.lane.b32.xlu0 %v6425, 32
    %v6607 = vpop.permute.xlu0 %6606
    %6608 = vrot.lane.b32.xlu0 %v6433, 32
    %v6609 = vpop.permute.xlu0 %6608
    %6610 = vrot.lane.b32.xlu0 %v6441, 32
    %v6611 = vpop.permute.xlu0 %6610
    %6612 = vrot.lane.b32.xlu0 %v6449, 32
    %v6613 = vpop.permute.xlu0 %6612
    %6614 = vrot.lane.b32.xlu0 %v6457, 32
    %v6615 = vpop.permute.xlu0 %6614
    %6616 = vrot.lane.b32.xlu0 %v6465, 32
    %v6617 = vpop.permute.xlu0 %6616
    %6618 = vrot.lane.b32.xlu0 %v6473, 32
    %v6619 = vpop.permute.xlu0 %6618
    %6620 = vrot.lane.b32.xlu0 %v6481, 32
    %v6621 = vpop.permute.xlu0 %6620
    %6622 = vrot.lane.b32.xlu0 %v6489, 32
    %v6623 = vpop.permute.xlu0 %6622
    %6624 = vrot.lane.b32.xlu0 %v6497, 32
    %v6625 = vpop.permute.xlu0 %6624
    %6626 = vrot.lane.b32.xlu0 %v6505, 32
    %v6627 = vpop.permute.xlu0 %6626
    %6628 = vrot.lane.b32.xlu0 %v6513, 32
    %v6629 = vpop.permute.xlu0 %6628
    %6630 = vrot.lane.b32.xlu0 %v6521, 32
    %v6631 = vpop.permute.xlu0 %6630
    %6632 = vrot.lane.b32.xlu0 %v6529, 32
    %v6633 = vpop.permute.xlu0 %6632
    %vm6686 = vcmask 523520
    %6687 = vst.msk [vmem:[#allocation5] sm:$0xff] %vm6686, %v6531
    %6688 = vst.msk [vmem:[#allocation5 + $0x8] sm:$0xff] %vm6686, %v6533
    %6689 = vst.msk [vmem:[#allocation5 + $0x10] sm:$0xff] %vm6686, %v6535
    %6690 = vst.msk [vmem:[#allocation5 + $0x18] sm:$0xff] %vm6686, %v6537
    %6691 = vst.msk [vmem:[#allocation5 + $0x20] sm:$0xff] %vm6686, %v6539
    %6692 = vst.msk [vmem:[#allocation5 + $0x28] sm:$0xff] %vm6686, %v6541
    %6693 = vst.msk [vmem:[#allocation5 + $0x30] sm:$0xff] %vm6686, %v6543
    %6694 = vst.msk [vmem:[#allocation5 + $0x38] sm:$0xff] %vm6686, %v6545
    %6695 = vst.msk [vmem:[#allocation5 + $0x40] sm:$0xff] %vm6686, %v6547
    %6696 = vst.msk [vmem:[#allocation5 + $0x48] sm:$0xff] %vm6686, %v6549
    %6697 = vst.msk [vmem:[#allocation5 + $0x50] sm:$0xff] %vm6686, %v6551
    %6698 = vst.msk [vmem:[#allocation5 + $0x58] sm:$0xff] %vm6686, %v6553
    %6699 = vst.msk [vmem:[#allocation5 + $0x60] sm:$0xff] %vm6686, %v6555
    %6700 = vst.msk [vmem:[#allocation5 + $0x68] sm:$0xff] %vm6686, %v6557
    %6701 = vst.msk [vmem:[#allocation5 + $0x70] sm:$0xff] %vm6686, %v6559
    %6702 = vst.msk [vmem:[#allocation5 + $0x78] sm:$0xff] %vm6686, %v6561
    %6703 = vst.msk [vmem:[#allocation5 + $0x80] sm:$0xff] %vm6686, %v6563
    %6704 = vst.msk [vmem:[#allocation5 + $0x88] sm:$0xff] %vm6686, %v6565
    %6705 = vst.msk [vmem:[#allocation5 + $0x90] sm:$0xff] %vm6686, %v6567
    %6706 = vst.msk [vmem:[#allocation5 + $0x98] sm:$0xff] %vm6686, %v6569
    %6707 = vst.msk [vmem:[#allocation5 + $0xa0] sm:$0xff] %vm6686, %v6571
    %6708 = vst.msk [vmem:[#allocation5 + $0xa8] sm:$0xff] %vm6686, %v6573
    %6709 = vst.msk [vmem:[#allocation5 + $0xb0] sm:$0xff] %vm6686, %v6575
    %6710 = vst.msk [vmem:[#allocation5 + $0xb8] sm:$0xff] %vm6686, %v6577
    %6711 = vst.msk [vmem:[#allocation5 + $0xc0] sm:$0xff] %vm6686, %v6579
    %6712 = vst.msk [vmem:[#allocation5 + $0xc8] sm:$0xff] %vm6686, %v6581
    %6713 = vst.msk [vmem:[#allocation5 + $0xd0] sm:$0xff] %vm6686, %v6583
    %6714 = vst.msk [vmem:[#allocation5 + $0xd8] sm:$0xff] %vm6686, %v6585
    %6715 = vst.msk [vmem:[#allocation5 + $0xe0] sm:$0xff] %vm6686, %v6587
    %6716 = vst.msk [vmem:[#allocation5 + $0xe8] sm:$0xff] %vm6686, %v6589
    %6717 = vst.msk [vmem:[#allocation5 + $0xf0] sm:$0xff] %vm6686, %v6591
    %6718 = vst.msk [vmem:[#allocation5 + $0xf8] sm:$0xff] %vm6686, %v6593
    %6719 = vst.msk [vmem:[#allocation5 + $0x100] sm:$0xff] %vm6686, %v6595
    %6720 = vst.msk [vmem:[#allocation5 + $0x108] sm:$0xff] %vm6686, %v6597
    %6721 = vst.msk [vmem:[#allocation5 + $0x110] sm:$0xff] %vm6686, %v6599
    %6722 = vst.msk [vmem:[#allocation5 + $0x118] sm:$0xff] %vm6686, %v6601
    %6723 = vst.msk [vmem:[#allocation5 + $0x120] sm:$0xff] %vm6686, %v6603
    %6724 = vst.msk [vmem:[#allocation5 + $0x128] sm:$0xff] %vm6686, %v6605
    %6725 = vst.msk [vmem:[#allocation5 + $0x130] sm:$0xff] %vm6686, %v6607
    %6726 = vst.msk [vmem:[#allocation5 + $0x138] sm:$0xff] %vm6686, %v6609
    %6727 = vst.msk [vmem:[#allocation5 + $0x140] sm:$0xff] %vm6686, %v6611
    %6728 = vst.msk [vmem:[#allocation5 + $0x148] sm:$0xff] %vm6686, %v6613
    %6729 = vst.msk [vmem:[#allocation5 + $0x150] sm:$0xff] %vm6686, %v6615
    %6730 = vst.msk [vmem:[#allocation5 + $0x158] sm:$0xff] %vm6686, %v6617
    %6731 = vst.msk [vmem:[#allocation5 + $0x160] sm:$0xff] %vm6686, %v6619
    %6732 = vst.msk [vmem:[#allocation5 + $0x168] sm:$0xff] %vm6686, %v6621
    %6733 = vst.msk [vmem:[#allocation5 + $0x170] sm:$0xff] %vm6686, %v6623
    %6734 = vst.msk [vmem:[#allocation5 + $0x178] sm:$0xff] %vm6686, %v6625
    %6735 = vst.msk [vmem:[#allocation5 + $0x180] sm:$0xff] %vm6686, %v6627
    %6736 = vst.msk [vmem:[#allocation5 + $0x188] sm:$0xff] %vm6686, %v6629
    %6737 = vst.msk [vmem:[#allocation5 + $0x190] sm:$0xff] %vm6686, %v6631
    %6738 = vst.msk [vmem:[#allocation5 + $0x198] sm:$0xff] %vm6686, %v6633
    %v6739 = vld [vmem:[#allocation4] sm:$0xe]
    %v6740 = vld [vmem:[#allocation4 + $0x4] sm:$0xf]
    %v6741 = vld [vmem:[#allocation4 + $0x8] sm:$0xf]
    %v6742 = vld [vmem:[#allocation4 + $0xc] sm:$0xf]
    %v6743 = vld [vmem:[#allocation4 + $0x10] sm:$0xf]
    %v6744 = vld [vmem:[#allocation4 + $0x14] sm:$0xf]
    %v6745 = vld [vmem:[#allocation4 + $0x18] sm:$0xf]
    %v6746 = vld [vmem:[#allocation4 + $0x1c] sm:$0xf]
    %v6747 = vld [vmem:[#allocation4 + $0x20] sm:$0xf]
    %v6748 = vld [vmem:[#allocation4 + $0x24] sm:$0xf]
    %v6749 = vld [vmem:[#allocation4 + $0x28] sm:$0xf]
    %v6750 = vld [vmem:[#allocation4 + $0x2c] sm:$0xf]
    %v6751 = vld [vmem:[#allocation4 + $0x30] sm:$0xf]
    %v6752 = vld [vmem:[#allocation4 + $0x34] sm:$0xf]
    %v6753 = vld [vmem:[#allocation4 + $0x38] sm:$0xf]
    %v6754 = vld [vmem:[#allocation4 + $0x3c] sm:$0xf]
    %v6755 = vld [vmem:[#allocation4 + $0x40] sm:$0xf]
    %v6756 = vld [vmem:[#allocation4 + $0x44] sm:$0xf]
    %v6757 = vld [vmem:[#allocation4 + $0x48] sm:$0xf]
    %v6758 = vld [vmem:[#allocation4 + $0x4c] sm:$0xf]
    %v6759 = vld [vmem:[#allocation4 + $0x50] sm:$0xf]
    %v6760 = vld [vmem:[#allocation4 + $0x54] sm:$0xf]
    %v6761 = vld [vmem:[#allocation4 + $0x58] sm:$0xf]
    %v6762 = vld [vmem:[#allocation4 + $0x5c] sm:$0xf]
    %v6763 = vld [vmem:[#allocation4 + $0x60] sm:$0xf]
    %v6764 = vld [vmem:[#allocation4 + $0x64] sm:$0xf]
    %v6765 = vld [vmem:[#allocation4 + $0x68] sm:$0xf]
    %v6766 = vld [vmem:[#allocation4 + $0x6c] sm:$0xf]
    %v6767 = vld [vmem:[#allocation4 + $0x70] sm:$0xf]
    %v6768 = vld [vmem:[#allocation4 + $0x74] sm:$0xf]
    %v6769 = vld [vmem:[#allocation4 + $0x78] sm:$0xf]
    %v6770 = vld [vmem:[#allocation4 + $0x7c] sm:$0xf]
    %v6771 = vld [vmem:[#allocation4 + $0x80] sm:$0xf]
    %v6772 = vld [vmem:[#allocation4 + $0x84] sm:$0xf]
    %v6773 = vld [vmem:[#allocation4 + $0x88] sm:$0xf]
    %v6774 = vld [vmem:[#allocation4 + $0x8c] sm:$0xf]
    %v6775 = vld [vmem:[#allocation4 + $0x90] sm:$0xf]
    %v6776 = vld [vmem:[#allocation4 + $0x94] sm:$0xf]
    %v6777 = vld [vmem:[#allocation4 + $0x98] sm:$0xf]
    %v6778 = vld [vmem:[#allocation4 + $0x9c] sm:$0xf]
    %v6779 = vld [vmem:[#allocation4 + $0xa0] sm:$0xf]
    %v6780 = vld [vmem:[#allocation4 + $0xa4] sm:$0xf]
    %v6781 = vld [vmem:[#allocation4 + $0xa8] sm:$0xf]
    %v6782 = vld [vmem:[#allocation4 + $0xac] sm:$0xf]
    %v6783 = vld [vmem:[#allocation4 + $0xb0] sm:$0xf]
    %v6784 = vld [vmem:[#allocation4 + $0xb4] sm:$0xf]
    %v6785 = vld [vmem:[#allocation4 + $0xb8] sm:$0xf]
    %v6786 = vld [vmem:[#allocation4 + $0xbc] sm:$0xf]
    %v6787 = vld [vmem:[#allocation4 + $0xc0] sm:$0xf]
    %v6788 = vld [vmem:[#allocation4 + $0xc4] sm:$0xf]
    %v6789 = vld [vmem:[#allocation4 + $0xc8] sm:$0xf]
    %v6790 = vld [vmem:[#allocation4 + $0xcc] sm:$0xf]
    %v6791 = vld [vmem:[#allocation4 + $0xd0] sm:$0xf]
    %v6792 = vld [vmem:[#allocation4 + $0xd4] sm:$0xf]
    %v6793 = vld [vmem:[#allocation4 + $0xd8] sm:$0xf]
    %v6794 = vld [vmem:[#allocation4 + $0xdc] sm:$0xf]
    %v6795 = vld [vmem:[#allocation4 + $0xe0] sm:$0xf]
    %v6796 = vld [vmem:[#allocation4 + $0xe4] sm:$0xf]
    %v6797 = vld [vmem:[#allocation4 + $0xe8] sm:$0xf]
    %v6798 = vld [vmem:[#allocation4 + $0xec] sm:$0xf]
    %v6799 = vld [vmem:[#allocation4 + $0xf0] sm:$0xf]
    %v6800 = vld [vmem:[#allocation4 + $0xf4] sm:$0xf]
    %v6801 = vld [vmem:[#allocation4 + $0xf8] sm:$0xf]
    %v6802 = vld [vmem:[#allocation4 + $0xfc] sm:$0xf]
    %v6803 = vld [vmem:[#allocation4 + $0x100] sm:$0xf]
    %v6804 = vld [vmem:[#allocation4 + $0x104] sm:$0xf]
    %v6805 = vld [vmem:[#allocation4 + $0x108] sm:$0xf]
    %v6806 = vld [vmem:[#allocation4 + $0x10c] sm:$0xf]
    %v6807 = vld [vmem:[#allocation4 + $0x110] sm:$0xf]
    %v6808 = vld [vmem:[#allocation4 + $0x114] sm:$0xf]
    %v6809 = vld [vmem:[#allocation4 + $0x118] sm:$0xf]
    %v6810 = vld [vmem:[#allocation4 + $0x11c] sm:$0xf]
    %v6811 = vld [vmem:[#allocation4 + $0x120] sm:$0xf]
    %v6812 = vld [vmem:[#allocation4 + $0x124] sm:$0xf]
    %v6813 = vld [vmem:[#allocation4 + $0x128] sm:$0xf]
    %v6814 = vld [vmem:[#allocation4 + $0x12c] sm:$0xf]
    %v6815 = vld [vmem:[#allocation4 + $0x130] sm:$0xf]
    %v6816 = vld [vmem:[#allocation4 + $0x134] sm:$0xf]
    %v6817 = vld [vmem:[#allocation4 + $0x138] sm:$0xf]
    %v6818 = vld [vmem:[#allocation4 + $0x13c] sm:$0xf]
    %v6819 = vld [vmem:[#allocation4 + $0x140] sm:$0xf]
    %v6820 = vld [vmem:[#allocation4 + $0x144] sm:$0xf]
    %v6821 = vld [vmem:[#allocation4 + $0x148] sm:$0xf]
    %v6822 = vld [vmem:[#allocation4 + $0x14c] sm:$0xf]
    %v6823 = vld [vmem:[#allocation4 + $0x150] sm:$0xf]
    %v6824 = vld [vmem:[#allocation4 + $0x154] sm:$0xf]
    %v6825 = vld [vmem:[#allocation4 + $0x158] sm:$0xf]
    %v6826 = vld [vmem:[#allocation4 + $0x15c] sm:$0xf]
    %v6827 = vld [vmem:[#allocation4 + $0x160] sm:$0xf]
    %v6828 = vld [vmem:[#allocation4 + $0x164] sm:$0xf]
    %v6829 = vld [vmem:[#allocation4 + $0x168] sm:$0xf]
    %v6830 = vld [vmem:[#allocation4 + $0x16c] sm:$0xf]
    %v6831 = vld [vmem:[#allocation4 + $0x170] sm:$0xf]
    %v6832 = vld [vmem:[#allocation4 + $0x174] sm:$0xf]
    %v6833 = vld [vmem:[#allocation4 + $0x178] sm:$0xf]
    %v6834 = vld [vmem:[#allocation4 + $0x17c] sm:$0xf]
    %v6835 = vld [vmem:[#allocation4 + $0x180] sm:$0xf]
    %v6836 = vld [vmem:[#allocation4 + $0x184] sm:$0xf]
    %v6837 = vld [vmem:[#allocation4 + $0x188] sm:$0xf]
    %v6838 = vld [vmem:[#allocation4 + $0x18c] sm:$0xf]
    %v6839 = vld [vmem:[#allocation4 + $0x190] sm:$0xf]
    %v6840 = vld [vmem:[#allocation4 + $0x194] sm:$0xf]
    %v6841 = vld [vmem:[#allocation4 + $0x198] sm:$0xf]
    %v6842 = vld [vmem:[#allocation4 + $0x19c] sm:$0xf]
    %v6843 = vld [vmem:[#allocation4 + $0x1a0] sm:$0x1]
    %v6949 = vunpack.c.l.b16 %v6739
    %v6950 = vunpack.c.l.b16 %v6740
    %v6951 = vunpack.c.l.b16 %v6741
    %v6952 = vunpack.c.l.b16 %v6742
    %v6953 = vunpack.c.l.b16 %v6743
    %v6954 = vunpack.c.l.b16 %v6744
    %v6955 = vunpack.c.l.b16 %v6745
    %v6956 = vunpack.c.l.b16 %v6746
    %v6957 = vunpack.c.l.b16 %v6747
    %v6958 = vunpack.c.l.b16 %v6748
    %v6959 = vunpack.c.l.b16 %v6749
    %v6960 = vunpack.c.l.b16 %v6750
    %v6961 = vunpack.c.l.b16 %v6751
    %v6962 = vunpack.c.l.b16 %v6752
    %v6963 = vunpack.c.l.b16 %v6753
    %v6964 = vunpack.c.l.b16 %v6754
    %v6965 = vunpack.c.l.b16 %v6755
    %v6966 = vunpack.c.l.b16 %v6756
    %v6967 = vunpack.c.l.b16 %v6757
    %v6968 = vunpack.c.l.b16 %v6758
    %v6969 = vunpack.c.l.b16 %v6759
    %v6970 = vunpack.c.l.b16 %v6760
    %v6971 = vunpack.c.l.b16 %v6761
    %v6972 = vunpack.c.l.b16 %v6762
    %v6973 = vunpack.c.l.b16 %v6763
    %v6974 = vunpack.c.l.b16 %v6764
    %v6975 = vunpack.c.l.b16 %v6765
    %v6976 = vunpack.c.l.b16 %v6766
    %v6977 = vunpack.c.l.b16 %v6767
    %v6978 = vunpack.c.l.b16 %v6768
    %v6979 = vunpack.c.l.b16 %v6769
    %v6980 = vunpack.c.l.b16 %v6770
    %v6981 = vunpack.c.l.b16 %v6771
    %v6982 = vunpack.c.l.b16 %v6772
    %v6983 = vunpack.c.l.b16 %v6773
    %v6984 = vunpack.c.l.b16 %v6774
    %v6985 = vunpack.c.l.b16 %v6775
    %v6986 = vunpack.c.l.b16 %v6776
    %v6987 = vunpack.c.l.b16 %v6777
    %v6988 = vunpack.c.l.b16 %v6778
    %v6989 = vunpack.c.l.b16 %v6779
    %v6990 = vunpack.c.l.b16 %v6780
    %v6991 = vunpack.c.l.b16 %v6781
    %v6992 = vunpack.c.l.b16 %v6782
    %v6993 = vunpack.c.l.b16 %v6783
    %v6994 = vunpack.c.l.b16 %v6784
    %v6995 = vunpack.c.l.b16 %v6785
    %v6996 = vunpack.c.l.b16 %v6786
    %v6997 = vunpack.c.l.b16 %v6787
    %v6998 = vunpack.c.l.b16 %v6788
    %v6999 = vunpack.c.l.b16 %v6789
    %v7000 = vunpack.c.l.b16 %v6790
    %v7001 = vunpack.c.l.b16 %v6791
    %v7002 = vunpack.c.l.b16 %v6792
    %v7003 = vunpack.c.l.b16 %v6793
    %v7004 = vunpack.c.l.b16 %v6794
    %v7005 = vunpack.c.l.b16 %v6795
    %v7006 = vunpack.c.l.b16 %v6796
    %v7007 = vunpack.c.l.b16 %v6797
    %v7008 = vunpack.c.l.b16 %v6798
    %v7009 = vunpack.c.l.b16 %v6799
    %v7010 = vunpack.c.l.b16 %v6800
    %v7011 = vunpack.c.l.b16 %v6801
    %v7012 = vunpack.c.l.b16 %v6802
    %v7013 = vunpack.c.l.b16 %v6803
    %v7014 = vunpack.c.l.b16 %v6804
    %v7015 = vunpack.c.l.b16 %v6805
    %v7016 = vunpack.c.l.b16 %v6806
    %v7017 = vunpack.c.l.b16 %v6807
    %v7018 = vunpack.c.l.b16 %v6808
    %v7019 = vunpack.c.l.b16 %v6809
    %v7020 = vunpack.c.l.b16 %v6810
    %v7021 = vunpack.c.l.b16 %v6811
    %v7022 = vunpack.c.l.b16 %v6812
    %v7023 = vunpack.c.l.b16 %v6813
    %v7024 = vunpack.c.l.b16 %v6814
    %v7025 = vunpack.c.l.b16 %v6815
    %v7026 = vunpack.c.l.b16 %v6816
    %v7027 = vunpack.c.l.b16 %v6817
    %v7028 = vunpack.c.l.b16 %v6818
    %v7029 = vunpack.c.l.b16 %v6819
    %v7030 = vunpack.c.l.b16 %v6820
    %v7031 = vunpack.c.l.b16 %v6821
    %v7032 = vunpack.c.l.b16 %v6822
    %v7033 = vunpack.c.l.b16 %v6823
    %v7034 = vunpack.c.l.b16 %v6824
    %v7035 = vunpack.c.l.b16 %v6825
    %v7036 = vunpack.c.l.b16 %v6826
    %v7037 = vunpack.c.l.b16 %v6827
    %v7038 = vunpack.c.l.b16 %v6828
    %v7039 = vunpack.c.l.b16 %v6829
    %v7040 = vunpack.c.l.b16 %v6830
    %v7041 = vunpack.c.l.b16 %v6831
    %v7042 = vunpack.c.l.b16 %v6832
    %v7043 = vunpack.c.l.b16 %v6833
    %v7044 = vunpack.c.l.b16 %v6834
    %v7045 = vunpack.c.l.b16 %v6835
    %v7046 = vunpack.c.l.b16 %v6836
    %v7047 = vunpack.c.l.b16 %v6837
    %v7048 = vunpack.c.l.b16 %v6838
    %v7049 = vunpack.c.l.b16 %v6839
    %v7050 = vunpack.c.l.b16 %v6840
    %v7051 = vunpack.c.l.b16 %v6841
    %v7052 = vunpack.c.l.b16 %v6842
    %v7053 = vunpack.c.l.b16 %v6843
    %v7054 = vpack.c.b16 %v6950, %v6949
    %v7055 = vpack.c.b16 %v6952, %v6951
    %v7056 = vpack.c.b16 %v6954, %v6953
    %v7057 = vpack.c.b16 %v6956, %v6955
    %v7058 = vpack.c.b16 %v6958, %v6957
    %v7059 = vpack.c.b16 %v6960, %v6959
    %v7060 = vpack.c.b16 %v6962, %v6961
    %v7061 = vpack.c.b16 %v6964, %v6963
    %v7062 = vpack.c.b16 %v6966, %v6965
    %v7063 = vpack.c.b16 %v6968, %v6967
    %v7064 = vpack.c.b16 %v6970, %v6969
    %v7065 = vpack.c.b16 %v6972, %v6971
    %v7066 = vpack.c.b16 %v6974, %v6973
    %v7067 = vpack.c.b16 %v6976, %v6975
    %v7068 = vpack.c.b16 %v6978, %v6977
    %v7069 = vpack.c.b16 %v6980, %v6979
    %v7070 = vpack.c.b16 %v6982, %v6981
    %v7071 = vpack.c.b16 %v6984, %v6983
    %v7072 = vpack.c.b16 %v6986, %v6985
    %v7073 = vpack.c.b16 %v6988, %v6987
    %v7074 = vpack.c.b16 %v6990, %v6989
    %v7075 = vpack.c.b16 %v6992, %v6991
    %v7076 = vpack.c.b16 %v6994, %v6993
    %v7077 = vpack.c.b16 %v6996, %v6995
    %v7078 = vpack.c.b16 %v6998, %v6997
    %v7079 = vpack.c.b16 %v7000, %v6999
    %v7080 = vpack.c.b16 %v7002, %v7001
    %v7081 = vpack.c.b16 %v7004, %v7003
    %v7082 = vpack.c.b16 %v7006, %v7005
    %v7083 = vpack.c.b16 %v7008, %v7007
    %v7084 = vpack.c.b16 %v7010, %v7009
    %v7085 = vpack.c.b16 %v7012, %v7011
    %v7086 = vpack.c.b16 %v7014, %v7013
    %v7087 = vpack.c.b16 %v7016, %v7015
    %v7088 = vpack.c.b16 %v7018, %v7017
    %v7089 = vpack.c.b16 %v7020, %v7019
    %v7090 = vpack.c.b16 %v7022, %v7021
    %v7091 = vpack.c.b16 %v7024, %v7023
    %v7092 = vpack.c.b16 %v7026, %v7025
    %v7093 = vpack.c.b16 %v7028, %v7027
    %v7094 = vpack.c.b16 %v7030, %v7029
    %v7095 = vpack.c.b16 %v7032, %v7031
    %v7096 = vpack.c.b16 %v7034, %v7033
    %v7097 = vpack.c.b16 %v7036, %v7035
    %v7098 = vpack.c.b16 %v7038, %v7037
    %v7099 = vpack.c.b16 %v7040, %v7039
    %v7100 = vpack.c.b16 %v7042, %v7041
    %v7101 = vpack.c.b16 %v7044, %v7043
    %v7102 = vpack.c.b16 %v7046, %v7045
    %v7103 = vpack.c.b16 %v7048, %v7047
    %v7104 = vpack.c.b16 %v7050, %v7049
    %v7105 = vpack.c.b16 %v7052, %v7051
    %v7106 = vpack.c.b16 %v7053, %v7053
    %vm7107 = vcmask 1046528
    %v7108 = vrot.slane %v7054, 1
    %v7109 = vrot.slane %v7055, 1
    %v7110 = vsel %vm7107, %v7108, %v7109
    %v7111 = vrot.slane %v7056, 1
    %v7112 = vsel %vm7107, %v7109, %v7111
    %v7113 = vrot.slane %v7057, 1
    %v7114 = vsel %vm7107, %v7111, %v7113
    %v7115 = vrot.slane %v7058, 1
    %v7116 = vsel %vm7107, %v7113, %v7115
    %v7117 = vrot.slane %v7059, 1
    %v7118 = vsel %vm7107, %v7115, %v7117
    %v7119 = vrot.slane %v7060, 1
    %v7120 = vsel %vm7107, %v7117, %v7119
    %v7121 = vrot.slane %v7061, 1
    %v7122 = vsel %vm7107, %v7119, %v7121
    %v7123 = vrot.slane %v7062, 1
    %v7124 = vsel %vm7107, %v7121, %v7123
    %v7125 = vrot.slane %v7063, 1
    %v7126 = vsel %vm7107, %v7123, %v7125
    %v7127 = vrot.slane %v7064, 1
    %v7128 = vsel %vm7107, %v7125, %v7127
    %v7129 = vrot.slane %v7065, 1
    %v7130 = vsel %vm7107, %v7127, %v7129
    %v7131 = vrot.slane %v7066, 1
    %v7132 = vsel %vm7107, %v7129, %v7131
    %v7133 = vrot.slane %v7067, 1
    %v7134 = vsel %vm7107, %v7131, %v7133
    %v7135 = vrot.slane %v7068, 1
    %v7136 = vsel %vm7107, %v7133, %v7135
    %v7137 = vrot.slane %v7069, 1
    %v7138 = vsel %vm7107, %v7135, %v7137
    %v7139 = vrot.slane %v7070, 1
    %v7140 = vsel %vm7107, %v7137, %v7139
    %v7141 = vrot.slane %v7071, 1
    %v7142 = vsel %vm7107, %v7139, %v7141
    %v7143 = vrot.slane %v7072, 1
    %v7144 = vsel %vm7107, %v7141, %v7143
    %v7145 = vrot.slane %v7073, 1
    %v7146 = vsel %vm7107, %v7143, %v7145
    %v7147 = vrot.slane %v7074, 1
    %v7148 = vsel %vm7107, %v7145, %v7147
    %v7149 = vrot.slane %v7075, 1
    %v7150 = vsel %vm7107, %v7147, %v7149
    %v7151 = vrot.slane %v7076, 1
    %v7152 = vsel %vm7107, %v7149, %v7151
    %v7153 = vrot.slane %v7077, 1
    %v7154 = vsel %vm7107, %v7151, %v7153
    %v7155 = vrot.slane %v7078, 1
    %v7156 = vsel %vm7107, %v7153, %v7155
    %v7157 = vrot.slane %v7079, 1
    %v7158 = vsel %vm7107, %v7155, %v7157
    %v7159 = vrot.slane %v7080, 1
    %v7160 = vsel %vm7107, %v7157, %v7159
    %v7161 = vrot.slane %v7081, 1
    %v7162 = vsel %vm7107, %v7159, %v7161
    %v7163 = vrot.slane %v7082, 1
    %v7164 = vsel %vm7107, %v7161, %v7163
    %v7165 = vrot.slane %v7083, 1
    %v7166 = vsel %vm7107, %v7163, %v7165
    %v7167 = vrot.slane %v7084, 1
    %v7168 = vsel %vm7107, %v7165, %v7167
    %v7169 = vrot.slane %v7085, 1
    %v7170 = vsel %vm7107, %v7167, %v7169
    %v7171 = vrot.slane %v7086, 1
    %v7172 = vsel %vm7107, %v7169, %v7171
    %v7173 = vrot.slane %v7087, 1
    %v7174 = vsel %vm7107, %v7171, %v7173
    %v7175 = vrot.slane %v7088, 1
    %v7176 = vsel %vm7107, %v7173, %v7175
    %v7177 = vrot.slane %v7089, 1
    %v7178 = vsel %vm7107, %v7175, %v7177
    %v7179 = vrot.slane %v7090, 1
    %v7180 = vsel %vm7107, %v7177, %v7179
    %v7181 = vrot.slane %v7091, 1
    %v7182 = vsel %vm7107, %v7179, %v7181
    %v7183 = vrot.slane %v7092, 1
    %v7184 = vsel %vm7107, %v7181, %v7183
    %v7185 = vrot.slane %v7093, 1
    %v7186 = vsel %vm7107, %v7183, %v7185
    %v7187 = vrot.slane %v7094, 1
    %v7188 = vsel %vm7107, %v7185, %v7187
    %v7189 = vrot.slane %v7095, 1
    %v7190 = vsel %vm7107, %v7187, %v7189
    %v7191 = vrot.slane %v7096, 1
    %v7192 = vsel %vm7107, %v7189, %v7191
    %v7193 = vrot.slane %v7097, 1
    %v7194 = vsel %vm7107, %v7191, %v7193
    %v7195 = vrot.slane %v7098, 1
    %v7196 = vsel %vm7107, %v7193, %v7195
    %v7197 = vrot.slane %v7099, 1
    %v7198 = vsel %vm7107, %v7195, %v7197
    %v7199 = vrot.slane %v7100, 1
    %v7200 = vsel %vm7107, %v7197, %v7199
    %v7201 = vrot.slane %v7101, 1
    %v7202 = vsel %vm7107, %v7199, %v7201
    %v7203 = vrot.slane %v7102, 1
    %v7204 = vsel %vm7107, %v7201, %v7203
    %v7205 = vrot.slane %v7103, 1
    %v7206 = vsel %vm7107, %v7203, %v7205
    %v7207 = vrot.slane %v7104, 1
    %v7208 = vsel %vm7107, %v7205, %v7207
    %v7209 = vrot.slane %v7105, 1
    %v7210 = vsel %vm7107, %v7207, %v7209
    %v7211 = vrot.slane %v7106, 1
    %v7212 = vsel %vm7107, %v7209, %v7211
    %7213 = vrot.lane.b32.xlu0 %v7110, 64
    %v7214 = vpop.permute.xlu0 %7213
    %7215 = vrot.lane.b32.xlu0 %v7112, 64
    %v7216 = vpop.permute.xlu0 %7215
    %7217 = vrot.lane.b32.xlu0 %v7114, 64
    %v7218 = vpop.permute.xlu0 %7217
    %7219 = vrot.lane.b32.xlu0 %v7116, 64
    %v7220 = vpop.permute.xlu0 %7219
    %7221 = vrot.lane.b32.xlu0 %v7118, 64
    %v7222 = vpop.permute.xlu0 %7221
    %7223 = vrot.lane.b32.xlu0 %v7120, 64
    %v7224 = vpop.permute.xlu0 %7223
    %7225 = vrot.lane.b32.xlu0 %v7122, 64
    %v7226 = vpop.permute.xlu0 %7225
    %7227 = vrot.lane.b32.xlu0 %v7124, 64
    %v7228 = vpop.permute.xlu0 %7227
    %7229 = vrot.lane.b32.xlu0 %v7126, 64
    %v7230 = vpop.permute.xlu0 %7229
    %7231 = vrot.lane.b32.xlu0 %v7128, 64
    %v7232 = vpop.permute.xlu0 %7231
    %7233 = vrot.lane.b32.xlu0 %v7130, 64
    %v7234 = vpop.permute.xlu0 %7233
    %7235 = vrot.lane.b32.xlu0 %v7132, 64
    %v7236 = vpop.permute.xlu0 %7235
    %7237 = vrot.lane.b32.xlu0 %v7134, 64
    %v7238 = vpop.permute.xlu0 %7237
    %7239 = vrot.lane.b32.xlu0 %v7136, 64
    %v7240 = vpop.permute.xlu0 %7239
    %7241 = vrot.lane.b32.xlu0 %v7138, 64
    %v7242 = vpop.permute.xlu0 %7241
    %7243 = vrot.lane.b32.xlu0 %v7140, 64
    %v7244 = vpop.permute.xlu0 %7243
    %7245 = vrot.lane.b32.xlu0 %v7142, 64
    %v7246 = vpop.permute.xlu0 %7245
    %7247 = vrot.lane.b32.xlu0 %v7144, 64
    %v7248 = vpop.permute.xlu0 %7247
    %7249 = vrot.lane.b32.xlu0 %v7146, 64
    %v7250 = vpop.permute.xlu0 %7249
    %7251 = vrot.lane.b32.xlu0 %v7148, 64
    %v7252 = vpop.permute.xlu0 %7251
    %7253 = vrot.lane.b32.xlu0 %v7150, 64
    %v7254 = vpop.permute.xlu0 %7253
    %7255 = vrot.lane.b32.xlu0 %v7152, 64
    %v7256 = vpop.permute.xlu0 %7255
    %7257 = vrot.lane.b32.xlu0 %v7154, 64
    %v7258 = vpop.permute.xlu0 %7257
    %7259 = vrot.lane.b32.xlu0 %v7156, 64
    %v7260 = vpop.permute.xlu0 %7259
    %7261 = vrot.lane.b32.xlu0 %v7158, 64
    %v7262 = vpop.permute.xlu0 %7261
    %7263 = vrot.lane.b32.xlu0 %v7160, 64
    %v7264 = vpop.permute.xlu0 %7263
    %7265 = vrot.lane.b32.xlu0 %v7162, 64
    %v7266 = vpop.permute.xlu0 %7265
    %7267 = vrot.lane.b32.xlu0 %v7164, 64
    %v7268 = vpop.permute.xlu0 %7267
    %7269 = vrot.lane.b32.xlu0 %v7166, 64
    %v7270 = vpop.permute.xlu0 %7269
    %7271 = vrot.lane.b32.xlu0 %v7168, 64
    %v7272 = vpop.permute.xlu0 %7271
    %7273 = vrot.lane.b32.xlu0 %v7170, 64
    %v7274 = vpop.permute.xlu0 %7273
    %7275 = vrot.lane.b32.xlu0 %v7172, 64
    %v7276 = vpop.permute.xlu0 %7275
    %7277 = vrot.lane.b32.xlu0 %v7174, 64
    %v7278 = vpop.permute.xlu0 %7277
    %7279 = vrot.lane.b32.xlu0 %v7176, 64
    %v7280 = vpop.permute.xlu0 %7279
    %7281 = vrot.lane.b32.xlu0 %v7178, 64
    %v7282 = vpop.permute.xlu0 %7281
    %7283 = vrot.lane.b32.xlu0 %v7180, 64
    %v7284 = vpop.permute.xlu0 %7283
    %7285 = vrot.lane.b32.xlu0 %v7182, 64
    %v7286 = vpop.permute.xlu0 %7285
    %7287 = vrot.lane.b32.xlu0 %v7184, 64
    %v7288 = vpop.permute.xlu0 %7287
    %7289 = vrot.lane.b32.xlu0 %v7186, 64
    %v7290 = vpop.permute.xlu0 %7289
    %7291 = vrot.lane.b32.xlu0 %v7188, 64
    %v7292 = vpop.permute.xlu0 %7291
    %7293 = vrot.lane.b32.xlu0 %v7190, 64
    %v7294 = vpop.permute.xlu0 %7293
    %7295 = vrot.lane.b32.xlu0 %v7192, 64
    %v7296 = vpop.permute.xlu0 %7295
    %7297 = vrot.lane.b32.xlu0 %v7194, 64
    %v7298 = vpop.permute.xlu0 %7297
    %7299 = vrot.lane.b32.xlu0 %v7196, 64
    %v7300 = vpop.permute.xlu0 %7299
    %7301 = vrot.lane.b32.xlu0 %v7198, 64
    %v7302 = vpop.permute.xlu0 %7301
    %7303 = vrot.lane.b32.xlu0 %v7200, 64
    %v7304 = vpop.permute.xlu0 %7303
    %7305 = vrot.lane.b32.xlu0 %v7202, 64
    %v7306 = vpop.permute.xlu0 %7305
    %7307 = vrot.lane.b32.xlu0 %v7204, 64
    %v7308 = vpop.permute.xlu0 %7307
    %7309 = vrot.lane.b32.xlu0 %v7206, 64
    %v7310 = vpop.permute.xlu0 %7309
    %7311 = vrot.lane.b32.xlu0 %v7208, 64
    %v7312 = vpop.permute.xlu0 %7311
    %7313 = vrot.lane.b32.xlu0 %v7210, 64
    %v7314 = vpop.permute.xlu0 %7313
    %7315 = vrot.lane.b32.xlu0 %v7212, 64
    %v7316 = vpop.permute.xlu0 %7315
    %vm7369 = vcmask 785920
    %7370 = vst.msk [vmem:[#allocation5] sm:$0xff] %vm7369, %v7214
    %7371 = vst.msk [vmem:[#allocation5 + $0x8] sm:$0xff] %vm7369, %v7216
    %7372 = vst.msk [vmem:[#allocation5 + $0x10] sm:$0xff] %vm7369, %v7218
    %7373 = vst.msk [vmem:[#allocation5 + $0x18] sm:$0xff] %vm7369, %v7220
    %7374 = vst.msk [vmem:[#allocation5 + $0x20] sm:$0xff] %vm7369, %v7222
    %7375 = vst.msk [vmem:[#allocation5 + $0x28] sm:$0xff] %vm7369, %v7224
    %7376 = vst.msk [vmem:[#allocation5 + $0x30] sm:$0xff] %vm7369, %v7226
    %7377 = vst.msk [vmem:[#allocation5 + $0x38] sm:$0xff] %vm7369, %v7228
    %7378 = vst.msk [vmem:[#allocation5 + $0x40] sm:$0xff] %vm7369, %v7230
    %7379 = vst.msk [vmem:[#allocation5 + $0x48] sm:$0xff] %vm7369, %v7232
    %7380 = vst.msk [vmem:[#allocation5 + $0x50] sm:$0xff] %vm7369, %v7234
    %7381 = vst.msk [vmem:[#allocation5 + $0x58] sm:$0xff] %vm7369, %v7236
    %7382 = vst.msk [vmem:[#allocation5 + $0x60] sm:$0xff] %vm7369, %v7238
    %7383 = vst.msk [vmem:[#allocation5 + $0x68] sm:$0xff] %vm7369, %v7240
    %7384 = vst.msk [vmem:[#allocation5 + $0x70] sm:$0xff] %vm7369, %v7242
    %7385 = vst.msk [vmem:[#allocation5 + $0x78] sm:$0xff] %vm7369, %v7244
    %7386 = vst.msk [vmem:[#allocation5 + $0x80] sm:$0xff] %vm7369, %v7246
    %7387 = vst.msk [vmem:[#allocation5 + $0x88] sm:$0xff] %vm7369, %v7248
    %7388 = vst.msk [vmem:[#allocation5 + $0x90] sm:$0xff] %vm7369, %v7250
    %7389 = vst.msk [vmem:[#allocation5 + $0x98] sm:$0xff] %vm7369, %v7252
    %7390 = vst.msk [vmem:[#allocation5 + $0xa0] sm:$0xff] %vm7369, %v7254
    %7391 = vst.msk [vmem:[#allocation5 + $0xa8] sm:$0xff] %vm7369, %v7256
    %7392 = vst.msk [vmem:[#allocation5 + $0xb0] sm:$0xff] %vm7369, %v7258
    %7393 = vst.msk [vmem:[#allocation5 + $0xb8] sm:$0xff] %vm7369, %v7260
    %7394 = vst.msk [vmem:[#allocation5 + $0xc0] sm:$0xff] %vm7369, %v7262
    %7395 = vst.msk [vmem:[#allocation5 + $0xc8] sm:$0xff] %vm7369, %v7264
    %7396 = vst.msk [vmem:[#allocation5 + $0xd0] sm:$0xff] %vm7369, %v7266
    %7397 = vst.msk [vmem:[#allocation5 + $0xd8] sm:$0xff] %vm7369, %v7268
    %7398 = vst.msk [vmem:[#allocation5 + $0xe0] sm:$0xff] %vm7369, %v7270
    %7399 = vst.msk [vmem:[#allocation5 + $0xe8] sm:$0xff] %vm7369, %v7272
    %7400 = vst.msk [vmem:[#allocation5 + $0xf0] sm:$0xff] %vm7369, %v7274
    %7401 = vst.msk [vmem:[#allocation5 + $0xf8] sm:$0xff] %vm7369, %v7276
    %7402 = vst.msk [vmem:[#allocation5 + $0x100] sm:$0xff] %vm7369, %v7278
    %7403 = vst.msk [vmem:[#allocation5 + $0x108] sm:$0xff] %vm7369, %v7280
    %7404 = vst.msk [vmem:[#allocation5 + $0x110] sm:$0xff] %vm7369, %v7282
    %7405 = vst.msk [vmem:[#allocation5 + $0x118] sm:$0xff] %vm7369, %v7284
    %7406 = vst.msk [vmem:[#allocation5 + $0x120] sm:$0xff] %vm7369, %v7286
    %7407 = vst.msk [vmem:[#allocation5 + $0x128] sm:$0xff] %vm7369, %v7288
    %7408 = vst.msk [vmem:[#allocation5 + $0x130] sm:$0xff] %vm7369, %v7290
    %7409 = vst.msk [vmem:[#allocation5 + $0x138] sm:$0xff] %vm7369, %v7292
    %7410 = vst.msk [vmem:[#allocation5 + $0x140] sm:$0xff] %vm7369, %v7294
    %7411 = vst.msk [vmem:[#allocation5 + $0x148] sm:$0xff] %vm7369, %v7296
    %7412 = vst.msk [vmem:[#allocation5 + $0x150] sm:$0xff] %vm7369, %v7298
    %7413 = vst.msk [vmem:[#allocation5 + $0x158] sm:$0xff] %vm7369, %v7300
    %7414 = vst.msk [vmem:[#allocation5 + $0x160] sm:$0xff] %vm7369, %v7302
    %7415 = vst.msk [vmem:[#allocation5 + $0x168] sm:$0xff] %vm7369, %v7304
    %7416 = vst.msk [vmem:[#allocation5 + $0x170] sm:$0xff] %vm7369, %v7306
    %7417 = vst.msk [vmem:[#allocation5 + $0x178] sm:$0xff] %vm7369, %v7308
    %7418 = vst.msk [vmem:[#allocation5 + $0x180] sm:$0xff] %vm7369, %v7310
    %7419 = vst.msk [vmem:[#allocation5 + $0x188] sm:$0xff] %vm7369, %v7312
    %7420 = vst.msk [vmem:[#allocation5 + $0x190] sm:$0xff] %vm7369, %v7314
    %7421 = vst.msk [vmem:[#allocation5 + $0x198] sm:$0xff] %vm7369, %v7316
    %v7422 = vld [vmem:[#allocation5] sm:$0xff]
    %v7423 = vld [vmem:[#allocation5 + $0x8] sm:$0xff]
    %v7424 = vld [vmem:[#allocation5 + $0x10] sm:$0xff]
    %v7425 = vld [vmem:[#allocation5 + $0x18] sm:$0xff]
    %v7426 = vld [vmem:[#allocation5 + $0x20] sm:$0xff]
    %v7427 = vld [vmem:[#allocation5 + $0x28] sm:$0xff]
    %v7428 = vld [vmem:[#allocation5 + $0x30] sm:$0xff]
    %v7429 = vld [vmem:[#allocation5 + $0x38] sm:$0xff]
    %v7430 = vld [vmem:[#allocation5 + $0x40] sm:$0xff]
    %v7431 = vld [vmem:[#allocation5 + $0x48] sm:$0xff]
    %v7432 = vld [vmem:[#allocation5 + $0x50] sm:$0xff]
    %v7433 = vld [vmem:[#allocation5 + $0x58] sm:$0xff]
    %v7434 = vld [vmem:[#allocation5 + $0x60] sm:$0xff]
    %v7435 = vld [vmem:[#allocation5 + $0x68] sm:$0xff]
    %v7436 = vld [vmem:[#allocation5 + $0x70] sm:$0xff]
    %v7437 = vld [vmem:[#allocation5 + $0x78] sm:$0xff]
    %v7438 = vld [vmem:[#allocation5 + $0x80] sm:$0xff]
    %v7439 = vld [vmem:[#allocation5 + $0x88] sm:$0xff]
    %v7440 = vld [vmem:[#allocation5 + $0x90] sm:$0xff]
    %v7441 = vld [vmem:[#allocation5 + $0x98] sm:$0xff]
    %v7442 = vld [vmem:[#allocation5 + $0xa0] sm:$0xff]
    %v7443 = vld [vmem:[#allocation5 + $0xa8] sm:$0xff]
    %v7444 = vld [vmem:[#allocation5 + $0xb0] sm:$0xff]
    %v7445 = vld [vmem:[#allocation5 + $0xb8] sm:$0xff]
    %v7446 = vld [vmem:[#allocation5 + $0xc0] sm:$0xff]
    %v7447 = vld [vmem:[#allocation5 + $0xc8] sm:$0xff]
    %v7448 = vld [vmem:[#allocation5 + $0xd0] sm:$0xff]
    %v7449 = vld [vmem:[#allocation5 + $0xd8] sm:$0xff]
    %v7450 = vld [vmem:[#allocation5 + $0xe0] sm:$0xff]
    %v7451 = vld [vmem:[#allocation5 + $0xe8] sm:$0xff]
    %v7452 = vld [vmem:[#allocation5 + $0xf0] sm:$0xff]
    %v7453 = vld [vmem:[#allocation5 + $0xf8] sm:$0xff]
    %v7454 = vld [vmem:[#allocation5 + $0x100] sm:$0xff]
    %v7455 = vld [vmem:[#allocation5 + $0x108] sm:$0xff]
    %v7456 = vld [vmem:[#allocation5 + $0x110] sm:$0xff]
    %v7457 = vld [vmem:[#allocation5 + $0x118] sm:$0xff]
    %v7458 = vld [vmem:[#allocation5 + $0x120] sm:$0xff]
    %v7459 = vld [vmem:[#allocation5 + $0x128] sm:$0xff]
    %v7460 = vld [vmem:[#allocation5 + $0x130] sm:$0xff]
    %v7461 = vld [vmem:[#allocation5 + $0x138] sm:$0xff]
    %v7462 = vld [vmem:[#allocation5 + $0x140] sm:$0xff]
    %v7463 = vld [vmem:[#allocation5 + $0x148] sm:$0xff]
    %v7464 = vld [vmem:[#allocation5 + $0x150] sm:$0xff]
    %v7465 = vld [vmem:[#allocation5 + $0x158] sm:$0xff]
    %v7466 = vld [vmem:[#allocation5 + $0x160] sm:$0xff]
    %v7467 = vld [vmem:[#allocation5 + $0x168] sm:$0xff]
    %v7468 = vld [vmem:[#allocation5 + $0x170] sm:$0xff]
    %v7469 = vld [vmem:[#allocation5 + $0x178] sm:$0xff]
    %v7470 = vld [vmem:[#allocation5 + $0x180] sm:$0xff]
    %v7471 = vld [vmem:[#allocation5 + $0x188] sm:$0xff]
    %v7472 = vld [vmem:[#allocation5 + $0x190] sm:$0xff]
    %v7473 = vld [vmem:[#allocation5 + $0x198] sm:$0xff]
    %v7474 = vld [vmem:[%s7] sm:$0xff]
    %v7475 = vld [vmem:[%s7 + $0x8] sm:$0xff]
    %v7476 = vld [vmem:[%s7 + $0x10] sm:$0xff]
    %v7477 = vld [vmem:[%s7 + $0x18] sm:$0xff]
    %v7478 = vld [vmem:[%s7 + $0x20] sm:$0xff]
    %v7479 = vld [vmem:[%s7 + $0x28] sm:$0xff]
    %v7480 = vld [vmem:[%s7 + $0x30] sm:$0xff]
    %v7481 = vld [vmem:[%s7 + $0x38] sm:$0xff]
    %v7482 = vld [vmem:[%s7 + $0x40] sm:$0xff]
    %v7483 = vld [vmem:[%s7 + $0x48] sm:$0xff]
    %v7484 = vld [vmem:[%s7 + $0x50] sm:$0xff]
    %v7485 = vld [vmem:[%s7 + $0x58] sm:$0xff]
    %v7498 = vunpack.c.l.b16 %v7474
    %v7499 = vunpack.c.h.b16 %v7474
    %v7500 = vunpack.c.l.b16 %v7475
    %v7501 = vunpack.c.h.b16 %v7475
    %v7502 = vunpack.c.l.b16 %v7476
    %v7503 = vunpack.c.h.b16 %v7476
    %v7504 = vunpack.c.l.b16 %v7477
    %v7505 = vunpack.c.h.b16 %v7477
    %v7506 = vunpack.c.l.b16 %v7478
    %v7507 = vunpack.c.h.b16 %v7478
    %v7508 = vunpack.c.l.b16 %v7479
    %v7509 = vunpack.c.h.b16 %v7479
    %v7510 = vunpack.c.l.b16 %v7480
    %v7511 = vunpack.c.h.b16 %v7480
    %v7512 = vunpack.c.l.b16 %v7481
    %v7513 = vunpack.c.h.b16 %v7481
    %v7514 = vunpack.c.l.b16 %v7482
    %v7515 = vunpack.c.h.b16 %v7482
    %v7516 = vunpack.c.l.b16 %v7483
    %v7517 = vunpack.c.h.b16 %v7483
    %v7518 = vunpack.c.l.b16 %v7484
    %v7519 = vunpack.c.h.b16 %v7484
    %v7520 = vunpack.c.l.b16 %v7485
    %v7521 = vunpack.c.h.b16 %v7485
    %v7522 = vpack.c.b16 %v7500, %v7498
    %v7523 = vpack.c.b16 %v7501, %v7499
    %v7524 = vpack.c.b16 %v7504, %v7502
    %v7525 = vpack.c.b16 %v7505, %v7503
    %v7526 = vpack.c.b16 %v7508, %v7506
    %v7527 = vpack.c.b16 %v7509, %v7507
    %v7528 = vpack.c.b16 %v7512, %v7510
    %v7529 = vpack.c.b16 %v7513, %v7511
    %v7530 = vpack.c.b16 %v7516, %v7514
    %v7531 = vpack.c.b16 %v7517, %v7515
    %v7532 = vpack.c.b16 %v7520, %v7518
    %v7533 = vpack.c.b16 %v7521, %v7519
    %v7547 = vsel %vm3370, %v7422, 0
    %v7550 = vsel %vm3370, %v7423, 0
    %v7553 = vsel %vm3370, %v7424, 0
    %v7556 = vsel %vm3370, %v7425, 0
    %v7559 = vsel %vm3370, %v7426, 0
    %v7562 = vsel %vm3370, %v7427, 0
    %v7565 = vsel %vm3370, %v7428, 0
    %v7568 = vsel %vm3370, %v7429, 0
    %v7571 = vsel %vm3370, %v7430, 0
    %v7574 = vsel %vm3370, %v7431, 0
    %v7577 = vsel %vm3370, %v7432, 0
    %v7580 = vsel %vm3370, %v7433, 0
    %v7583 = vsel %vm3370, %v7434, 0
    %v7586 = vsel %vm3370, %v7435, 0
    %v7589 = vsel %vm3370, %v7436, 0
    %v7592 = vsel %vm3370, %v7437, 0
    %v7595 = vsel %vm3370, %v7438, 0
    %v7598 = vsel %vm3370, %v7439, 0
    %v7601 = vsel %vm3370, %v7440, 0
    %v7604 = vsel %vm3370, %v7441, 0
    %v7607 = vsel %vm3370, %v7442, 0
    %v7610 = vsel %vm3370, %v7443, 0
    %v7613 = vsel %vm3370, %v7444, 0
    %v7616 = vsel %vm3370, %v7445, 0
    %v7619 = vsel %vm3370, %v7446, 0
    %v7622 = vsel %vm3370, %v7447, 0
    %v7625 = vsel %vm3370, %v7448, 0
    %v7628 = vsel %vm3370, %v7449, 0
    %v7631 = vsel %vm3370, %v7450, 0
    %v7634 = vsel %vm3370, %v7451, 0
    %v7637 = vsel %vm3370, %v7452, 0
    %v7640 = vsel %vm3370, %v7453, 0
    %v7643 = vsel %vm3370, %v7454, 0
    %v7646 = vsel %vm3370, %v7455, 0
    %v7649 = vsel %vm3370, %v7456, 0
    %v7652 = vsel %vm3370, %v7457, 0
    %v7655 = vsel %vm3370, %v7458, 0
    %v7658 = vsel %vm3370, %v7459, 0
    %v7661 = vsel %vm3370, %v7460, 0
    %v7664 = vsel %vm3370, %v7461, 0
    %v7667 = vsel %vm3370, %v7462, 0
    %v7670 = vsel %vm3370, %v7463, 0
    %v7673 = vsel %vm3370, %v7464, 0
    %v7676 = vsel %vm3370, %v7465, 0
    %v7679 = vsel %vm3370, %v7466, 0
    %v7682 = vsel %vm3370, %v7467, 0
    %v7685 = vsel %vm3370, %v7468, 0
    %v7688 = vsel %vm3370, %v7469, 0
    %v7691 = vsel %vm3370, %v7470, 0
    %v7694 = vsel %vm3370, %v7471, 0
    %v7697 = vsel %vm3370, %v7472, 0
    %v7700 = vsel %vm3370, %v7473, 0
    %7702 = vmatprep.subr.bf16.mxu0 %v7523
    %7703 = vmatpush1.bf16.msra.mxu0 %v7522
    %7704 = vmatprep.subr.bf16.mxu0 %v7525
    %7705 = vmatpush1.bf16.msra.mxu0 %v7524
    %7706 = vmatprep.subr.bf16.mxu0 %v7527
    %7707 = vmatpush1.bf16.msra.mxu0 %v7526
    %7708 = vmatprep.subr.bf16.mxu0 %v7529
    %7709 = vmatpush1.bf16.msra.mxu0 %v7528
    %7710 = vmatprep.subr.bf16.mxu0 %v7531
    %7711 = vmatpush1.bf16.msra.mxu0 %v7530
    %7712 = vmatprep.subr.bf16.mxu0 %v7533
    %7713 = vmatpush1.bf16.msra.mxu0 %v7532
    %7714 = vmatprep.subr.bf16.mxu0 0
    %7715 = vmatpush1.bf16.msra.mxu0 0
    %7716 = vmatprep.subr.bf16.mxu0 0
    %7717 = vmatpush1.bf16.msra.mxu0 0
    %7718 = vmatprep.subr.bf16.mxu0 0
    %7719 = vmatpush1.bf16.msra.mxu0 0
    %7720 = vmatprep.subr.bf16.mxu0 0
    %7721 = vmatpush1.bf16.msra.mxu0 0
    %7722 = vmatprep.subr.bf16.mxu0 0
    %7723 = vmatpush1.bf16.msra.mxu0 0
    %7724 = vmatprep.subr.bf16.mxu0 0
    %7725 = vmatpush1.bf16.msra.mxu0 0
    %7726 = vmatprep.subr.bf16.mxu0 0
    %7727 = vmatpush1.bf16.msra.mxu0 0
    %7728 = vmatprep.subr.bf16.mxu0 0
    %7729 = vmatpush1.bf16.msra.mxu0 0
    %7730 = vmatprep.subr.bf16.mxu0 0
    %7731 = vmatpush1.bf16.msra.mxu0 0
    %7732 = vmatprep.subr.bf16.mxu0 0
    %7733 = vmatpush1.bf16.msra.mxu0 0
    %7734 = vmatprep.mubr.bf16.mxu0 0
    %7735 = vmatmul.mubr.bf16.gmra.mrb[0].mxu0 %v7547
    %v7736 = vpop.f32.mrb[0].mxu0
    %v7737 = vadd.f32 0.0, %v7736
    %v7738 = vpop.f32.mrb[0].mxu0
    %v7739 = vadd.f32 0.0, %v7738
    %v7740 = vpop.f32.mrb[0].mxu0
    %v7741 = vadd.f32 0.0, %v7740
    %v7742 = vpop.f32.mrb[0].mxu0
    %v7743 = vadd.f32 0.0, %v7742
    %7744 = vmatprep.mubr.bf16.mxu0 0
    %7745 = vmatmul.mubr.bf16.gmra.mrb[0].mxu0 %v7550
    %v7746 = vpop.f32.mrb[0].mxu0
    %v7747 = vadd.f32 0.0, %v7746
    %v7748 = vpop.f32.mrb[0].mxu0
    %v7749 = vadd.f32 0.0, %v7748
    %v7750 = vpop.f32.mrb[0].mxu0
    %v7751 = vadd.f32 0.0, %v7750
    %v7752 = vpop.f32.mrb[0].mxu0
    %v7753 = vadd.f32 0.0, %v7752
    %7754 = vmatprep.mubr.bf16.mxu0 0
    %7755 = vmatmul.mubr.bf16.gmra.mrb[0].mxu0 %v7553
    %v7756 = vpop.f32.mrb[0].mxu0
    %v7757 = vadd.f32 0.0, %v7756
    %v7758 = vpop.f32.mrb[0].mxu0
    %v7759 = vadd.f32 0.0, %v7758
    %v7760 = vpop.f32.mrb[0].mxu0
    %v7761 = vadd.f32 0.0, %v7760
    %v7762 = vpop.f32.mrb[0].mxu0
    %v7763 = vadd.f32 0.0, %v7762
    %7764 = vmatprep.mubr.bf16.mxu0 0
    %7765 = vmatmul.mubr.bf16.gmra.mrb[0].mxu0 %v7556
    %v7766 = vpop.f32.mrb[0].mxu0
    %v7767 = vadd.f32 0.0, %v7766
    %v7768 = vpop.f32.mrb[0].mxu0
    %v7769 = vadd.f32 0.0, %v7768
    %v7770 = vpop.f32.mrb[0].mxu0
    %v7771 = vadd.f32 0.0, %v7770
    %v7772 = vpop.f32.mrb[0].mxu0
    %v7773 = vadd.f32 0.0, %v7772
    %7774 = vmatprep.mubr.bf16.mxu0 0
    %7775 = vmatmul.mubr.bf16.gmra.mrb[0].mxu0 %v7559
    %v7776 = vpop.f32.mrb[0].mxu0
    %v7777 = vadd.f32 0.0, %v7776
    %v7778 = vpop.f32.mrb[0].mxu0
    %v7779 = vadd.f32 0.0, %v7778
    %v7780 = vpop.f32.mrb[0].mxu0
    %v7781 = vadd.f32 0.0, %v7780
    %v7782 = vpop.f32.mrb[0].mxu0
    %v7783 = vadd.f32 0.0, %v7782
    %7784 = vmatprep.mubr.bf16.mxu0 0
    %7785 = vmatmul.mubr.bf16.gmra.mrb[0].mxu0 %v7562
    %v7786 = vpop.f32.mrb[0].mxu0
    %v7787 = vadd.f32 0.0, %v7786
    %v7788 = vpop.f32.mrb[0].mxu0
    %v7789 = vadd.f32 0.0, %v7788
    %v7790 = vpop.f32.mrb[0].mxu0
    %v7791 = vadd.f32 0.0, %v7790
    %v7792 = vpop.f32.mrb[0].mxu0
    %v7793 = vadd.f32 0.0, %v7792
    %7794 = vmatprep.mubr.bf16.mxu0 0
    %7795 = vmatmul.mubr.bf16.gmra.mrb[0].mxu0 %v7565
    %v7796 = vpop.f32.mrb[0].mxu0
    %v7797 = vadd.f32 0.0, %v7796
    %v7798 = vpop.f32.mrb[0].mxu0
    %v7799 = vadd.f32 0.0, %v7798
    %v7800 = vpop.f32.mrb[0].mxu0
    %v7801 = vadd.f32 0.0, %v7800
    %v7802 = vpop.f32.mrb[0].mxu0
    %v7803 = vadd.f32 0.0, %v7802
    %7804 = vmatprep.mubr.bf16.mxu0 0
    %7805 = vmatmul.mubr.bf16.gmra.mrb[0].mxu0 %v7568
    %v7806 = vpop.f32.mrb[0].mxu0
    %v7807 = vadd.f32 0.0, %v7806
    %v7808 = vpop.f32.mrb[0].mxu0
    %v7809 = vadd.f32 0.0, %v7808
    %v7810 = vpop.f32.mrb[0].mxu0
    %v7811 = vadd.f32 0.0, %v7810
    %v7812 = vpop.f32.mrb[0].mxu0
    %v7813 = vadd.f32 0.0, %v7812
    %7814 = vmatprep.mubr.bf16.mxu0 0
    %7815 = vmatmul.mubr.bf16.gmra.mrb[0].mxu0 %v7571
    %v7816 = vpop.f32.mrb[0].mxu0
    %v7817 = vadd.f32 0.0, %v7816
    %v7818 = vpop.f32.mrb[0].mxu0
    %v7819 = vadd.f32 0.0, %v7818
    %v7820 = vpop.f32.mrb[0].mxu0
    %v7821 = vadd.f32 0.0, %v7820
    %v7822 = vpop.f32.mrb[0].mxu0
    %v7823 = vadd.f32 0.0, %v7822
    %7824 = vmatprep.mubr.bf16.mxu0 0
    %7825 = vmatmul.mubr.bf16.gmra.mrb[0].mxu0 %v7574
    %v7826 = vpop.f32.mrb[0].mxu0
    %v7827 = vadd.f32 0.0, %v7826
    %v7828 = vpop.f32.mrb[0].mxu0
    %v7829 = vadd.f32 0.0, %v7828
    %v7830 = vpop.f32.mrb[0].mxu0
    %v7831 = vadd.f32 0.0, %v7830
    %v7832 = vpop.f32.mrb[0].mxu0
    %v7833 = vadd.f32 0.0, %v7832
    %7834 = vmatprep.mubr.bf16.mxu0 0
    %7835 = vmatmul.mubr.bf16.gmra.mrb[0].mxu0 %v7577
    %v7836 = vpop.f32.mrb[0].mxu0
    %v7837 = vadd.f32 0.0, %v7836
    %v7838 = vpop.f32.mrb[0].mxu0
    %v7839 = vadd.f32 0.0, %v7838
    %v7840 = vpop.f32.mrb[0].mxu0
    %v7841 = vadd.f32 0.0, %v7840
    %v7842 = vpop.f32.mrb[0].mxu0
    %v7843 = vadd.f32 0.0, %v7842
    %7844 = vmatprep.mubr.bf16.mxu0 0
    %7845 = vmatmul.mubr.bf16.gmra.mrb[0].mxu0 %v7580
    %v7846 = vpop.f32.mrb[0].mxu0
    %v7847 = vadd.f32 0.0, %v7846
    %v7848 = vpop.f32.mrb[0].mxu0
    %v7849 = vadd.f32 0.0, %v7848
    %v7850 = vpop.f32.mrb[0].mxu0
    %v7851 = vadd.f32 0.0, %v7850
    %v7852 = vpop.f32.mrb[0].mxu0
    %v7853 = vadd.f32 0.0, %v7852
    %7854 = vmatprep.mubr.bf16.mxu0 0
    %7855 = vmatmul.mubr.bf16.gmra.mrb[0].mxu0 %v7583
    %v7856 = vpop.f32.mrb[0].mxu0
    %v7857 = vadd.f32 0.0, %v7856
    %v7858 = vpop.f32.mrb[0].mxu0
    %v7859 = vadd.f32 0.0, %v7858
    %v7860 = vpop.f32.mrb[0].mxu0
    %v7861 = vadd.f32 0.0, %v7860
    %v7862 = vpop.f32.mrb[0].mxu0
    %v7863 = vadd.f32 0.0, %v7862
    %7864 = vmatprep.mubr.bf16.mxu0 0
    %7865 = vmatmul.mubr.bf16.gmra.mrb[0].mxu0 %v7586
    %v7866 = vpop.f32.mrb[0].mxu0
    %v7867 = vadd.f32 0.0, %v7866
    %v7868 = vpop.f32.mrb[0].mxu0
    %v7869 = vadd.f32 0.0, %v7868
    %v7870 = vpop.f32.mrb[0].mxu0
    %v7871 = vadd.f32 0.0, %v7870
    %v7872 = vpop.f32.mrb[0].mxu0
    %v7873 = vadd.f32 0.0, %v7872
    %7874 = vmatprep.mubr.bf16.mxu0 0
    %7875 = vmatmul.mubr.bf16.gmra.mrb[0].mxu0 %v7589
    %v7876 = vpop.f32.mrb[0].mxu0
    %v7877 = vadd.f32 0.0, %v7876
    %v7878 = vpop.f32.mrb[0].mxu0
    %v7879 = vadd.f32 0.0, %v7878
    %v7880 = vpop.f32.mrb[0].mxu0
    %v7881 = vadd.f32 0.0, %v7880
    %v7882 = vpop.f32.mrb[0].mxu0
    %v7883 = vadd.f32 0.0, %v7882
    %7884 = vmatprep.mubr.bf16.mxu0 0
    %7885 = vmatmul.mubr.bf16.gmra.mrb[0].mxu0 %v7592
    %v7886 = vpop.f32.mrb[0].mxu0
    %v7887 = vadd.f32 0.0, %v7886
    %v7888 = vpop.f32.mrb[0].mxu0
    %v7889 = vadd.f32 0.0, %v7888
    %v7890 = vpop.f32.mrb[0].mxu0
    %v7891 = vadd.f32 0.0, %v7890
    %v7892 = vpop.f32.mrb[0].mxu0
    %v7893 = vadd.f32 0.0, %v7892
    %7894 = vmatprep.mubr.bf16.mxu0 0
    %7895 = vmatmul.mubr.bf16.gmra.mrb[0].mxu0 %v7595
    %v7896 = vpop.f32.mrb[0].mxu0
    %v7897 = vadd.f32 0.0, %v7896
    %v7898 = vpop.f32.mrb[0].mxu0
    %v7899 = vadd.f32 0.0, %v7898
    %v7900 = vpop.f32.mrb[0].mxu0
    %v7901 = vadd.f32 0.0, %v7900
    %v7902 = vpop.f32.mrb[0].mxu0
    %v7903 = vadd.f32 0.0, %v7902
    %7904 = vmatprep.mubr.bf16.mxu0 0
    %7905 = vmatmul.mubr.bf16.gmra.mrb[0].mxu0 %v7598
    %v7906 = vpop.f32.mrb[0].mxu0
    %v7907 = vadd.f32 0.0, %v7906
    %v7908 = vpop.f32.mrb[0].mxu0
    %v7909 = vadd.f32 0.0, %v7908
    %v7910 = vpop.f32.mrb[0].mxu0
    %v7911 = vadd.f32 0.0, %v7910
    %v7912 = vpop.f32.mrb[0].mxu0
    %v7913 = vadd.f32 0.0, %v7912
    %7914 = vmatprep.mubr.bf16.mxu0 0
    %7915 = vmatmul.mubr.bf16.gmra.mrb[0].mxu0 %v7601
    %v7916 = vpop.f32.mrb[0].mxu0
    %v7917 = vadd.f32 0.0, %v7916
    %v7918 = vpop.f32.mrb[0].mxu0
    %v7919 = vadd.f32 0.0, %v7918
    %v7920 = vpop.f32.mrb[0].mxu0
    %v7921 = vadd.f32 0.0, %v7920
    %v7922 = vpop.f32.mrb[0].mxu0
    %v7923 = vadd.f32 0.0, %v7922
    %7924 = vmatprep.mubr.bf16.mxu0 0
    %7925 = vmatmul.mubr.bf16.gmra.mrb[0].mxu0 %v7604
    %v7926 = vpop.f32.mrb[0].mxu0
    %v7927 = vadd.f32 0.0, %v7926
    %v7928 = vpop.f32.mrb[0].mxu0
    %v7929 = vadd.f32 0.0, %v7928
    %v7930 = vpop.f32.mrb[0].mxu0
    %v7931 = vadd.f32 0.0, %v7930
    %v7932 = vpop.f32.mrb[0].mxu0
    %v7933 = vadd.f32 0.0, %v7932
    %7934 = vmatprep.mubr.bf16.mxu0 0
    %7935 = vmatmul.mubr.bf16.gmra.mrb[0].mxu0 %v7607
    %v7936 = vpop.f32.mrb[0].mxu0
    %v7937 = vadd.f32 0.0, %v7936
    %v7938 = vpop.f32.mrb[0].mxu0
    %v7939 = vadd.f32 0.0, %v7938
    %v7940 = vpop.f32.mrb[0].mxu0
    %v7941 = vadd.f32 0.0, %v7940
    %v7942 = vpop.f32.mrb[0].mxu0
    %v7943 = vadd.f32 0.0, %v7942
    %7944 = vmatprep.mubr.bf16.mxu0 0
    %7945 = vmatmul.mubr.bf16.gmra.mrb[0].mxu0 %v7610
    %v7946 = vpop.f32.mrb[0].mxu0
    %v7947 = vadd.f32 0.0, %v7946
    %v7948 = vpop.f32.mrb[0].mxu0
    %v7949 = vadd.f32 0.0, %v7948
    %v7950 = vpop.f32.mrb[0].mxu0
    %v7951 = vadd.f32 0.0, %v7950
    %v7952 = vpop.f32.mrb[0].mxu0
    %v7953 = vadd.f32 0.0, %v7952
    %7954 = vmatprep.mubr.bf16.mxu0 0
    %7955 = vmatmul.mubr.bf16.gmra.mrb[0].mxu0 %v7613
    %v7956 = vpop.f32.mrb[0].mxu0
    %v7957 = vadd.f32 0.0, %v7956
    %v7958 = vpop.f32.mrb[0].mxu0
    %v7959 = vadd.f32 0.0, %v7958
    %v7960 = vpop.f32.mrb[0].mxu0
    %v7961 = vadd.f32 0.0, %v7960
    %v7962 = vpop.f32.mrb[0].mxu0
    %v7963 = vadd.f32 0.0, %v7962
    %7964 = vmatprep.mubr.bf16.mxu0 0
    %7965 = vmatmul.mubr.bf16.gmra.mrb[0].mxu0 %v7616
    %v7966 = vpop.f32.mrb[0].mxu0
    %v7967 = vadd.f32 0.0, %v7966
    %v7968 = vpop.f32.mrb[0].mxu0
    %v7969 = vadd.f32 0.0, %v7968
    %v7970 = vpop.f32.mrb[0].mxu0
    %v7971 = vadd.f32 0.0, %v7970
    %v7972 = vpop.f32.mrb[0].mxu0
    %v7973 = vadd.f32 0.0, %v7972
    %7974 = vmatprep.mubr.bf16.mxu0 0
    %7975 = vmatmul.mubr.bf16.gmra.mrb[0].mxu0 %v7619
    %v7976 = vpop.f32.mrb[0].mxu0
    %v7977 = vadd.f32 0.0, %v7976
    %v7978 = vpop.f32.mrb[0].mxu0
    %v7979 = vadd.f32 0.0, %v7978
    %v7980 = vpop.f32.mrb[0].mxu0
    %v7981 = vadd.f32 0.0, %v7980
    %v7982 = vpop.f32.mrb[0].mxu0
    %v7983 = vadd.f32 0.0, %v7982
    %7984 = vmatprep.mubr.bf16.mxu0 0
    %7985 = vmatmul.mubr.bf16.gmra.mrb[0].mxu0 %v7622
    %v7986 = vpop.f32.mrb[0].mxu0
    %v7987 = vadd.f32 0.0, %v7986
    %v7988 = vpop.f32.mrb[0].mxu0
    %v7989 = vadd.f32 0.0, %v7988
    %v7990 = vpop.f32.mrb[0].mxu0
    %v7991 = vadd.f32 0.0, %v7990
    %v7992 = vpop.f32.mrb[0].mxu0
    %v7993 = vadd.f32 0.0, %v7992
    %7994 = vmatprep.mubr.bf16.mxu0 0
    %7995 = vmatmul.mubr.bf16.gmra.mrb[0].mxu0 %v7625
    %v7996 = vpop.f32.mrb[0].mxu0
    %v7997 = vadd.f32 0.0, %v7996
    %v7998 = vpop.f32.mrb[0].mxu0
    %v7999 = vadd.f32 0.0, %v7998
    %v8000 = vpop.f32.mrb[0].mxu0
    %v8001 = vadd.f32 0.0, %v8000
    %v8002 = vpop.f32.mrb[0].mxu0
    %v8003 = vadd.f32 0.0, %v8002
    %8004 = vmatprep.mubr.bf16.mxu0 0
    %8005 = vmatmul.mubr.bf16.gmra.mrb[0].mxu0 %v7628
    %v8006 = vpop.f32.mrb[0].mxu0
    %v8007 = vadd.f32 0.0, %v8006
    %v8008 = vpop.f32.mrb[0].mxu0
    %v8009 = vadd.f32 0.0, %v8008
    %v8010 = vpop.f32.mrb[0].mxu0
    %v8011 = vadd.f32 0.0, %v8010
    %v8012 = vpop.f32.mrb[0].mxu0
    %v8013 = vadd.f32 0.0, %v8012
    %8014 = vmatprep.mubr.bf16.mxu0 0
    %8015 = vmatmul.mubr.bf16.gmra.mrb[0].mxu0 %v7631
    %v8016 = vpop.f32.mrb[0].mxu0
    %v8017 = vadd.f32 0.0, %v8016
    %v8018 = vpop.f32.mrb[0].mxu0
    %v8019 = vadd.f32 0.0, %v8018
    %v8020 = vpop.f32.mrb[0].mxu0
    %v8021 = vadd.f32 0.0, %v8020
    %v8022 = vpop.f32.mrb[0].mxu0
    %v8023 = vadd.f32 0.0, %v8022
    %8024 = vmatprep.mubr.bf16.mxu0 0
    %8025 = vmatmul.mubr.bf16.gmra.mrb[0].mxu0 %v7634
    %v8026 = vpop.f32.mrb[0].mxu0
    %v8027 = vadd.f32 0.0, %v8026
    %v8028 = vpop.f32.mrb[0].mxu0
    %v8029 = vadd.f32 0.0, %v8028
    %v8030 = vpop.f32.mrb[0].mxu0
    %v8031 = vadd.f32 0.0, %v8030
    %v8032 = vpop.f32.mrb[0].mxu0
    %v8033 = vadd.f32 0.0, %v8032
    %8034 = vmatprep.mubr.bf16.mxu0 0
    %8035 = vmatmul.mubr.bf16.gmra.mrb[0].mxu0 %v7637
    %v8036 = vpop.f32.mrb[0].mxu0
    %v8037 = vadd.f32 0.0, %v8036
    %v8038 = vpop.f32.mrb[0].mxu0
    %v8039 = vadd.f32 0.0, %v8038
    %v8040 = vpop.f32.mrb[0].mxu0
    %v8041 = vadd.f32 0.0, %v8040
    %v8042 = vpop.f32.mrb[0].mxu0
    %v8043 = vadd.f32 0.0, %v8042
    %8044 = vmatprep.mubr.bf16.mxu0 0
    %8045 = vmatmul.mubr.bf16.gmra.mrb[0].mxu0 %v7640
    %v8046 = vpop.f32.mrb[0].mxu0
    %v8047 = vadd.f32 0.0, %v8046
    %v8048 = vpop.f32.mrb[0].mxu0
    %v8049 = vadd.f32 0.0, %v8048
    %v8050 = vpop.f32.mrb[0].mxu0
    %v8051 = vadd.f32 0.0, %v8050
    %v8052 = vpop.f32.mrb[0].mxu0
    %v8053 = vadd.f32 0.0, %v8052
    %8054 = vmatprep.mubr.bf16.mxu0 0
    %8055 = vmatmul.mubr.bf16.gmra.mrb[0].mxu0 %v7643
    %v8056 = vpop.f32.mrb[0].mxu0
    %v8057 = vadd.f32 0.0, %v8056
    %v8058 = vpop.f32.mrb[0].mxu0
    %v8059 = vadd.f32 0.0, %v8058
    %v8060 = vpop.f32.mrb[0].mxu0
    %v8061 = vadd.f32 0.0, %v8060
    %v8062 = vpop.f32.mrb[0].mxu0
    %v8063 = vadd.f32 0.0, %v8062
    %8064 = vmatprep.mubr.bf16.mxu0 0
    %8065 = vmatmul.mubr.bf16.gmra.mrb[0].mxu0 %v7646
    %v8066 = vpop.f32.mrb[0].mxu0
    %v8067 = vadd.f32 0.0, %v8066
    %v8068 = vpop.f32.mrb[0].mxu0
    %v8069 = vadd.f32 0.0, %v8068
    %v8070 = vpop.f32.mrb[0].mxu0
    %v8071 = vadd.f32 0.0, %v8070
    %v8072 = vpop.f32.mrb[0].mxu0
    %v8073 = vadd.f32 0.0, %v8072
    %8074 = vmatprep.mubr.bf16.mxu0 0
    %8075 = vmatmul.mubr.bf16.gmra.mrb[0].mxu0 %v7649
    %v8076 = vpop.f32.mrb[0].mxu0
    %v8077 = vadd.f32 0.0, %v8076
    %v8078 = vpop.f32.mrb[0].mxu0
    %v8079 = vadd.f32 0.0, %v8078
    %v8080 = vpop.f32.mrb[0].mxu0
    %v8081 = vadd.f32 0.0, %v8080
    %v8082 = vpop.f32.mrb[0].mxu0
    %v8083 = vadd.f32 0.0, %v8082
    %8084 = vmatprep.mubr.bf16.mxu0 0
    %8085 = vmatmul.mubr.bf16.gmra.mrb[0].mxu0 %v7652
    %v8086 = vpop.f32.mrb[0].mxu0
    %v8087 = vadd.f32 0.0, %v8086
    %v8088 = vpop.f32.mrb[0].mxu0
    %v8089 = vadd.f32 0.0, %v8088
    %v8090 = vpop.f32.mrb[0].mxu0
    %v8091 = vadd.f32 0.0, %v8090
    %v8092 = vpop.f32.mrb[0].mxu0
    %v8093 = vadd.f32 0.0, %v8092
    %8094 = vmatprep.mubr.bf16.mxu0 0
    %8095 = vmatmul.mubr.bf16.gmra.mrb[0].mxu0 %v7655
    %v8096 = vpop.f32.mrb[0].mxu0
    %v8097 = vadd.f32 0.0, %v8096
    %v8098 = vpop.f32.mrb[0].mxu0
    %v8099 = vadd.f32 0.0, %v8098
    %v8100 = vpop.f32.mrb[0].mxu0
    %v8101 = vadd.f32 0.0, %v8100
    %v8102 = vpop.f32.mrb[0].mxu0
    %v8103 = vadd.f32 0.0, %v8102
    %8104 = vmatprep.mubr.bf16.mxu0 0
    %8105 = vmatmul.mubr.bf16.gmra.mrb[0].mxu0 %v7658
    %v8106 = vpop.f32.mrb[0].mxu0
    %v8107 = vadd.f32 0.0, %v8106
    %v8108 = vpop.f32.mrb[0].mxu0
    %v8109 = vadd.f32 0.0, %v8108
    %v8110 = vpop.f32.mrb[0].mxu0
    %v8111 = vadd.f32 0.0, %v8110
    %v8112 = vpop.f32.mrb[0].mxu0
    %v8113 = vadd.f32 0.0, %v8112
    %8114 = vmatprep.mubr.bf16.mxu0 0
    %8115 = vmatmul.mubr.bf16.gmra.mrb[0].mxu0 %v7661
    %v8116 = vpop.f32.mrb[0].mxu0
    %v8117 = vadd.f32 0.0, %v8116
    %v8118 = vpop.f32.mrb[0].mxu0
    %v8119 = vadd.f32 0.0, %v8118
    %v8120 = vpop.f32.mrb[0].mxu0
    %v8121 = vadd.f32 0.0, %v8120
    %v8122 = vpop.f32.mrb[0].mxu0
    %v8123 = vadd.f32 0.0, %v8122
    %8124 = vmatprep.mubr.bf16.mxu0 0
    %8125 = vmatmul.mubr.bf16.gmra.mrb[0].mxu0 %v7664
    %v8126 = vpop.f32.mrb[0].mxu0
    %v8127 = vadd.f32 0.0, %v8126
    %v8128 = vpop.f32.mrb[0].mxu0
    %v8129 = vadd.f32 0.0, %v8128
    %v8130 = vpop.f32.mrb[0].mxu0
    %v8131 = vadd.f32 0.0, %v8130
    %v8132 = vpop.f32.mrb[0].mxu0
    %v8133 = vadd.f32 0.0, %v8132
    %8134 = vmatprep.mubr.bf16.mxu0 0
    %8135 = vmatmul.mubr.bf16.gmra.mrb[0].mxu0 %v7667
    %v8136 = vpop.f32.mrb[0].mxu0
    %v8137 = vadd.f32 0.0, %v8136
    %v8138 = vpop.f32.mrb[0].mxu0
    %v8139 = vadd.f32 0.0, %v8138
    %v8140 = vpop.f32.mrb[0].mxu0
    %v8141 = vadd.f32 0.0, %v8140
    %v8142 = vpop.f32.mrb[0].mxu0
    %v8143 = vadd.f32 0.0, %v8142
    %8144 = vmatprep.mubr.bf16.mxu0 0
    %8145 = vmatmul.mubr.bf16.gmra.mrb[0].mxu0 %v7670
    %v8146 = vpop.f32.mrb[0].mxu0
    %v8147 = vadd.f32 0.0, %v8146
    %v8148 = vpop.f32.mrb[0].mxu0
    %v8149 = vadd.f32 0.0, %v8148
    %v8150 = vpop.f32.mrb[0].mxu0
    %v8151 = vadd.f32 0.0, %v8150
    %v8152 = vpop.f32.mrb[0].mxu0
    %v8153 = vadd.f32 0.0, %v8152
    %8154 = vmatprep.mubr.bf16.mxu0 0
    %8155 = vmatmul.mubr.bf16.gmra.mrb[0].mxu0 %v7673
    %v8156 = vpop.f32.mrb[0].mxu0
    %v8157 = vadd.f32 0.0, %v8156
    %v8158 = vpop.f32.mrb[0].mxu0
    %v8159 = vadd.f32 0.0, %v8158
    %v8160 = vpop.f32.mrb[0].mxu0
    %v8161 = vadd.f32 0.0, %v8160
    %v8162 = vpop.f32.mrb[0].mxu0
    %v8163 = vadd.f32 0.0, %v8162
    %8164 = vmatprep.mubr.bf16.mxu0 0
    %8165 = vmatmul.mubr.bf16.gmra.mrb[0].mxu0 %v7676
    %v8166 = vpop.f32.mrb[0].mxu0
    %v8167 = vadd.f32 0.0, %v8166
    %v8168 = vpop.f32.mrb[0].mxu0
    %v8169 = vadd.f32 0.0, %v8168
    %v8170 = vpop.f32.mrb[0].mxu0
    %v8171 = vadd.f32 0.0, %v8170
    %v8172 = vpop.f32.mrb[0].mxu0
    %v8173 = vadd.f32 0.0, %v8172
    %8174 = vmatprep.mubr.bf16.mxu0 0
    %8175 = vmatmul.mubr.bf16.gmra.mrb[0].mxu0 %v7679
    %v8176 = vpop.f32.mrb[0].mxu0
    %v8177 = vadd.f32 0.0, %v8176
    %v8178 = vpop.f32.mrb[0].mxu0
    %v8179 = vadd.f32 0.0, %v8178
    %v8180 = vpop.f32.mrb[0].mxu0
    %v8181 = vadd.f32 0.0, %v8180
    %v8182 = vpop.f32.mrb[0].mxu0
    %v8183 = vadd.f32 0.0, %v8182
    %8184 = vmatprep.mubr.bf16.mxu0 0
    %8185 = vmatmul.mubr.bf16.gmra.mrb[0].mxu0 %v7682
    %v8186 = vpop.f32.mrb[0].mxu0
    %v8187 = vadd.f32 0.0, %v8186
    %v8188 = vpop.f32.mrb[0].mxu0
    %v8189 = vadd.f32 0.0, %v8188
    %v8190 = vpop.f32.mrb[0].mxu0
    %v8191 = vadd.f32 0.0, %v8190
    %v8192 = vpop.f32.mrb[0].mxu0
    %v8193 = vadd.f32 0.0, %v8192
    %8194 = vmatprep.mubr.bf16.mxu0 0
    %8195 = vmatmul.mubr.bf16.gmra.mrb[0].mxu0 %v7685
    %v8196 = vpop.f32.mrb[0].mxu0
    %v8197 = vadd.f32 0.0, %v8196
    %v8198 = vpop.f32.mrb[0].mxu0
    %v8199 = vadd.f32 0.0, %v8198
    %v8200 = vpop.f32.mrb[0].mxu0
    %v8201 = vadd.f32 0.0, %v8200
    %v8202 = vpop.f32.mrb[0].mxu0
    %v8203 = vadd.f32 0.0, %v8202
    %8204 = vmatprep.mubr.bf16.mxu0 0
    %8205 = vmatmul.mubr.bf16.gmra.mrb[0].mxu0 %v7688
    %v8206 = vpop.f32.mrb[0].mxu0
    %v8207 = vadd.f32 0.0, %v8206
    %v8208 = vpop.f32.mrb[0].mxu0
    %v8209 = vadd.f32 0.0, %v8208
    %v8210 = vpop.f32.mrb[0].mxu0
    %v8211 = vadd.f32 0.0, %v8210
    %v8212 = vpop.f32.mrb[0].mxu0
    %v8213 = vadd.f32 0.0, %v8212
    %8214 = vmatprep.mubr.bf16.mxu0 0
    %8215 = vmatmul.mubr.bf16.gmra.mrb[0].mxu0 %v7691
    %v8216 = vpop.f32.mrb[0].mxu0
    %v8217 = vadd.f32 0.0, %v8216
    %v8218 = vpop.f32.mrb[0].mxu0
    %v8219 = vadd.f32 0.0, %v8218
    %v8220 = vpop.f32.mrb[0].mxu0
    %v8221 = vadd.f32 0.0, %v8220
    %v8222 = vpop.f32.mrb[0].mxu0
    %v8223 = vadd.f32 0.0, %v8222
    %8224 = vmatprep.mubr.bf16.mxu0 0
    %8225 = vmatmul.mubr.bf16.gmra.mrb[0].mxu0 %v7694
    %v8226 = vpop.f32.mrb[0].mxu0
    %v8227 = vadd.f32 0.0, %v8226
    %v8228 = vpop.f32.mrb[0].mxu0
    %v8229 = vadd.f32 0.0, %v8228
    %v8230 = vpop.f32.mrb[0].mxu0
    %v8231 = vadd.f32 0.0, %v8230
    %v8232 = vpop.f32.mrb[0].mxu0
    %v8233 = vadd.f32 0.0, %v8232
    %8234 = vmatprep.mubr.bf16.mxu0 0
    %8235 = vmatmul.mubr.bf16.gmra.mrb[0].mxu0 %v7697
    %v8236 = vpop.f32.mrb[0].mxu0
    %v8237 = vadd.f32 0.0, %v8236
    %v8238 = vpop.f32.mrb[0].mxu0
    %v8239 = vadd.f32 0.0, %v8238
    %v8240 = vpop.f32.mrb[0].mxu0
    %v8241 = vadd.f32 0.0, %v8240
    %v8242 = vpop.f32.mrb[0].mxu0
    %v8243 = vadd.f32 0.0, %v8242
    %8244 = vmatprep.mubr.bf16.mxu0 0
    %8245 = vmatmul.mubr.bf16.gmra.mrb[0].mxu0 %v7700
    %v8246 = vpop.f32.mrb[0].mxu0
    %v8247 = vadd.f32 0.0, %v8246
    %v8248 = vpop.f32.mrb[0].mxu0
    %v8249 = vadd.f32 0.0, %v8248
    %v8250 = vpop.f32.mrb[0].mxu0
    %v8251 = vadd.f32 0.0, %v8250
    %v8252 = vpop.f32.mrb[0].mxu0
    %v8253 = vadd.f32 0.0, %v8252
    %8254 = vdwg.mxu0
    %8255 = vst [vmem:[#allocation6] sm:$0xff] %v7737
    %vm8256 = vcmask 523264
    %8257 = vst.msk [vmem:[#allocation6 + $0x8] sm:$0xff] %vm8256, %v7739
    %8258 = vst [vmem:[#allocation6 + $0x10] sm:$0xff] %v7741
    %8259 = vst.msk [vmem:[#allocation6 + $0x18] sm:$0xff] %vm8256, %v7743
    %8260 = vst [vmem:[#allocation6 + $0x20] sm:$0xff] %v7747
    %8261 = vst.msk [vmem:[#allocation6 + $0x28] sm:$0xff] %vm8256, %v7749
    %8262 = vst [vmem:[#allocation6 + $0x30] sm:$0xff] %v7751
    %8263 = vst.msk [vmem:[#allocation6 + $0x38] sm:$0xff] %vm8256, %v7753
    %8264 = vst [vmem:[#allocation6 + $0x40] sm:$0xff] %v7757
    %8265 = vst.msk [vmem:[#allocation6 + $0x48] sm:$0xff] %vm8256, %v7759
    %8266 = vst [vmem:[#allocation6 + $0x50] sm:$0xff] %v7761
    %8267 = vst.msk [vmem:[#allocation6 + $0x58] sm:$0xff] %vm8256, %v7763
    %8268 = vst [vmem:[#allocation6 + $0x60] sm:$0xff] %v7767
    %8269 = vst.msk [vmem:[#allocation6 + $0x68] sm:$0xff] %vm8256, %v7769
    %8270 = vst [vmem:[#allocation6 + $0x70] sm:$0xff] %v7771
    %8271 = vst.msk [vmem:[#allocation6 + $0x78] sm:$0xff] %vm8256, %v7773
    %8272 = vst [vmem:[#allocation6 + $0x80] sm:$0xff] %v7777
    %8273 = vst.msk [vmem:[#allocation6 + $0x88] sm:$0xff] %vm8256, %v7779
    %8274 = vst [vmem:[#allocation6 + $0x90] sm:$0xff] %v7781
    %8275 = vst.msk [vmem:[#allocation6 + $0x98] sm:$0xff] %vm8256, %v7783
    %8276 = vst [vmem:[#allocation6 + $0xa0] sm:$0xff] %v7787
    %8277 = vst.msk [vmem:[#allocation6 + $0xa8] sm:$0xff] %vm8256, %v7789
    %8278 = vst [vmem:[#allocation6 + $0xb0] sm:$0xff] %v7791
    %8279 = vst.msk [vmem:[#allocation6 + $0xb8] sm:$0xff] %vm8256, %v7793
    %8280 = vst [vmem:[#allocation6 + $0xc0] sm:$0xff] %v7797
    %8281 = vst.msk [vmem:[#allocation6 + $0xc8] sm:$0xff] %vm8256, %v7799
    %8282 = vst [vmem:[#allocation6 + $0xd0] sm:$0xff] %v7801
    %8283 = vst.msk [vmem:[#allocation6 + $0xd8] sm:$0xff] %vm8256, %v7803
    %8284 = vst [vmem:[#allocation6 + $0xe0] sm:$0xff] %v7807
    %8285 = vst.msk [vmem:[#allocation6 + $0xe8] sm:$0xff] %vm8256, %v7809
    %8286 = vst [vmem:[#allocation6 + $0xf0] sm:$0xff] %v7811
    %8287 = vst.msk [vmem:[#allocation6 + $0xf8] sm:$0xff] %vm8256, %v7813
    %8288 = vst [vmem:[#allocation6 + $0x100] sm:$0xff] %v7817
    %8289 = vst.msk [vmem:[#allocation6 + $0x108] sm:$0xff] %vm8256, %v7819
    %8290 = vst [vmem:[#allocation6 + $0x110] sm:$0xff] %v7821
    %8291 = vst.msk [vmem:[#allocation6 + $0x118] sm:$0xff] %vm8256, %v7823
    %8292 = vst [vmem:[#allocation6 + $0x120] sm:$0xff] %v7827
    %8293 = vst.msk [vmem:[#allocation6 + $0x128] sm:$0xff] %vm8256, %v7829
    %8294 = vst [vmem:[#allocation6 + $0x130] sm:$0xff] %v7831
    %8295 = vst.msk [vmem:[#allocation6 + $0x138] sm:$0xff] %vm8256, %v7833
    %8296 = vst [vmem:[#allocation6 + $0x140] sm:$0xff] %v7837
    %8297 = vst.msk [vmem:[#allocation6 + $0x148] sm:$0xff] %vm8256, %v7839
    %8298 = vst [vmem:[#allocation6 + $0x150] sm:$0xff] %v7841
    %8299 = vst.msk [vmem:[#allocation6 + $0x158] sm:$0xff] %vm8256, %v7843
    %8300 = vst [vmem:[#allocation6 + $0x160] sm:$0xff] %v7847
    %8301 = vst.msk [vmem:[#allocation6 + $0x168] sm:$0xff] %vm8256, %v7849
    %8302 = vst [vmem:[#allocation6 + $0x170] sm:$0xff] %v7851
    %8303 = vst.msk [vmem:[#allocation6 + $0x178] sm:$0xff] %vm8256, %v7853
    %8304 = vst [vmem:[#allocation6 + $0x180] sm:$0xff] %v7857
    %8305 = vst.msk [vmem:[#allocation6 + $0x188] sm:$0xff] %vm8256, %v7859
    %8306 = vst [vmem:[#allocation6 + $0x190] sm:$0xff] %v7861
    %8307 = vst.msk [vmem:[#allocation6 + $0x198] sm:$0xff] %vm8256, %v7863
    %8308 = vst [vmem:[#allocation6 + $0x1a0] sm:$0xff] %v7867
    %8309 = vst.msk [vmem:[#allocation6 + $0x1a8] sm:$0xff] %vm8256, %v7869
    %8310 = vst [vmem:[#allocation6 + $0x1b0] sm:$0xff] %v7871
    %8311 = vst.msk [vmem:[#allocation6 + $0x1b8] sm:$0xff] %vm8256, %v7873
    %8312 = vst [vmem:[#allocation6 + $0x1c0] sm:$0xff] %v7877
    %8313 = vst.msk [vmem:[#allocation6 + $0x1c8] sm:$0xff] %vm8256, %v7879
    %8314 = vst [vmem:[#allocation6 + $0x1d0] sm:$0xff] %v7881
    %8315 = vst.msk [vmem:[#allocation6 + $0x1d8] sm:$0xff] %vm8256, %v7883
    %8316 = vst [vmem:[#allocation6 + $0x1e0] sm:$0xff] %v7887
    %8317 = vst.msk [vmem:[#allocation6 + $0x1e8] sm:$0xff] %vm8256, %v7889
    %8318 = vst [vmem:[#allocation6 + $0x1f0] sm:$0xff] %v7891
    %8319 = vst.msk [vmem:[#allocation6 + $0x1f8] sm:$0xff] %vm8256, %v7893
    %8320 = vst [vmem:[#allocation6 + $0x200] sm:$0xff] %v7897
    %8321 = vst.msk [vmem:[#allocation6 + $0x208] sm:$0xff] %vm8256, %v7899
    %8322 = vst [vmem:[#allocation6 + $0x210] sm:$0xff] %v7901
    %8323 = vst.msk [vmem:[#allocation6 + $0x218] sm:$0xff] %vm8256, %v7903
    %8324 = vst [vmem:[#allocation6 + $0x220] sm:$0xff] %v7907
    %8325 = vst.msk [vmem:[#allocation6 + $0x228] sm:$0xff] %vm8256, %v7909
    %8326 = vst [vmem:[#allocation6 + $0x230] sm:$0xff] %v7911
    %8327 = vst.msk [vmem:[#allocation6 + $0x238] sm:$0xff] %vm8256, %v7913
    %8328 = vst [vmem:[#allocation6 + $0x240] sm:$0xff] %v7917
    %8329 = vst.msk [vmem:[#allocation6 + $0x248] sm:$0xff] %vm8256, %v7919
    %8330 = vst [vmem:[#allocation6 + $0x250] sm:$0xff] %v7921
    %8331 = vst.msk [vmem:[#allocation6 + $0x258] sm:$0xff] %vm8256, %v7923
    %8332 = vst [vmem:[#allocation6 + $0x260] sm:$0xff] %v7927
    %8333 = vst.msk [vmem:[#allocation6 + $0x268] sm:$0xff] %vm8256, %v7929
    %8334 = vst [vmem:[#allocation6 + $0x270] sm:$0xff] %v7931
    %8335 = vst.msk [vmem:[#allocation6 + $0x278] sm:$0xff] %vm8256, %v7933
    %8336 = vst [vmem:[#allocation6 + $0x280] sm:$0xff] %v7937
    %8337 = vst.msk [vmem:[#allocation6 + $0x288] sm:$0xff] %vm8256, %v7939
    %8338 = vst [vmem:[#allocation6 + $0x290] sm:$0xff] %v7941
    %8339 = vst.msk [vmem:[#allocation6 + $0x298] sm:$0xff] %vm8256, %v7943
    %8340 = vst [vmem:[#allocation6 + $0x2a0] sm:$0xff] %v7947
    %8341 = vst.msk [vmem:[#allocation6 + $0x2a8] sm:$0xff] %vm8256, %v7949
    %8342 = vst [vmem:[#allocation6 + $0x2b0] sm:$0xff] %v7951
    %8343 = vst.msk [vmem:[#allocation6 + $0x2b8] sm:$0xff] %vm8256, %v7953
    %8344 = vst [vmem:[#allocation6 + $0x2c0] sm:$0xff] %v7957
    %8345 = vst.msk [vmem:[#allocation6 + $0x2c8] sm:$0xff] %vm8256, %v7959
    %8346 = vst [vmem:[#allocation6 + $0x2d0] sm:$0xff] %v7961
    %8347 = vst.msk [vmem:[#allocation6 + $0x2d8] sm:$0xff] %vm8256, %v7963
    %8348 = vst [vmem:[#allocation6 + $0x2e0] sm:$0xff] %v7967
    %8349 = vst.msk [vmem:[#allocation6 + $0x2e8] sm:$0xff] %vm8256, %v7969
    %8350 = vst [vmem:[#allocation6 + $0x2f0] sm:$0xff] %v7971
    %8351 = vst.msk [vmem:[#allocation6 + $0x2f8] sm:$0xff] %vm8256, %v7973
    %8352 = vst [vmem:[#allocation6 + $0x300] sm:$0xff] %v7977
    %8353 = vst.msk [vmem:[#allocation6 + $0x308] sm:$0xff] %vm8256, %v7979
    %8354 = vst [vmem:[#allocation6 + $0x310] sm:$0xff] %v7981
    %8355 = vst.msk [vmem:[#allocation6 + $0x318] sm:$0xff] %vm8256, %v7983
    %8356 = vst [vmem:[#allocation6 + $0x320] sm:$0xff] %v7987
    %8357 = vst.msk [vmem:[#allocation6 + $0x328] sm:$0xff] %vm8256, %v7989
    %8358 = vst [vmem:[#allocation6 + $0x330] sm:$0xff] %v7991
    %8359 = vst.msk [vmem:[#allocation6 + $0x338] sm:$0xff] %vm8256, %v7993
    %8360 = vst [vmem:[#allocation6 + $0x340] sm:$0xff] %v7997
    %8361 = vst.msk [vmem:[#allocation6 + $0x348] sm:$0xff] %vm8256, %v7999
    %8362 = vst [vmem:[#allocation6 + $0x350] sm:$0xff] %v8001
    %8363 = vst.msk [vmem:[#allocation6 + $0x358] sm:$0xff] %vm8256, %v8003
    %8364 = vst [vmem:[#allocation6 + $0x360] sm:$0xff] %v8007
    %8365 = vst.msk [vmem:[#allocation6 + $0x368] sm:$0xff] %vm8256, %v8009
    %8366 = vst [vmem:[#allocation6 + $0x370] sm:$0xff] %v8011
    %8367 = vst.msk [vmem:[#allocation6 + $0x378] sm:$0xff] %vm8256, %v8013
    %8368 = vst [vmem:[#allocation6 + $0x380] sm:$0xff] %v8017
    %8369 = vst.msk [vmem:[#allocation6 + $0x388] sm:$0xff] %vm8256, %v8019
    %8370 = vst [vmem:[#allocation6 + $0x390] sm:$0xff] %v8021
    %8371 = vst.msk [vmem:[#allocation6 + $0x398] sm:$0xff] %vm8256, %v8023
    %8372 = vst [vmem:[#allocation6 + $0x3a0] sm:$0xff] %v8027
    %8373 = vst.msk [vmem:[#allocation6 + $0x3a8] sm:$0xff] %vm8256, %v8029
    %8374 = vst [vmem:[#allocation6 + $0x3b0] sm:$0xff] %v8031
    %8375 = vst.msk [vmem:[#allocation6 + $0x3b8] sm:$0xff] %vm8256, %v8033
    %8376 = vst [vmem:[#allocation6 + $0x3c0] sm:$0xff] %v8037
    %8377 = vst.msk [vmem:[#allocation6 + $0x3c8] sm:$0xff] %vm8256, %v8039
    %8378 = vst [vmem:[#allocation6 + $0x3d0] sm:$0xff] %v8041
    %8379 = vst.msk [vmem:[#allocation6 + $0x3d8] sm:$0xff] %vm8256, %v8043
    %8380 = vst [vmem:[#allocation6 + $0x3e0] sm:$0xff] %v8047
    %8381 = vst.msk [vmem:[#allocation6 + $0x3e8] sm:$0xff] %vm8256, %v8049
    %8382 = vst [vmem:[#allocation6 + $0x3f0] sm:$0xff] %v8051
    %8383 = vst.msk [vmem:[#allocation6 + $0x3f8] sm:$0xff] %vm8256, %v8053
    %8384 = vst [vmem:[#allocation6 + $0x400] sm:$0xff] %v8057
    %8385 = vst.msk [vmem:[#allocation6 + $0x408] sm:$0xff] %vm8256, %v8059
    %8386 = vst [vmem:[#allocation6 + $0x410] sm:$0xff] %v8061
    %8387 = vst.msk [vmem:[#allocation6 + $0x418] sm:$0xff] %vm8256, %v8063
    %8388 = vst [vmem:[#allocation6 + $0x420] sm:$0xff] %v8067
    %8389 = vst.msk [vmem:[#allocation6 + $0x428] sm:$0xff] %vm8256, %v8069
    %8390 = vst [vmem:[#allocation6 + $0x430] sm:$0xff] %v8071
    %8391 = vst.msk [vmem:[#allocation6 + $0x438] sm:$0xff] %vm8256, %v8073
    %8392 = vst [vmem:[#allocation6 + $0x440] sm:$0xff] %v8077
    %8393 = vst.msk [vmem:[#allocation6 + $0x448] sm:$0xff] %vm8256, %v8079
    %8394 = vst [vmem:[#allocation6 + $0x450] sm:$0xff] %v8081
    %8395 = vst.msk [vmem:[#allocation6 + $0x458] sm:$0xff] %vm8256, %v8083
    %8396 = vst [vmem:[#allocation6 + $0x460] sm:$0xff] %v8087
    %8397 = vst.msk [vmem:[#allocation6 + $0x468] sm:$0xff] %vm8256, %v8089
    %8398 = vst [vmem:[#allocation6 + $0x470] sm:$0xff] %v8091
    %8399 = vst.msk [vmem:[#allocation6 + $0x478] sm:$0xff] %vm8256, %v8093
    %8400 = vst [vmem:[#allocation6 + $0x480] sm:$0xff] %v8097
    %8401 = vst.msk [vmem:[#allocation6 + $0x488] sm:$0xff] %vm8256, %v8099
    %8402 = vst [vmem:[#allocation6 + $0x490] sm:$0xff] %v8101
    %8403 = vst.msk [vmem:[#allocation6 + $0x498] sm:$0xff] %vm8256, %v8103
    %8404 = vst [vmem:[#allocation6 + $0x4a0] sm:$0xff] %v8107
    %8405 = vst.msk [vmem:[#allocation6 + $0x4a8] sm:$0xff] %vm8256, %v8109
    %8406 = vst [vmem:[#allocation6 + $0x4b0] sm:$0xff] %v8111
    %8407 = vst.msk [vmem:[#allocation6 + $0x4b8] sm:$0xff] %vm8256, %v8113
    %8408 = vst [vmem:[#allocation6 + $0x4c0] sm:$0xff] %v8117
    %8409 = vst.msk [vmem:[#allocation6 + $0x4c8] sm:$0xff] %vm8256, %v8119
    %8410 = vst [vmem:[#allocation6 + $0x4d0] sm:$0xff] %v8121
    %8411 = vst.msk [vmem:[#allocation6 + $0x4d8] sm:$0xff] %vm8256, %v8123
    %8412 = vst [vmem:[#allocation6 + $0x4e0] sm:$0xff] %v8127
    %8413 = vst.msk [vmem:[#allocation6 + $0x4e8] sm:$0xff] %vm8256, %v8129
    %8414 = vst [vmem:[#allocation6 + $0x4f0] sm:$0xff] %v8131
    %8415 = vst.msk [vmem:[#allocation6 + $0x4f8] sm:$0xff] %vm8256, %v8133
    %8416 = vst [vmem:[#allocation6 + $0x500] sm:$0xff] %v8137
    %8417 = vst.msk [vmem:[#allocation6 + $0x508] sm:$0xff] %vm8256, %v8139
    %8418 = vst [vmem:[#allocation6 + $0x510] sm:$0xff] %v8141
    %8419 = vst.msk [vmem:[#allocation6 + $0x518] sm:$0xff] %vm8256, %v8143
    %8420 = vst [vmem:[#allocation6 + $0x520] sm:$0xff] %v8147
    %8421 = vst.msk [vmem:[#allocation6 + $0x528] sm:$0xff] %vm8256, %v8149
    %8422 = vst [vmem:[#allocation6 + $0x530] sm:$0xff] %v8151
    %8423 = vst.msk [vmem:[#allocation6 + $0x538] sm:$0xff] %vm8256, %v8153
    %8424 = vst [vmem:[#allocation6 + $0x540] sm:$0xff] %v8157
    %8425 = vst.msk [vmem:[#allocation6 + $0x548] sm:$0xff] %vm8256, %v8159
    %8426 = vst [vmem:[#allocation6 + $0x550] sm:$0xff] %v8161
    %8427 = vst.msk [vmem:[#allocation6 + $0x558] sm:$0xff] %vm8256, %v8163
    %8428 = vst [vmem:[#allocation6 + $0x560] sm:$0xff] %v8167
    %8429 = vst.msk [vmem:[#allocation6 + $0x568] sm:$0xff] %vm8256, %v8169
    %8430 = vst [vmem:[#allocation6 + $0x570] sm:$0xff] %v8171
    %8431 = vst.msk [vmem:[#allocation6 + $0x578] sm:$0xff] %vm8256, %v8173
    %8432 = vst [vmem:[#allocation6 + $0x580] sm:$0xff] %v8177
    %8433 = vst.msk [vmem:[#allocation6 + $0x588] sm:$0xff] %vm8256, %v8179
    %8434 = vst [vmem:[#allocation6 + $0x590] sm:$0xff] %v8181
    %8435 = vst.msk [vmem:[#allocation6 + $0x598] sm:$0xff] %vm8256, %v8183
    %8436 = vst [vmem:[#allocation6 + $0x5a0] sm:$0xff] %v8187
    %8437 = vst.msk [vmem:[#allocation6 + $0x5a8] sm:$0xff] %vm8256, %v8189
    %8438 = vst [vmem:[#allocation6 + $0x5b0] sm:$0xff] %v8191
    %8439 = vst.msk [vmem:[#allocation6 + $0x5b8] sm:$0xff] %vm8256, %v8193
    %8440 = vst [vmem:[#allocation6 + $0x5c0] sm:$0xff] %v8197
    %8441 = vst.msk [vmem:[#allocation6 + $0x5c8] sm:$0xff] %vm8256, %v8199
    %8442 = vst [vmem:[#allocation6 + $0x5d0] sm:$0xff] %v8201
    %8443 = vst.msk [vmem:[#allocation6 + $0x5d8] sm:$0xff] %vm8256, %v8203
    %8444 = vst [vmem:[#allocation6 + $0x5e0] sm:$0xff] %v8207
    %8445 = vst.msk [vmem:[#allocation6 + $0x5e8] sm:$0xff] %vm8256, %v8209
    %8446 = vst [vmem:[#allocation6 + $0x5f0] sm:$0xff] %v8211
    %8447 = vst.msk [vmem:[#allocation6 + $0x5f8] sm:$0xff] %vm8256, %v8213
    %8448 = vst [vmem:[#allocation6 + $0x600] sm:$0xff] %v8217
    %8449 = vst.msk [vmem:[#allocation6 + $0x608] sm:$0xff] %vm8256, %v8219
    %8450 = vst [vmem:[#allocation6 + $0x610] sm:$0xff] %v8221
    %8451 = vst.msk [vmem:[#allocation6 + $0x618] sm:$0xff] %vm8256, %v8223
    %8452 = vst [vmem:[#allocation6 + $0x620] sm:$0xff] %v8227
    %8453 = vst.msk [vmem:[#allocation6 + $0x628] sm:$0xff] %vm8256, %v8229
    %8454 = vst [vmem:[#allocation6 + $0x630] sm:$0xff] %v8231
    %8455 = vst.msk [vmem:[#allocation6 + $0x638] sm:$0xff] %vm8256, %v8233
    %8456 = vst [vmem:[#allocation6 + $0x640] sm:$0xff] %v8237
    %8457 = vst.msk [vmem:[#allocation6 + $0x648] sm:$0xff] %vm8256, %v8239
    %8458 = vst [vmem:[#allocation6 + $0x650] sm:$0xff] %v8241
    %8459 = vst.msk [vmem:[#allocation6 + $0x658] sm:$0xff] %vm8256, %v8243
    %8460 = vst [vmem:[#allocation6 + $0x660] sm:$0xff] %v8247
    %8461 = vst.msk [vmem:[#allocation6 + $0x668] sm:$0xff] %vm8256, %v8249
    %8462 = vst [vmem:[#allocation6 + $0x670] sm:$0xff] %v8251
    %8463 = vst.msk [vmem:[#allocation6 + $0x678] sm:$0xff] %vm8256, %v8253
    %v8464 = vld [vmem:[#allocation6] sm:$0xff]
    %v8465 = vld [vmem:[#allocation6 + $0x10] sm:$0xff]
    %v8466 = vld [vmem:[#allocation6 + $0x20] sm:$0xff]
    %v8467 = vld [vmem:[#allocation6 + $0x30] sm:$0xff]
    %v8468 = vld [vmem:[#allocation6 + $0x40] sm:$0xff]
    %v8469 = vld [vmem:[#allocation6 + $0x50] sm:$0xff]
    %v8470 = vld [vmem:[#allocation6 + $0x60] sm:$0xff]
    %v8471 = vld [vmem:[#allocation6 + $0x70] sm:$0xff]
    %v8472 = vld [vmem:[#allocation6 + $0x80] sm:$0xff]
    %v8473 = vld [vmem:[#allocation6 + $0x90] sm:$0xff]
    %v8474 = vld [vmem:[#allocation6 + $0xa0] sm:$0xff]
    %v8475 = vld [vmem:[#allocation6 + $0xb0] sm:$0xff]
    %v8476 = vld [vmem:[#allocation6 + $0xc0] sm:$0xff]
    %v8477 = vld [vmem:[#allocation6 + $0xd0] sm:$0xff]
    %v8478 = vld [vmem:[#allocation6 + $0xe0] sm:$0xff]
    %v8479 = vld [vmem:[#allocation6 + $0xf0] sm:$0xff]
    %v8480 = vld [vmem:[#allocation6 + $0x100] sm:$0xff]
    %v8481 = vld [vmem:[#allocation6 + $0x110] sm:$0xff]
    %v8482 = vld [vmem:[#allocation6 + $0x120] sm:$0xff]
    %v8483 = vld [vmem:[#allocation6 + $0x130] sm:$0xff]
    %v8484 = vld [vmem:[#allocation6 + $0x140] sm:$0xff]
    %v8485 = vld [vmem:[#allocation6 + $0x150] sm:$0xff]
    %v8486 = vld [vmem:[#allocation6 + $0x160] sm:$0xff]
    %v8487 = vld [vmem:[#allocation6 + $0x170] sm:$0xff]
    %v8488 = vld [vmem:[#allocation6 + $0x180] sm:$0xff]
    %v8489 = vld [vmem:[#allocation6 + $0x190] sm:$0xff]
    %v8490 = vld [vmem:[#allocation6 + $0x1a0] sm:$0xff]
    %v8491 = vld [vmem:[#allocation6 + $0x1b0] sm:$0xff]
    %v8492 = vld [vmem:[#allocation6 + $0x1c0] sm:$0xff]
    %v8493 = vld [vmem:[#allocation6 + $0x1d0] sm:$0xff]
    %v8494 = vld [vmem:[#allocation6 + $0x1e0] sm:$0xff]
    %v8495 = vld [vmem:[#allocation6 + $0x1f0] sm:$0xff]
    %v8496 = vld [vmem:[#allocation6 + $0x200] sm:$0xff]
    %v8497 = vld [vmem:[#allocation6 + $0x210] sm:$0xff]
    %v8498 = vld [vmem:[#allocation6 + $0x220] sm:$0xff]
    %v8499 = vld [vmem:[#allocation6 + $0x230] sm:$0xff]
    %v8500 = vld [vmem:[#allocation6 + $0x240] sm:$0xff]
    %v8501 = vld [vmem:[#allocation6 + $0x250] sm:$0xff]
    %v8502 = vld [vmem:[#allocation6 + $0x260] sm:$0xff]
    %v8503 = vld [vmem:[#allocation6 + $0x270] sm:$0xff]
    %v8504 = vld [vmem:[#allocation6 + $0x280] sm:$0xff]
    %v8505 = vld [vmem:[#allocation6 + $0x290] sm:$0xff]
    %v8506 = vld [vmem:[#allocation6 + $0x2a0] sm:$0xff]
    %v8507 = vld [vmem:[#allocation6 + $0x2b0] sm:$0xff]
    %v8508 = vld [vmem:[#allocation6 + $0x2c0] sm:$0xff]
    %v8509 = vld [vmem:[#allocation6 + $0x2d0] sm:$0xff]
    %v8510 = vld [vmem:[#allocation6 + $0x2e0] sm:$0xff]
    %v8511 = vld [vmem:[#allocation6 + $0x2f0] sm:$0xff]
    %v8512 = vld [vmem:[#allocation6 + $0x300] sm:$0xff]
    %v8513 = vld [vmem:[#allocation6 + $0x310] sm:$0xff]
    %v8514 = vld [vmem:[#allocation6 + $0x320] sm:$0xff]
    %v8515 = vld [vmem:[#allocation6 + $0x330] sm:$0xff]
    %v8516 = vld [vmem:[#allocation6 + $0x340] sm:$0xff]
    %v8517 = vld [vmem:[#allocation6 + $0x350] sm:$0xff]
    %v8518 = vld [vmem:[#allocation6 + $0x360] sm:$0xff]
    %v8519 = vld [vmem:[#allocation6 + $0x370] sm:$0xff]
    %v8520 = vld [vmem:[#allocation6 + $0x380] sm:$0xff]
    %v8521 = vld [vmem:[#allocation6 + $0x390] sm:$0xff]
    %v8522 = vld [vmem:[#allocation6 + $0x3a0] sm:$0xff]
    %v8523 = vld [vmem:[#allocation6 + $0x3b0] sm:$0xff]
    %v8524 = vld [vmem:[#allocation6 + $0x3c0] sm:$0xff]
    %v8525 = vld [vmem:[#allocation6 + $0x3d0] sm:$0xff]
    %v8526 = vld [vmem:[#allocation6 + $0x3e0] sm:$0xff]
    %v8527 = vld [vmem:[#allocation6 + $0x3f0] sm:$0xff]
    %v8528 = vld [vmem:[#allocation6 + $0x400] sm:$0xff]
    %v8529 = vld [vmem:[#allocation6 + $0x410] sm:$0xff]
    %v8530 = vld [vmem:[#allocation6 + $0x420] sm:$0xff]
    %v8531 = vld [vmem:[#allocation6 + $0x430] sm:$0xff]
    %v8532 = vld [vmem:[#allocation6 + $0x440] sm:$0xff]
    %v8533 = vld [vmem:[#allocation6 + $0x450] sm:$0xff]
    %v8534 = vld [vmem:[#allocation6 + $0x460] sm:$0xff]
    %v8535 = vld [vmem:[#allocation6 + $0x470] sm:$0xff]
    %v8536 = vld [vmem:[#allocation6 + $0x480] sm:$0xff]
    %v8537 = vld [vmem:[#allocation6 + $0x490] sm:$0xff]
    %v8538 = vld [vmem:[#allocation6 + $0x4a0] sm:$0xff]
    %v8539 = vld [vmem:[#allocation6 + $0x4b0] sm:$0xff]
    %v8540 = vld [vmem:[#allocation6 + $0x4c0] sm:$0xff]
    %v8541 = vld [vmem:[#allocation6 + $0x4d0] sm:$0xff]
    %v8542 = vld [vmem:[#allocation6 + $0x4e0] sm:$0xff]
    %v8543 = vld [vmem:[#allocation6 + $0x4f0] sm:$0xff]
    %v8544 = vld [vmem:[#allocation6 + $0x500] sm:$0xff]
    %v8545 = vld [vmem:[#allocation6 + $0x510] sm:$0xff]
    %v8546 = vld [vmem:[#allocation6 + $0x520] sm:$0xff]
    %v8547 = vld [vmem:[#allocation6 + $0x530] sm:$0xff]
    %v8548 = vld [vmem:[#allocation6 + $0x540] sm:$0xff]
    %v8549 = vld [vmem:[#allocation6 + $0x550] sm:$0xff]
    %v8550 = vld [vmem:[#allocation6 + $0x560] sm:$0xff]
    %v8551 = vld [vmem:[#allocation6 + $0x570] sm:$0xff]
    %v8552 = vld [vmem:[#allocation6 + $0x580] sm:$0xff]
    %v8553 = vld [vmem:[#allocation6 + $0x590] sm:$0xff]
    %v8554 = vld [vmem:[#allocation6 + $0x5a0] sm:$0xff]
    %v8555 = vld [vmem:[#allocation6 + $0x5b0] sm:$0xff]
    %v8556 = vld [vmem:[#allocation6 + $0x5c0] sm:$0xff]
    %v8557 = vld [vmem:[#allocation6 + $0x5d0] sm:$0xff]
    %v8558 = vld [vmem:[#allocation6 + $0x5e0] sm:$0xff]
    %v8559 = vld [vmem:[#allocation6 + $0x5f0] sm:$0xff]
    %v8560 = vld [vmem:[#allocation6 + $0x600] sm:$0xff]
    %v8561 = vld [vmem:[#allocation6 + $0x610] sm:$0xff]
    %v8562 = vld [vmem:[#allocation6 + $0x620] sm:$0xff]
    %v8563 = vld [vmem:[#allocation6 + $0x630] sm:$0xff]
    %8660 = vrot.lane.b32.xlu0 %v8468, 64
    %v8661 = vpop.permute.xlu0 %8660
    %8662 = vrot.lane.b32.xlu0 %v8469, 64
    %v8663 = vpop.permute.xlu0 %8662
    %8664 = vrot.lane.b32.xlu0 %v8470, 64
    %v8665 = vpop.permute.xlu0 %8664
    %8666 = vrot.lane.b32.xlu0 %v8471, 64
    %v8667 = vpop.permute.xlu0 %8666
    %8668 = vrot.lane.b32.xlu0 %v8472, 64
    %v8669 = vpop.permute.xlu0 %8668
    %8670 = vrot.lane.b32.xlu0 %v8473, 64
    %v8671 = vpop.permute.xlu0 %8670
    %8672 = vrot.lane.b32.xlu0 %v8474, 64
    %v8673 = vpop.permute.xlu0 %8672
    %8674 = vrot.lane.b32.xlu0 %v8475, 64
    %v8675 = vpop.permute.xlu0 %8674
    %8676 = vrot.lane.b32.xlu0 %v8476, 64
    %v8677 = vpop.permute.xlu0 %8676
    %8678 = vrot.lane.b32.xlu0 %v8477, 64
    %v8679 = vpop.permute.xlu0 %8678
    %8680 = vrot.lane.b32.xlu0 %v8478, 64
    %v8681 = vpop.permute.xlu0 %8680
    %8682 = vrot.lane.b32.xlu0 %v8479, 64
    %v8683 = vpop.permute.xlu0 %8682
    %8684 = vrot.lane.b32.xlu0 %v8480, 64
    %v8685 = vpop.permute.xlu0 %8684
    %8686 = vrot.lane.b32.xlu0 %v8481, 64
    %v8687 = vpop.permute.xlu0 %8686
    %8688 = vrot.lane.b32.xlu0 %v8482, 64
    %v8689 = vpop.permute.xlu0 %8688
    %8690 = vrot.lane.b32.xlu0 %v8483, 64
    %v8691 = vpop.permute.xlu0 %8690
    %8692 = vrot.lane.b32.xlu0 %v8484, 64
    %v8693 = vpop.permute.xlu0 %8692
    %8694 = vrot.lane.b32.xlu0 %v8485, 64
    %v8695 = vpop.permute.xlu0 %8694
    %8696 = vrot.lane.b32.xlu0 %v8486, 64
    %v8697 = vpop.permute.xlu0 %8696
    %8698 = vrot.lane.b32.xlu0 %v8487, 64
    %v8699 = vpop.permute.xlu0 %8698
    %8700 = vrot.lane.b32.xlu0 %v8488, 64
    %v8701 = vpop.permute.xlu0 %8700
    %8702 = vrot.lane.b32.xlu0 %v8489, 64
    %v8703 = vpop.permute.xlu0 %8702
    %8704 = vrot.lane.b32.xlu0 %v8490, 64
    %v8705 = vpop.permute.xlu0 %8704
    %8706 = vrot.lane.b32.xlu0 %v8491, 64
    %v8707 = vpop.permute.xlu0 %8706
    %8708 = vrot.lane.b32.xlu0 %v8492, 64
    %v8709 = vpop.permute.xlu0 %8708
    %8710 = vrot.lane.b32.xlu0 %v8493, 64
    %v8711 = vpop.permute.xlu0 %8710
    %8712 = vrot.lane.b32.xlu0 %v8494, 64
    %v8713 = vpop.permute.xlu0 %8712
    %8714 = vrot.lane.b32.xlu0 %v8495, 64
    %v8715 = vpop.permute.xlu0 %8714
    %8716 = vrot.lane.b32.xlu0 %v8496, 64
    %v8717 = vpop.permute.xlu0 %8716
    %8718 = vrot.lane.b32.xlu0 %v8497, 64
    %v8719 = vpop.permute.xlu0 %8718
    %8720 = vrot.lane.b32.xlu0 %v8498, 64
    %v8721 = vpop.permute.xlu0 %8720
    %8722 = vrot.lane.b32.xlu0 %v8499, 64
    %v8723 = vpop.permute.xlu0 %8722
    %8724 = vrot.lane.b32.xlu0 %v8500, 64
    %v8725 = vpop.permute.xlu0 %8724
    %8726 = vrot.lane.b32.xlu0 %v8501, 64
    %v8727 = vpop.permute.xlu0 %8726
    %8728 = vrot.lane.b32.xlu0 %v8502, 64
    %v8729 = vpop.permute.xlu0 %8728
    %8730 = vrot.lane.b32.xlu0 %v8503, 64
    %v8731 = vpop.permute.xlu0 %8730
    %8732 = vrot.lane.b32.xlu0 %v8504, 64
    %v8733 = vpop.permute.xlu0 %8732
    %8734 = vrot.lane.b32.xlu0 %v8505, 64
    %v8735 = vpop.permute.xlu0 %8734
    %8736 = vrot.lane.b32.xlu0 %v8506, 64
    %v8737 = vpop.permute.xlu0 %8736
    %8738 = vrot.lane.b32.xlu0 %v8507, 64
    %v8739 = vpop.permute.xlu0 %8738
    %8740 = vrot.lane.b32.xlu0 %v8508, 64
    %v8741 = vpop.permute.xlu0 %8740
    %8742 = vrot.lane.b32.xlu0 %v8509, 64
    %v8743 = vpop.permute.xlu0 %8742
    %8744 = vrot.lane.b32.xlu0 %v8510, 64
    %v8745 = vpop.permute.xlu0 %8744
    %8746 = vrot.lane.b32.xlu0 %v8511, 64
    %v8747 = vpop.permute.xlu0 %8746
    %8748 = vrot.lane.b32.xlu0 %v8512, 64
    %v8749 = vpop.permute.xlu0 %8748
    %8750 = vrot.lane.b32.xlu0 %v8513, 64
    %v8751 = vpop.permute.xlu0 %8750
    %8752 = vrot.lane.b32.xlu0 %v8514, 64
    %v8753 = vpop.permute.xlu0 %8752
    %8754 = vrot.lane.b32.xlu0 %v8515, 64
    %v8755 = vpop.permute.xlu0 %8754
    %8756 = vrot.lane.b32.xlu0 %v8516, 64
    %v8757 = vpop.permute.xlu0 %8756
    %8758 = vrot.lane.b32.xlu0 %v8517, 64
    %v8759 = vpop.permute.xlu0 %8758
    %8760 = vrot.lane.b32.xlu0 %v8518, 64
    %v8761 = vpop.permute.xlu0 %8760
    %8762 = vrot.lane.b32.xlu0 %v8519, 64
    %v8763 = vpop.permute.xlu0 %8762
    %8764 = vrot.lane.b32.xlu0 %v8520, 64
    %v8765 = vpop.permute.xlu0 %8764
    %8766 = vrot.lane.b32.xlu0 %v8521, 64
    %v8767 = vpop.permute.xlu0 %8766
    %8768 = vrot.lane.b32.xlu0 %v8522, 64
    %v8769 = vpop.permute.xlu0 %8768
    %8770 = vrot.lane.b32.xlu0 %v8523, 64
    %v8771 = vpop.permute.xlu0 %8770
    %8772 = vrot.lane.b32.xlu0 %v8524, 64
    %v8773 = vpop.permute.xlu0 %8772
    %8774 = vrot.lane.b32.xlu0 %v8525, 64
    %v8775 = vpop.permute.xlu0 %8774
    %8776 = vrot.lane.b32.xlu0 %v8526, 64
    %v8777 = vpop.permute.xlu0 %8776
    %8778 = vrot.lane.b32.xlu0 %v8527, 64
    %v8779 = vpop.permute.xlu0 %8778
    %8780 = vrot.lane.b32.xlu0 %v8528, 64
    %v8781 = vpop.permute.xlu0 %8780
    %8782 = vrot.lane.b32.xlu0 %v8529, 64
    %v8783 = vpop.permute.xlu0 %8782
    %8784 = vrot.lane.b32.xlu0 %v8530, 64
    %v8785 = vpop.permute.xlu0 %8784
    %8786 = vrot.lane.b32.xlu0 %v8531, 64
    %v8787 = vpop.permute.xlu0 %8786
    %8788 = vrot.lane.b32.xlu0 %v8532, 64
    %v8789 = vpop.permute.xlu0 %8788
    %8790 = vrot.lane.b32.xlu0 %v8533, 64
    %v8791 = vpop.permute.xlu0 %8790
    %8792 = vrot.lane.b32.xlu0 %v8534, 64
    %v8793 = vpop.permute.xlu0 %8792
    %8794 = vrot.lane.b32.xlu0 %v8535, 64
    %v8795 = vpop.permute.xlu0 %8794
    %8796 = vrot.lane.b32.xlu0 %v8536, 64
    %v8797 = vpop.permute.xlu0 %8796
    %8798 = vrot.lane.b32.xlu0 %v8537, 64
    %v8799 = vpop.permute.xlu0 %8798
    %8800 = vrot.lane.b32.xlu0 %v8538, 64
    %v8801 = vpop.permute.xlu0 %8800
    %8802 = vrot.lane.b32.xlu0 %v8539, 64
    %v8803 = vpop.permute.xlu0 %8802
    %8804 = vrot.lane.b32.xlu0 %v8540, 64
    %v8805 = vpop.permute.xlu0 %8804
    %8806 = vrot.lane.b32.xlu0 %v8541, 64
    %v8807 = vpop.permute.xlu0 %8806
    %8808 = vrot.lane.b32.xlu0 %v8542, 64
    %v8809 = vpop.permute.xlu0 %8808
    %8810 = vrot.lane.b32.xlu0 %v8543, 64
    %v8811 = vpop.permute.xlu0 %8810
    %8812 = vrot.lane.b32.xlu0 %v8544, 64
    %v8813 = vpop.permute.xlu0 %8812
    %8814 = vrot.lane.b32.xlu0 %v8545, 64
    %v8815 = vpop.permute.xlu0 %8814
    %8816 = vrot.lane.b32.xlu0 %v8546, 64
    %v8817 = vpop.permute.xlu0 %8816
    %8818 = vrot.lane.b32.xlu0 %v8547, 64
    %v8819 = vpop.permute.xlu0 %8818
    %8820 = vrot.lane.b32.xlu0 %v8548, 64
    %v8821 = vpop.permute.xlu0 %8820
    %8822 = vrot.lane.b32.xlu0 %v8549, 64
    %v8823 = vpop.permute.xlu0 %8822
    %8824 = vrot.lane.b32.xlu0 %v8550, 64
    %v8825 = vpop.permute.xlu0 %8824
    %8826 = vrot.lane.b32.xlu0 %v8551, 64
    %v8827 = vpop.permute.xlu0 %8826
    %8828 = vrot.lane.b32.xlu0 %v8552, 64
    %v8829 = vpop.permute.xlu0 %8828
    %8830 = vrot.lane.b32.xlu0 %v8553, 64
    %v8831 = vpop.permute.xlu0 %8830
    %8832 = vrot.lane.b32.xlu0 %v8554, 64
    %v8833 = vpop.permute.xlu0 %8832
    %8834 = vrot.lane.b32.xlu0 %v8555, 64
    %v8835 = vpop.permute.xlu0 %8834
    %8836 = vrot.lane.b32.xlu0 %v8556, 64
    %v8837 = vpop.permute.xlu0 %8836
    %8838 = vrot.lane.b32.xlu0 %v8557, 64
    %v8839 = vpop.permute.xlu0 %8838
    %8840 = vrot.lane.b32.xlu0 %v8558, 64
    %v8841 = vpop.permute.xlu0 %8840
    %8842 = vrot.lane.b32.xlu0 %v8559, 64
    %v8843 = vpop.permute.xlu0 %8842
    %8844 = vrot.lane.b32.xlu0 %v8560, 64
    %v8845 = vpop.permute.xlu0 %8844
    %8846 = vrot.lane.b32.xlu0 %v8561, 64
    %v8847 = vpop.permute.xlu0 %8846
    %8848 = vrot.lane.b32.xlu0 %v8562, 64
    %v8849 = vpop.permute.xlu0 %8848
    %8850 = vrot.lane.b32.xlu0 %v8563, 64
    %v8851 = vpop.permute.xlu0 %8850
    %v8948 = vadd.f32 %v8464, %v8661
    %v8949 = vadd.f32 %v8465, %v8663
    %v8950 = vadd.f32 %v8466, %v8665
    %v8951 = vadd.f32 %v8467, %v8667
    %v8952 = vadd.f32 %v8468, %v8669
    %v8953 = vadd.f32 %v8469, %v8671
    %v8954 = vadd.f32 %v8470, %v8673
    %v8955 = vadd.f32 %v8471, %v8675
    %v8956 = vadd.f32 %v8472, %v8677
    %v8957 = vadd.f32 %v8473, %v8679
    %v8958 = vadd.f32 %v8474, %v8681
    %v8959 = vadd.f32 %v8475, %v8683
    %v8960 = vadd.f32 %v8476, %v8685
    %v8961 = vadd.f32 %v8477, %v8687
    %v8962 = vadd.f32 %v8478, %v8689
    %v8963 = vadd.f32 %v8479, %v8691
    %v8964 = vadd.f32 %v8480, %v8693
    %v8965 = vadd.f32 %v8481, %v8695
    %v8966 = vadd.f32 %v8482, %v8697
    %v8967 = vadd.f32 %v8483, %v8699
    %v8968 = vadd.f32 %v8484, %v8701
    %v8969 = vadd.f32 %v8485, %v8703
    %v8970 = vadd.f32 %v8486, %v8705
    %v8971 = vadd.f32 %v8487, %v8707
    %v8972 = vadd.f32 %v8488, %v8709
    %v8973 = vadd.f32 %v8489, %v8711
    %v8974 = vadd.f32 %v8490, %v8713
    %v8975 = vadd.f32 %v8491, %v8715
    %v8976 = vadd.f32 %v8492, %v8717
    %v8977 = vadd.f32 %v8493, %v8719
    %v8978 = vadd.f32 %v8494, %v8721
    %v8979 = vadd.f32 %v8495, %v8723
    %v8980 = vadd.f32 %v8496, %v8725
    %v8981 = vadd.f32 %v8497, %v8727
    %v8982 = vadd.f32 %v8498, %v8729
    %v8983 = vadd.f32 %v8499, %v8731
    %v8984 = vadd.f32 %v8500, %v8733
    %v8985 = vadd.f32 %v8501, %v8735
    %v8986 = vadd.f32 %v8502, %v8737
    %v8987 = vadd.f32 %v8503, %v8739
    %v8988 = vadd.f32 %v8504, %v8741
    %v8989 = vadd.f32 %v8505, %v8743
    %v8990 = vadd.f32 %v8506, %v8745
    %v8991 = vadd.f32 %v8507, %v8747
    %v8992 = vadd.f32 %v8508, %v8749
    %v8993 = vadd.f32 %v8509, %v8751
    %v8994 = vadd.f32 %v8510, %v8753
    %v8995 = vadd.f32 %v8511, %v8755
    %v8996 = vadd.f32 %v8512, %v8757
    %v8997 = vadd.f32 %v8513, %v8759
    %v8998 = vadd.f32 %v8514, %v8761
    %v8999 = vadd.f32 %v8515, %v8763
    %v9000 = vadd.f32 %v8516, %v8765
    %v9001 = vadd.f32 %v8517, %v8767
    %v9002 = vadd.f32 %v8518, %v8769
    %v9003 = vadd.f32 %v8519, %v8771
    %v9004 = vadd.f32 %v8520, %v8773
    %v9005 = vadd.f32 %v8521, %v8775
    %v9006 = vadd.f32 %v8522, %v8777
    %v9007 = vadd.f32 %v8523, %v8779
    %v9008 = vadd.f32 %v8524, %v8781
    %v9009 = vadd.f32 %v8525, %v8783
    %v9010 = vadd.f32 %v8526, %v8785
    %v9011 = vadd.f32 %v8527, %v8787
    %v9012 = vadd.f32 %v8528, %v8789
    %v9013 = vadd.f32 %v8529, %v8791
    %v9014 = vadd.f32 %v8530, %v8793
    %v9015 = vadd.f32 %v8531, %v8795
    %v9016 = vadd.f32 %v8532, %v8797
    %v9017 = vadd.f32 %v8533, %v8799
    %v9018 = vadd.f32 %v8534, %v8801
    %v9019 = vadd.f32 %v8535, %v8803
    %v9020 = vadd.f32 %v8536, %v8805
    %v9021 = vadd.f32 %v8537, %v8807
    %v9022 = vadd.f32 %v8538, %v8809
    %v9023 = vadd.f32 %v8539, %v8811
    %v9024 = vadd.f32 %v8540, %v8813
    %v9025 = vadd.f32 %v8541, %v8815
    %v9026 = vadd.f32 %v8542, %v8817
    %v9027 = vadd.f32 %v8543, %v8819
    %v9028 = vadd.f32 %v8544, %v8821
    %v9029 = vadd.f32 %v8545, %v8823
    %v9030 = vadd.f32 %v8546, %v8825
    %v9031 = vadd.f32 %v8547, %v8827
    %v9032 = vadd.f32 %v8548, %v8829
    %v9033 = vadd.f32 %v8549, %v8831
    %v9034 = vadd.f32 %v8550, %v8833
    %v9035 = vadd.f32 %v8551, %v8835
    %v9036 = vadd.f32 %v8552, %v8837
    %v9037 = vadd.f32 %v8553, %v8839
    %v9038 = vadd.f32 %v8554, %v8841
    %v9039 = vadd.f32 %v8555, %v8843
    %v9040 = vadd.f32 %v8556, %v8845
    %v9041 = vadd.f32 %v8557, %v8847
    %v9042 = vadd.f32 %v8558, %v8849
    %v9043 = vadd.f32 %v8559, %v8851
    %v9044 = vld [vmem:[#allocation6 + $0x88] sm:$0xff]
    %v9045 = vld [vmem:[#allocation6 + $0x98] sm:$0xff]
    %v9046 = vld [vmem:[#allocation6 + $0xa8] sm:$0xff]
    %v9047 = vld [vmem:[#allocation6 + $0xb8] sm:$0xff]
    %v9048 = vld [vmem:[#allocation6 + $0xc8] sm:$0xff]
    %v9049 = vld [vmem:[#allocation6 + $0xd8] sm:$0xff]
    %v9050 = vld [vmem:[#allocation6 + $0xe8] sm:$0xff]
    %v9051 = vld [vmem:[#allocation6 + $0xf8] sm:$0xff]
    %v9052 = vld [vmem:[#allocation6 + $0x108] sm:$0xff]
    %v9053 = vld [vmem:[#allocation6 + $0x118] sm:$0xff]
    %v9054 = vld [vmem:[#allocation6 + $0x128] sm:$0xff]
    %v9055 = vld [vmem:[#allocation6 + $0x138] sm:$0xff]
    %v9056 = vld [vmem:[#allocation6 + $0x148] sm:$0xff]
    %v9057 = vld [vmem:[#allocation6 + $0x158] sm:$0xff]
    %v9058 = vld [vmem:[#allocation6 + $0x168] sm:$0xff]
    %v9059 = vld [vmem:[#allocation6 + $0x178] sm:$0xff]
    %v9060 = vld [vmem:[#allocation6 + $0x188] sm:$0xff]
    %v9061 = vld [vmem:[#allocation6 + $0x198] sm:$0xff]
    %v9062 = vld [vmem:[#allocation6 + $0x1a8] sm:$0xff]
    %v9063 = vld [vmem:[#allocation6 + $0x1b8] sm:$0xff]
    %v9064 = vld [vmem:[#allocation6 + $0x1c8] sm:$0xff]
    %v9065 = vld [vmem:[#allocation6 + $0x1d8] sm:$0xff]
    %v9066 = vld [vmem:[#allocation6 + $0x1e8] sm:$0xff]
    %v9067 = vld [vmem:[#allocation6 + $0x1f8] sm:$0xff]
    %v9068 = vld [vmem:[#allocation6 + $0x208] sm:$0xff]
    %v9069 = vld [vmem:[#allocation6 + $0x218] sm:$0xff]
    %v9070 = vld [vmem:[#allocation6 + $0x228] sm:$0xff]
    %v9071 = vld [vmem:[#allocation6 + $0x238] sm:$0xff]
    %v9072 = vld [vmem:[#allocation6 + $0x248] sm:$0xff]
    %v9073 = vld [vmem:[#allocation6 + $0x258] sm:$0xff]
    %v9074 = vld [vmem:[#allocation6 + $0x268] sm:$0xff]
    %v9075 = vld [vmem:[#allocation6 + $0x278] sm:$0xff]
    %v9076 = vld [vmem:[#allocation6 + $0x288] sm:$0xff]
    %v9077 = vld [vmem:[#allocation6 + $0x298] sm:$0xff]
    %v9078 = vld [vmem:[#allocation6 + $0x2a8] sm:$0xff]
    %v9079 = vld [vmem:[#allocation6 + $0x2b8] sm:$0xff]
    %v9080 = vld [vmem:[#allocation6 + $0x2c8] sm:$0xff]
    %v9081 = vld [vmem:[#allocation6 + $0x2d8] sm:$0xff]
    %v9082 = vld [vmem:[#allocation6 + $0x2e8] sm:$0xff]
    %v9083 = vld [vmem:[#allocation6 + $0x2f8] sm:$0xff]
    %v9084 = vld [vmem:[#allocation6 + $0x308] sm:$0xff]
    %v9085 = vld [vmem:[#allocation6 + $0x318] sm:$0xff]
    %v9086 = vld [vmem:[#allocation6 + $0x328] sm:$0xff]
    %v9087 = vld [vmem:[#allocation6 + $0x338] sm:$0xff]
    %v9088 = vld [vmem:[#allocation6 + $0x348] sm:$0xff]
    %v9089 = vld [vmem:[#allocation6 + $0x358] sm:$0xff]
    %v9090 = vld [vmem:[#allocation6 + $0x368] sm:$0xff]
    %v9091 = vld [vmem:[#allocation6 + $0x378] sm:$0xff]
    %v9092 = vld [vmem:[#allocation6 + $0x388] sm:$0xff]
    %v9093 = vld [vmem:[#allocation6 + $0x398] sm:$0xff]
    %v9094 = vld [vmem:[#allocation6 + $0x3a8] sm:$0xff]
    %v9095 = vld [vmem:[#allocation6 + $0x3b8] sm:$0xff]
    %v9096 = vld [vmem:[#allocation6 + $0x3c8] sm:$0xff]
    %v9097 = vld [vmem:[#allocation6 + $0x3d8] sm:$0xff]
    %v9098 = vld [vmem:[#allocation6 + $0x3e8] sm:$0xff]
    %v9099 = vld [vmem:[#allocation6 + $0x3f8] sm:$0xff]
    %v9100 = vld [vmem:[#allocation6 + $0x408] sm:$0xff]
    %v9101 = vld [vmem:[#allocation6 + $0x418] sm:$0xff]
    %v9102 = vld [vmem:[#allocation6 + $0x428] sm:$0xff]
    %v9103 = vld [vmem:[#allocation6 + $0x438] sm:$0xff]
    %v9104 = vld [vmem:[#allocation6 + $0x448] sm:$0xff]
    %v9105 = vld [vmem:[#allocation6 + $0x458] sm:$0xff]
    %v9106 = vld [vmem:[#allocation6 + $0x468] sm:$0xff]
    %v9107 = vld [vmem:[#allocation6 + $0x478] sm:$0xff]
    %v9108 = vld [vmem:[#allocation6 + $0x488] sm:$0xff]
    %v9109 = vld [vmem:[#allocation6 + $0x498] sm:$0xff]
    %v9110 = vld [vmem:[#allocation6 + $0x4a8] sm:$0xff]
    %v9111 = vld [vmem:[#allocation6 + $0x4b8] sm:$0xff]
    %v9112 = vld [vmem:[#allocation6 + $0x4c8] sm:$0xff]
    %v9113 = vld [vmem:[#allocation6 + $0x4d8] sm:$0xff]
    %v9114 = vld [vmem:[#allocation6 + $0x4e8] sm:$0xff]
    %v9115 = vld [vmem:[#allocation6 + $0x4f8] sm:$0xff]
    %v9116 = vld [vmem:[#allocation6 + $0x508] sm:$0xff]
    %v9117 = vld [vmem:[#allocation6 + $0x518] sm:$0xff]
    %v9118 = vld [vmem:[#allocation6 + $0x528] sm:$0xff]
    %v9119 = vld [vmem:[#allocation6 + $0x538] sm:$0xff]
    %v9120 = vld [vmem:[#allocation6 + $0x548] sm:$0xff]
    %v9121 = vld [vmem:[#allocation6 + $0x558] sm:$0xff]
    %v9122 = vld [vmem:[#allocation6 + $0x568] sm:$0xff]
    %v9123 = vld [vmem:[#allocation6 + $0x578] sm:$0xff]
    %v9124 = vld [vmem:[#allocation6 + $0x588] sm:$0xff]
    %v9125 = vld [vmem:[#allocation6 + $0x598] sm:$0xff]
    %v9126 = vld [vmem:[#allocation6 + $0x5a8] sm:$0xff]
    %v9127 = vld [vmem:[#allocation6 + $0x5b8] sm:$0xff]
    %v9128 = vld [vmem:[#allocation6 + $0x5c8] sm:$0xff]
    %v9129 = vld [vmem:[#allocation6 + $0x5d8] sm:$0xff]
    %v9130 = vld [vmem:[#allocation6 + $0x5e8] sm:$0xff]
    %v9131 = vld [vmem:[#allocation6 + $0x5f8] sm:$0xff]
    %v9132 = vld [vmem:[#allocation6 + $0x608] sm:$0xff]
    %v9133 = vld [vmem:[#allocation6 + $0x618] sm:$0xff]
    %v9134 = vld [vmem:[#allocation6 + $0x628] sm:$0xff]
    %v9135 = vld [vmem:[#allocation6 + $0x638] sm:$0xff]
    %v9136 = vld [vmem:[#allocation6 + $0x648] sm:$0xff]
    %v9137 = vld [vmem:[#allocation6 + $0x658] sm:$0xff]
    %v9138 = vld [vmem:[#allocation6 + $0x668] sm:$0xff]
    %v9139 = vld [vmem:[#allocation6 + $0x678] sm:$0xff]
    %v9140 = vadd.f32 %v8948, %v9044
    %v9141 = vadd.f32 %v8949, %v9045
    %v9142 = vadd.f32 %v8950, %v9046
    %v9143 = vadd.f32 %v8951, %v9047
    %v9144 = vadd.f32 %v8952, %v9048
    %v9145 = vadd.f32 %v8953, %v9049
    %v9146 = vadd.f32 %v8954, %v9050
    %v9147 = vadd.f32 %v8955, %v9051
    %v9148 = vadd.f32 %v8956, %v9052
    %v9149 = vadd.f32 %v8957, %v9053
    %v9150 = vadd.f32 %v8958, %v9054
    %v9151 = vadd.f32 %v8959, %v9055
    %v9152 = vadd.f32 %v8960, %v9056
    %v9153 = vadd.f32 %v8961, %v9057
    %v9154 = vadd.f32 %v8962, %v9058
    %v9155 = vadd.f32 %v8963, %v9059
    %v9156 = vadd.f32 %v8964, %v9060
    %v9157 = vadd.f32 %v8965, %v9061
    %v9158 = vadd.f32 %v8966, %v9062
    %v9159 = vadd.f32 %v8967, %v9063
    %v9160 = vadd.f32 %v8968, %v9064
    %v9161 = vadd.f32 %v8969, %v9065
    %v9162 = vadd.f32 %v8970, %v9066
    %v9163 = vadd.f32 %v8971, %v9067
    %v9164 = vadd.f32 %v8972, %v9068
    %v9165 = vadd.f32 %v8973, %v9069
    %v9166 = vadd.f32 %v8974, %v9070
    %v9167 = vadd.f32 %v8975, %v9071
    %v9168 = vadd.f32 %v8976, %v9072
    %v9169 = vadd.f32 %v8977, %v9073
    %v9170 = vadd.f32 %v8978, %v9074
    %v9171 = vadd.f32 %v8979, %v9075
    %v9172 = vadd.f32 %v8980, %v9076
    %v9173 = vadd.f32 %v8981, %v9077
    %v9174 = vadd.f32 %v8982, %v9078
    %v9175 = vadd.f32 %v8983, %v9079
    %v9176 = vadd.f32 %v8984, %v9080
    %v9177 = vadd.f32 %v8985, %v9081
    %v9178 = vadd.f32 %v8986, %v9082
    %v9179 = vadd.f32 %v8987, %v9083
    %v9180 = vadd.f32 %v8988, %v9084
    %v9181 = vadd.f32 %v8989, %v9085
    %v9182 = vadd.f32 %v8990, %v9086
    %v9183 = vadd.f32 %v8991, %v9087
    %v9184 = vadd.f32 %v8992, %v9088
    %v9185 = vadd.f32 %v8993, %v9089
    %v9186 = vadd.f32 %v8994, %v9090
    %v9187 = vadd.f32 %v8995, %v9091
    %v9188 = vadd.f32 %v8996, %v9092
    %v9189 = vadd.f32 %v8997, %v9093
    %v9190 = vadd.f32 %v8998, %v9094
    %v9191 = vadd.f32 %v8999, %v9095
    %v9192 = vadd.f32 %v9000, %v9096
    %v9193 = vadd.f32 %v9001, %v9097
    %v9194 = vadd.f32 %v9002, %v9098
    %v9195 = vadd.f32 %v9003, %v9099
    %v9196 = vadd.f32 %v9004, %v9100
    %v9197 = vadd.f32 %v9005, %v9101
    %v9198 = vadd.f32 %v9006, %v9102
    %v9199 = vadd.f32 %v9007, %v9103
    %v9200 = vadd.f32 %v9008, %v9104
    %v9201 = vadd.f32 %v9009, %v9105
    %v9202 = vadd.f32 %v9010, %v9106
    %v9203 = vadd.f32 %v9011, %v9107
    %v9204 = vadd.f32 %v9012, %v9108
    %v9205 = vadd.f32 %v9013, %v9109
    %v9206 = vadd.f32 %v9014, %v9110
    %v9207 = vadd.f32 %v9015, %v9111
    %v9208 = vadd.f32 %v9016, %v9112
    %v9209 = vadd.f32 %v9017, %v9113
    %v9210 = vadd.f32 %v9018, %v9114
    %v9211 = vadd.f32 %v9019, %v9115
    %v9212 = vadd.f32 %v9020, %v9116
    %v9213 = vadd.f32 %v9021, %v9117
    %v9214 = vadd.f32 %v9022, %v9118
    %v9215 = vadd.f32 %v9023, %v9119
    %v9216 = vadd.f32 %v9024, %v9120
    %v9217 = vadd.f32 %v9025, %v9121
    %v9218 = vadd.f32 %v9026, %v9122
    %v9219 = vadd.f32 %v9027, %v9123
    %v9220 = vadd.f32 %v9028, %v9124
    %v9221 = vadd.f32 %v9029, %v9125
    %v9222 = vadd.f32 %v9030, %v9126
    %v9223 = vadd.f32 %v9031, %v9127
    %v9224 = vadd.f32 %v9032, %v9128
    %v9225 = vadd.f32 %v9033, %v9129
    %v9226 = vadd.f32 %v9034, %v9130
    %v9227 = vadd.f32 %v9035, %v9131
    %v9228 = vadd.f32 %v9036, %v9132
    %v9229 = vadd.f32 %v9037, %v9133
    %v9230 = vadd.f32 %v9038, %v9134
    %v9231 = vadd.f32 %v9039, %v9135
    %v9232 = vadd.f32 %v9040, %v9136
    %v9233 = vadd.f32 %v9041, %v9137
    %v9234 = vadd.f32 %v9042, %v9138
    %v9235 = vadd.f32 %v9043, %v9139
    %9236 = vst.msk [vmem:[#allocation7] sm:$0xff] %vm8256, %v9140
    %9237 = vst.msk [vmem:[#allocation7 + $0x8] sm:$0xff] %vm8256, %v9141
    %9238 = vst.msk [vmem:[#allocation7 + $0x10] sm:$0xff] %vm8256, %v9142
    %9239 = vst.msk [vmem:[#allocation7 + $0x18] sm:$0xff] %vm8256, %v9143
    %9240 = vst.msk [vmem:[#allocation7 + $0x20] sm:$0xff] %vm8256, %v9144
    %9241 = vst.msk [vmem:[#allocation7 + $0x28] sm:$0xff] %vm8256, %v9145
    %9242 = vst.msk [vmem:[#allocation7 + $0x30] sm:$0xff] %vm8256, %v9146
    %9243 = vst.msk [vmem:[#allocation7 + $0x38] sm:$0xff] %vm8256, %v9147
    %9244 = vst.msk [vmem:[#allocation7 + $0x40] sm:$0xff] %vm8256, %v9148
    %9245 = vst.msk [vmem:[#allocation7 + $0x48] sm:$0xff] %vm8256, %v9149
    %9246 = vst.msk [vmem:[#allocation7 + $0x50] sm:$0xff] %vm8256, %v9150
    %9247 = vst.msk [vmem:[#allocation7 + $0x58] sm:$0xff] %vm8256, %v9151
    %9248 = vst.msk [vmem:[#allocation7 + $0x60] sm:$0xff] %vm8256, %v9152
    %9249 = vst.msk [vmem:[#allocation7 + $0x68] sm:$0xff] %vm8256, %v9153
    %9250 = vst.msk [vmem:[#allocation7 + $0x70] sm:$0xff] %vm8256, %v9154
    %9251 = vst.msk [vmem:[#allocation7 + $0x78] sm:$0xff] %vm8256, %v9155
    %9252 = vst.msk [vmem:[#allocation7 + $0x80] sm:$0xff] %vm8256, %v9156
    %9253 = vst.msk [vmem:[#allocation7 + $0x88] sm:$0xff] %vm8256, %v9157
    %9254 = vst.msk [vmem:[#allocation7 + $0x90] sm:$0xff] %vm8256, %v9158
    %9255 = vst.msk [vmem:[#allocation7 + $0x98] sm:$0xff] %vm8256, %v9159
    %9256 = vst.msk [vmem:[#allocation7 + $0xa0] sm:$0xff] %vm8256, %v9160
    %9257 = vst.msk [vmem:[#allocation7 + $0xa8] sm:$0xff] %vm8256, %v9161
    %9258 = vst.msk [vmem:[#allocation7 + $0xb0] sm:$0xff] %vm8256, %v9162
    %9259 = vst.msk [vmem:[#allocation7 + $0xb8] sm:$0xff] %vm8256, %v9163
    %9260 = vst.msk [vmem:[#allocation7 + $0xc0] sm:$0xff] %vm8256, %v9164
    %9261 = vst.msk [vmem:[#allocation7 + $0xc8] sm:$0xff] %vm8256, %v9165
    %9262 = vst.msk [vmem:[#allocation7 + $0xd0] sm:$0xff] %vm8256, %v9166
    %9263 = vst.msk [vmem:[#allocation7 + $0xd8] sm:$0xff] %vm8256, %v9167
    %9264 = vst.msk [vmem:[#allocation7 + $0xe0] sm:$0xff] %vm8256, %v9168
    %9265 = vst.msk [vmem:[#allocation7 + $0xe8] sm:$0xff] %vm8256, %v9169
    %9266 = vst.msk [vmem:[#allocation7 + $0xf0] sm:$0xff] %vm8256, %v9170
    %9267 = vst.msk [vmem:[#allocation7 + $0xf8] sm:$0xff] %vm8256, %v9171
    %9268 = vst.msk [vmem:[#allocation7 + $0x100] sm:$0xff] %vm8256, %v9172
    %9269 = vst.msk [vmem:[#allocation7 + $0x108] sm:$0xff] %vm8256, %v9173
    %9270 = vst.msk [vmem:[#allocation7 + $0x110] sm:$0xff] %vm8256, %v9174
    %9271 = vst.msk [vmem:[#allocation7 + $0x118] sm:$0xff] %vm8256, %v9175
    %9272 = vst.msk [vmem:[#allocation7 + $0x120] sm:$0xff] %vm8256, %v9176
    %9273 = vst.msk [vmem:[#allocation7 + $0x128] sm:$0xff] %vm8256, %v9177
    %9274 = vst.msk [vmem:[#allocation7 + $0x130] sm:$0xff] %vm8256, %v9178
    %9275 = vst.msk [vmem:[#allocation7 + $0x138] sm:$0xff] %vm8256, %v9179
    %9276 = vst.msk [vmem:[#allocation7 + $0x140] sm:$0xff] %vm8256, %v9180
    %9277 = vst.msk [vmem:[#allocation7 + $0x148] sm:$0xff] %vm8256, %v9181
    %9278 = vst.msk [vmem:[#allocation7 + $0x150] sm:$0xff] %vm8256, %v9182
    %9279 = vst.msk [vmem:[#allocation7 + $0x158] sm:$0xff] %vm8256, %v9183
    %9280 = vst.msk [vmem:[#allocation7 + $0x160] sm:$0xff] %vm8256, %v9184
    %9281 = vst.msk [vmem:[#allocation7 + $0x168] sm:$0xff] %vm8256, %v9185
    %9282 = vst.msk [vmem:[#allocation7 + $0x170] sm:$0xff] %vm8256, %v9186
    %9283 = vst.msk [vmem:[#allocation7 + $0x178] sm:$0xff] %vm8256, %v9187
    %9284 = vst.msk [vmem:[#allocation7 + $0x180] sm:$0xff] %vm8256, %v9188
    %9285 = vst.msk [vmem:[#allocation7 + $0x188] sm:$0xff] %vm8256, %v9189
    %9286 = vst.msk [vmem:[#allocation7 + $0x190] sm:$0xff] %vm8256, %v9190
    %9287 = vst.msk [vmem:[#allocation7 + $0x198] sm:$0xff] %vm8256, %v9191
    %9288 = vst.msk [vmem:[#allocation7 + $0x1a0] sm:$0xff] %vm8256, %v9192
    %9289 = vst.msk [vmem:[#allocation7 + $0x1a8] sm:$0xff] %vm8256, %v9193
    %9290 = vst.msk [vmem:[#allocation7 + $0x1b0] sm:$0xff] %vm8256, %v9194
    %9291 = vst.msk [vmem:[#allocation7 + $0x1b8] sm:$0xff] %vm8256, %v9195
    %9292 = vst.msk [vmem:[#allocation7 + $0x1c0] sm:$0xff] %vm8256, %v9196
    %9293 = vst.msk [vmem:[#allocation7 + $0x1c8] sm:$0xff] %vm8256, %v9197
    %9294 = vst.msk [vmem:[#allocation7 + $0x1d0] sm:$0xff] %vm8256, %v9198
    %9295 = vst.msk [vmem:[#allocation7 + $0x1d8] sm:$0xff] %vm8256, %v9199
    %9296 = vst.msk [vmem:[#allocation7 + $0x1e0] sm:$0xff] %vm8256, %v9200
    %9297 = vst.msk [vmem:[#allocation7 + $0x1e8] sm:$0xff] %vm8256, %v9201
    %9298 = vst.msk [vmem:[#allocation7 + $0x1f0] sm:$0xff] %vm8256, %v9202
    %9299 = vst.msk [vmem:[#allocation7 + $0x1f8] sm:$0xff] %vm8256, %v9203
    %9300 = vst.msk [vmem:[#allocation7 + $0x200] sm:$0xff] %vm8256, %v9204
    %9301 = vst.msk [vmem:[#allocation7 + $0x208] sm:$0xff] %vm8256, %v9205
    %9302 = vst.msk [vmem:[#allocation7 + $0x210] sm:$0xff] %vm8256, %v9206
    %9303 = vst.msk [vmem:[#allocation7 + $0x218] sm:$0xff] %vm8256, %v9207
    %9304 = vst.msk [vmem:[#allocation7 + $0x220] sm:$0xff] %vm8256, %v9208
    %9305 = vst.msk [vmem:[#allocation7 + $0x228] sm:$0xff] %vm8256, %v9209
    %9306 = vst.msk [vmem:[#allocation7 + $0x230] sm:$0xff] %vm8256, %v9210
    %9307 = vst.msk [vmem:[#allocation7 + $0x238] sm:$0xff] %vm8256, %v9211
    %9308 = vst.msk [vmem:[#allocation7 + $0x240] sm:$0xff] %vm8256, %v9212
    %9309 = vst.msk [vmem:[#allocation7 + $0x248] sm:$0xff] %vm8256, %v9213
    %9310 = vst.msk [vmem:[#allocation7 + $0x250] sm:$0xff] %vm8256, %v9214
    %9311 = vst.msk [vmem:[#allocation7 + $0x258] sm:$0xff] %vm8256, %v9215
    %9312 = vst.msk [vmem:[#allocation7 + $0x260] sm:$0xff] %vm8256, %v9216
    %9313 = vst.msk [vmem:[#allocation7 + $0x268] sm:$0xff] %vm8256, %v9217
    %9314 = vst.msk [vmem:[#allocation7 + $0x270] sm:$0xff] %vm8256, %v9218
    %9315 = vst.msk [vmem:[#allocation7 + $0x278] sm:$0xff] %vm8256, %v9219
    %9316 = vst.msk [vmem:[#allocation7 + $0x280] sm:$0xff] %vm8256, %v9220
    %9317 = vst.msk [vmem:[#allocation7 + $0x288] sm:$0xff] %vm8256, %v9221
    %9318 = vst.msk [vmem:[#allocation7 + $0x290] sm:$0xff] %vm8256, %v9222
    %9319 = vst.msk [vmem:[#allocation7 + $0x298] sm:$0xff] %vm8256, %v9223
    %9320 = vst.msk [vmem:[#allocation7 + $0x2a0] sm:$0xff] %vm8256, %v9224
    %9321 = vst.msk [vmem:[#allocation7 + $0x2a8] sm:$0xff] %vm8256, %v9225
    %9322 = vst.msk [vmem:[#allocation7 + $0x2b0] sm:$0xff] %vm8256, %v9226
    %9323 = vst.msk [vmem:[#allocation7 + $0x2b8] sm:$0xff] %vm8256, %v9227
    %9324 = vst.msk [vmem:[#allocation7 + $0x2c0] sm:$0xff] %vm8256, %v9228
    %9325 = vst.msk [vmem:[#allocation7 + $0x2c8] sm:$0xff] %vm8256, %v9229
    %9326 = vst.msk [vmem:[#allocation7 + $0x2d0] sm:$0xff] %vm8256, %v9230
    %9327 = vst.msk [vmem:[#allocation7 + $0x2d8] sm:$0xff] %vm8256, %v9231
    %9328 = vst.msk [vmem:[#allocation7 + $0x2e0] sm:$0xff] %vm8256, %v9232
    %9329 = vst.msk [vmem:[#allocation7 + $0x2e8] sm:$0xff] %vm8256, %v9233
    %9330 = vst.msk [vmem:[#allocation7 + $0x2f0] sm:$0xff] %vm8256, %v9234
    %9331 = vst.msk [vmem:[#allocation7 + $0x2f8] sm:$0xff] %vm8256, %v9235
    %v9332 = vld [vmem:[#allocation7] sm:$0xff]
    %v9333 = vld [vmem:[#allocation7 + $0x8] sm:$0xff]
    %v9334 = vld [vmem:[#allocation7 + $0x10] sm:$0xff]
    %v9335 = vld [vmem:[#allocation7 + $0x18] sm:$0xff]
    %v9336 = vld [vmem:[#allocation7 + $0x20] sm:$0xff]
    %v9337 = vld [vmem:[#allocation7 + $0x28] sm:$0xff]
    %v9338 = vld [vmem:[#allocation7 + $0x30] sm:$0xff]
    %v9339 = vld [vmem:[#allocation7 + $0x38] sm:$0xff]
    %v9340 = vld [vmem:[#allocation7 + $0x40] sm:$0xff]
    %v9341 = vld [vmem:[#allocation7 + $0x48] sm:$0xff]
    %v9342 = vld [vmem:[#allocation7 + $0x50] sm:$0xff]
    %v9343 = vld [vmem:[#allocation7 + $0x58] sm:$0xff]
    %v9344 = vld [vmem:[#allocation7 + $0x60] sm:$0xff]
    %v9345 = vld [vmem:[#allocation7 + $0x68] sm:$0xff]
    %v9346 = vld [vmem:[#allocation7 + $0x70] sm:$0xff]
    %v9347 = vld [vmem:[#allocation7 + $0x78] sm:$0xff]
    %v9348 = vld [vmem:[#allocation7 + $0x80] sm:$0xff]
    %v9349 = vld [vmem:[#allocation7 + $0x88] sm:$0xff]
    %v9350 = vld [vmem:[#allocation7 + $0x90] sm:$0xff]
    %v9351 = vld [vmem:[#allocation7 + $0x98] sm:$0xff]
    %v9352 = vld [vmem:[#allocation7 + $0xa0] sm:$0xff]
    %v9353 = vld [vmem:[#allocation7 + $0xa8] sm:$0xff]
    %v9354 = vld [vmem:[#allocation7 + $0xb0] sm:$0xff]
    %v9355 = vld [vmem:[#allocation7 + $0xb8] sm:$0xff]
    %v9356 = vld [vmem:[#allocation7 + $0xc0] sm:$0xff]
    %v9357 = vld [vmem:[#allocation7 + $0xc8] sm:$0xff]
    %v9358 = vld [vmem:[#allocation7 + $0xd0] sm:$0xff]
    %v9359 = vld [vmem:[#allocation7 + $0xd8] sm:$0xff]
    %v9360 = vld [vmem:[#allocation7 + $0xe0] sm:$0xff]
    %v9361 = vld [vmem:[#allocation7 + $0xe8] sm:$0xff]
    %v9362 = vld [vmem:[#allocation7 + $0xf0] sm:$0xff]
    %v9363 = vld [vmem:[#allocation7 + $0xf8] sm:$0xff]
    %v9364 = vld [vmem:[#allocation7 + $0x100] sm:$0xff]
    %v9365 = vld [vmem:[#allocation7 + $0x108] sm:$0xff]
    %v9366 = vld [vmem:[#allocation7 + $0x110] sm:$0xff]
    %v9367 = vld [vmem:[#allocation7 + $0x118] sm:$0xff]
    %v9368 = vld [vmem:[#allocation7 + $0x120] sm:$0xff]
    %v9369 = vld [vmem:[#allocation7 + $0x128] sm:$0xff]
    %v9370 = vld [vmem:[#allocation7 + $0x130] sm:$0xff]
    %v9371 = vld [vmem:[#allocation7 + $0x138] sm:$0xff]
    %v9372 = vld [vmem:[#allocation7 + $0x140] sm:$0xff]
    %v9373 = vld [vmem:[#allocation7 + $0x148] sm:$0xff]
    %v9374 = vld [vmem:[#allocation7 + $0x150] sm:$0xff]
    %v9375 = vld [vmem:[#allocation7 + $0x158] sm:$0xff]
    %v9376 = vld [vmem:[#allocation7 + $0x160] sm:$0xff]
    %v9377 = vld [vmem:[#allocation7 + $0x168] sm:$0xff]
    %v9378 = vld [vmem:[#allocation7 + $0x170] sm:$0xff]
    %v9379 = vld [vmem:[#allocation7 + $0x178] sm:$0xff]
    %v9380 = vld [vmem:[#allocation7 + $0x180] sm:$0xff]
    %v9381 = vld [vmem:[#allocation7 + $0x188] sm:$0xff]
    %v9382 = vld [vmem:[#allocation7 + $0x190] sm:$0xff]
    %v9383 = vld [vmem:[#allocation7 + $0x198] sm:$0xff]
    %v9384 = vld [vmem:[#allocation7 + $0x1a0] sm:$0xff]
    %v9385 = vld [vmem:[#allocation7 + $0x1a8] sm:$0xff]
    %v9386 = vld [vmem:[#allocation7 + $0x1b0] sm:$0xff]
    %v9387 = vld [vmem:[#allocation7 + $0x1b8] sm:$0xff]
    %v9388 = vld [vmem:[#allocation7 + $0x1c0] sm:$0xff]
    %v9389 = vld [vmem:[#allocation7 + $0x1c8] sm:$0xff]
    %v9390 = vld [vmem:[#allocation7 + $0x1d0] sm:$0xff]
    %v9391 = vld [vmem:[#allocation7 + $0x1d8] sm:$0xff]
    %v9392 = vld [vmem:[#allocation7 + $0x1e0] sm:$0xff]
    %v9393 = vld [vmem:[#allocation7 + $0x1e8] sm:$0xff]
    %v9394 = vld [vmem:[#allocation7 + $0x1f0] sm:$0xff]
    %v9395 = vld [vmem:[#allocation7 + $0x1f8] sm:$0xff]
    %v9396 = vld [vmem:[#allocation7 + $0x200] sm:$0xff]
    %v9397 = vld [vmem:[#allocation7 + $0x208] sm:$0xff]
    %v9398 = vld [vmem:[#allocation7 + $0x210] sm:$0xff]
    %v9399 = vld [vmem:[#allocation7 + $0x218] sm:$0xff]
    %v9400 = vld [vmem:[#allocation7 + $0x220] sm:$0xff]
    %v9401 = vld [vmem:[#allocation7 + $0x228] sm:$0xff]
    %v9402 = vld [vmem:[#allocation7 + $0x230] sm:$0xff]
    %v9403 = vld [vmem:[#allocation7 + $0x238] sm:$0xff]
    %v9404 = vld [vmem:[#allocation7 + $0x240] sm:$0xff]
    %v9405 = vld [vmem:[#allocation7 + $0x248] sm:$0xff]
    %v9406 = vld [vmem:[#allocation7 + $0x250] sm:$0xff]
    %v9407 = vld [vmem:[#allocation7 + $0x258] sm:$0xff]
    %v9408 = vld [vmem:[#allocation7 + $0x260] sm:$0xff]
    %v9409 = vld [vmem:[#allocation7 + $0x268] sm:$0xff]
    %v9410 = vld [vmem:[#allocation7 + $0x270] sm:$0xff]
    %v9411 = vld [vmem:[#allocation7 + $0x278] sm:$0xff]
    %v9412 = vld [vmem:[#allocation7 + $0x280] sm:$0xff]
    %v9413 = vld [vmem:[#allocation7 + $0x288] sm:$0xff]
    %v9414 = vld [vmem:[#allocation7 + $0x290] sm:$0xff]
    %v9415 = vld [vmem:[#allocation7 + $0x298] sm:$0xff]
    %v9416 = vld [vmem:[#allocation7 + $0x2a0] sm:$0xff]
    %v9417 = vld [vmem:[#allocation7 + $0x2a8] sm:$0xff]
    %v9418 = vld [vmem:[#allocation7 + $0x2b0] sm:$0xff]
    %v9419 = vld [vmem:[#allocation7 + $0x2b8] sm:$0xff]
    %v9420 = vld [vmem:[#allocation7 + $0x2c0] sm:$0xff]
    %v9421 = vld [vmem:[#allocation7 + $0x2c8] sm:$0xff]
    %v9422 = vld [vmem:[#allocation7 + $0x2d0] sm:$0xff]
    %v9423 = vld [vmem:[#allocation7 + $0x1] sm:$0xff]
    %v9424 = vld [vmem:[#allocation7 + $0x9] sm:$0xff]
    %v9425 = vld [vmem:[#allocation7 + $0x11] sm:$0xff]
    %v9426 = vld [vmem:[#allocation7 + $0x19] sm:$0xff]
    %v9427 = vld [vmem:[#allocation7 + $0x21] sm:$0xff]
    %v9428 = vld [vmem:[#allocation7 + $0x29] sm:$0xff]
    %v9429 = vld [vmem:[#allocation7 + $0x31] sm:$0xff]
    %v9430 = vld [vmem:[#allocation7 + $0x39] sm:$0xff]
    %v9431 = vld [vmem:[#allocation7 + $0x41] sm:$0xff]
    %v9432 = vld [vmem:[#allocation7 + $0x49] sm:$0xff]
    %v9433 = vld [vmem:[#allocation7 + $0x51] sm:$0xff]
    %v9434 = vld [vmem:[#allocation7 + $0x59] sm:$0xff]
    %v9435 = vld [vmem:[#allocation7 + $0x61] sm:$0xff]
    %v9436 = vld [vmem:[#allocation7 + $0x69] sm:$0xff]
    %v9437 = vld [vmem:[#allocation7 + $0x71] sm:$0xff]
    %v9438 = vld [vmem:[#allocation7 + $0x79] sm:$0xff]
    %v9439 = vld [vmem:[#allocation7 + $0x81] sm:$0xff]
    %v9440 = vld [vmem:[#allocation7 + $0x89] sm:$0xff]
    %v9441 = vld [vmem:[#allocation7 + $0x91] sm:$0xff]
    %v9442 = vld [vmem:[#allocation7 + $0x99] sm:$0xff]
    %v9443 = vld [vmem:[#allocation7 + $0xa1] sm:$0xff]
    %v9444 = vld [vmem:[#allocation7 + $0xa9] sm:$0xff]
    %v9445 = vld [vmem:[#allocation7 + $0xb1] sm:$0xff]
    %v9446 = vld [vmem:[#allocation7 + $0xb9] sm:$0xff]
    %v9447 = vld [vmem:[#allocation7 + $0xc1] sm:$0xff]
    %v9448 = vld [vmem:[#allocation7 + $0xc9] sm:$0xff]
    %v9449 = vld [vmem:[#allocation7 + $0xd1] sm:$0xff]
    %v9450 = vld [vmem:[#allocation7 + $0xd9] sm:$0xff]
    %v9451 = vld [vmem:[#allocation7 + $0xe1] sm:$0xff]
    %v9452 = vld [vmem:[#allocation7 + $0xe9] sm:$0xff]
    %v9453 = vld [vmem:[#allocation7 + $0xf1] sm:$0xff]
    %v9454 = vld [vmem:[#allocation7 + $0xf9] sm:$0xff]
    %v9455 = vld [vmem:[#allocation7 + $0x101] sm:$0xff]
    %v9456 = vld [vmem:[#allocation7 + $0x109] sm:$0xff]
    %v9457 = vld [vmem:[#allocation7 + $0x111] sm:$0xff]
    %v9458 = vld [vmem:[#allocation7 + $0x119] sm:$0xff]
    %v9459 = vld [vmem:[#allocation7 + $0x121] sm:$0xff]
    %v9460 = vld [vmem:[#allocation7 + $0x129] sm:$0xff]
    %v9461 = vld [vmem:[#allocation7 + $0x131] sm:$0xff]
    %v9462 = vld [vmem:[#allocation7 + $0x139] sm:$0xff]
    %v9463 = vld [vmem:[#allocation7 + $0x141] sm:$0xff]
    %v9464 = vld [vmem:[#allocation7 + $0x149] sm:$0xff]
    %v9465 = vld [vmem:[#allocation7 + $0x151] sm:$0xff]
    %v9466 = vld [vmem:[#allocation7 + $0x159] sm:$0xff]
    %v9467 = vld [vmem:[#allocation7 + $0x161] sm:$0xff]
    %v9468 = vld [vmem:[#allocation7 + $0x169] sm:$0xff]
    %v9469 = vld [vmem:[#allocation7 + $0x171] sm:$0xff]
    %v9470 = vld [vmem:[#allocation7 + $0x179] sm:$0xff]
    %v9471 = vld [vmem:[#allocation7 + $0x181] sm:$0xff]
    %v9472 = vld [vmem:[#allocation7 + $0x189] sm:$0xff]
    %v9473 = vld [vmem:[#allocation7 + $0x191] sm:$0xff]
    %v9474 = vld [vmem:[#allocation7 + $0x199] sm:$0xff]
    %v9475 = vld [vmem:[#allocation7 + $0x1a1] sm:$0xff]
    %v9476 = vld [vmem:[#allocation7 + $0x1a9] sm:$0xff]
    %v9477 = vld [vmem:[#allocation7 + $0x1b1] sm:$0xff]
    %v9478 = vld [vmem:[#allocation7 + $0x1b9] sm:$0xff]
    %v9479 = vld [vmem:[#allocation7 + $0x1c1] sm:$0xff]
    %v9480 = vld [vmem:[#allocation7 + $0x1c9] sm:$0xff]
    %v9481 = vld [vmem:[#allocation7 + $0x1d1] sm:$0xff]
    %v9482 = vld [vmem:[#allocation7 + $0x1d9] sm:$0xff]
    %v9483 = vld [vmem:[#allocation7 + $0x1e1] sm:$0xff]
    %v9484 = vld [vmem:[#allocation7 + $0x1e9] sm:$0xff]
    %v9485 = vld [vmem:[#allocation7 + $0x1f1] sm:$0xff]
    %v9486 = vld [vmem:[#allocation7 + $0x1f9] sm:$0xff]
    %v9487 = vld [vmem:[#allocation7 + $0x201] sm:$0xff]
    %v9488 = vld [vmem:[#allocation7 + $0x209] sm:$0xff]
    %v9489 = vld [vmem:[#allocation7 + $0x211] sm:$0xff]
    %v9490 = vld [vmem:[#allocation7 + $0x219] sm:$0xff]
    %v9491 = vld [vmem:[#allocation7 + $0x221] sm:$0xff]
    %v9492 = vld [vmem:[#allocation7 + $0x229] sm:$0xff]
    %v9493 = vld [vmem:[#allocation7 + $0x231] sm:$0xff]
    %v9494 = vld [vmem:[#allocation7 + $0x239] sm:$0xff]
    %v9495 = vld [vmem:[#allocation7 + $0x241] sm:$0xff]
    %v9496 = vld [vmem:[#allocation7 + $0x249] sm:$0xff]
    %v9497 = vld [vmem:[#allocation7 + $0x251] sm:$0xff]
    %v9498 = vld [vmem:[#allocation7 + $0x259] sm:$0xff]
    %v9499 = vld [vmem:[#allocation7 + $0x261] sm:$0xff]
    %v9500 = vld [vmem:[#allocation7 + $0x269] sm:$0xff]
    %v9501 = vld [vmem:[#allocation7 + $0x271] sm:$0xff]
    %v9502 = vld [vmem:[#allocation7 + $0x279] sm:$0xff]
    %v9503 = vld [vmem:[#allocation7 + $0x281] sm:$0xff]
    %v9504 = vld [vmem:[#allocation7 + $0x289] sm:$0xff]
    %v9505 = vld [vmem:[#allocation7 + $0x291] sm:$0xff]
    %v9506 = vld [vmem:[#allocation7 + $0x299] sm:$0xff]
    %v9507 = vld [vmem:[#allocation7 + $0x2a1] sm:$0xff]
    %v9508 = vld [vmem:[#allocation7 + $0x2a9] sm:$0xff]
    %v9509 = vld [vmem:[#allocation7 + $0x2b1] sm:$0xff]
    %v9510 = vld [vmem:[#allocation7 + $0x2b9] sm:$0xff]
    %v9511 = vld [vmem:[#allocation7 + $0x2c1] sm:$0xff]
    %v9512 = vld [vmem:[#allocation7 + $0x2c9] sm:$0xff]
    %v9513 = vld [vmem:[#allocation7 + $0x2d1] sm:$0xff]
    %v9514 = vmax.f32 %v9332, %v9423
    %v9515 = vmax.f32 %v9333, %v9424
    %v9516 = vmax.f32 %v9334, %v9425
    %v9517 = vmax.f32 %v9335, %v9426
    %v9518 = vmax.f32 %v9336, %v9427
    %v9519 = vmax.f32 %v9337, %v9428
    %v9520 = vmax.f32 %v9338, %v9429
    %v9521 = vmax.f32 %v9339, %v9430
    %v9522 = vmax.f32 %v9340, %v9431
    %v9523 = vmax.f32 %v9341, %v9432
    %v9524 = vmax.f32 %v9342, %v9433
    %v9525 = vmax.f32 %v9343, %v9434
    %v9526 = vmax.f32 %v9344, %v9435
    %v9527 = vmax.f32 %v9345, %v9436
    %v9528 = vmax.f32 %v9346, %v9437
    %v9529 = vmax.f32 %v9347, %v9438
    %v9530 = vmax.f32 %v9348, %v9439
    %v9531 = vmax.f32 %v9349, %v9440
    %v9532 = vmax.f32 %v9350, %v9441
    %v9533 = vmax.f32 %v9351, %v9442
    %v9534 = vmax.f32 %v9352, %v9443
    %v9535 = vmax.f32 %v9353, %v9444
    %v9536 = vmax.f32 %v9354, %v9445
    %v9537 = vmax.f32 %v9355, %v9446
    %v9538 = vmax.f32 %v9356, %v9447
    %v9539 = vmax.f32 %v9357, %v9448
    %v9540 = vmax.f32 %v9358, %v9449
    %v9541 = vmax.f32 %v9359, %v9450
    %v9542 = vmax.f32 %v9360, %v9451
    %v9543 = vmax.f32 %v9361, %v9452
    %v9544 = vmax.f32 %v9362, %v9453
    %v9545 = vmax.f32 %v9363, %v9454
    %v9546 = vmax.f32 %v9364, %v9455
    %v9547 = vmax.f32 %v9365, %v9456
    %v9548 = vmax.f32 %v9366, %v9457
    %v9549 = vmax.f32 %v9367, %v9458
    %v9550 = vmax.f32 %v9368, %v9459
    %v9551 = vmax.f32 %v9369, %v9460
    %v9552 = vmax.f32 %v9370, %v9461
    %v9553 = vmax.f32 %v9371, %v9462
    %v9554 = vmax.f32 %v9372, %v9463
    %v9555 = vmax.f32 %v9373, %v9464
    %v9556 = vmax.f32 %v9374, %v9465
    %v9557 = vmax.f32 %v9375, %v9466
    %v9558 = vmax.f32 %v9376, %v9467
    %v9559 = vmax.f32 %v9377, %v9468
    %v9560 = vmax.f32 %v9378, %v9469
    %v9561 = vmax.f32 %v9379, %v9470
    %v9562 = vmax.f32 %v9380, %v9471
    %v9563 = vmax.f32 %v9381, %v9472
    %v9564 = vmax.f32 %v9382, %v9473
    %v9565 = vmax.f32 %v9383, %v9474
    %v9566 = vmax.f32 %v9384, %v9475
    %v9567 = vmax.f32 %v9385, %v9476
    %v9568 = vmax.f32 %v9386, %v9477
    %v9569 = vmax.f32 %v9387, %v9478
    %v9570 = vmax.f32 %v9388, %v9479
    %v9571 = vmax.f32 %v9389, %v9480
    %v9572 = vmax.f32 %v9390, %v9481
    %v9573 = vmax.f32 %v9391, %v9482
    %v9574 = vmax.f32 %v9392, %v9483
    %v9575 = vmax.f32 %v9393, %v9484
    %v9576 = vmax.f32 %v9394, %v9485
    %v9577 = vmax.f32 %v9395, %v9486
    %v9578 = vmax.f32 %v9396, %v9487
    %v9579 = vmax.f32 %v9397, %v9488
    %v9580 = vmax.f32 %v9398, %v9489
    %v9581 = vmax.f32 %v9399, %v9490
    %v9582 = vmax.f32 %v9400, %v9491
    %v9583 = vmax.f32 %v9401, %v9492
    %v9584 = vmax.f32 %v9402, %v9493
    %v9585 = vmax.f32 %v9403, %v9494
    %v9586 = vmax.f32 %v9404, %v9495
    %v9587 = vmax.f32 %v9405, %v9496
    %v9588 = vmax.f32 %v9406, %v9497
    %v9589 = vmax.f32 %v9407, %v9498
    %v9590 = vmax.f32 %v9408, %v9499
    %v9591 = vmax.f32 %v9409, %v9500
    %v9592 = vmax.f32 %v9410, %v9501
    %v9593 = vmax.f32 %v9411, %v9502
    %v9594 = vmax.f32 %v9412, %v9503
    %v9595 = vmax.f32 %v9413, %v9504
    %v9596 = vmax.f32 %v9414, %v9505
    %v9597 = vmax.f32 %v9415, %v9506
    %v9598 = vmax.f32 %v9416, %v9507
    %v9599 = vmax.f32 %v9417, %v9508
    %v9600 = vmax.f32 %v9418, %v9509
    %v9601 = vmax.f32 %v9419, %v9510
    %v9602 = vmax.f32 %v9420, %v9511
    %v9603 = vmax.f32 %v9421, %v9512
    %v9604 = vmax.f32 %v9422, %v9513
    %v9605 = vld [vmem:[#allocation7 + $0x2d8] sm:$0xff]
    %v9606 = vld [vmem:[#allocation7 + $0x2e0] sm:$0xff]
    %v9607 = vld [vmem:[#allocation7 + $0x2e8] sm:$0xff]
    %v9608 = vld [vmem:[#allocation7 + $0x2f0] sm:$0xff]
    %v9609 = vld [vmem:[#allocation7 + $0x2d9] sm:$0xff]
    %v9610 = vld [vmem:[#allocation7 + $0x2e1] sm:$0xff]
    %v9611 = vld [vmem:[#allocation7 + $0x2e9] sm:$0xff]
    %v9612 = vld [vmem:[#allocation7 + $0x2f1] sm:$0xff]
    %v9613 = vmax.f32 %v9605, %v9609
    %v9614 = vmax.f32 %v9606, %v9610
    %v9615 = vmax.f32 %v9607, %v9611
    %v9616 = vmax.f32 %v9608, %v9612
    %v9617 = vmax.f32 %v9514, %v9518
    %v9618 = vmax.f32 %v9515, %v9519
    %v9619 = vmax.f32 %v9516, %v9520
    %v9620 = vmax.f32 %v9517, %v9521
    %v9621 = vmax.f32 %v9518, %v9522
    %v9622 = vmax.f32 %v9519, %v9523
    %v9623 = vmax.f32 %v9520, %v9524
    %v9624 = vmax.f32 %v9521, %v9525
    %v9625 = vmax.f32 %v9522, %v9526
    %v9626 = vmax.f32 %v9523, %v9527
    %v9627 = vmax.f32 %v9524, %v9528
    %v9628 = vmax.f32 %v9525, %v9529
    %v9629 = vmax.f32 %v9526, %v9530
    %v9630 = vmax.f32 %v9527, %v9531
    %v9631 = vmax.f32 %v9528, %v9532
    %v9632 = vmax.f32 %v9529, %v9533
    %v9633 = vmax.f32 %v9530, %v9534
    %v9634 = vmax.f32 %v9531, %v9535
    %v9635 = vmax.f32 %v9532, %v9536
    %v9636 = vmax.f32 %v9533, %v9537
    %v9637 = vmax.f32 %v9534, %v9538
    %v9638 = vmax.f32 %v9535, %v9539
    %v9639 = vmax.f32 %v9536, %v9540
    %v9640 = vmax.f32 %v9537, %v9541
    %v9641 = vmax.f32 %v9538, %v9542
    %v9642 = vmax.f32 %v9539, %v9543
    %v9643 = vmax.f32 %v9540, %v9544
    %v9644 = vmax.f32 %v9541, %v9545
    %v9645 = vmax.f32 %v9542, %v9546
    %v9646 = vmax.f32 %v9543, %v9547
    %v9647 = vmax.f32 %v9544, %v9548
    %v9648 = vmax.f32 %v9545, %v9549
    %v9649 = vmax.f32 %v9546, %v9550
    %v9650 = vmax.f32 %v9547, %v9551
    %v9651 = vmax.f32 %v9548, %v9552
    %v9652 = vmax.f32 %v9549, %v9553
    %v9653 = vmax.f32 %v9550, %v9554
    %v9654 = vmax.f32 %v9551, %v9555
    %v9655 = vmax.f32 %v9552, %v9556
    %v9656 = vmax.f32 %v9553, %v9557
    %v9657 = vmax.f32 %v9554, %v9558
    %v9658 = vmax.f32 %v9555, %v9559
    %v9659 = vmax.f32 %v9556, %v9560
    %v9660 = vmax.f32 %v9557, %v9561
    %v9661 = vmax.f32 %v9558, %v9562
    %v9662 = vmax.f32 %v9559, %v9563
    %v9663 = vmax.f32 %v9560, %v9564
    %v9664 = vmax.f32 %v9561, %v9565
    %v9665 = vmax.f32 %v9562, %v9566
    %v9666 = vmax.f32 %v9563, %v9567
    %v9667 = vmax.f32 %v9564, %v9568
    %v9668 = vmax.f32 %v9565, %v9569
    %v9669 = vmax.f32 %v9566, %v9570
    %v9670 = vmax.f32 %v9567, %v9571
    %v9671 = vmax.f32 %v9568, %v9572
    %v9672 = vmax.f32 %v9569, %v9573
    %v9673 = vmax.f32 %v9570, %v9574
    %v9674 = vmax.f32 %v9571, %v9575
    %v9675 = vmax.f32 %v9572, %v9576
    %v9676 = vmax.f32 %v9573, %v9577
    %v9677 = vmax.f32 %v9574, %v9578
    %v9678 = vmax.f32 %v9575, %v9579
    %v9679 = vmax.f32 %v9576, %v9580
    %v9680 = vmax.f32 %v9577, %v9581
    %v9681 = vmax.f32 %v9578, %v9582
    %v9682 = vmax.f32 %v9579, %v9583
    %v9683 = vmax.f32 %v9580, %v9584
    %v9684 = vmax.f32 %v9581, %v9585
    %v9685 = vmax.f32 %v9582, %v9586
    %v9686 = vmax.f32 %v9583, %v9587
    %v9687 = vmax.f32 %v9584, %v9588
    %v9688 = vmax.f32 %v9585, %v9589
    %v9689 = vmax.f32 %v9586, %v9590
    %v9690 = vmax.f32 %v9587, %v9591
    %v9691 = vmax.f32 %v9588, %v9592
    %v9692 = vmax.f32 %v9589, %v9593
    %v9693 = vmax.f32 %v9590, %v9594
    %v9694 = vmax.f32 %v9591, %v9595
    %v9695 = vmax.f32 %v9592, %v9596
    %v9696 = vmax.f32 %v9593, %v9597
    %v9697 = vmax.f32 %v9594, %v9598
    %v9698 = vmax.f32 %v9595, %v9599
    %v9699 = vmax.f32 %v9596, %v9600
    %v9700 = vmax.f32 %v9597, %v9601
    %v9701 = vmax.f32 %v9598, %v9602
    %v9702 = vmax.f32 %v9599, %v9603
    %v9703 = vmax.f32 %v9600, %v9604
    %v9704 = vmax.f32 %v9601, %v9613
    %v9705 = vmax.f32 %v9602, %v9614
    %v9706 = vmax.f32 %v9603, %v9615
    %v9707 = vmax.f32 %v9604, %v9616
    %v9708 = vpack.c.bf16 %v9618, %v9617
    %v9709 = vpack.c.bf16 %v9620, %v9619
    %v9710 = vpack.c.bf16 %v9622, %v9621
    %v9711 = vpack.c.bf16 %v9624, %v9623
    %v9712 = vpack.c.bf16 %v9626, %v9625
    %v9713 = vpack.c.bf16 %v9628, %v9627
    %v9714 = vpack.c.bf16 %v9630, %v9629
    %v9715 = vpack.c.bf16 %v9632, %v9631
    %v9716 = vpack.c.bf16 %v9634, %v9633
    %v9717 = vpack.c.bf16 %v9636, %v9635
    %v9718 = vpack.c.bf16 %v9638, %v9637
    %v9719 = vpack.c.bf16 %v9640, %v9639
    %v9720 = vpack.c.bf16 %v9642, %v9641
    %v9721 = vpack.c.bf16 %v9644, %v9643
    %v9722 = vpack.c.bf16 %v9646, %v9645
    %v9723 = vpack.c.bf16 %v9648, %v9647
    %v9724 = vpack.c.bf16 %v9650, %v9649
    %v9725 = vpack.c.bf16 %v9652, %v9651
    %v9726 = vpack.c.bf16 %v9654, %v9653
    %v9727 = vpack.c.bf16 %v9656, %v9655
    %v9728 = vpack.c.bf16 %v9658, %v9657
    %v9729 = vpack.c.bf16 %v9660, %v9659
    %v9730 = vpack.c.bf16 %v9662, %v9661
    %v9731 = vpack.c.bf16 %v9664, %v9663
    %v9732 = vpack.c.bf16 %v9666, %v9665
    %v9733 = vpack.c.bf16 %v9668, %v9667
    %v9734 = vpack.c.bf16 %v9670, %v9669
    %v9735 = vpack.c.bf16 %v9672, %v9671
    %v9736 = vpack.c.bf16 %v9674, %v9673
    %v9737 = vpack.c.bf16 %v9676, %v9675
    %v9738 = vpack.c.bf16 %v9678, %v9677
    %v9739 = vpack.c.bf16 %v9680, %v9679
    %v9740 = vpack.c.bf16 %v9682, %v9681
    %v9741 = vpack.c.bf16 %v9684, %v9683
    %v9742 = vpack.c.bf16 %v9686, %v9685
    %v9743 = vpack.c.bf16 %v9688, %v9687
    %v9744 = vpack.c.bf16 %v9690, %v9689
    %v9745 = vpack.c.bf16 %v9692, %v9691
    %v9746 = vpack.c.bf16 %v9694, %v9693
    %v9747 = vpack.c.bf16 %v9696, %v9695
    %v9748 = vpack.c.bf16 %v9698, %v9697
    %v9749 = vpack.c.bf16 %v9700, %v9699
    %v9750 = vpack.c.bf16 %v9702, %v9701
    %v9751 = vpack.c.bf16 %v9704, %v9703
    %v9752 = vpack.c.bf16 %v9706, %v9705
    %v9753 = vpack.c.bf16 %v9707, %v9707
    %v9800 = vunpack.c.l.b16 %v9708
    %v9801 = vunpack.c.h.b16 %v9708
    %v9802 = vunpack.c.l.b16 %v9709
    %v9803 = vunpack.c.h.b16 %v9709
    %v9804 = vunpack.c.l.b16 %v9710
    %v9805 = vunpack.c.h.b16 %v9710
    %v9806 = vunpack.c.l.b16 %v9711
    %v9807 = vunpack.c.h.b16 %v9711
    %v9808 = vunpack.c.l.b16 %v9712
    %v9809 = vunpack.c.h.b16 %v9712
    %v9810 = vunpack.c.l.b16 %v9713
    %v9811 = vunpack.c.h.b16 %v9713
    %v9812 = vunpack.c.l.b16 %v9714
    %v9813 = vunpack.c.h.b16 %v9714
    %v9814 = vunpack.c.l.b16 %v9715
    %v9815 = vunpack.c.h.b16 %v9715
    %v9816 = vunpack.c.l.b16 %v9716
    %v9817 = vunpack.c.h.b16 %v9716
    %v9818 = vunpack.c.l.b16 %v9717
    %v9819 = vunpack.c.h.b16 %v9717
    %v9820 = vunpack.c.l.b16 %v9718
    %v9821 = vunpack.c.h.b16 %v9718
    %v9822 = vunpack.c.l.b16 %v9719
    %v9823 = vunpack.c.h.b16 %v9719
    %v9824 = vunpack.c.l.b16 %v9720
    %v9825 = vunpack.c.h.b16 %v9720
    %v9826 = vunpack.c.l.b16 %v9721
    %v9827 = vunpack.c.h.b16 %v9721
    %v9828 = vunpack.c.l.b16 %v9722
    %v9829 = vunpack.c.h.b16 %v9722
    %v9830 = vunpack.c.l.b16 %v9723
    %v9831 = vunpack.c.h.b16 %v9723
    %v9832 = vunpack.c.l.b16 %v9724
    %v9833 = vunpack.c.h.b16 %v9724
    %v9834 = vunpack.c.l.b16 %v9725
    %v9835 = vunpack.c.h.b16 %v9725
    %v9836 = vunpack.c.l.b16 %v9726
    %v9837 = vunpack.c.h.b16 %v9726
    %v9838 = vunpack.c.l.b16 %v9727
    %v9839 = vunpack.c.h.b16 %v9727
    %v9840 = vunpack.c.l.b16 %v9728
    %v9841 = vunpack.c.h.b16 %v9728
    %v9842 = vunpack.c.l.b16 %v9729
    %v9843 = vunpack.c.h.b16 %v9729
    %v9844 = vunpack.c.l.b16 %v9730
    %v9845 = vunpack.c.h.b16 %v9730
    %v9846 = vunpack.c.l.b16 %v9731
    %v9847 = vunpack.c.h.b16 %v9731
    %v9848 = vunpack.c.l.b16 %v9732
    %v9849 = vunpack.c.h.b16 %v9732
    %v9850 = vunpack.c.l.b16 %v9733
    %v9851 = vunpack.c.h.b16 %v9733
    %v9852 = vunpack.c.l.b16 %v9734
    %v9853 = vunpack.c.h.b16 %v9734
    %v9854 = vunpack.c.l.b16 %v9735
    %v9855 = vunpack.c.h.b16 %v9735
    %v9856 = vunpack.c.l.b16 %v9736
    %v9857 = vunpack.c.h.b16 %v9736
    %v9858 = vunpack.c.l.b16 %v9737
    %v9859 = vunpack.c.h.b16 %v9737
    %v9860 = vunpack.c.l.b16 %v9738
    %v9861 = vunpack.c.h.b16 %v9738
    %v9862 = vunpack.c.l.b16 %v9739
    %v9863 = vunpack.c.h.b16 %v9739
    %v9864 = vunpack.c.l.b16 %v9740
    %v9865 = vunpack.c.h.b16 %v9740
    %v9866 = vunpack.c.l.b16 %v9741
    %v9867 = vunpack.c.h.b16 %v9741
    %v9868 = vunpack.c.l.b16 %v9742
    %v9869 = vunpack.c.h.b16 %v9742
    %v9870 = vunpack.c.l.b16 %v9743
    %v9871 = vunpack.c.h.b16 %v9743
    %v9872 = vunpack.c.l.b16 %v9744
    %v9873 = vunpack.c.h.b16 %v9744
    %v9874 = vunpack.c.l.b16 %v9745
    %v9875 = vunpack.c.h.b16 %v9745
    %v9876 = vunpack.c.l.b16 %v9746
    %v9877 = vunpack.c.h.b16 %v9746
    %v9878 = vunpack.c.l.b16 %v9747
    %v9879 = vunpack.c.h.b16 %v9747
    %v9880 = vunpack.c.l.b16 %v9748
    %v9881 = vunpack.c.h.b16 %v9748
    %v9882 = vunpack.c.l.b16 %v9749
    %v9883 = vunpack.c.h.b16 %v9749
    %v9884 = vunpack.c.l.b16 %v9750
    %v9885 = vunpack.c.h.b16 %v9750
    %v9886 = vunpack.c.l.b16 %v9751
    %v9887 = vunpack.c.h.b16 %v9751
    %v9888 = vunpack.c.l.b16 %v9752
    %v9889 = vunpack.c.h.b16 %v9752
    %v9890 = vunpack.c.l.b16 %v9753
    %v9891 = vpack.c.b16 %v9800, %v9800
    %v9892 = vpack.c.b16 %v9801, %v9801
    %v9893 = vpack.c.b16 %v9802, %v9802
    %v9894 = vpack.c.b16 %v9803, %v9803
    %v9895 = vpack.c.b16 %v9804, %v9804
    %v9896 = vpack.c.b16 %v9805, %v9805
    %v9897 = vpack.c.b16 %v9806, %v9806
    %v9898 = vpack.c.b16 %v9807, %v9807
    %v9899 = vpack.c.b16 %v9808, %v9808
    %v9900 = vpack.c.b16 %v9809, %v9809
    %v9901 = vpack.c.b16 %v9810, %v9810
    %v9902 = vpack.c.b16 %v9811, %v9811
    %v9903 = vpack.c.b16 %v9812, %v9812
    %v9904 = vpack.c.b16 %v9813, %v9813
    %v9905 = vpack.c.b16 %v9814, %v9814
    %v9906 = vpack.c.b16 %v9815, %v9815
    %v9907 = vpack.c.b16 %v9816, %v9816
    %v9908 = vpack.c.b16 %v9817, %v9817
    %v9909 = vpack.c.b16 %v9818, %v9818
    %v9910 = vpack.c.b16 %v9819, %v9819
    %v9911 = vpack.c.b16 %v9820, %v9820
    %v9912 = vpack.c.b16 %v9821, %v9821
    %v9913 = vpack.c.b16 %v9822, %v9822
    %v9914 = vpack.c.b16 %v9823, %v9823
    %v9915 = vpack.c.b16 %v9824, %v9824
    %v9916 = vpack.c.b16 %v9825, %v9825
    %v9917 = vpack.c.b16 %v9826, %v9826
    %v9918 = vpack.c.b16 %v9827, %v9827
    %v9919 = vpack.c.b16 %v9828, %v9828
    %v9920 = vpack.c.b16 %v9829, %v9829
    %v9921 = vpack.c.b16 %v9830, %v9830
    %v9922 = vpack.c.b16 %v9831, %v9831
    %v9923 = vpack.c.b16 %v9832, %v9832
    %v9924 = vpack.c.b16 %v9833, %v9833
    %v9925 = vpack.c.b16 %v9834, %v9834
    %v9926 = vpack.c.b16 %v9835, %v9835
    %v9927 = vpack.c.b16 %v9836, %v9836
    %v9928 = vpack.c.b16 %v9837, %v9837
    %v9929 = vpack.c.b16 %v9838, %v9838
    %v9930 = vpack.c.b16 %v9839, %v9839
    %v9931 = vpack.c.b16 %v9840, %v9840
    %v9932 = vpack.c.b16 %v9841, %v9841
    %v9933 = vpack.c.b16 %v9842, %v9842
    %v9934 = vpack.c.b16 %v9843, %v9843
    %v9935 = vpack.c.b16 %v9844, %v9844
    %v9936 = vpack.c.b16 %v9845, %v9845
    %v9937 = vpack.c.b16 %v9846, %v9846
    %v9938 = vpack.c.b16 %v9847, %v9847
    %v9939 = vpack.c.b16 %v9848, %v9848
    %v9940 = vpack.c.b16 %v9849, %v9849
    %v9941 = vpack.c.b16 %v9850, %v9850
    %v9942 = vpack.c.b16 %v9851, %v9851
    %v9943 = vpack.c.b16 %v9852, %v9852
    %v9944 = vpack.c.b16 %v9853, %v9853
    %v9945 = vpack.c.b16 %v9854, %v9854
    %v9946 = vpack.c.b16 %v9855, %v9855
    %v9947 = vpack.c.b16 %v9856, %v9856
    %v9948 = vpack.c.b16 %v9857, %v9857
    %v9949 = vpack.c.b16 %v9858, %v9858
    %v9950 = vpack.c.b16 %v9859, %v9859
    %v9951 = vpack.c.b16 %v9860, %v9860
    %v9952 = vpack.c.b16 %v9861, %v9861
    %v9953 = vpack.c.b16 %v9862, %v9862
    %v9954 = vpack.c.b16 %v9863, %v9863
    %v9955 = vpack.c.b16 %v9864, %v9864
    %v9956 = vpack.c.b16 %v9865, %v9865
    %v9957 = vpack.c.b16 %v9866, %v9866
    %v9958 = vpack.c.b16 %v9867, %v9867
    %v9959 = vpack.c.b16 %v9868, %v9868
    %v9960 = vpack.c.b16 %v9869, %v9869
    %v9961 = vpack.c.b16 %v9870, %v9870
    %v9962 = vpack.c.b16 %v9871, %v9871
    %v9963 = vpack.c.b16 %v9872, %v9872
    %v9964 = vpack.c.b16 %v9873, %v9873
    %v9965 = vpack.c.b16 %v9874, %v9874
    %v9966 = vpack.c.b16 %v9875, %v9875
    %v9967 = vpack.c.b16 %v9876, %v9876
    %v9968 = vpack.c.b16 %v9877, %v9877
    %v9969 = vpack.c.b16 %v9878, %v9878
    %v9970 = vpack.c.b16 %v9879, %v9879
    %v9971 = vpack.c.b16 %v9880, %v9880
    %v9972 = vpack.c.b16 %v9881, %v9881
    %v9973 = vpack.c.b16 %v9882, %v9882
    %v9974 = vpack.c.b16 %v9883, %v9883
    %v9975 = vpack.c.b16 %v9884, %v9884
    %v9976 = vpack.c.b16 %v9885, %v9885
    %v9977 = vpack.c.b16 %v9886, %v9886
    %v9978 = vpack.c.b16 %v9887, %v9887
    %v9979 = vpack.c.b16 %v9888, %v9888
    %v9980 = vpack.c.b16 %v9889, %v9889
    %v9981 = vpack.c.b16 %v9890, %v9890
    %vm10073 = vcmask 519168
    %10074 = vst.msk [vmem:[#allocation8] sm:$0xf] %vm10073, %v9891
    %10075 = vst.msk [vmem:[#allocation8 + $0x4] sm:$0xf] %vm10073, %v9892
    %10076 = vst.msk [vmem:[#allocation8 + $0x8] sm:$0xf] %vm10073, %v9893
    %10077 = vst.msk [vmem:[#allocation8 + $0xc] sm:$0xf] %vm10073, %v9894
    %10078 = vst.msk [vmem:[#allocation8 + $0x10] sm:$0xf] %vm10073, %v9895
    %10079 = vst.msk [vmem:[#allocation8 + $0x14] sm:$0xf] %vm10073, %v9896
    %10080 = vst.msk [vmem:[#allocation8 + $0x18] sm:$0xf] %vm10073, %v9897
    %10081 = vst.msk [vmem:[#allocation8 + $0x1c] sm:$0xf] %vm10073, %v9898
    %10082 = vst.msk [vmem:[#allocation8 + $0x20] sm:$0xf] %vm10073, %v9899
    %10083 = vst.msk [vmem:[#allocation8 + $0x24] sm:$0xf] %vm10073, %v9900
    %10084 = vst.msk [vmem:[#allocation8 + $0x28] sm:$0xf] %vm10073, %v9901
    %10085 = vst.msk [vmem:[#allocation8 + $0x2c] sm:$0xf] %vm10073, %v9902
    %10086 = vst.msk [vmem:[#allocation8 + $0x30] sm:$0xf] %vm10073, %v9903
    %10087 = vst.msk [vmem:[#allocation8 + $0x34] sm:$0xf] %vm10073, %v9904
    %10088 = vst.msk [vmem:[#allocation8 + $0x38] sm:$0xf] %vm10073, %v9905
    %10089 = vst.msk [vmem:[#allocation8 + $0x3c] sm:$0xf] %vm10073, %v9906
    %10090 = vst.msk [vmem:[#allocation8 + $0x40] sm:$0xf] %vm10073, %v9907
    %10091 = vst.msk [vmem:[#allocation8 + $0x44] sm:$0xf] %vm10073, %v9908
    %10092 = vst.msk [vmem:[#allocation8 + $0x48] sm:$0xf] %vm10073, %v9909
    %10093 = vst.msk [vmem:[#allocation8 + $0x4c] sm:$0xf] %vm10073, %v9910
    %10094 = vst.msk [vmem:[#allocation8 + $0x50] sm:$0xf] %vm10073, %v9911
    %10095 = vst.msk [vmem:[#allocation8 + $0x54] sm:$0xf] %vm10073, %v9912
    %10096 = vst.msk [vmem:[#allocation8 + $0x58] sm:$0xf] %vm10073, %v9913
    %10097 = vst.msk [vmem:[#allocation8 + $0x5c] sm:$0xf] %vm10073, %v9914
    %10098 = vst.msk [vmem:[#allocation8 + $0x60] sm:$0xf] %vm10073, %v9915
    %10099 = vst.msk [vmem:[#allocation8 + $0x64] sm:$0xf] %vm10073, %v9916
    %10100 = vst.msk [vmem:[#allocation8 + $0x68] sm:$0xf] %vm10073, %v9917
    %10101 = vst.msk [vmem:[#allocation8 + $0x6c] sm:$0xf] %vm10073, %v9918
    %10102 = vst.msk [vmem:[#allocation8 + $0x70] sm:$0xf] %vm10073, %v9919
    %10103 = vst.msk [vmem:[#allocation8 + $0x74] sm:$0xf] %vm10073, %v9920
    %10104 = vst.msk [vmem:[#allocation8 + $0x78] sm:$0xf] %vm10073, %v9921
    %10105 = vst.msk [vmem:[#allocation8 + $0x7c] sm:$0xf] %vm10073, %v9922
    %10106 = vst.msk [vmem:[#allocation8 + $0x80] sm:$0xf] %vm10073, %v9923
    %10107 = vst.msk [vmem:[#allocation8 + $0x84] sm:$0xf] %vm10073, %v9924
    %10108 = vst.msk [vmem:[#allocation8 + $0x88] sm:$0xf] %vm10073, %v9925
    %10109 = vst.msk [vmem:[#allocation8 + $0x8c] sm:$0xf] %vm10073, %v9926
    %10110 = vst.msk [vmem:[#allocation8 + $0x90] sm:$0xf] %vm10073, %v9927
    %10111 = vst.msk [vmem:[#allocation8 + $0x94] sm:$0xf] %vm10073, %v9928
    %10112 = vst.msk [vmem:[#allocation8 + $0x98] sm:$0xf] %vm10073, %v9929
    %10113 = vst.msk [vmem:[#allocation8 + $0x9c] sm:$0xf] %vm10073, %v9930
    %10114 = vst.msk [vmem:[#allocation8 + $0xa0] sm:$0xf] %vm10073, %v9931
    %10115 = vst.msk [vmem:[#allocation8 + $0xa4] sm:$0xf] %vm10073, %v9932
    %10116 = vst.msk [vmem:[#allocation8 + $0xa8] sm:$0xf] %vm10073, %v9933
    %10117 = vst.msk [vmem:[#allocation8 + $0xac] sm:$0xf] %vm10073, %v9934
    %10118 = vst.msk [vmem:[#allocation8 + $0xb0] sm:$0xf] %vm10073, %v9935
    %10119 = vst.msk [vmem:[#allocation8 + $0xb4] sm:$0xf] %vm10073, %v9936
    %10120 = vst.msk [vmem:[#allocation8 + $0xb8] sm:$0xf] %vm10073, %v9937
    %10121 = vst.msk [vmem:[#allocation8 + $0xbc] sm:$0xf] %vm10073, %v9938
    %10122 = vst.msk [vmem:[#allocation8 + $0xc0] sm:$0xf] %vm10073, %v9939
    %10123 = vst.msk [vmem:[#allocation8 + $0xc4] sm:$0xf] %vm10073, %v9940
    %10124 = vst.msk [vmem:[#allocation8 + $0xc8] sm:$0xf] %vm10073, %v9941
    %10125 = vst.msk [vmem:[#allocation8 + $0xcc] sm:$0xf] %vm10073, %v9942
    %10126 = vst.msk [vmem:[#allocation8 + $0xd0] sm:$0xf] %vm10073, %v9943
    %10127 = vst.msk [vmem:[#allocation8 + $0xd4] sm:$0xf] %vm10073, %v9944
    %10128 = vst.msk [vmem:[#allocation8 + $0xd8] sm:$0xf] %vm10073, %v9945
    %10129 = vst.msk [vmem:[#allocation8 + $0xdc] sm:$0xf] %vm10073, %v9946
    %10130 = vst.msk [vmem:[#allocation8 + $0xe0] sm:$0xf] %vm10073, %v9947
    %10131 = vst.msk [vmem:[#allocation8 + $0xe4] sm:$0xf] %vm10073, %v9948
    %10132 = vst.msk [vmem:[#allocation8 + $0xe8] sm:$0xf] %vm10073, %v9949
    %10133 = vst.msk [vmem:[#allocation8 + $0xec] sm:$0xf] %vm10073, %v9950
    %10134 = vst.msk [vmem:[#allocation8 + $0xf0] sm:$0xf] %vm10073, %v9951
    %10135 = vst.msk [vmem:[#allocation8 + $0xf4] sm:$0xf] %vm10073, %v9952
    %10136 = vst.msk [vmem:[#allocation8 + $0xf8] sm:$0xf] %vm10073, %v9953
    %10137 = vst.msk [vmem:[#allocation8 + $0xfc] sm:$0xf] %vm10073, %v9954
    %10138 = vst.msk [vmem:[#allocation8 + $0x100] sm:$0xf] %vm10073, %v9955
    %10139 = vst.msk [vmem:[#allocation8 + $0x104] sm:$0xf] %vm10073, %v9956
    %10140 = vst.msk [vmem:[#allocation8 + $0x108] sm:$0xf] %vm10073, %v9957
    %10141 = vst.msk [vmem:[#allocation8 + $0x10c] sm:$0xf] %vm10073, %v9958
    %10142 = vst.msk [vmem:[#allocation8 + $0x110] sm:$0xf] %vm10073, %v9959
    %10143 = vst.msk [vmem:[#allocation8 + $0x114] sm:$0xf] %vm10073, %v9960
    %10144 = vst.msk [vmem:[#allocation8 + $0x118] sm:$0xf] %vm10073, %v9961
    %10145 = vst.msk [vmem:[#allocation8 + $0x11c] sm:$0xf] %vm10073, %v9962
    %10146 = vst.msk [vmem:[#allocation8 + $0x120] sm:$0xf] %vm10073, %v9963
    %10147 = vst.msk [vmem:[#allocation8 + $0x124] sm:$0xf] %vm10073, %v9964
    %10148 = vst.msk [vmem:[#allocation8 + $0x128] sm:$0xf] %vm10073, %v9965
    %10149 = vst.msk [vmem:[#allocation8 + $0x12c] sm:$0xf] %vm10073, %v9966
    %10150 = vst.msk [vmem:[#allocation8 + $0x130] sm:$0xf] %vm10073, %v9967
    %10151 = vst.msk [vmem:[#allocation8 + $0x134] sm:$0xf] %vm10073, %v9968
    %10152 = vst.msk [vmem:[#allocation8 + $0x138] sm:$0xf] %vm10073, %v9969
    %10153 = vst.msk [vmem:[#allocation8 + $0x13c] sm:$0xf] %vm10073, %v9970
    %10154 = vst.msk [vmem:[#allocation8 + $0x140] sm:$0xf] %vm10073, %v9971
    %10155 = vst.msk [vmem:[#allocation8 + $0x144] sm:$0xf] %vm10073, %v9972
    %10156 = vst.msk [vmem:[#allocation8 + $0x148] sm:$0xf] %vm10073, %v9973
    %10157 = vst.msk [vmem:[#allocation8 + $0x14c] sm:$0xf] %vm10073, %v9974
    %10158 = vst.msk [vmem:[#allocation8 + $0x150] sm:$0xf] %vm10073, %v9975
    %10159 = vst.msk [vmem:[#allocation8 + $0x154] sm:$0xf] %vm10073, %v9976
    %10160 = vst.msk [vmem:[#allocation8 + $0x158] sm:$0xf] %vm10073, %v9977
    %10161 = vst.msk [vmem:[#allocation8 + $0x15c] sm:$0xf] %vm10073, %v9978
    %10162 = vst.msk [vmem:[#allocation8 + $0x160] sm:$0xf] %vm10073, %v9979
    %10163 = vst.msk [vmem:[#allocation8 + $0x164] sm:$0xf] %vm10073, %v9980
    %10164 = vst.msk [vmem:[#allocation8 + $0x168] sm:$0xf] %vm10073, %v9981
    %v10165 = vld [vmem:[%s9] sm:$0xff]
    %v10166 = vld [vmem:[%s9 + $0x8] sm:$0xff]
    %v10167 = vld [vmem:[%s9 + $0x10] sm:$0xff]
    %v10168 = vld [vmem:[%s9 + $0x18] sm:$0xff]
    %v10169 = vld [vmem:[%s9 + $0x20] sm:$0xff]
    %v10170 = vld [vmem:[%s9 + $0x28] sm:$0xff]
    %v10171 = vld [vmem:[%s9 + $0x30] sm:$0xff]
    %v10172 = vld [vmem:[%s9 + $0x38] sm:$0xff]
    %v10173 = vld [vmem:[%s9 + $0x40] sm:$0xff]
    %v10174 = vld [vmem:[%s9 + $0x48] sm:$0xff]
    %v10175 = vld [vmem:[%s9 + $0x50] sm:$0xff]
    %v10176 = vld [vmem:[%s9 + $0x58] sm:$0xff]
    %v10177 = vld [vmem:[%s9 + $0x60] sm:$0xff]
    %v10178 = vld [vmem:[%s9 + $0x68] sm:$0xff]
    %v10179 = vld [vmem:[%s9 + $0x70] sm:$0xff]
    %v10180 = vld [vmem:[%s9 + $0x78] sm:$0xff]
    %v10181 = vld [vmem:[%s9 + $0x80] sm:$0xff]
    %v10182 = vld [vmem:[%s9 + $0x88] sm:$0xff]
    %v10183 = vld [vmem:[%s9 + $0x90] sm:$0xff]
    %v10184 = vld [vmem:[%s9 + $0x98] sm:$0xff]
    %v10185 = vld [vmem:[%s9 + $0xa0] sm:$0xff]
    %v10186 = vld [vmem:[%s9 + $0xa8] sm:$0xff]
    %v10187 = vld [vmem:[%s9 + $0xb0] sm:$0xff]
    %v10188 = vld [vmem:[%s9 + $0xb8] sm:$0xff]
    %v10189 = vld [vmem:[%s9 + $0xc0] sm:$0xff]
    %v10190 = vld [vmem:[%s9 + $0xc8] sm:$0xff]
    %v10191 = vld [vmem:[%s9 + $0xd0] sm:$0xff]
    %v10192 = vld [vmem:[%s9 + $0xd8] sm:$0xff]
    %v10193 = vld [vmem:[%s9 + $0xe0] sm:$0xff]
    %v10194 = vld [vmem:[%s9 + $0xe8] sm:$0xff]
    %v10195 = vld [vmem:[%s9 + $0xf0] sm:$0xff]
    %v10196 = vld [vmem:[%s9 + $0xf8] sm:$0xff]
    %v10197 = vld [vmem:[%s9 + $0x100] sm:$0xff]
    %v10198 = vld [vmem:[%s9 + $0x108] sm:$0xff]
    %v10199 = vld [vmem:[%s9 + $0x110] sm:$0xff]
    %v10200 = vld [vmem:[%s9 + $0x118] sm:$0xff]
    %v10201 = vld [vmem:[%s9 + $0x120] sm:$0xff]
    %v10202 = vld [vmem:[%s9 + $0x128] sm:$0xff]
    %v10203 = vld [vmem:[%s9 + $0x130] sm:$0xff]
    %v10204 = vld [vmem:[%s9 + $0x138] sm:$0xff]
    %v10205 = vld [vmem:[%s9 + $0x140] sm:$0xff]
    %v10206 = vld [vmem:[%s9 + $0x148] sm:$0xff]
    %v10207 = vld [vmem:[%s9 + $0x150] sm:$0xff]
    %v10208 = vld [vmem:[%s9 + $0x158] sm:$0xff]
    %v10209 = vld [vmem:[%s9 + $0x160] sm:$0xff]
    %v10210 = vld [vmem:[%s9 + $0x168] sm:$0xff]
    %v10211 = vld [vmem:[%s9 + $0x170] sm:$0xff]
    %v10212 = vld [vmem:[%s9 + $0x178] sm:$0xff]
    %v10213 = vld [vmem:[%s9 + $0x180] sm:$0xff]
    %v10214 = vld [vmem:[%s9 + $0x188] sm:$0xff]
    %v10215 = vld [vmem:[%s9 + $0x190] sm:$0xff]
    %v10216 = vld [vmem:[%s9 + $0x198] sm:$0xff]
    %v10217 = vld [vmem:[%s9 + $0x1a0] sm:$0xff]
    %v10218 = vld [vmem:[%s9 + $0x1a8] sm:$0xff]
    %v10219 = vld [vmem:[#allocation8] sm:$0xf]
    %v10220 = vld [vmem:[#allocation8 + $0x4] sm:$0xf]
    %v10221 = vld [vmem:[#allocation8 + $0x8] sm:$0xf]
    %v10222 = vld [vmem:[#allocation8 + $0xc] sm:$0xf]
    %v10223 = vld [vmem:[#allocation8 + $0x10] sm:$0xf]
    %v10224 = vld [vmem:[#allocation8 + $0x14] sm:$0xf]
    %v10225 = vld [vmem:[#allocation8 + $0x18] sm:$0xf]
    %v10226 = vld [vmem:[#allocation8 + $0x1c] sm:$0xf]
    %v10227 = vld [vmem:[#allocation8 + $0x20] sm:$0xf]
    %v10228 = vld [vmem:[#allocation8 + $0x24] sm:$0xf]
    %v10229 = vld [vmem:[#allocation8 + $0x28] sm:$0xf]
    %v10230 = vld [vmem:[#allocation8 + $0x2c] sm:$0xf]
    %v10231 = vld [vmem:[#allocation8 + $0x30] sm:$0xf]
    %v10232 = vld [vmem:[#allocation8 + $0x34] sm:$0xf]
    %v10233 = vld [vmem:[#allocation8 + $0x38] sm:$0xf]
    %v10234 = vld [vmem:[#allocation8 + $0x3c] sm:$0xf]
    %v10235 = vld [vmem:[#allocation8 + $0x40] sm:$0xf]
    %v10236 = vld [vmem:[#allocation8 + $0x44] sm:$0xf]
    %v10237 = vld [vmem:[#allocation8 + $0x48] sm:$0xf]
    %v10238 = vld [vmem:[#allocation8 + $0x4c] sm:$0xf]
    %v10239 = vld [vmem:[#allocation8 + $0x50] sm:$0xf]
    %v10240 = vld [vmem:[#allocation8 + $0x54] sm:$0xf]
    %v10241 = vld [vmem:[#allocation8 + $0x58] sm:$0xf]
    %v10242 = vld [vmem:[#allocation8 + $0x5c] sm:$0xf]
    %v10243 = vld [vmem:[#allocation8 + $0x60] sm:$0xf]
    %v10244 = vld [vmem:[#allocation8 + $0x64] sm:$0xf]
    %v10245 = vld [vmem:[#allocation8 + $0x68] sm:$0xf]
    %v10246 = vld [vmem:[#allocation8 + $0x6c] sm:$0xf]
    %v10247 = vld [vmem:[#allocation8 + $0x70] sm:$0xf]
    %v10248 = vld [vmem:[#allocation8 + $0x74] sm:$0xf]
    %v10249 = vld [vmem:[#allocation8 + $0x78] sm:$0xf]
    %v10250 = vld [vmem:[#allocation8 + $0x7c] sm:$0xf]
    %v10251 = vld [vmem:[#allocation8 + $0x80] sm:$0xf]
    %v10252 = vld [vmem:[#allocation8 + $0x84] sm:$0xf]
    %v10253 = vld [vmem:[#allocation8 + $0x88] sm:$0xf]
    %v10254 = vld [vmem:[#allocation8 + $0x8c] sm:$0xf]
    %v10255 = vld [vmem:[#allocation8 + $0x90] sm:$0xf]
    %v10256 = vld [vmem:[#allocation8 + $0x94] sm:$0xf]
    %v10257 = vld [vmem:[#allocation8 + $0x98] sm:$0xf]
    %v10258 = vld [vmem:[#allocation8 + $0x9c] sm:$0xf]
    %v10259 = vld [vmem:[#allocation8 + $0xa0] sm:$0xf]
    %v10260 = vld [vmem:[#allocation8 + $0xa4] sm:$0xf]
    %v10261 = vld [vmem:[#allocation8 + $0xa8] sm:$0xf]
    %v10262 = vld [vmem:[#allocation8 + $0xac] sm:$0xf]
    %v10263 = vld [vmem:[#allocation8 + $0xb0] sm:$0xf]
    %v10264 = vld [vmem:[#allocation8 + $0xb4] sm:$0xf]
    %v10265 = vld [vmem:[#allocation8 + $0xb8] sm:$0xf]
    %v10266 = vld [vmem:[#allocation8 + $0xbc] sm:$0xf]
    %v10267 = vld [vmem:[#allocation8 + $0xc0] sm:$0xf]
    %v10268 = vld [vmem:[#allocation8 + $0xc4] sm:$0xf]
    %v10269 = vld [vmem:[#allocation8 + $0xc8] sm:$0xf]
    %v10270 = vld [vmem:[#allocation8 + $0xcc] sm:$0xf]
    %v10271 = vld [vmem:[#allocation8 + $0xd0] sm:$0xf]
    %v10272 = vld [vmem:[#allocation8 + $0xd4] sm:$0xf]
    %v10273 = vld [vmem:[#allocation8 + $0xd8] sm:$0xf]
    %v10274 = vld [vmem:[#allocation8 + $0xdc] sm:$0xf]
    %v10275 = vld [vmem:[#allocation8 + $0xe0] sm:$0xf]
    %v10276 = vld [vmem:[#allocation8 + $0xe4] sm:$0xf]
    %v10277 = vld [vmem:[#allocation8 + $0xe8] sm:$0xf]
    %v10278 = vld [vmem:[#allocation8 + $0xec] sm:$0xf]
    %v10279 = vld [vmem:[#allocation8 + $0xf0] sm:$0xf]
    %v10280 = vld [vmem:[#allocation8 + $0xf4] sm:$0xf]
    %v10281 = vld [vmem:[#allocation8 + $0xf8] sm:$0xf]
    %v10282 = vld [vmem:[#allocation8 + $0xfc] sm:$0xf]
    %v10283 = vld [vmem:[#allocation8 + $0x100] sm:$0xf]
    %v10284 = vld [vmem:[#allocation8 + $0x104] sm:$0xf]
    %v10285 = vld [vmem:[#allocation8 + $0x108] sm:$0xf]
    %v10286 = vld [vmem:[#allocation8 + $0x10c] sm:$0xf]
    %v10287 = vld [vmem:[#allocation8 + $0x110] sm:$0xf]
    %v10288 = vld [vmem:[#allocation8 + $0x114] sm:$0xf]
    %v10289 = vld [vmem:[#allocation8 + $0x118] sm:$0xf]
    %v10290 = vld [vmem:[#allocation8 + $0x11c] sm:$0xf]
    %v10291 = vld [vmem:[#allocation8 + $0x120] sm:$0xf]
    %v10292 = vld [vmem:[#allocation8 + $0x124] sm:$0xf]
    %v10293 = vld [vmem:[#allocation8 + $0x128] sm:$0xf]
    %v10294 = vld [vmem:[#allocation8 + $0x12c] sm:$0xf]
    %v10295 = vld [vmem:[#allocation8 + $0x130] sm:$0xf]
    %v10296 = vld [vmem:[#allocation8 + $0x134] sm:$0xf]
    %v10297 = vld [vmem:[#allocation8 + $0x138] sm:$0xf]
    %v10298 = vld [vmem:[#allocation8 + $0x13c] sm:$0xf]
    %v10299 = vld [vmem:[#allocation8 + $0x140] sm:$0xf]
    %v10300 = vld [vmem:[#allocation8 + $0x144] sm:$0xf]
    %v10301 = vld [vmem:[#allocation8 + $0x148] sm:$0xf]
    %v10302 = vld [vmem:[#allocation8 + $0x14c] sm:$0xf]
    %v10303 = vld [vmem:[#allocation8 + $0x150] sm:$0xf]
    %v10304 = vld [vmem:[#allocation8 + $0x154] sm:$0xf]
    %v10305 = vld [vmem:[#allocation8 + $0x158] sm:$0xf]
    %v10306 = vld [vmem:[#allocation8 + $0x15c] sm:$0xf]
    %v10307 = vld [vmem:[#allocation8 + $0x160] sm:$0xf]
    %v10308 = vld [vmem:[#allocation8 + $0x164] sm:$0xf]
    %v10309 = vld [vmem:[#allocation8 + $0x168] sm:$0xf]
    %v10310 = vld [vmem:[%s8] sm:$0x1]
    %v10312 = vlaneseq
    %v10313 = vshrl.u32 %v10312, 7
    %v10314 = vsub.s32 0, %v10313
    %v10315 = vrot.slane %v10310, %v10314
    %v10371 = vunpack.c.l.b16 %v10165
    %v10372 = vunpack.c.h.b16 %v10165
    %v10373 = vunpack.c.l.b16 %v10166
    %v10374 = vunpack.c.h.b16 %v10166
    %v10375 = vunpack.c.l.b16 %v10167
    %v10376 = vunpack.c.h.b16 %v10167
    %v10377 = vunpack.c.l.b16 %v10168
    %v10378 = vunpack.c.h.b16 %v10168
    %v10379 = vunpack.c.l.b16 %v10169
    %v10380 = vunpack.c.h.b16 %v10169
    %v10381 = vunpack.c.l.b16 %v10170
    %v10382 = vunpack.c.h.b16 %v10170
    %v10383 = vunpack.c.l.b16 %v10171
    %v10384 = vunpack.c.h.b16 %v10171
    %v10385 = vunpack.c.l.b16 %v10172
    %v10386 = vunpack.c.h.b16 %v10172
    %v10387 = vunpack.c.l.b16 %v10173
    %v10388 = vunpack.c.h.b16 %v10173
    %v10389 = vunpack.c.l.b16 %v10174
    %v10390 = vunpack.c.h.b16 %v10174
    %v10391 = vunpack.c.l.b16 %v10175
    %v10392 = vunpack.c.h.b16 %v10175
    %v10393 = vunpack.c.l.b16 %v10176
    %v10394 = vunpack.c.h.b16 %v10176
    %v10395 = vunpack.c.l.b16 %v10177
    %v10396 = vunpack.c.h.b16 %v10177
    %v10397 = vunpack.c.l.b16 %v10178
    %v10398 = vunpack.c.h.b16 %v10178
    %v10399 = vunpack.c.l.b16 %v10179
    %v10400 = vunpack.c.h.b16 %v10179
    %v10401 = vunpack.c.l.b16 %v10180
    %v10402 = vunpack.c.h.b16 %v10180
    %v10403 = vunpack.c.l.b16 %v10181
    %v10404 = vunpack.c.h.b16 %v10181
    %v10405 = vunpack.c.l.b16 %v10182
    %v10406 = vunpack.c.h.b16 %v10182
    %v10407 = vunpack.c.l.b16 %v10183
    %v10408 = vunpack.c.h.b16 %v10183
    %v10409 = vunpack.c.l.b16 %v10184
    %v10410 = vunpack.c.h.b16 %v10184
    %v10411 = vunpack.c.l.b16 %v10185
    %v10412 = vunpack.c.h.b16 %v10185
    %v10413 = vunpack.c.l.b16 %v10186
    %v10414 = vunpack.c.h.b16 %v10186
    %v10415 = vunpack.c.l.b16 %v10187
    %v10416 = vunpack.c.h.b16 %v10187
    %v10417 = vunpack.c.l.b16 %v10188
    %v10418 = vunpack.c.h.b16 %v10188
    %v10419 = vunpack.c.l.b16 %v10189
    %v10420 = vunpack.c.h.b16 %v10189
    %v10421 = vunpack.c.l.b16 %v10190
    %v10422 = vunpack.c.h.b16 %v10190
    %v10423 = vunpack.c.l.b16 %v10191
    %v10424 = vunpack.c.h.b16 %v10191
    %v10425 = vunpack.c.l.b16 %v10192
    %v10426 = vunpack.c.h.b16 %v10192
    %v10427 = vunpack.c.l.b16 %v10193
    %v10428 = vunpack.c.h.b16 %v10193
    %v10429 = vunpack.c.l.b16 %v10194
    %v10430 = vunpack.c.h.b16 %v10194
    %v10431 = vunpack.c.l.b16 %v10195
    %v10432 = vunpack.c.h.b16 %v10195
    %v10433 = vunpack.c.l.b16 %v10196
    %v10434 = vunpack.c.h.b16 %v10196
    %v10435 = vunpack.c.l.b16 %v10197
    %v10436 = vunpack.c.h.b16 %v10197
    %v10437 = vunpack.c.l.b16 %v10198
    %v10438 = vunpack.c.h.b16 %v10198
    %v10439 = vunpack.c.l.b16 %v10199
    %v10440 = vunpack.c.h.b16 %v10199
    %v10441 = vunpack.c.l.b16 %v10200
    %v10442 = vunpack.c.h.b16 %v10200
    %v10443 = vunpack.c.l.b16 %v10201
    %v10444 = vunpack.c.h.b16 %v10201
    %v10445 = vunpack.c.l.b16 %v10202
    %v10446 = vunpack.c.h.b16 %v10202
    %v10447 = vunpack.c.l.b16 %v10203
    %v10448 = vunpack.c.h.b16 %v10203
    %v10449 = vunpack.c.l.b16 %v10204
    %v10450 = vunpack.c.h.b16 %v10204
    %v10451 = vunpack.c.l.b16 %v10205
    %v10452 = vunpack.c.h.b16 %v10205
    %v10453 = vunpack.c.l.b16 %v10206
    %v10454 = vunpack.c.h.b16 %v10206
    %v10455 = vunpack.c.l.b16 %v10207
    %v10456 = vunpack.c.h.b16 %v10207
    %v10457 = vunpack.c.l.b16 %v10208
    %v10458 = vunpack.c.h.b16 %v10208
    %v10459 = vunpack.c.l.b16 %v10209
    %v10460 = vunpack.c.h.b16 %v10209
    %v10461 = vunpack.c.l.b16 %v10210
    %v10462 = vunpack.c.h.b16 %v10210
    %v10463 = vunpack.c.l.b16 %v10211
    %v10464 = vunpack.c.h.b16 %v10211
    %v10465 = vunpack.c.l.b16 %v10212
    %v10466 = vunpack.c.h.b16 %v10212
    %v10467 = vunpack.c.l.b16 %v10213
    %v10468 = vunpack.c.h.b16 %v10213
    %v10469 = vunpack.c.l.b16 %v10214
    %v10470 = vunpack.c.h.b16 %v10214
    %v10471 = vunpack.c.l.b16 %v10215
    %v10472 = vunpack.c.h.b16 %v10215
    %v10473 = vunpack.c.l.b16 %v10216
    %v10474 = vunpack.c.h.b16 %v10216
    %v10475 = vunpack.c.l.b16 %v10217
    %v10476 = vunpack.c.h.b16 %v10217
    %v10477 = vunpack.c.l.b16 %v10218
    %v10478 = vunpack.c.h.b16 %v10218
    %v10479 = vpack.c.b16 %v10377, %v10371
    %v10480 = vpack.c.b16 %v10378, %v10372
    %v10481 = vpack.c.b16 %v10379, %v10373
    %v10482 = vpack.c.b16 %v10380, %v10374
    %v10483 = vpack.c.b16 %v10381, %v10375
    %v10484 = vpack.c.b16 %v10382, %v10376
    %v10485 = vpack.c.b16 %v10389, %v10383
    %v10486 = vpack.c.b16 %v10390, %v10384
    %v10487 = vpack.c.b16 %v10391, %v10385
    %v10488 = vpack.c.b16 %v10392, %v10386
    %v10489 = vpack.c.b16 %v10393, %v10387
    %v10490 = vpack.c.b16 %v10394, %v10388
    %v10491 = vpack.c.b16 %v10401, %v10395
    %v10492 = vpack.c.b16 %v10402, %v10396
    %v10493 = vpack.c.b16 %v10403, %v10397
    %v10494 = vpack.c.b16 %v10404, %v10398
    %v10495 = vpack.c.b16 %v10405, %v10399
    %v10496 = vpack.c.b16 %v10406, %v10400
    %v10497 = vpack.c.b16 %v10413, %v10407
    %v10498 = vpack.c.b16 %v10414, %v10408
    %v10499 = vpack.c.b16 %v10415, %v10409
    %v10500 = vpack.c.b16 %v10416, %v10410
    %v10501 = vpack.c.b16 %v10417, %v10411
    %v10502 = vpack.c.b16 %v10418, %v10412
    %v10503 = vpack.c.b16 %v10425, %v10419
    %v10504 = vpack.c.b16 %v10426, %v10420
    %v10505 = vpack.c.b16 %v10427, %v10421
    %v10506 = vpack.c.b16 %v10428, %v10422
    %v10507 = vpack.c.b16 %v10429, %v10423
    %v10508 = vpack.c.b16 %v10430, %v10424
    %v10509 = vpack.c.b16 %v10437, %v10431
    %v10510 = vpack.c.b16 %v10438, %v10432
    %v10511 = vpack.c.b16 %v10439, %v10433
    %v10512 = vpack.c.b16 %v10440, %v10434
    %v10513 = vpack.c.b16 %v10441, %v10435
    %v10514 = vpack.c.b16 %v10442, %v10436
    %v10515 = vpack.c.b16 %v10449, %v10443
    %v10516 = vpack.c.b16 %v10450, %v10444
    %v10517 = vpack.c.b16 %v10451, %v10445
    %v10518 = vpack.c.b16 %v10452, %v10446
    %v10519 = vpack.c.b16 %v10453, %v10447
    %v10520 = vpack.c.b16 %v10454, %v10448
    %v10521 = vpack.c.b16 %v10461, %v10455
    %v10522 = vpack.c.b16 %v10462, %v10456
    %v10523 = vpack.c.b16 %v10463, %v10457
    %v10524 = vpack.c.b16 %v10464, %v10458
    %v10525 = vpack.c.b16 %v10465, %v10459
    %v10526 = vpack.c.b16 %v10466, %v10460
    %v10527 = vpack.c.b16 %v10473, %v10467
    %v10528 = vpack.c.b16 %v10474, %v10468
    %v10529 = vpack.c.b16 %v10475, %v10469
    %v10530 = vpack.c.b16 %v10476, %v10470
    %v10531 = vpack.c.b16 %v10477, %v10471
    %v10532 = vpack.c.b16 %v10478, %v10472
    %v10669 = vunpack.c.l.b16 %v10219
    %v10670 = vunpack.c.l.b16 %v10220
    %v10671 = vunpack.c.l.b16 %v10221
    %v10672 = vunpack.c.l.b16 %v10222
    %v10673 = vunpack.c.l.b16 %v10223
    %v10674 = vunpack.c.l.b16 %v10224
    %v10675 = vunpack.c.l.b16 %v10225
    %v10676 = vunpack.c.l.b16 %v10226
    %v10677 = vunpack.c.l.b16 %v10227
    %v10678 = vunpack.c.l.b16 %v10228
    %v10679 = vunpack.c.l.b16 %v10229
    %v10680 = vunpack.c.l.b16 %v10230
    %v10681 = vunpack.c.l.b16 %v10231
    %v10682 = vunpack.c.l.b16 %v10232
    %v10683 = vunpack.c.l.b16 %v10233
    %v10684 = vunpack.c.l.b16 %v10234
    %v10685 = vunpack.c.l.b16 %v10235
    %v10686 = vunpack.c.l.b16 %v10236
    %v10687 = vunpack.c.l.b16 %v10237
    %v10688 = vunpack.c.l.b16 %v10238
    %v10689 = vunpack.c.l.b16 %v10239
    %v10690 = vunpack.c.l.b16 %v10240
    %v10691 = vunpack.c.l.b16 %v10241
    %v10692 = vunpack.c.l.b16 %v10242
    %v10693 = vunpack.c.l.b16 %v10243
    %v10694 = vunpack.c.l.b16 %v10244
    %v10695 = vunpack.c.l.b16 %v10245
    %v10696 = vunpack.c.l.b16 %v10246
    %v10697 = vunpack.c.l.b16 %v10247
    %v10698 = vunpack.c.l.b16 %v10248
    %v10699 = vunpack.c.l.b16 %v10249
    %v10700 = vunpack.c.l.b16 %v10250
    %v10701 = vunpack.c.l.b16 %v10251
    %v10702 = vunpack.c.l.b16 %v10252
    %v10703 = vunpack.c.l.b16 %v10253
    %v10704 = vunpack.c.l.b16 %v10254
    %v10705 = vunpack.c.l.b16 %v10255
    %v10706 = vunpack.c.l.b16 %v10256
    %v10707 = vunpack.c.l.b16 %v10257
    %v10708 = vunpack.c.l.b16 %v10258
    %v10709 = vunpack.c.l.b16 %v10259
    %v10710 = vunpack.c.l.b16 %v10260
    %v10711 = vunpack.c.l.b16 %v10261
    %v10712 = vunpack.c.l.b16 %v10262
    %v10713 = vunpack.c.l.b16 %v10263
    %v10714 = vunpack.c.l.b16 %v10264
    %v10715 = vunpack.c.l.b16 %v10265
    %v10716 = vunpack.c.l.b16 %v10266
    %v10717 = vunpack.c.l.b16 %v10267
    %v10718 = vunpack.c.l.b16 %v10268
    %v10719 = vunpack.c.l.b16 %v10269
    %v10720 = vunpack.c.l.b16 %v10270
    %v10721 = vunpack.c.l.b16 %v10271
    %v10722 = vunpack.c.l.b16 %v10272
    %v10723 = vunpack.c.l.b16 %v10273
    %v10724 = vunpack.c.l.b16 %v10274
    %v10725 = vunpack.c.l.b16 %v10275
    %v10726 = vunpack.c.l.b16 %v10276
    %v10727 = vunpack.c.l.b16 %v10277
    %v10728 = vunpack.c.l.b16 %v10278
    %v10729 = vunpack.c.l.b16 %v10279
    %v10730 = vunpack.c.l.b16 %v10280
    %v10731 = vunpack.c.l.b16 %v10281
    %v10732 = vunpack.c.l.b16 %v10282
    %v10733 = vunpack.c.l.b16 %v10283
    %v10734 = vunpack.c.l.b16 %v10284
    %v10735 = vunpack.c.l.b16 %v10285
    %v10736 = vunpack.c.l.b16 %v10286
    %v10737 = vunpack.c.l.b16 %v10287
    %v10738 = vunpack.c.l.b16 %v10288
    %v10739 = vunpack.c.l.b16 %v10289
    %v10740 = vunpack.c.l.b16 %v10290
    %v10741 = vunpack.c.l.b16 %v10291
    %v10742 = vunpack.c.l.b16 %v10292
    %v10743 = vunpack.c.l.b16 %v10293
    %v10744 = vunpack.c.l.b16 %v10294
    %v10745 = vunpack.c.l.b16 %v10295
    %v10746 = vunpack.c.l.b16 %v10296
    %v10747 = vunpack.c.l.b16 %v10297
    %v10748 = vunpack.c.l.b16 %v10298
    %v10749 = vunpack.c.l.b16 %v10299
    %v10750 = vunpack.c.l.b16 %v10300
    %v10751 = vunpack.c.l.b16 %v10301
    %v10752 = vunpack.c.l.b16 %v10302
    %v10753 = vunpack.c.l.b16 %v10303
    %v10754 = vunpack.c.l.b16 %v10304
    %v10755 = vunpack.c.l.b16 %v10305
    %v10756 = vunpack.c.l.b16 %v10306
    %v10757 = vunpack.c.l.b16 %v10307
    %v10758 = vunpack.c.l.b16 %v10308
    %v10759 = vunpack.c.l.b16 %v10309
    %v10760 = vpack.c.b16 %v10670, %v10669
    %v10761 = vpack.c.b16 %v10672, %v10671
    %v10762 = vpack.c.b16 %v10674, %v10673
    %v10763 = vpack.c.b16 %v10676, %v10675
    %v10764 = vpack.c.b16 %v10678, %v10677
    %v10765 = vpack.c.b16 %v10680, %v10679
    %v10766 = vpack.c.b16 %v10682, %v10681
    %v10767 = vpack.c.b16 %v10684, %v10683
    %v10768 = vpack.c.b16 %v10686, %v10685
    %v10769 = vpack.c.b16 %v10688, %v10687
    %v10770 = vpack.c.b16 %v10690, %v10689
    %v10771 = vpack.c.b16 %v10692, %v10691
    %v10772 = vpack.c.b16 %v10694, %v10693
    %v10773 = vpack.c.b16 %v10696, %v10695
    %v10774 = vpack.c.b16 %v10698, %v10697
    %v10775 = vpack.c.b16 %v10700, %v10699
    %v10776 = vpack.c.b16 %v10702, %v10701
    %v10777 = vpack.c.b16 %v10704, %v10703
    %v10778 = vpack.c.b16 %v10706, %v10705
    %v10779 = vpack.c.b16 %v10708, %v10707
    %v10780 = vpack.c.b16 %v10710, %v10709
    %v10781 = vpack.c.b16 %v10712, %v10711
    %v10782 = vpack.c.b16 %v10714, %v10713
    %v10783 = vpack.c.b16 %v10716, %v10715
    %v10784 = vpack.c.b16 %v10718, %v10717
    %v10785 = vpack.c.b16 %v10720, %v10719
    %v10786 = vpack.c.b16 %v10722, %v10721
    %v10787 = vpack.c.b16 %v10724, %v10723
    %v10788 = vpack.c.b16 %v10726, %v10725
    %v10789 = vpack.c.b16 %v10728, %v10727
    %v10790 = vpack.c.b16 %v10730, %v10729
    %v10791 = vpack.c.b16 %v10732, %v10731
    %v10792 = vpack.c.b16 %v10734, %v10733
    %v10793 = vpack.c.b16 %v10736, %v10735
    %v10794 = vpack.c.b16 %v10738, %v10737
    %v10795 = vpack.c.b16 %v10740, %v10739
    %v10796 = vpack.c.b16 %v10742, %v10741
    %v10797 = vpack.c.b16 %v10744, %v10743
    %v10798 = vpack.c.b16 %v10746, %v10745
    %v10799 = vpack.c.b16 %v10748, %v10747
    %v10800 = vpack.c.b16 %v10750, %v10749
    %v10801 = vpack.c.b16 %v10752, %v10751
    %v10802 = vpack.c.b16 %v10754, %v10753
    %v10803 = vpack.c.b16 %v10756, %v10755
    %v10804 = vpack.c.b16 %v10758, %v10757
    %v10805 = vpack.c.b16 %v10759, %v10759
    %vm10851 = vcmask 719872
    %v10853 = vsel %vm10851, %v10484, 0
    %v10856 = vsel %vm10851, %v10490, 0
    %v10859 = vsel %vm10851, %v10496, 0
    %v10862 = vsel %vm10851, %v10502, 0
    %v10865 = vsel %vm10851, %v10508, 0
    %v10868 = vsel %vm10851, %v10514, 0
    %v10871 = vsel %vm10851, %v10520, 0
    %v10874 = vsel %vm10851, %v10526, 0
    %v10877 = vsel %vm10851, %v10532, 0
    %v10880 = vsel %vm477, %v10805, 0
    %10882 = vmatprep.subr.bf16.mxu0 0
    %10883 = vmatpush1.bf16.msra.mxu0 %v10760
    %10884 = vmatprep.subr.bf16.mxu0 0
    %10885 = vmatpush1.bf16.msra.mxu0 %v10761
    %10886 = vmatprep.subr.bf16.mxu0 0
    %10887 = vmatpush1.bf16.msra.mxu0 %v10762
    %10888 = vmatprep.subr.bf16.mxu0 0
    %10889 = vmatpush1.bf16.msra.mxu0 %v10763
    %10890 = vmatprep.subr.bf16.mxu0 0
    %10891 = vmatpush1.bf16.msra.mxu0 %v10764
    %10892 = vmatprep.subr.bf16.mxu0 0
    %10893 = vmatpush1.bf16.msra.mxu0 %v10765
    %10894 = vmatprep.subr.bf16.mxu0 0
    %10895 = vmatpush1.bf16.msra.mxu0 %v10766
    %10896 = vmatprep.subr.bf16.mxu0 0
    %10897 = vmatpush1.bf16.msra.mxu0 %v10767
    %10898 = vmatprep.subr.bf16.mxu0 0
    %10899 = vmatpush1.bf16.msra.mxu0 %v10768
    %10900 = vmatprep.subr.bf16.mxu0 0
    %10901 = vmatpush1.bf16.msra.mxu0 %v10769
    %10902 = vmatprep.subr.bf16.mxu0 0
    %10903 = vmatpush1.bf16.msra.mxu0 %v10770
    %10904 = vmatprep.subr.bf16.mxu0 0
    %10905 = vmatpush1.bf16.msra.mxu0 %v10771
    %10906 = vmatprep.subr.bf16.mxu0 0
    %10907 = vmatpush1.bf16.msra.mxu0 %v10772
    %10908 = vmatprep.subr.bf16.mxu0 0
    %10909 = vmatpush1.bf16.msra.mxu0 %v10773
    %10910 = vmatprep.subr.bf16.mxu0 0
    %10911 = vmatpush1.bf16.msra.mxu0 %v10774
    %10912 = vmatprep.subr.bf16.mxu0 0
    %10913 = vmatpush1.bf16.msra.mxu0 %v10775
    %10914 = vmatprep.mubr.bf16.mxu0 %v10480
    %10915 = vmatmul.mubr.bf16.gmra.mrb[0].mxu0 %v10479
    %v10916 = vpop.f32.mrb[0].mxu0
    %v10917 = vadd.f32 %v10315, %v10916
    %v10918 = vpop.f32.mrb[0].mxu0
    %v10919 = vpop.f32.mrb[0].mxu0
    %v10920 = vadd.f32 %v10315, %v10919
    %v10921 = vpop.f32.mrb[0].mxu0
    %10922 = vmatprep.mubr.bf16.mxu0 %v10486
    %10923 = vmatmul.mubr.bf16.gmra.mrb[0].mxu0 %v10485
    %v10924 = vpop.f32.mrb[0].mxu0
    %v10925 = vadd.f32 %v10315, %v10924
    %v10926 = vpop.f32.mrb[0].mxu0
    %v10927 = vpop.f32.mrb[0].mxu0
    %v10928 = vadd.f32 %v10315, %v10927
    %v10929 = vpop.f32.mrb[0].mxu0
    %10930 = vmatprep.mubr.bf16.mxu0 %v10492
    %10931 = vmatmul.mubr.bf16.gmra.mrb[0].mxu0 %v10491
    %v10932 = vpop.f32.mrb[0].mxu0
    %v10933 = vadd.f32 %v10315, %v10932
    %v10934 = vpop.f32.mrb[0].mxu0
    %v10935 = vpop.f32.mrb[0].mxu0
    %v10936 = vadd.f32 %v10315, %v10935
    %v10937 = vpop.f32.mrb[0].mxu0
    %10938 = vmatprep.mubr.bf16.mxu0 %v10498
    %10939 = vmatmul.mubr.bf16.gmra.mrb[0].mxu0 %v10497
    %v10940 = vpop.f32.mrb[0].mxu0
    %v10941 = vadd.f32 %v10315, %v10940
    %v10942 = vpop.f32.mrb[0].mxu0
    %v10943 = vpop.f32.mrb[0].mxu0
    %v10944 = vadd.f32 %v10315, %v10943
    %v10945 = vpop.f32.mrb[0].mxu0
    %10946 = vmatprep.mubr.bf16.mxu0 %v10504
    %10947 = vmatmul.mubr.bf16.gmra.mrb[0].mxu0 %v10503
    %v10948 = vpop.f32.mrb[0].mxu0
    %v10949 = vadd.f32 %v10315, %v10948
    %v10950 = vpop.f32.mrb[0].mxu0
    %v10951 = vpop.f32.mrb[0].mxu0
    %v10952 = vadd.f32 %v10315, %v10951
    %v10953 = vpop.f32.mrb[0].mxu0
    %10954 = vmatprep.mubr.bf16.mxu0 %v10510
    %10955 = vmatmul.mubr.bf16.gmra.mrb[0].mxu0 %v10509
    %v10956 = vpop.f32.mrb[0].mxu0
    %v10957 = vadd.f32 %v10315, %v10956
    %v10958 = vpop.f32.mrb[0].mxu0
    %v10959 = vpop.f32.mrb[0].mxu0
    %v10960 = vadd.f32 %v10315, %v10959
    %v10961 = vpop.f32.mrb[0].mxu0
    %10962 = vmatprep.mubr.bf16.mxu0 %v10516
    %10963 = vmatmul.mubr.bf16.gmra.mrb[0].mxu0 %v10515
    %v10964 = vpop.f32.mrb[0].mxu0
    %v10965 = vadd.f32 %v10315, %v10964
    %v10966 = vpop.f32.mrb[0].mxu0
    %v10967 = vpop.f32.mrb[0].mxu0
    %v10968 = vadd.f32 %v10315, %v10967
    %v10969 = vpop.f32.mrb[0].mxu0
    %10970 = vmatprep.mubr.bf16.mxu0 %v10522
    %10971 = vmatmul.mubr.bf16.gmra.mrb[0].mxu0 %v10521
    %v10972 = vpop.f32.mrb[0].mxu0
    %v10973 = vadd.f32 %v10315, %v10972
    %v10974 = vpop.f32.mrb[0].mxu0
    %v10975 = vpop.f32.mrb[0].mxu0
    %v10976 = vadd.f32 %v10315, %v10975
    %v10977 = vpop.f32.mrb[0].mxu0
    %10978 = vmatprep.mubr.bf16.mxu0 %v10528
    %10979 = vmatmul.mubr.bf16.gmra.mrb[0].mxu0 %v10527
    %v10980 = vpop.f32.mrb[0].mxu0
    %v10981 = vadd.f32 %v10315, %v10980
    %v10982 = vpop.f32.mrb[0].mxu0
    %v10983 = vpop.f32.mrb[0].mxu0
    %v10984 = vadd.f32 %v10315, %v10983
    %v10985 = vpop.f32.mrb[0].mxu0
    %10986 = vdwg.mxu0
    %10987 = vmatprep.subr.bf16.mxu0 0
    %10988 = vmatpush1.bf16.msra.mxu0 %v10776
    %10989 = vmatprep.subr.bf16.mxu0 0
    %10990 = vmatpush1.bf16.msra.mxu0 %v10777
    %10991 = vmatprep.subr.bf16.mxu0 0
    %10992 = vmatpush1.bf16.msra.mxu0 %v10778
    %10993 = vmatprep.subr.bf16.mxu0 0
    %10994 = vmatpush1.bf16.msra.mxu0 %v10779
    %10995 = vmatprep.subr.bf16.mxu0 0
    %10996 = vmatpush1.bf16.msra.mxu0 %v10780
    %10997 = vmatprep.subr.bf16.mxu0 0
    %10998 = vmatpush1.bf16.msra.mxu0 %v10781
    %10999 = vmatprep.subr.bf16.mxu0 0
    %11000 = vmatpush1.bf16.msra.mxu0 %v10782
    %11001 = vmatprep.subr.bf16.mxu0 0
    %11002 = vmatpush1.bf16.msra.mxu0 %v10783
    %11003 = vmatprep.subr.bf16.mxu0 0
    %11004 = vmatpush1.bf16.msra.mxu0 %v10784
    %11005 = vmatprep.subr.bf16.mxu0 0
    %11006 = vmatpush1.bf16.msra.mxu0 %v10785
    %11007 = vmatprep.subr.bf16.mxu0 0
    %11008 = vmatpush1.bf16.msra.mxu0 %v10786
    %11009 = vmatprep.subr.bf16.mxu0 0
    %11010 = vmatpush1.bf16.msra.mxu0 %v10787
    %11011 = vmatprep.subr.bf16.mxu0 0
    %11012 = vmatpush1.bf16.msra.mxu0 %v10788
    %11013 = vmatprep.subr.bf16.mxu0 0
    %11014 = vmatpush1.bf16.msra.mxu0 %v10789
    %11015 = vmatprep.subr.bf16.mxu0 0
    %11016 = vmatpush1.bf16.msra.mxu0 %v10790
    %11017 = vmatprep.subr.bf16.mxu0 0
    %11018 = vmatpush1.bf16.msra.mxu0 %v10791
    %11019 = vmatprep.mubr.bf16.mxu0 %v10482
    %11020 = vmatmul.mubr.bf16.gmra.mrb[0].mxu0 %v10481
    %v11021 = vpop.f32.mrb[0].mxu0
    %v11022 = vadd.f32 %v10917, %v11021
    %v11023 = vpop.f32.mrb[0].mxu0
    %v11024 = vpop.f32.mrb[0].mxu0
    %v11025 = vadd.f32 %v10920, %v11024
    %v11026 = vpop.f32.mrb[0].mxu0
    %11027 = vmatprep.mubr.bf16.mxu0 %v10488
    %11028 = vmatmul.mubr.bf16.gmra.mrb[0].mxu0 %v10487
    %v11029 = vpop.f32.mrb[0].mxu0
    %v11030 = vadd.f32 %v10925, %v11029
    %v11031 = vpop.f32.mrb[0].mxu0
    %v11032 = vpop.f32.mrb[0].mxu0
    %v11033 = vadd.f32 %v10928, %v11032
    %v11034 = vpop.f32.mrb[0].mxu0
    %11035 = vmatprep.mubr.bf16.mxu0 %v10494
    %11036 = vmatmul.mubr.bf16.gmra.mrb[0].mxu0 %v10493
    %v11037 = vpop.f32.mrb[0].mxu0
    %v11038 = vadd.f32 %v10933, %v11037
    %v11039 = vpop.f32.mrb[0].mxu0
    %v11040 = vpop.f32.mrb[0].mxu0
    %v11041 = vadd.f32 %v10936, %v11040
    %v11042 = vpop.f32.mrb[0].mxu0
    %11043 = vmatprep.mubr.bf16.mxu0 %v10500
    %11044 = vmatmul.mubr.bf16.gmra.mrb[0].mxu0 %v10499
    %v11045 = vpop.f32.mrb[0].mxu0
    %v11046 = vadd.f32 %v10941, %v11045
    %v11047 = vpop.f32.mrb[0].mxu0
    %v11048 = vpop.f32.mrb[0].mxu0
    %v11049 = vadd.f32 %v10944, %v11048
    %v11050 = vpop.f32.mrb[0].mxu0
    %11051 = vmatprep.mubr.bf16.mxu0 %v10506
    %11052 = vmatmul.mubr.bf16.gmra.mrb[0].mxu0 %v10505
    %v11053 = vpop.f32.mrb[0].mxu0
    %v11054 = vadd.f32 %v10949, %v11053
    %v11055 = vpop.f32.mrb[0].mxu0
    %v11056 = vpop.f32.mrb[0].mxu0
    %v11057 = vadd.f32 %v10952, %v11056
    %v11058 = vpop.f32.mrb[0].mxu0
    %11059 = vmatprep.mubr.bf16.mxu0 %v10512
    %11060 = vmatmul.mubr.bf16.gmra.mrb[0].mxu0 %v10511
    %v11061 = vpop.f32.mrb[0].mxu0
    %v11062 = vadd.f32 %v10957, %v11061
    %v11063 = vpop.f32.mrb[0].mxu0
    %v11064 = vpop.f32.mrb[0].mxu0
    %v11065 = vadd.f32 %v10960, %v11064
    %v11066 = vpop.f32.mrb[0].mxu0
    %11067 = vmatprep.mubr.bf16.mxu0 %v10518
    %11068 = vmatmul.mubr.bf16.gmra.mrb[0].mxu0 %v10517
    %v11069 = vpop.f32.mrb[0].mxu0
    %v11070 = vadd.f32 %v10965, %v11069
    %v11071 = vpop.f32.mrb[0].mxu0
    %v11072 = vpop.f32.mrb[0].mxu0
    %v11073 = vadd.f32 %v10968, %v11072
    %v11074 = vpop.f32.mrb[0].mxu0
    %11075 = vmatprep.mubr.bf16.mxu0 %v10524
    %11076 = vmatmul.mubr.bf16.gmra.mrb[0].mxu0 %v10523
    %v11077 = vpop.f32.mrb[0].mxu0
    %v11078 = vadd.f32 %v10973, %v11077
    %v11079 = vpop.f32.mrb[0].mxu0
    %v11080 = vpop.f32.mrb[0].mxu0
    %v11081 = vadd.f32 %v10976, %v11080
    %v11082 = vpop.f32.mrb[0].mxu0
    %11083 = vmatprep.mubr.bf16.mxu0 %v10530
    %11084 = vmatmul.mubr.bf16.gmra.mrb[0].mxu0 %v10529
    %v11085 = vpop.f32.mrb[0].mxu0
    %v11086 = vadd.f32 %v10981, %v11085
    %v11087 = vpop.f32.mrb[0].mxu0
    %v11088 = vpop.f32.mrb[0].mxu0
    %v11089 = vadd.f32 %v10984, %v11088
    %v11090 = vpop.f32.mrb[0].mxu0
    %11091 = vdwg.mxu0
    %11092 = vmatprep.subr.bf16.mxu0 0
    %11093 = vmatpush1.bf16.msra.mxu0 %v10792
    %11094 = vmatprep.subr.bf16.mxu0 0
    %11095 = vmatpush1.bf16.msra.mxu0 %v10793
    %11096 = vmatprep.subr.bf16.mxu0 0
    %11097 = vmatpush1.bf16.msra.mxu0 %v10794
    %11098 = vmatprep.subr.bf16.mxu0 0
    %11099 = vmatpush1.bf16.msra.mxu0 %v10795
    %11100 = vmatprep.subr.bf16.mxu0 0
    %11101 = vmatpush1.bf16.msra.mxu0 %v10796
    %11102 = vmatprep.subr.bf16.mxu0 0
    %11103 = vmatpush1.bf16.msra.mxu0 %v10797
    %11104 = vmatprep.subr.bf16.mxu0 0
    %11105 = vmatpush1.bf16.msra.mxu0 %v10798
    %11106 = vmatprep.subr.bf16.mxu0 0
    %11107 = vmatpush1.bf16.msra.mxu0 %v10799
    %11108 = vmatprep.subr.bf16.mxu0 0
    %11109 = vmatpush1.bf16.msra.mxu0 %v10800
    %11110 = vmatprep.subr.bf16.mxu0 0
    %11111 = vmatpush1.bf16.msra.mxu0 %v10801
    %11112 = vmatprep.subr.bf16.mxu0 0
    %11113 = vmatpush1.bf16.msra.mxu0 %v10802
    %11114 = vmatprep.subr.bf16.mxu0 0
    %11115 = vmatpush1.bf16.msra.mxu0 %v10803
    %11116 = vmatprep.subr.bf16.mxu0 0
    %11117 = vmatpush1.bf16.msra.mxu0 %v10804
    %11118 = vmatprep.subr.bf16.mxu0 0
    %11119 = vmatpush1.bf16.msra.mxu0 %v10880
    %11120 = vmatprep.subr.bf16.mxu0 0
    %11121 = vmatpush1.bf16.msra.mxu0 0
    %11122 = vmatprep.subr.bf16.mxu0 0
    %11123 = vmatpush1.bf16.msra.mxu0 0
    %11124 = vmatprep.mubr.bf16.mxu0 %v10853
    %11125 = vmatmul.mubr.bf16.gmra.mrb[0].mxu0 %v10483
    %v11126 = vpop.f32.mrb[0].mxu0
    %v11127 = vadd.f32 %v11022, %v11126
    %v11128 = vpop.f32.mrb[0].mxu0
    %v11129 = vpop.f32.mrb[0].mxu0
    %v11130 = vadd.f32 %v11025, %v11129
    %v11131 = vpop.f32.mrb[0].mxu0
    %11132 = vmatprep.mubr.bf16.mxu0 %v10856
    %11133 = vmatmul.mubr.bf16.gmra.mrb[0].mxu0 %v10489
    %v11134 = vpop.f32.mrb[0].mxu0
    %v11135 = vadd.f32 %v11030, %v11134
    %v11136 = vpop.f32.mrb[0].mxu0
    %v11137 = vpop.f32.mrb[0].mxu0
    %v11138 = vadd.f32 %v11033, %v11137
    %v11139 = vpop.f32.mrb[0].mxu0
    %11140 = vmatprep.mubr.bf16.mxu0 %v10859
    %11141 = vmatmul.mubr.bf16.gmra.mrb[0].mxu0 %v10495
    %v11142 = vpop.f32.mrb[0].mxu0
    %v11143 = vadd.f32 %v11038, %v11142
    %v11144 = vpop.f32.mrb[0].mxu0
    %v11145 = vpop.f32.mrb[0].mxu0
    %v11146 = vadd.f32 %v11041, %v11145
    %v11147 = vpop.f32.mrb[0].mxu0
    %11148 = vmatprep.mubr.bf16.mxu0 %v10862
    %11149 = vmatmul.mubr.bf16.gmra.mrb[0].mxu0 %v10501
    %v11150 = vpop.f32.mrb[0].mxu0
    %v11151 = vadd.f32 %v11046, %v11150
    %v11152 = vpop.f32.mrb[0].mxu0
    %v11153 = vpop.f32.mrb[0].mxu0
    %v11154 = vadd.f32 %v11049, %v11153
    %v11155 = vpop.f32.mrb[0].mxu0
    %11156 = vmatprep.mubr.bf16.mxu0 %v10865
    %11157 = vmatmul.mubr.bf16.gmra.mrb[0].mxu0 %v10507
    %v11158 = vpop.f32.mrb[0].mxu0
    %v11159 = vadd.f32 %v11054, %v11158
    %v11160 = vpop.f32.mrb[0].mxu0
    %v11161 = vpop.f32.mrb[0].mxu0
    %v11162 = vadd.f32 %v11057, %v11161
    %v11163 = vpop.f32.mrb[0].mxu0
    %11164 = vmatprep.mubr.bf16.mxu0 %v10868
    %11165 = vmatmul.mubr.bf16.gmra.mrb[0].mxu0 %v10513
    %v11166 = vpop.f32.mrb[0].mxu0
    %v11167 = vadd.f32 %v11062, %v11166
    %v11168 = vpop.f32.mrb[0].mxu0
    %v11169 = vpop.f32.mrb[0].mxu0
    %v11170 = vadd.f32 %v11065, %v11169
    %v11171 = vpop.f32.mrb[0].mxu0
    %11172 = vmatprep.mubr.bf16.mxu0 %v10871
    %11173 = vmatmul.mubr.bf16.gmra.mrb[0].mxu0 %v10519
    %v11174 = vpop.f32.mrb[0].mxu0
    %v11175 = vadd.f32 %v11070, %v11174
    %v11176 = vpop.f32.mrb[0].mxu0
    %v11177 = vpop.f32.mrb[0].mxu0
    %v11178 = vadd.f32 %v11073, %v11177
    %v11179 = vpop.f32.mrb[0].mxu0
    %11180 = vmatprep.mubr.bf16.mxu0 %v10874
    %11181 = vmatmul.mubr.bf16.gmra.mrb[0].mxu0 %v10525
    %v11182 = vpop.f32.mrb[0].mxu0
    %v11183 = vadd.f32 %v11078, %v11182
    %v11184 = vpop.f32.mrb[0].mxu0
    %v11185 = vpop.f32.mrb[0].mxu0
    %v11186 = vadd.f32 %v11081, %v11185
    %v11187 = vpop.f32.mrb[0].mxu0
    %11188 = vmatprep.mubr.bf16.mxu0 %v10877
    %11189 = vmatmul.mubr.bf16.gmra.mrb[0].mxu0 %v10531
    %v11190 = vpop.f32.mrb[0].mxu0
    %v11191 = vadd.f32 %v11086, %v11190
    %v11192 = vpop.f32.mrb[0].mxu0
    %v11193 = vpop.f32.mrb[0].mxu0
    %v11194 = vadd.f32 %v11089, %v11193
    %v11195 = vpop.f32.mrb[0].mxu0
    %11196 = vdwg.mxu0
    %11197 = vxpose.xlu0.b32.start [1/16] %v11127, 128
    %11198 = vxpose.xlu0.b32.cont [2/16] %v11130, 128
    %11199 = vxpose.xlu0.b32.cont [3/16] %v11135, 128
    %11200 = vxpose.xlu0.b32.cont [4/16] %v11138, 128
    %11201 = vxpose.xlu0.b32.cont [5/16] %v11143, 128
    %11202 = vxpose.xlu0.b32.cont [6/16] %v11146, 128
    %11203 = vxpose.xlu0.b32.cont [7/16] %v11151, 128
    %11204 = vxpose.xlu0.b32.cont [8/16] %v11154, 128
    %11205 = vxpose.xlu0.b32.cont [9/16] %v11159, 128
    %11206 = vxpose.xlu0.b32.cont [10/16] %v11162, 128
    %11207 = vxpose.xlu0.b32.cont [11/16] %v11167, 128
    %11208 = vxpose.xlu0.b32.cont [12/16] %v11170, 128
    %11209 = vxpose.xlu0.b32.cont [13/16] %v11175, 128
    %11210 = vxpose.xlu0.b32.cont [14/16] %v11178, 128
    %11211 = vxpose.xlu0.b32.cont [15/16] %v11183, 128
    %11212 = vxpose.xlu0.b32.end [16/16] %v11186, 128
    %v11213 = vpop.trf.xlu0
    %v11214 = vpop.trf.xlu0
    %v11215 = vpop.trf.xlu0
    %v11216 = vpop.trf.xlu0
    %v11217 = vpop.trf.xlu0
    %v11218 = vpop.trf.xlu0
    %v11219 = vpop.trf.xlu0
    %v11220 = vpop.trf.xlu0
    %v11221 = vpop.trf.xlu0
    %v11222 = vpop.trf.xlu0
    %v11223 = vpop.trf.xlu0
    %v11224 = vpop.trf.xlu0
    %v11225 = vpop.trf.xlu0
    %v11226 = vpop.trf.xlu0
    %v11227 = vpop.trf.xlu0
    %v11228 = vpop.trf.xlu0
    %11229 = vxpose.xlu0.b32.start [1/16] %v11191, 128
    %11230 = vxpose.xlu0.b32.cont [2/16] %v11194, 128
    %11231 = vxpose.xlu0.b32.cont [3/16] 0.0, 128
    %11232 = vxpose.xlu0.b32.cont [4/16] 0.0, 128
    %11233 = vxpose.xlu0.b32.cont [5/16] 0.0, 128
    %11234 = vxpose.xlu0.b32.cont [6/16] 0.0, 128
    %11235 = vxpose.xlu0.b32.cont [7/16] 0.0, 128
    %11236 = vxpose.xlu0.b32.cont [8/16] 0.0, 128
    %11237 = vxpose.xlu0.b32.cont [9/16] 0.0, 128
    %11238 = vxpose.xlu0.b32.cont [10/16] 0.0, 128
    %11239 = vxpose.xlu0.b32.cont [11/16] 0.0, 128
    %11240 = vxpose.xlu0.b32.cont [12/16] 0.0, 128
    %11241 = vxpose.xlu0.b32.cont [13/16] 0.0, 128
    %11242 = vxpose.xlu0.b32.cont [14/16] 0.0, 128
    %11243 = vxpose.xlu0.b32.cont [15/16] 0.0, 128
    %11244 = vxpose.xlu0.b32.end [16/16] 0.0, 128
    %v11245 = vpop.trf.xlu0
    %v11246 = vpop.trf.xlu0
    %v11247 = vpop.trf.xlu0
    %v11248 = vpop.trf.xlu0
    %v11249 = vpop.trf.xlu0
    %v11250 = vpop.trf.xlu0
    %v11251 = vpop.trf.xlu0
    %v11252 = vpop.trf.xlu0
    %v11253 = vpop.trf.xlu0
    %v11254 = vpop.trf.xlu0
    %v11255 = vpop.trf.xlu0
    %v11256 = vpop.trf.xlu0
    %v11257 = vpop.trf.xlu0
    %v11258 = vpop.trf.xlu0
    %v11259 = vpop.trf.xlu0
    %v11260 = vpop.trf.xlu0
    %11263 = vrot.lane.b32.xlu0 %v11214, 16
    %v11264 = vpop.permute.xlu0 %11263
    %11265 = vrot.lane.b32.xlu0 %v11246, 16
    %v11266 = vpop.permute.xlu0 %11265
    %vm11267 = vcmask 130048
    %v11268 = vsel %vm11267, %v11264, %v11266
    %11273 = vrot.lane.b32.xlu0 %v11215, 32
    %v11274 = vpop.permute.xlu0 %11273
    %11275 = vrot.lane.b32.xlu0 %v11247, 32
    %v11276 = vpop.permute.xlu0 %11275
    %v11277 = vsel %vm5688, %v11274, %v11276
    %11282 = vrot.lane.b32.xlu0 %v11216, 48
    %v11283 = vpop.permute.xlu0 %11282
    %11284 = vrot.lane.b32.xlu0 %v11248, 48
    %v11285 = vpop.permute.xlu0 %11284
    %vm11286 = vcmask 392192
    %v11287 = vsel %vm11286, %v11283, %v11285
    %11292 = vrot.lane.b32.xlu0 %v11217, 64
    %v11293 = vpop.permute.xlu0 %11292
    %11294 = vrot.lane.b32.xlu0 %v11249, 64
    %v11295 = vpop.permute.xlu0 %11294
    %v11296 = vsel %vm8256, %v11293, %v11295
    %11301 = vrot.lane.b32.xlu0 %v11218, 80
    %v11302 = vpop.permute.xlu0 %11301
    %11303 = vrot.lane.b32.xlu0 %v11250, 80
    %v11304 = vpop.permute.xlu0 %11303
    %vm11305 = vcmask 654336
    %v11306 = vsel %vm11305, %v11302, %v11304
    %11311 = vrot.lane.b32.xlu0 %v11219, 96
    %v11312 = vpop.permute.xlu0 %11311
    %11313 = vrot.lane.b32.xlu0 %v11251, 96
    %v11314 = vpop.permute.xlu0 %11313
    %v11315 = vsel %vm3370, %v11312, %v11314
    %11320 = vrot.lane.b32.xlu0 %v11220, 112
    %v11321 = vpop.permute.xlu0 %11320
    %11322 = vrot.lane.b32.xlu0 %v11252, 112
    %v11323 = vpop.permute.xlu0 %11322
    %vm11324 = vcmask 916480
    %v11325 = vsel %vm11324, %v11321, %v11323
    %v11328 = vsel %vm11267, %v11245, %v11264
    %v11329 = vsel %vm5688, %v11268, %v11274
    %v11330 = vsel %vm11286, %v11277, %v11283
    %v11331 = vsel %vm8256, %v11287, %v11293
    %v11332 = vsel %vm11305, %v11296, %v11302
    %v11333 = vsel %vm3370, %v11306, %v11312
    %v11334 = vsel %vm11324, %v11315, %v11321
    %v11335 = vpack.c.bf16 %v11213, %v11213
    %v11336 = vpack.c.bf16 %v11328, %v11328
    %v11337 = vpack.c.bf16 %v11329, %v11329
    %v11338 = vpack.c.bf16 %v11330, %v11330
    %v11339 = vpack.c.bf16 %v11331, %v11331
    %v11340 = vpack.c.bf16 %v11332, %v11332
    %v11341 = vpack.c.bf16 %v11333, %v11333
    %v11342 = vpack.c.bf16 %v11334, %v11334
    %v11343 = vpack.c.bf16 %v11325, %v11325
    %s11344 = smul.u32 4, 144
    %s11345 = smul.u32 %s11344, 8
    %s11346 = sshll.u32 %s11345, 4
    %11347 = dma.done [#allocation10], %s11346
    %v11348 = vld [vmem:[#allocation9] sm:$0xff]
    %v11349 = vld [vmem:[#allocation9 + $0x8] sm:$0xff]
    %v11350 = vld [vmem:[#allocation9 + $0x10] sm:$0xff]
    %v11351 = vld [vmem:[#allocation9 + $0x18] sm:$0xff]
    %v11352 = vld [vmem:[#allocation9 + $0x20] sm:$0xff]
    %v11353 = vld [vmem:[#allocation9 + $0x28] sm:$0xff]
    %v11354 = vld [vmem:[#allocation9 + $0x30] sm:$0xff]
    %v11355 = vld [vmem:[#allocation9 + $0x38] sm:$0xff]
    %v11356 = vld [vmem:[#allocation9 + $0x40] sm:$0xff]
    %v11357 = vld [vmem:[#allocation9 + $0x48] sm:$0xff]
    %v11358 = vld [vmem:[#allocation9 + $0x50] sm:$0xff]
    %v11359 = vld [vmem:[#allocation9 + $0x58] sm:$0xff]
    %v11360 = vld [vmem:[#allocation9 + $0x60] sm:$0xff]
    %v11361 = vld [vmem:[#allocation9 + $0x68] sm:$0xff]
    %v11362 = vld [vmem:[#allocation9 + $0x70] sm:$0xff]
    %v11363 = vld [vmem:[#allocation9 + $0x78] sm:$0xff]
    %v11364 = vld [vmem:[#allocation9 + $0x80] sm:$0xff]
    %v11365 = vld [vmem:[#allocation9 + $0x88] sm:$0xff]
    %v11366 = vld [vmem:[#allocation9 + $0x90] sm:$0xff]
    %v11367 = vld [vmem:[#allocation9 + $0x98] sm:$0xff]
    %v11368 = vld [vmem:[#allocation9 + $0xa0] sm:$0xff]
    %v11369 = vld [vmem:[#allocation9 + $0xa8] sm:$0xff]
    %v11370 = vld [vmem:[#allocation9 + $0xb0] sm:$0xff]
    %v11371 = vld [vmem:[#allocation9 + $0xb8] sm:$0xff]
    %v11372 = vld [vmem:[#allocation9 + $0xc0] sm:$0xff]
    %v11373 = vld [vmem:[#allocation9 + $0xc8] sm:$0xff]
    %v11374 = vld [vmem:[#allocation9 + $0xd0] sm:$0xff]
    %v11375 = vld [vmem:[#allocation9 + $0xd8] sm:$0xff]
    %v11376 = vld [vmem:[#allocation9 + $0xe0] sm:$0xff]
    %v11377 = vld [vmem:[#allocation9 + $0xe8] sm:$0xff]
    %v11378 = vld [vmem:[#allocation9 + $0xf0] sm:$0xff]
    %v11379 = vld [vmem:[#allocation9 + $0xf8] sm:$0xff]
    %v11380 = vld [vmem:[#allocation9 + $0x100] sm:$0xff]
    %v11381 = vld [vmem:[#allocation9 + $0x108] sm:$0xff]
    %v11382 = vld [vmem:[#allocation9 + $0x110] sm:$0xff]
    %v11383 = vld [vmem:[#allocation9 + $0x118] sm:$0xff]
    %v11384 = vld [vmem:[#allocation9 + $0x120] sm:$0xff]
    %v11385 = vld [vmem:[#allocation9 + $0x128] sm:$0xff]
    %v11386 = vld [vmem:[#allocation9 + $0x130] sm:$0xff]
    %v11387 = vld [vmem:[#allocation9 + $0x138] sm:$0xff]
    %v11388 = vld [vmem:[#allocation9 + $0x140] sm:$0xff]
    %v11389 = vld [vmem:[#allocation9 + $0x148] sm:$0xff]
    %v11390 = vld [vmem:[#allocation9 + $0x150] sm:$0xff]
    %v11391 = vld [vmem:[#allocation9 + $0x158] sm:$0xff]
    %v11392 = vld [vmem:[#allocation9 + $0x160] sm:$0xff]
    %v11393 = vld [vmem:[#allocation9 + $0x168] sm:$0xff]
    %v11394 = vld [vmem:[#allocation9 + $0x170] sm:$0xff]
    %v11395 = vld [vmem:[#allocation9 + $0x178] sm:$0xff]
    %v11396 = vld [vmem:[#allocation9 + $0x180] sm:$0xff]
    %v11397 = vld [vmem:[#allocation9 + $0x188] sm:$0xff]
    %v11398 = vld [vmem:[#allocation9 + $0x190] sm:$0xff]
    %v11399 = vld [vmem:[#allocation9 + $0x198] sm:$0xff]
    %v11400 = vld [vmem:[#allocation9 + $0x1a0] sm:$0xff]
    %v11401 = vld [vmem:[#allocation9 + $0x1a8] sm:$0xff]
    %v11402 = vld [vmem:[#allocation9 + $0x1b0] sm:$0xff]
    %v11403 = vld [vmem:[#allocation9 + $0x1b8] sm:$0xff]
    %v11404 = vld [vmem:[#allocation9 + $0x1c0] sm:$0xff]
    %v11405 = vld [vmem:[#allocation9 + $0x1c8] sm:$0xff]
    %v11406 = vld [vmem:[#allocation9 + $0x1d0] sm:$0xff]
    %v11407 = vld [vmem:[#allocation9 + $0x1d8] sm:$0xff]
    %v11408 = vld [vmem:[#allocation9 + $0x1e0] sm:$0xff]
    %v11409 = vld [vmem:[#allocation9 + $0x1e8] sm:$0xff]
    %v11410 = vld [vmem:[#allocation9 + $0x1f0] sm:$0xff]
    %v11411 = vld [vmem:[#allocation9 + $0x1f8] sm:$0xff]
    %v11412 = vld [vmem:[#allocation9 + $0x200] sm:$0xff]
    %v11413 = vld [vmem:[#allocation9 + $0x208] sm:$0xff]
    %v11414 = vld [vmem:[#allocation9 + $0x210] sm:$0xff]
    %v11415 = vld [vmem:[#allocation9 + $0x218] sm:$0xff]
    %v11416 = vld [vmem:[#allocation9 + $0x220] sm:$0xff]
    %v11417 = vld [vmem:[#allocation9 + $0x228] sm:$0xff]
    %v11418 = vld [vmem:[#allocation9 + $0x230] sm:$0xff]
    %v11419 = vld [vmem:[#allocation9 + $0x238] sm:$0xff]
    %v11420 = vld [vmem:[#allocation9 + $0x240] sm:$0xff]
    %v11421 = vld [vmem:[#allocation9 + $0x248] sm:$0xff]
    %v11422 = vld [vmem:[#allocation9 + $0x250] sm:$0xff]
    %v11423 = vld [vmem:[#allocation9 + $0x258] sm:$0xff]
    %v11424 = vld [vmem:[#allocation9 + $0x260] sm:$0xff]
    %v11425 = vld [vmem:[#allocation9 + $0x268] sm:$0xff]
    %v11426 = vld [vmem:[#allocation9 + $0x270] sm:$0xff]
    %v11427 = vld [vmem:[#allocation9 + $0x278] sm:$0xff]
    %v11428 = vld [vmem:[#allocation9 + $0x280] sm:$0xff]
    %v11429 = vld [vmem:[#allocation9 + $0x288] sm:$0xff]
    %v11430 = vld [vmem:[#allocation9 + $0x290] sm:$0xff]
    %v11431 = vld [vmem:[#allocation9 + $0x298] sm:$0xff]
    %v11432 = vld [vmem:[#allocation9 + $0x2a0] sm:$0xff]
    %v11433 = vld [vmem:[#allocation9 + $0x2a8] sm:$0xff]
    %v11434 = vld [vmem:[#allocation9 + $0x2b0] sm:$0xff]
    %v11435 = vld [vmem:[#allocation9 + $0x2b8] sm:$0xff]
    %v11436 = vld [vmem:[#allocation9 + $0x2c0] sm:$0xff]
    %v11437 = vld [vmem:[#allocation9 + $0x2c8] sm:$0xff]
    %v11438 = vld [vmem:[#allocation9 + $0x2d0] sm:$0xff]
    %v11439 = vld [vmem:[#allocation9 + $0x2d8] sm:$0xff]
    %v11440 = vld [vmem:[#allocation9 + $0x2e0] sm:$0xff]
    %v11441 = vld [vmem:[#allocation9 + $0x2e8] sm:$0xff]
    %v11442 = vld [vmem:[#allocation9 + $0x2f0] sm:$0xff]
    %v11443 = vld [vmem:[#allocation9 + $0x2f8] sm:$0xff]
    %v11444 = vld [vmem:[#allocation9 + $0x300] sm:$0xff]
    %v11445 = vld [vmem:[#allocation9 + $0x308] sm:$0xff]
    %v11446 = vld [vmem:[#allocation9 + $0x310] sm:$0xff]
    %v11447 = vld [vmem:[#allocation9 + $0x318] sm:$0xff]
    %v11448 = vld [vmem:[#allocation9 + $0x320] sm:$0xff]
    %v11449 = vld [vmem:[#allocation9 + $0x328] sm:$0xff]
    %v11450 = vld [vmem:[#allocation9 + $0x330] sm:$0xff]
    %v11451 = vld [vmem:[#allocation9 + $0x338] sm:$0xff]
    %v11452 = vld [vmem:[#allocation9 + $0x340] sm:$0xff]
    %v11453 = vld [vmem:[#allocation9 + $0x348] sm:$0xff]
    %v11454 = vld [vmem:[#allocation9 + $0x350] sm:$0xff]
    %v11455 = vld [vmem:[#allocation9 + $0x358] sm:$0xff]
    %v11456 = vld [vmem:[#allocation9 + $0x360] sm:$0xff]
    %v11457 = vld [vmem:[#allocation9 + $0x368] sm:$0xff]
    %v11458 = vld [vmem:[#allocation9 + $0x370] sm:$0xff]
    %v11459 = vld [vmem:[#allocation9 + $0x378] sm:$0xff]
    %v11460 = vld [vmem:[#allocation9 + $0x380] sm:$0xff]
    %v11461 = vld [vmem:[#allocation9 + $0x388] sm:$0xff]
    %v11462 = vld [vmem:[#allocation9 + $0x390] sm:$0xff]
    %v11463 = vld [vmem:[#allocation9 + $0x398] sm:$0xff]
    %v11464 = vld [vmem:[#allocation9 + $0x3a0] sm:$0xff]
    %v11465 = vld [vmem:[#allocation9 + $0x3a8] sm:$0xff]
    %v11466 = vld [vmem:[#allocation9 + $0x3b0] sm:$0xff]
    %v11467 = vld [vmem:[#allocation9 + $0x3b8] sm:$0xff]
    %v11468 = vld [vmem:[#allocation9 + $0x3c0] sm:$0xff]
    %v11469 = vld [vmem:[#allocation9 + $0x3c8] sm:$0xff]
    %v11470 = vld [vmem:[#allocation9 + $0x3d0] sm:$0xff]
    %v11471 = vld [vmem:[#allocation9 + $0x3d8] sm:$0xff]
    %v11472 = vld [vmem:[#allocation9 + $0x3e0] sm:$0xff]
    %v11473 = vld [vmem:[#allocation9 + $0x3e8] sm:$0xff]
    %v11474 = vld [vmem:[#allocation9 + $0x3f0] sm:$0xff]
    %v11475 = vld [vmem:[#allocation9 + $0x3f8] sm:$0xff]
    %v11476 = vld [vmem:[#allocation9 + $0x400] sm:$0xff]
    %v11477 = vld [vmem:[#allocation9 + $0x408] sm:$0xff]
    %v11478 = vld [vmem:[#allocation9 + $0x410] sm:$0xff]
    %v11479 = vld [vmem:[#allocation9 + $0x418] sm:$0xff]
    %v11480 = vld [vmem:[#allocation9 + $0x420] sm:$0xff]
    %v11481 = vld [vmem:[#allocation9 + $0x428] sm:$0xff]
    %v11482 = vld [vmem:[#allocation9 + $0x430] sm:$0xff]
    %v11483 = vld [vmem:[#allocation9 + $0x438] sm:$0xff]
    %v11484 = vld [vmem:[#allocation9 + $0x440] sm:$0xff]
    %v11485 = vld [vmem:[#allocation9 + $0x448] sm:$0xff]
    %v11486 = vld [vmem:[#allocation9 + $0x450] sm:$0xff]
    %v11487 = vld [vmem:[#allocation9 + $0x458] sm:$0xff]
    %v11488 = vld [vmem:[#allocation9 + $0x460] sm:$0xff]
    %v11489 = vld [vmem:[#allocation9 + $0x468] sm:$0xff]
    %v11490 = vld [vmem:[#allocation9 + $0x470] sm:$0xff]
    %v11491 = vld [vmem:[#allocation9 + $0x478] sm:$0xff]
    %v11492 = vld [vmem:[#allocation9 + $0x480] sm:$0xff]
    %v11493 = vld [vmem:[#allocation9 + $0x488] sm:$0xff]
    %v11494 = vld [vmem:[#allocation9 + $0x490] sm:$0xff]
    %v11495 = vld [vmem:[#allocation9 + $0x498] sm:$0xff]
    %v11496 = vld [vmem:[#allocation9 + $0x4a0] sm:$0xff]
    %v11497 = vld [vmem:[#allocation9 + $0x4a8] sm:$0xff]
    %v11498 = vld [vmem:[#allocation9 + $0x4b0] sm:$0xff]
    %v11499 = vld [vmem:[#allocation9 + $0x4b8] sm:$0xff]
    %v11500 = vld [vmem:[#allocation9 + $0x4c0] sm:$0xff]
    %v11501 = vld [vmem:[#allocation9 + $0x4c8] sm:$0xff]
    %v11502 = vld [vmem:[#allocation9 + $0x4d0] sm:$0xff]
    %v11503 = vld [vmem:[#allocation9 + $0x4d8] sm:$0xff]
    %v11504 = vld [vmem:[#allocation9 + $0x4e0] sm:$0xff]
    %v11505 = vld [vmem:[#allocation9 + $0x4e8] sm:$0xff]
    %v11506 = vld [vmem:[#allocation9 + $0x4f0] sm:$0xff]
    %v11507 = vld [vmem:[#allocation9 + $0x4f8] sm:$0xff]
    %v11508 = vld [vmem:[#allocation9 + $0x500] sm:$0xff]
    %v11509 = vld [vmem:[#allocation9 + $0x508] sm:$0xff]
    %v11510 = vld [vmem:[#allocation9 + $0x510] sm:$0xff]
    %v11511 = vld [vmem:[#allocation9 + $0x518] sm:$0xff]
    %v11512 = vld [vmem:[#allocation9 + $0x520] sm:$0xff]
    %v11513 = vld [vmem:[#allocation9 + $0x528] sm:$0xff]
    %v11514 = vld [vmem:[#allocation9 + $0x530] sm:$0xff]
    %v11515 = vld [vmem:[#allocation9 + $0x538] sm:$0xff]
    %v11516 = vld [vmem:[#allocation9 + $0x540] sm:$0xff]
    %v11517 = vld [vmem:[#allocation9 + $0x548] sm:$0xff]
    %v11518 = vld [vmem:[#allocation9 + $0x550] sm:$0xff]
    %v11519 = vld [vmem:[#allocation9 + $0x558] sm:$0xff]
    %v11520 = vld [vmem:[#allocation9 + $0x560] sm:$0xff]
    %v11521 = vld [vmem:[#allocation9 + $0x568] sm:$0xff]
    %v11522 = vld [vmem:[#allocation9 + $0x570] sm:$0xff]
    %v11523 = vld [vmem:[#allocation9 + $0x578] sm:$0xff]
    %v11524 = vld [vmem:[#allocation9 + $0x580] sm:$0xff]
    %v11525 = vld [vmem:[#allocation9 + $0x588] sm:$0xff]
    %v11526 = vld [vmem:[#allocation9 + $0x590] sm:$0xff]
    %v11527 = vld [vmem:[#allocation9 + $0x598] sm:$0xff]
    %v11528 = vld [vmem:[#allocation9 + $0x5a0] sm:$0xff]
    %v11529 = vld [vmem:[#allocation9 + $0x5a8] sm:$0xff]
    %v11530 = vld [vmem:[#allocation9 + $0x5b0] sm:$0xff]
    %v11531 = vld [vmem:[#allocation9 + $0x5b8] sm:$0xff]
    %v11532 = vld [vmem:[#allocation9 + $0x5c0] sm:$0xff]
    %v11533 = vld [vmem:[#allocation9 + $0x5c8] sm:$0xff]
    %v11534 = vld [vmem:[#allocation9 + $0x5d0] sm:$0xff]
    %v11535 = vld [vmem:[#allocation9 + $0x5d8] sm:$0xff]
    %v11536 = vld [vmem:[#allocation9 + $0x5e0] sm:$0xff]
    %v11537 = vld [vmem:[#allocation9 + $0x5e8] sm:$0xff]
    %v11538 = vld [vmem:[#allocation9 + $0x5f0] sm:$0xff]
    %v11539 = vld [vmem:[#allocation9 + $0x5f8] sm:$0xff]
    %v11540 = vld [vmem:[#allocation9 + $0x600] sm:$0xff]
    %v11541 = vld [vmem:[#allocation9 + $0x608] sm:$0xff]
    %v11542 = vld [vmem:[#allocation9 + $0x610] sm:$0xff]
    %v11543 = vld [vmem:[#allocation9 + $0x618] sm:$0xff]
    %v11544 = vld [vmem:[#allocation9 + $0x620] sm:$0xff]
    %v11545 = vld [vmem:[#allocation9 + $0x628] sm:$0xff]
    %v11546 = vld [vmem:[#allocation9 + $0x630] sm:$0xff]
    %v11547 = vld [vmem:[#allocation9 + $0x638] sm:$0xff]
    %v11548 = vld [vmem:[#allocation9 + $0x640] sm:$0xff]
    %v11549 = vld [vmem:[#allocation9 + $0x648] sm:$0xff]
    %v11550 = vld [vmem:[#allocation9 + $0x650] sm:$0xff]
    %v11551 = vld [vmem:[#allocation9 + $0x658] sm:$0xff]
    %v11552 = vld [vmem:[#allocation9 + $0x660] sm:$0xff]
    %v11553 = vld [vmem:[#allocation9 + $0x668] sm:$0xff]
    %v11554 = vld [vmem:[#allocation9 + $0x670] sm:$0xff]
    %v11555 = vld [vmem:[#allocation9 + $0x678] sm:$0xff]
    %v11556 = vld [vmem:[#allocation9 + $0x680] sm:$0xff]
    %v11557 = vld [vmem:[#allocation9 + $0x688] sm:$0xff]
    %v11558 = vld [vmem:[#allocation9 + $0x690] sm:$0xff]
    %v11559 = vld [vmem:[#allocation9 + $0x698] sm:$0xff]
    %v11560 = vld [vmem:[#allocation9 + $0x6a0] sm:$0xff]
    %v11561 = vld [vmem:[#allocation9 + $0x6a8] sm:$0xff]
    %v11562 = vld [vmem:[#allocation9 + $0x6b0] sm:$0xff]
    %v11563 = vld [vmem:[#allocation9 + $0x6b8] sm:$0xff]
    %v11564 = vld [vmem:[#allocation9 + $0x6c0] sm:$0xff]
    %v11565 = vld [vmem:[#allocation9 + $0x6c8] sm:$0xff]
    %v11566 = vld [vmem:[#allocation9 + $0x6d0] sm:$0xff]
    %v11567 = vld [vmem:[#allocation9 + $0x6d8] sm:$0xff]
    %v11568 = vld [vmem:[#allocation9 + $0x6e0] sm:$0xff]
    %v11569 = vld [vmem:[#allocation9 + $0x6e8] sm:$0xff]
    %v11570 = vld [vmem:[#allocation9 + $0x6f0] sm:$0xff]
    %v11571 = vld [vmem:[#allocation9 + $0x6f8] sm:$0xff]
    %v11572 = vld [vmem:[#allocation9 + $0x700] sm:$0xff]
    %v11573 = vld [vmem:[#allocation9 + $0x708] sm:$0xff]
    %v11574 = vld [vmem:[#allocation9 + $0x710] sm:$0xff]
    %v11575 = vld [vmem:[#allocation9 + $0x718] sm:$0xff]
    %v11576 = vld [vmem:[#allocation9 + $0x720] sm:$0xff]
    %v11577 = vld [vmem:[#allocation9 + $0x728] sm:$0xff]
    %v11578 = vld [vmem:[#allocation9 + $0x730] sm:$0xff]
    %v11579 = vld [vmem:[#allocation9 + $0x738] sm:$0xff]
    %v11580 = vld [vmem:[#allocation9 + $0x740] sm:$0xff]
    %v11581 = vld [vmem:[#allocation9 + $0x748] sm:$0xff]
    %v11582 = vld [vmem:[#allocation9 + $0x750] sm:$0xff]
    %v11583 = vld [vmem:[#allocation9 + $0x758] sm:$0xff]
    %v11584 = vld [vmem:[#allocation9 + $0x760] sm:$0xff]
    %v11585 = vld [vmem:[#allocation9 + $0x768] sm:$0xff]
    %v11586 = vld [vmem:[#allocation9 + $0x770] sm:$0xff]
    %v11587 = vld [vmem:[#allocation9 + $0x778] sm:$0xff]
    %v11588 = vld [vmem:[#allocation9 + $0x780] sm:$0xff]
    %v11589 = vld [vmem:[#allocation9 + $0x788] sm:$0xff]
    %v11590 = vld [vmem:[#allocation9 + $0x790] sm:$0xff]
    %v11591 = vld [vmem:[#allocation9 + $0x798] sm:$0xff]
    %v11592 = vld [vmem:[#allocation9 + $0x7a0] sm:$0xff]
    %v11593 = vld [vmem:[#allocation9 + $0x7a8] sm:$0xff]
    %v11594 = vld [vmem:[#allocation9 + $0x7b0] sm:$0xff]
    %v11595 = vld [vmem:[#allocation9 + $0x7b8] sm:$0xff]
    %v11596 = vld [vmem:[#allocation9 + $0x7c0] sm:$0xff]
    %v11597 = vld [vmem:[#allocation9 + $0x7c8] sm:$0xff]
    %v11598 = vld [vmem:[#allocation9 + $0x7d0] sm:$0xff]
    %v11599 = vld [vmem:[#allocation9 + $0x7d8] sm:$0xff]
    %v11600 = vld [vmem:[#allocation9 + $0x7e0] sm:$0xff]
    %v11601 = vld [vmem:[#allocation9 + $0x7e8] sm:$0xff]
    %v11602 = vld [vmem:[#allocation9 + $0x7f0] sm:$0xff]
    %v11603 = vld [vmem:[#allocation9 + $0x7f8] sm:$0xff]
    %v11604 = vld [vmem:[#allocation9 + $0x800] sm:$0xff]
    %v11605 = vld [vmem:[#allocation9 + $0x808] sm:$0xff]
    %v11606 = vld [vmem:[#allocation9 + $0x810] sm:$0xff]
    %v11607 = vld [vmem:[#allocation9 + $0x818] sm:$0xff]
    %v11608 = vld [vmem:[#allocation9 + $0x820] sm:$0xff]
    %v11609 = vld [vmem:[#allocation9 + $0x828] sm:$0xff]
    %v11610 = vld [vmem:[#allocation9 + $0x830] sm:$0xff]
    %v11611 = vld [vmem:[#allocation9 + $0x838] sm:$0xff]
    %v11612 = vld [vmem:[#allocation9 + $0x840] sm:$0xff]
    %v11613 = vld [vmem:[#allocation9 + $0x848] sm:$0xff]
    %v11614 = vld [vmem:[#allocation9 + $0x850] sm:$0xff]
    %v11615 = vld [vmem:[#allocation9 + $0x858] sm:$0xff]
    %v11616 = vld [vmem:[#allocation9 + $0x860] sm:$0xff]
    %v11617 = vld [vmem:[#allocation9 + $0x868] sm:$0xff]
    %v11618 = vld [vmem:[#allocation9 + $0x870] sm:$0xff]
    %v11619 = vld [vmem:[#allocation9 + $0x878] sm:$0xff]
    %v11620 = vld [vmem:[#allocation9 + $0x880] sm:$0xff]
    %v11621 = vld [vmem:[#allocation9 + $0x888] sm:$0xff]
    %v11622 = vld [vmem:[#allocation9 + $0x890] sm:$0xff]
    %v11623 = vld [vmem:[#allocation9 + $0x898] sm:$0xff]
    %v11624 = vld [vmem:[#allocation9 + $0x8a0] sm:$0xff]
    %v11625 = vld [vmem:[#allocation9 + $0x8a8] sm:$0xff]
    %v11626 = vld [vmem:[#allocation9 + $0x8b0] sm:$0xff]
    %v11627 = vld [vmem:[#allocation9 + $0x8b8] sm:$0xff]
    %v11628 = vld [vmem:[#allocation9 + $0x8c0] sm:$0xff]
    %v11629 = vld [vmem:[#allocation9 + $0x8c8] sm:$0xff]
    %v11630 = vld [vmem:[#allocation9 + $0x8d0] sm:$0xff]
    %v11631 = vld [vmem:[#allocation9 + $0x8d8] sm:$0xff]
    %v11632 = vld [vmem:[#allocation9 + $0x8e0] sm:$0xff]
    %v11633 = vld [vmem:[#allocation9 + $0x8e8] sm:$0xff]
    %v11634 = vld [vmem:[#allocation9 + $0x8f0] sm:$0xff]
    %v11635 = vld [vmem:[#allocation9 + $0x8f8] sm:$0xff]
    %v11636 = vld [vmem:[#allocation9 + $0x900] sm:$0xff]
    %v11637 = vld [vmem:[#allocation9 + $0x908] sm:$0xff]
    %v11638 = vld [vmem:[#allocation9 + $0x910] sm:$0xff]
    %v11639 = vld [vmem:[#allocation9 + $0x918] sm:$0xff]
    %v11640 = vld [vmem:[#allocation9 + $0x920] sm:$0xff]
    %v11641 = vld [vmem:[#allocation9 + $0x928] sm:$0xff]
    %v11642 = vld [vmem:[#allocation9 + $0x930] sm:$0xff]
    %v11643 = vld [vmem:[#allocation9 + $0x938] sm:$0xff]
    %v11644 = vld [vmem:[#allocation9 + $0x940] sm:$0xff]
    %v11645 = vld [vmem:[#allocation9 + $0x948] sm:$0xff]
    %v11646 = vld [vmem:[#allocation9 + $0x950] sm:$0xff]
    %v11647 = vld [vmem:[#allocation9 + $0x958] sm:$0xff]
    %v11648 = vld [vmem:[#allocation9 + $0x960] sm:$0xff]
    %v11649 = vld [vmem:[#allocation9 + $0x968] sm:$0xff]
    %v11650 = vld [vmem:[#allocation9 + $0x970] sm:$0xff]
    %v11651 = vld [vmem:[#allocation9 + $0x978] sm:$0xff]
    %v11652 = vld [vmem:[#allocation9 + $0x980] sm:$0xff]
    %v11653 = vld [vmem:[#allocation9 + $0x988] sm:$0xff]
    %v11654 = vld [vmem:[#allocation9 + $0x990] sm:$0xff]
    %v11655 = vld [vmem:[#allocation9 + $0x998] sm:$0xff]
    %v11656 = vld [vmem:[#allocation9 + $0x9a0] sm:$0xff]
    %v11657 = vld [vmem:[#allocation9 + $0x9a8] sm:$0xff]
    %v11658 = vld [vmem:[#allocation9 + $0x9b0] sm:$0xff]
    %v11659 = vld [vmem:[#allocation9 + $0x9b8] sm:$0xff]
    %v11660 = vld [vmem:[#allocation9 + $0x9c0] sm:$0xff]
    %v11661 = vld [vmem:[#allocation9 + $0x9c8] sm:$0xff]
    %v11662 = vld [vmem:[#allocation9 + $0x9d0] sm:$0xff]
    %v11663 = vld [vmem:[#allocation9 + $0x9d8] sm:$0xff]
    %v11664 = vld [vmem:[#allocation9 + $0x9e0] sm:$0xff]
    %v11665 = vld [vmem:[#allocation9 + $0x9e8] sm:$0xff]
    %v11666 = vld [vmem:[#allocation9 + $0x9f0] sm:$0xff]
    %v11667 = vld [vmem:[#allocation9 + $0x9f8] sm:$0xff]
    %v11668 = vld [vmem:[#allocation9 + $0xa00] sm:$0xff]
    %v11669 = vld [vmem:[#allocation9 + $0xa08] sm:$0xff]
    %v11670 = vld [vmem:[#allocation9 + $0xa10] sm:$0xff]
    %v11671 = vld [vmem:[#allocation9 + $0xa18] sm:$0xff]
    %v11672 = vld [vmem:[#allocation9 + $0xa20] sm:$0xff]
    %v11673 = vld [vmem:[#allocation9 + $0xa28] sm:$0xff]
    %v11674 = vld [vmem:[#allocation9 + $0xa30] sm:$0xff]
    %v11675 = vld [vmem:[#allocation9 + $0xa38] sm:$0xff]
    %v11676 = vld [vmem:[#allocation9 + $0xa40] sm:$0xff]
    %v11677 = vld [vmem:[#allocation9 + $0xa48] sm:$0xff]
    %v11678 = vld [vmem:[#allocation9 + $0xa50] sm:$0xff]
    %v11679 = vld [vmem:[#allocation9 + $0xa58] sm:$0xff]
    %v11680 = vld [vmem:[#allocation9 + $0xa60] sm:$0xff]
    %v11681 = vld [vmem:[#allocation9 + $0xa68] sm:$0xff]
    %v11682 = vld [vmem:[#allocation9 + $0xa70] sm:$0xff]
    %v11683 = vld [vmem:[#allocation9 + $0xa78] sm:$0xff]
    %v11684 = vld [vmem:[#allocation9 + $0xa80] sm:$0xff]
    %v11685 = vld [vmem:[#allocation9 + $0xa88] sm:$0xff]
    %v11686 = vld [vmem:[#allocation9 + $0xa90] sm:$0xff]
    %v11687 = vld [vmem:[#allocation9 + $0xa98] sm:$0xff]
    %v11688 = vld [vmem:[#allocation9 + $0xaa0] sm:$0xff]
    %v11689 = vld [vmem:[#allocation9 + $0xaa8] sm:$0xff]
    %v11690 = vld [vmem:[#allocation9 + $0xab0] sm:$0xff]
    %v11691 = vld [vmem:[#allocation9 + $0xab8] sm:$0xff]
    %v11692 = vld [vmem:[#allocation9 + $0xac0] sm:$0xff]
    %v11693 = vld [vmem:[#allocation9 + $0xac8] sm:$0xff]
    %v11694 = vld [vmem:[#allocation9 + $0xad0] sm:$0xff]
    %v11695 = vld [vmem:[#allocation9 + $0xad8] sm:$0xff]
    %v11696 = vld [vmem:[#allocation9 + $0xae0] sm:$0xff]
    %v11697 = vld [vmem:[#allocation9 + $0xae8] sm:$0xff]
    %v11698 = vld [vmem:[#allocation9 + $0xaf0] sm:$0xff]
    %v11699 = vld [vmem:[#allocation9 + $0xaf8] sm:$0xff]
    %v11700 = vld [vmem:[#allocation9 + $0xb00] sm:$0xff]
    %v11701 = vld [vmem:[#allocation9 + $0xb08] sm:$0xff]
    %v11702 = vld [vmem:[#allocation9 + $0xb10] sm:$0xff]
    %v11703 = vld [vmem:[#allocation9 + $0xb18] sm:$0xff]
    %v11704 = vld [vmem:[#allocation9 + $0xb20] sm:$0xff]
    %v11705 = vld [vmem:[#allocation9 + $0xb28] sm:$0xff]
    %v11706 = vld [vmem:[#allocation9 + $0xb30] sm:$0xff]
    %v11707 = vld [vmem:[#allocation9 + $0xb38] sm:$0xff]
    %v11708 = vld [vmem:[#allocation9 + $0xb40] sm:$0xff]
    %v11709 = vld [vmem:[#allocation9 + $0xb48] sm:$0xff]
    %v11710 = vld [vmem:[#allocation9 + $0xb50] sm:$0xff]
    %v11711 = vld [vmem:[#allocation9 + $0xb58] sm:$0xff]
    %v11712 = vld [vmem:[#allocation9 + $0xb60] sm:$0xff]
    %v11713 = vld [vmem:[#allocation9 + $0xb68] sm:$0xff]
    %v11714 = vld [vmem:[#allocation9 + $0xb70] sm:$0xff]
    %v11715 = vld [vmem:[#allocation9 + $0xb78] sm:$0xff]
    %v11716 = vld [vmem:[#allocation9 + $0xb80] sm:$0xff]
    %v11717 = vld [vmem:[#allocation9 + $0xb88] sm:$0xff]
    %v11718 = vld [vmem:[#allocation9 + $0xb90] sm:$0xff]
    %v11719 = vld [vmem:[#allocation9 + $0xb98] sm:$0xff]
    %v11720 = vld [vmem:[#allocation9 + $0xba0] sm:$0xff]
    %v11721 = vld [vmem:[#allocation9 + $0xba8] sm:$0xff]
    %v11722 = vld [vmem:[#allocation9 + $0xbb0] sm:$0xff]
    %v11723 = vld [vmem:[#allocation9 + $0xbb8] sm:$0xff]
    %v11724 = vld [vmem:[#allocation9 + $0xbc0] sm:$0xff]
    %v11725 = vld [vmem:[#allocation9 + $0xbc8] sm:$0xff]
    %v11726 = vld [vmem:[#allocation9 + $0xbd0] sm:$0xff]
    %v11727 = vld [vmem:[#allocation9 + $0xbd8] sm:$0xff]
    %v11728 = vld [vmem:[#allocation9 + $0xbe0] sm:$0xff]
    %v11729 = vld [vmem:[#allocation9 + $0xbe8] sm:$0xff]
    %v11730 = vld [vmem:[#allocation9 + $0xbf0] sm:$0xff]
    %v11731 = vld [vmem:[#allocation9 + $0xbf8] sm:$0xff]
    %v11732 = vld [vmem:[#allocation9 + $0xc00] sm:$0xff]
    %v11733 = vld [vmem:[#allocation9 + $0xc08] sm:$0xff]
    %v11734 = vld [vmem:[#allocation9 + $0xc10] sm:$0xff]
    %v11735 = vld [vmem:[#allocation9 + $0xc18] sm:$0xff]
    %v11736 = vld [vmem:[#allocation9 + $0xc20] sm:$0xff]
    %v11737 = vld [vmem:[#allocation9 + $0xc28] sm:$0xff]
    %v11738 = vld [vmem:[#allocation9 + $0xc30] sm:$0xff]
    %v11739 = vld [vmem:[#allocation9 + $0xc38] sm:$0xff]
    %v11740 = vld [vmem:[#allocation9 + $0xc40] sm:$0xff]
    %v11741 = vld [vmem:[#allocation9 + $0xc48] sm:$0xff]
    %v11742 = vld [vmem:[#allocation9 + $0xc50] sm:$0xff]
    %v11743 = vld [vmem:[#allocation9 + $0xc58] sm:$0xff]
    %v11744 = vld [vmem:[#allocation9 + $0xc60] sm:$0xff]
    %v11745 = vld [vmem:[#allocation9 + $0xc68] sm:$0xff]
    %v11746 = vld [vmem:[#allocation9 + $0xc70] sm:$0xff]
    %v11747 = vld [vmem:[#allocation9 + $0xc78] sm:$0xff]
    %v11748 = vld [vmem:[#allocation9 + $0xc80] sm:$0xff]
    %v11749 = vld [vmem:[#allocation9 + $0xc88] sm:$0xff]
    %v11750 = vld [vmem:[#allocation9 + $0xc90] sm:$0xff]
    %v11751 = vld [vmem:[#allocation9 + $0xc98] sm:$0xff]
    %v11752 = vld [vmem:[#allocation9 + $0xca0] sm:$0xff]
    %v11753 = vld [vmem:[#allocation9 + $0xca8] sm:$0xff]
    %v11754 = vld [vmem:[#allocation9 + $0xcb0] sm:$0xff]
    %v11755 = vld [vmem:[#allocation9 + $0xcb8] sm:$0xff]
    %v11756 = vld [vmem:[#allocation9 + $0xcc0] sm:$0xff]
    %v11757 = vld [vmem:[#allocation9 + $0xcc8] sm:$0xff]
    %v11758 = vld [vmem:[#allocation9 + $0xcd0] sm:$0xff]
    %v11759 = vld [vmem:[#allocation9 + $0xcd8] sm:$0xff]
    %v11760 = vld [vmem:[#allocation9 + $0xce0] sm:$0xff]
    %v11761 = vld [vmem:[#allocation9 + $0xce8] sm:$0xff]
    %v11762 = vld [vmem:[#allocation9 + $0xcf0] sm:$0xff]
    %v11763 = vld [vmem:[#allocation9 + $0xcf8] sm:$0xff]
    %v11764 = vld [vmem:[#allocation9 + $0xd00] sm:$0xff]
    %v11765 = vld [vmem:[#allocation9 + $0xd08] sm:$0xff]
    %v11766 = vld [vmem:[#allocation9 + $0xd10] sm:$0xff]
    %v11767 = vld [vmem:[#allocation9 + $0xd18] sm:$0xff]
    %v11768 = vld [vmem:[#allocation9 + $0xd20] sm:$0xff]
    %v11769 = vld [vmem:[#allocation9 + $0xd28] sm:$0xff]
    %v11770 = vld [vmem:[#allocation9 + $0xd30] sm:$0xff]
    %v11771 = vld [vmem:[#allocation9 + $0xd38] sm:$0xff]
    %v11772 = vld [vmem:[#allocation9 + $0xd40] sm:$0xff]
    %v11773 = vld [vmem:[#allocation9 + $0xd48] sm:$0xff]
    %v11774 = vld [vmem:[#allocation9 + $0xd50] sm:$0xff]
    %v11775 = vld [vmem:[#allocation9 + $0xd58] sm:$0xff]
    %v11776 = vld [vmem:[#allocation9 + $0xd60] sm:$0xff]
    %v11777 = vld [vmem:[#allocation9 + $0xd68] sm:$0xff]
    %v11778 = vld [vmem:[#allocation9 + $0xd70] sm:$0xff]
    %v11779 = vld [vmem:[#allocation9 + $0xd78] sm:$0xff]
    %v11780 = vld [vmem:[#allocation9 + $0xd80] sm:$0xff]
    %v11781 = vld [vmem:[#allocation9 + $0xd88] sm:$0xff]
    %v11782 = vld [vmem:[#allocation9 + $0xd90] sm:$0xff]
    %v11783 = vld [vmem:[#allocation9 + $0xd98] sm:$0xff]
    %v11784 = vld [vmem:[#allocation9 + $0xda0] sm:$0xff]
    %v11785 = vld [vmem:[#allocation9 + $0xda8] sm:$0xff]
    %v11786 = vld [vmem:[#allocation9 + $0xdb0] sm:$0xff]
    %v11787 = vld [vmem:[#allocation9 + $0xdb8] sm:$0xff]
    %v11788 = vld [vmem:[#allocation9 + $0xdc0] sm:$0xff]
    %v11789 = vld [vmem:[#allocation9 + $0xdc8] sm:$0xff]
    %v11790 = vld [vmem:[#allocation9 + $0xdd0] sm:$0xff]
    %v11791 = vld [vmem:[#allocation9 + $0xdd8] sm:$0xff]
    %v11792 = vld [vmem:[#allocation9 + $0xde0] sm:$0xff]
    %v11793 = vld [vmem:[#allocation9 + $0xde8] sm:$0xff]
    %v11794 = vld [vmem:[#allocation9 + $0xdf0] sm:$0xff]
    %v11795 = vld [vmem:[#allocation9 + $0xdf8] sm:$0xff]
    %v11796 = vld [vmem:[#allocation9 + $0xe00] sm:$0xff]
    %v11797 = vld [vmem:[#allocation9 + $0xe08] sm:$0xff]
    %v11798 = vld [vmem:[#allocation9 + $0xe10] sm:$0xff]
    %v11799 = vld [vmem:[#allocation9 + $0xe18] sm:$0xff]
    %v11800 = vld [vmem:[#allocation9 + $0xe20] sm:$0xff]
    %v11801 = vld [vmem:[#allocation9 + $0xe28] sm:$0xff]
    %v11802 = vld [vmem:[#allocation9 + $0xe30] sm:$0xff]
    %v11803 = vld [vmem:[#allocation9 + $0xe38] sm:$0xff]
    %v11804 = vld [vmem:[#allocation9 + $0xe40] sm:$0xff]
    %v11805 = vld [vmem:[#allocation9 + $0xe48] sm:$0xff]
    %v11806 = vld [vmem:[#allocation9 + $0xe50] sm:$0xff]
    %v11807 = vld [vmem:[#allocation9 + $0xe58] sm:$0xff]
    %v11808 = vld [vmem:[#allocation9 + $0xe60] sm:$0xff]
    %v11809 = vld [vmem:[#allocation9 + $0xe68] sm:$0xff]
    %v11810 = vld [vmem:[#allocation9 + $0xe70] sm:$0xff]
    %v11811 = vld [vmem:[#allocation9 + $0xe78] sm:$0xff]
    %v11812 = vld [vmem:[#allocation9 + $0xe80] sm:$0xff]
    %v11813 = vld [vmem:[#allocation9 + $0xe88] sm:$0xff]
    %v11814 = vld [vmem:[#allocation9 + $0xe90] sm:$0xff]
    %v11815 = vld [vmem:[#allocation9 + $0xe98] sm:$0xff]
    %v11816 = vld [vmem:[#allocation9 + $0xea0] sm:$0xff]
    %v11817 = vld [vmem:[#allocation9 + $0xea8] sm:$0xff]
    %v11818 = vld [vmem:[#allocation9 + $0xeb0] sm:$0xff]
    %v11819 = vld [vmem:[#allocation9 + $0xeb8] sm:$0xff]
    %v11820 = vld [vmem:[#allocation9 + $0xec0] sm:$0xff]
    %v11821 = vld [vmem:[#allocation9 + $0xec8] sm:$0xff]
    %v11822 = vld [vmem:[#allocation9 + $0xed0] sm:$0xff]
    %v11823 = vld [vmem:[#allocation9 + $0xed8] sm:$0xff]
    %v11824 = vld [vmem:[#allocation9 + $0xee0] sm:$0xff]
    %v11825 = vld [vmem:[#allocation9 + $0xee8] sm:$0xff]
    %v11826 = vld [vmem:[#allocation9 + $0xef0] sm:$0xff]
    %v11827 = vld [vmem:[#allocation9 + $0xef8] sm:$0xff]
    %v11828 = vld [vmem:[#allocation9 + $0xf00] sm:$0xff]
    %v11829 = vld [vmem:[#allocation9 + $0xf08] sm:$0xff]
    %v11830 = vld [vmem:[#allocation9 + $0xf10] sm:$0xff]
    %v11831 = vld [vmem:[#allocation9 + $0xf18] sm:$0xff]
    %v11832 = vld [vmem:[#allocation9 + $0xf20] sm:$0xff]
    %v11833 = vld [vmem:[#allocation9 + $0xf28] sm:$0xff]
    %v11834 = vld [vmem:[#allocation9 + $0xf30] sm:$0xff]
    %v11835 = vld [vmem:[#allocation9 + $0xf38] sm:$0xff]
    %v11836 = vld [vmem:[#allocation9 + $0xf40] sm:$0xff]
    %v11837 = vld [vmem:[#allocation9 + $0xf48] sm:$0xff]
    %v11838 = vld [vmem:[#allocation9 + $0xf50] sm:$0xff]
    %v11839 = vld [vmem:[#allocation9 + $0xf58] sm:$0xff]
    %v11840 = vld [vmem:[#allocation9 + $0xf60] sm:$0xff]
    %v11841 = vld [vmem:[#allocation9 + $0xf68] sm:$0xff]
    %v11842 = vld [vmem:[#allocation9 + $0xf70] sm:$0xff]
    %v11843 = vld [vmem:[#allocation9 + $0xf78] sm:$0xff]
    %v11844 = vld [vmem:[#allocation9 + $0xf80] sm:$0xff]
    %v11845 = vld [vmem:[#allocation9 + $0xf88] sm:$0xff]
    %v11846 = vld [vmem:[#allocation9 + $0xf90] sm:$0xff]
    %v11847 = vld [vmem:[#allocation9 + $0xf98] sm:$0xff]
    %v11848 = vld [vmem:[#allocation9 + $0xfa0] sm:$0xff]
    %v11849 = vld [vmem:[#allocation9 + $0xfa8] sm:$0xff]
    %v11850 = vld [vmem:[#allocation9 + $0xfb0] sm:$0xff]
    %v11851 = vld [vmem:[#allocation9 + $0xfb8] sm:$0xff]
    %v11852 = vld [vmem:[#allocation9 + $0xfc0] sm:$0xff]
    %v11853 = vld [vmem:[#allocation9 + $0xfc8] sm:$0xff]
    %v11854 = vld [vmem:[#allocation9 + $0xfd0] sm:$0xff]
    %v11855 = vld [vmem:[#allocation9 + $0xfd8] sm:$0xff]
    %v11856 = vld [vmem:[#allocation9 + $0xfe0] sm:$0xff]
    %v11857 = vld [vmem:[#allocation9 + $0xfe8] sm:$0xff]
    %v11858 = vld [vmem:[#allocation9 + $0xff0] sm:$0xff]
    %v11859 = vld [vmem:[#allocation9 + $0xff8] sm:$0xff]
    %v11860 = vld [vmem:[#allocation9 + $0x1000] sm:$0xff]
    %v11861 = vld [vmem:[#allocation9 + $0x1008] sm:$0xff]
    %v11862 = vld [vmem:[#allocation9 + $0x1010] sm:$0xff]
    %v11863 = vld [vmem:[#allocation9 + $0x1018] sm:$0xff]
    %v11864 = vld [vmem:[#allocation9 + $0x1020] sm:$0xff]
    %v11865 = vld [vmem:[#allocation9 + $0x1028] sm:$0xff]
    %v11866 = vld [vmem:[#allocation9 + $0x1030] sm:$0xff]
    %v11867 = vld [vmem:[#allocation9 + $0x1038] sm:$0xff]
    %v11868 = vld [vmem:[#allocation9 + $0x1040] sm:$0xff]
    %v11869 = vld [vmem:[#allocation9 + $0x1048] sm:$0xff]
    %v11870 = vld [vmem:[#allocation9 + $0x1050] sm:$0xff]
    %v11871 = vld [vmem:[#allocation9 + $0x1058] sm:$0xff]
    %v11872 = vld [vmem:[#allocation9 + $0x1060] sm:$0xff]
    %v11873 = vld [vmem:[#allocation9 + $0x1068] sm:$0xff]
    %v11874 = vld [vmem:[#allocation9 + $0x1070] sm:$0xff]
    %v11875 = vld [vmem:[#allocation9 + $0x1078] sm:$0xff]
    %v11876 = vld [vmem:[#allocation9 + $0x1080] sm:$0xff]
    %v11877 = vld [vmem:[#allocation9 + $0x1088] sm:$0xff]
    %v11878 = vld [vmem:[#allocation9 + $0x1090] sm:$0xff]
    %v11879 = vld [vmem:[#allocation9 + $0x1098] sm:$0xff]
    %v11880 = vld [vmem:[#allocation9 + $0x10a0] sm:$0xff]
    %v11881 = vld [vmem:[#allocation9 + $0x10a8] sm:$0xff]
    %v11882 = vld [vmem:[#allocation9 + $0x10b0] sm:$0xff]
    %v11883 = vld [vmem:[#allocation9 + $0x10b8] sm:$0xff]
    %v11884 = vld [vmem:[#allocation9 + $0x10c0] sm:$0xff]
    %v11885 = vld [vmem:[#allocation9 + $0x10c8] sm:$0xff]
    %v11886 = vld [vmem:[#allocation9 + $0x10d0] sm:$0xff]
    %v11887 = vld [vmem:[#allocation9 + $0x10d8] sm:$0xff]
    %v11888 = vld [vmem:[#allocation9 + $0x10e0] sm:$0xff]
    %v11889 = vld [vmem:[#allocation9 + $0x10e8] sm:$0xff]
    %v11890 = vld [vmem:[#allocation9 + $0x10f0] sm:$0xff]
    %v11891 = vld [vmem:[#allocation9 + $0x10f8] sm:$0xff]
    %v11892 = vld [vmem:[#allocation9 + $0x1100] sm:$0xff]
    %v11893 = vld [vmem:[#allocation9 + $0x1108] sm:$0xff]
    %v11894 = vld [vmem:[#allocation9 + $0x1110] sm:$0xff]
    %v11895 = vld [vmem:[#allocation9 + $0x1118] sm:$0xff]
    %v11896 = vld [vmem:[#allocation9 + $0x1120] sm:$0xff]
    %v11897 = vld [vmem:[#allocation9 + $0x1128] sm:$0xff]
    %v11898 = vld [vmem:[#allocation9 + $0x1130] sm:$0xff]
    %v11899 = vld [vmem:[#allocation9 + $0x1138] sm:$0xff]
    %v11900 = vld [vmem:[#allocation9 + $0x1140] sm:$0xff]
    %v11901 = vld [vmem:[#allocation9 + $0x1148] sm:$0xff]
    %v11902 = vld [vmem:[#allocation9 + $0x1150] sm:$0xff]
    %v11903 = vld [vmem:[#allocation9 + $0x1158] sm:$0xff]
    %v11904 = vld [vmem:[#allocation9 + $0x1160] sm:$0xff]
    %v11905 = vld [vmem:[#allocation9 + $0x1168] sm:$0xff]
    %v11906 = vld [vmem:[#allocation9 + $0x1170] sm:$0xff]
    %v11907 = vld [vmem:[#allocation9 + $0x1178] sm:$0xff]
    %v11908 = vld [vmem:[#allocation9 + $0x1180] sm:$0xff]
    %v11909 = vld [vmem:[#allocation9 + $0x1188] sm:$0xff]
    %v11910 = vld [vmem:[#allocation9 + $0x1190] sm:$0xff]
    %v11911 = vld [vmem:[#allocation9 + $0x1198] sm:$0xff]
    %v11912 = vld [vmem:[#allocation9 + $0x11a0] sm:$0xff]
    %v11913 = vld [vmem:[#allocation9 + $0x11a8] sm:$0xff]
    %v11914 = vld [vmem:[#allocation9 + $0x11b0] sm:$0xff]
    %v11915 = vld [vmem:[#allocation9 + $0x11b8] sm:$0xff]
    %v11916 = vld [vmem:[#allocation9 + $0x11c0] sm:$0xff]
    %v11917 = vld [vmem:[#allocation9 + $0x11c8] sm:$0xff]
    %v11918 = vld [vmem:[#allocation9 + $0x11d0] sm:$0xff]
    %v11919 = vld [vmem:[#allocation9 + $0x11d8] sm:$0xff]
    %v11920 = vld [vmem:[#allocation9 + $0x11e0] sm:$0xff]
    %v11921 = vld [vmem:[#allocation9 + $0x11e8] sm:$0xff]
    %v11922 = vld [vmem:[#allocation9 + $0x11f0] sm:$0xff]
    %v11923 = vld [vmem:[#allocation9 + $0x11f8] sm:$0xff]
    %11924 = vmatprep.subr.bf16.mxu0 %v11349
    %11925 = vmatpush1.bf16.msra.mxu0 %v11348
    %11926 = vmatprep.subr.bf16.mxu0 %v11357
    %11927 = vmatpush1.bf16.msra.mxu0 %v11356
    %11928 = vmatprep.subr.bf16.mxu0 %v11365
    %11929 = vmatpush1.bf16.msra.mxu0 %v11364
    %11930 = vmatprep.subr.bf16.mxu0 %v11373
    %11931 = vmatpush1.bf16.msra.mxu0 %v11372
    %11932 = vmatprep.subr.bf16.mxu0 %v11381
    %11933 = vmatpush1.bf16.msra.mxu0 %v11380
    %11934 = vmatprep.subr.bf16.mxu0 %v11389
    %11935 = vmatpush1.bf16.msra.mxu0 %v11388
    %11936 = vmatprep.subr.bf16.mxu0 %v11397
    %11937 = vmatpush1.bf16.msra.mxu0 %v11396
    %11938 = vmatprep.subr.bf16.mxu0 %v11405
    %11939 = vmatpush1.bf16.msra.mxu0 %v11404
    %11940 = vmatprep.subr.bf16.mxu0 %v11413
    %11941 = vmatpush1.bf16.msra.mxu0 %v11412
    %11942 = vmatprep.subr.bf16.mxu0 %v11421
    %11943 = vmatpush1.bf16.msra.mxu0 %v11420
    %11944 = vmatprep.subr.bf16.mxu0 %v11429
    %11945 = vmatpush1.bf16.msra.mxu0 %v11428
    %11946 = vmatprep.subr.bf16.mxu0 %v11437
    %11947 = vmatpush1.bf16.msra.mxu0 %v11436
    %11948 = vmatprep.subr.bf16.mxu0 %v11445
    %11949 = vmatpush1.bf16.msra.mxu0 %v11444
    %11950 = vmatprep.subr.bf16.mxu0 %v11453
    %11951 = vmatpush1.bf16.msra.mxu0 %v11452
    %11952 = vmatprep.subr.bf16.mxu0 %v11461
    %11953 = vmatpush1.bf16.msra.mxu0 %v11460
    %11954 = vmatprep.subr.bf16.mxu0 %v11469
    %11955 = vmatpush1.bf16.msra.mxu0 %v11468
    %11956 = vmatprep.mubr.bf16.mxu0 %v11336
    %11957 = vmatmul.mubr.bf16.gmra.mrb[0].mxu0 %v11335
    %v11958 = vpop.f32.mrb[0].mxu0
    %v11959 = vadd.f32 0.0, %v11958
    %v11960 = vpop.f32.mrb[0].mxu0
    %v11961 = vadd.f32 0.0, %v11960
    %v11962 = vpop.f32.mrb[0].mxu0
    %v11963 = vpop.f32.mrb[0].mxu0
    %11964 = vdwg.mxu0
    %11965 = vmatprep.subr.bf16.mxu0 %v11477
    %11966 = vmatpush1.bf16.msra.mxu0 %v11476
    %11967 = vmatprep.subr.bf16.mxu0 %v11485
    %11968 = vmatpush1.bf16.msra.mxu0 %v11484
    %11969 = vmatprep.subr.bf16.mxu0 %v11493
    %11970 = vmatpush1.bf16.msra.mxu0 %v11492
    %11971 = vmatprep.subr.bf16.mxu0 %v11501
    %11972 = vmatpush1.bf16.msra.mxu0 %v11500
    %11973 = vmatprep.subr.bf16.mxu0 %v11509
    %11974 = vmatpush1.bf16.msra.mxu0 %v11508
    %11975 = vmatprep.subr.bf16.mxu0 %v11517
    %11976 = vmatpush1.bf16.msra.mxu0 %v11516
    %11977 = vmatprep.subr.bf16.mxu0 %v11525
    %11978 = vmatpush1.bf16.msra.mxu0 %v11524
    %11979 = vmatprep.subr.bf16.mxu0 %v11533
    %11980 = vmatpush1.bf16.msra.mxu0 %v11532
    %11981 = vmatprep.subr.bf16.mxu0 %v11541
    %11982 = vmatpush1.bf16.msra.mxu0 %v11540
    %11983 = vmatprep.subr.bf16.mxu0 %v11549
    %11984 = vmatpush1.bf16.msra.mxu0 %v11548
    %11985 = vmatprep.subr.bf16.mxu0 %v11557
    %11986 = vmatpush1.bf16.msra.mxu0 %v11556
    %11987 = vmatprep.subr.bf16.mxu0 %v11565
    %11988 = vmatpush1.bf16.msra.mxu0 %v11564
    %11989 = vmatprep.subr.bf16.mxu0 %v11573
    %11990 = vmatpush1.bf16.msra.mxu0 %v11572
    %11991 = vmatprep.subr.bf16.mxu0 %v11581
    %11992 = vmatpush1.bf16.msra.mxu0 %v11580
    %11993 = vmatprep.subr.bf16.mxu0 %v11589
    %11994 = vmatpush1.bf16.msra.mxu0 %v11588
    %11995 = vmatprep.subr.bf16.mxu0 %v11597
    %11996 = vmatpush1.bf16.msra.mxu0 %v11596
    %11997 = vmatprep.mubr.bf16.mxu0 %v11338
    %11998 = vmatmul.mubr.bf16.gmra.mrb[0].mxu0 %v11337
    %v11999 = vpop.f32.mrb[0].mxu0
    %v12000 = vadd.f32 %v11959, %v11999
    %v12001 = vpop.f32.mrb[0].mxu0
    %v12002 = vadd.f32 %v11961, %v12001
    %v12003 = vpop.f32.mrb[0].mxu0
    %v12004 = vpop.f32.mrb[0].mxu0
    %12005 = vdwg.mxu0
    %12006 = vmatprep.subr.bf16.mxu0 %v11605
    %12007 = vmatpush1.bf16.msra.mxu0 %v11604
    %12008 = vmatprep.subr.bf16.mxu0 %v11613
    %12009 = vmatpush1.bf16.msra.mxu0 %v11612
    %12010 = vmatprep.subr.bf16.mxu0 %v11621
    %12011 = vmatpush1.bf16.msra.mxu0 %v11620
    %12012 = vmatprep.subr.bf16.mxu0 %v11629
    %12013 = vmatpush1.bf16.msra.mxu0 %v11628
    %12014 = vmatprep.subr.bf16.mxu0 %v11637
    %12015 = vmatpush1.bf16.msra.mxu0 %v11636
    %12016 = vmatprep.subr.bf16.mxu0 %v11645
    %12017 = vmatpush1.bf16.msra.mxu0 %v11644
    %12018 = vmatprep.subr.bf16.mxu0 %v11653
    %12019 = vmatpush1.bf16.msra.mxu0 %v11652
    %12020 = vmatprep.subr.bf16.mxu0 %v11661
    %12021 = vmatpush1.bf16.msra.mxu0 %v11660
    %12022 = vmatprep.subr.bf16.mxu0 %v11669
    %12023 = vmatpush1.bf16.msra.mxu0 %v11668
    %12024 = vmatprep.subr.bf16.mxu0 %v11677
    %12025 = vmatpush1.bf16.msra.mxu0 %v11676
    %12026 = vmatprep.subr.bf16.mxu0 %v11685
    %12027 = vmatpush1.bf16.msra.mxu0 %v11684
    %12028 = vmatprep.subr.bf16.mxu0 %v11693
    %12029 = vmatpush1.bf16.msra.mxu0 %v11692
    %12030 = vmatprep.subr.bf16.mxu0 %v11701
    %12031 = vmatpush1.bf16.msra.mxu0 %v11700
    %12032 = vmatprep.subr.bf16.mxu0 %v11709
    %12033 = vmatpush1.bf16.msra.mxu0 %v11708
    %12034 = vmatprep.subr.bf16.mxu0 %v11717
    %12035 = vmatpush1.bf16.msra.mxu0 %v11716
    %12036 = vmatprep.subr.bf16.mxu0 %v11725
    %12037 = vmatpush1.bf16.msra.mxu0 %v11724
    %12038 = vmatprep.mubr.bf16.mxu0 %v11340
    %12039 = vmatmul.mubr.bf16.gmra.mrb[0].mxu0 %v11339
    %v12040 = vpop.f32.mrb[0].mxu0
    %v12041 = vadd.f32 %v12000, %v12040
    %v12042 = vpop.f32.mrb[0].mxu0
    %v12043 = vadd.f32 %v12002, %v12042
    %v12044 = vpop.f32.mrb[0].mxu0
    %v12045 = vpop.f32.mrb[0].mxu0
    %12046 = vdwg.mxu0
    %12047 = vmatprep.subr.bf16.mxu0 %v11733
    %12048 = vmatpush1.bf16.msra.mxu0 %v11732
    %12049 = vmatprep.subr.bf16.mxu0 %v11741
    %12050 = vmatpush1.bf16.msra.mxu0 %v11740
    %12051 = vmatprep.subr.bf16.mxu0 %v11749
    %12052 = vmatpush1.bf16.msra.mxu0 %v11748
    %12053 = vmatprep.subr.bf16.mxu0 %v11757
    %12054 = vmatpush1.bf16.msra.mxu0 %v11756
    %12055 = vmatprep.subr.bf16.mxu0 %v11765
    %12056 = vmatpush1.bf16.msra.mxu0 %v11764
    %12057 = vmatprep.subr.bf16.mxu0 %v11773
    %12058 = vmatpush1.bf16.msra.mxu0 %v11772
    %12059 = vmatprep.subr.bf16.mxu0 %v11781
    %12060 = vmatpush1.bf16.msra.mxu0 %v11780
    %12061 = vmatprep.subr.bf16.mxu0 %v11789
    %12062 = vmatpush1.bf16.msra.mxu0 %v11788
    %12063 = vmatprep.subr.bf16.mxu0 %v11797
    %12064 = vmatpush1.bf16.msra.mxu0 %v11796
    %12065 = vmatprep.subr.bf16.mxu0 %v11805
    %12066 = vmatpush1.bf16.msra.mxu0 %v11804
    %12067 = vmatprep.subr.bf16.mxu0 %v11813
    %12068 = vmatpush1.bf16.msra.mxu0 %v11812
    %12069 = vmatprep.subr.bf16.mxu0 %v11821
    %12070 = vmatpush1.bf16.msra.mxu0 %v11820
    %12071 = vmatprep.subr.bf16.mxu0 %v11829
    %12072 = vmatpush1.bf16.msra.mxu0 %v11828
    %12073 = vmatprep.subr.bf16.mxu0 %v11837
    %12074 = vmatpush1.bf16.msra.mxu0 %v11836
    %12075 = vmatprep.subr.bf16.mxu0 %v11845
    %12076 = vmatpush1.bf16.msra.mxu0 %v11844
    %12077 = vmatprep.subr.bf16.mxu0 %v11853
    %12078 = vmatpush1.bf16.msra.mxu0 %v11852
    %12079 = vmatprep.mubr.bf16.mxu0 %v11342
    %12080 = vmatmul.mubr.bf16.gmra.mrb[0].mxu0 %v11341
    %v12081 = vpop.f32.mrb[0].mxu0
    %v12082 = vadd.f32 %v12041, %v12081
    %v12083 = vpop.f32.mrb[0].mxu0
    %v12084 = vadd.f32 %v12043, %v12083
    %v12085 = vpop.f32.mrb[0].mxu0
    %v12086 = vpop.f32.mrb[0].mxu0
    %12087 = vdwg.mxu0
    %12088 = vmatprep.subr.bf16.mxu0 %v11861
    %12089 = vmatpush1.bf16.msra.mxu0 %v11860
    %12090 = vmatprep.subr.bf16.mxu0 %v11869
    %12091 = vmatpush1.bf16.msra.mxu0 %v11868
    %12092 = vmatprep.subr.bf16.mxu0 %v11877
    %12093 = vmatpush1.bf16.msra.mxu0 %v11876
    %12094 = vmatprep.subr.bf16.mxu0 %v11885
    %12095 = vmatpush1.bf16.msra.mxu0 %v11884
    %12096 = vmatprep.subr.bf16.mxu0 %v11893
    %12097 = vmatpush1.bf16.msra.mxu0 %v11892
    %12098 = vmatprep.subr.bf16.mxu0 %v11901
    %12099 = vmatpush1.bf16.msra.mxu0 %v11900
    %12100 = vmatprep.subr.bf16.mxu0 %v11909
    %12101 = vmatpush1.bf16.msra.mxu0 %v11908
    %12102 = vmatprep.subr.bf16.mxu0 %v11917
    %12103 = vmatpush1.bf16.msra.mxu0 %v11916
    %12104 = vmatprep.subr.bf16.mxu0 0
    %12105 = vmatpush1.bf16.msra.mxu0 0
    %12106 = vmatprep.subr.bf16.mxu0 0
    %12107 = vmatpush1.bf16.msra.mxu0 0
    %12108 = vmatprep.subr.bf16.mxu0 0
    %12109 = vmatpush1.bf16.msra.mxu0 0
    %12110 = vmatprep.subr.bf16.mxu0 0
    %12111 = vmatpush1.bf16.msra.mxu0 0
    %12112 = vmatprep.subr.bf16.mxu0 0
    %12113 = vmatpush1.bf16.msra.mxu0 0
    %12114 = vmatprep.subr.bf16.mxu0 0
    %12115 = vmatpush1.bf16.msra.mxu0 0
    %12116 = vmatprep.subr.bf16.mxu0 0
    %12117 = vmatpush1.bf16.msra.mxu0 0
    %12118 = vmatprep.subr.bf16.mxu0 0
    %12119 = vmatpush1.bf16.msra.mxu0 0
    %12120 = vmatprep.mubr.bf16.mxu0 0
    %12121 = vmatmul.mubr.bf16.gmra.mrb[0].mxu0 %v11343
    %v12122 = vpop.f32.mrb[0].mxu0
    %v12123 = vadd.f32 %v12082, %v12122
    %v12124 = vpop.f32.mrb[0].mxu0
    %v12125 = vadd.f32 %v12084, %v12124
    %v12126 = vpop.f32.mrb[0].mxu0
    %v12127 = vpop.f32.mrb[0].mxu0
    %12128 = vdwg.mxu0
    %12129 = vmatprep.subr.bf16.mxu0 %v11351
    %12130 = vmatpush1.bf16.msra.mxu0 %v11350
    %12131 = vmatprep.subr.bf16.mxu0 %v11359
    %12132 = vmatpush1.bf16.msra.mxu0 %v11358
    %12133 = vmatprep.subr.bf16.mxu0 %v11367
    %12134 = vmatpush1.bf16.msra.mxu0 %v11366
    %12135 = vmatprep.subr.bf16.mxu0 %v11375
    %12136 = vmatpush1.bf16.msra.mxu0 %v11374
    %12137 = vmatprep.subr.bf16.mxu0 %v11383
    %12138 = vmatpush1.bf16.msra.mxu0 %v11382
    %12139 = vmatprep.subr.bf16.mxu0 %v11391
    %12140 = vmatpush1.bf16.msra.mxu0 %v11390
    %12141 = vmatprep.subr.bf16.mxu0 %v11399
    %12142 = vmatpush1.bf16.msra.mxu0 %v11398
    %12143 = vmatprep.subr.bf16.mxu0 %v11407
    %12144 = vmatpush1.bf16.msra.mxu0 %v11406
    %12145 = vmatprep.subr.bf16.mxu0 %v11415
    %12146 = vmatpush1.bf16.msra.mxu0 %v11414
    %12147 = vmatprep.subr.bf16.mxu0 %v11423
    %12148 = vmatpush1.bf16.msra.mxu0 %v11422
    %12149 = vmatprep.subr.bf16.mxu0 %v11431
    %12150 = vmatpush1.bf16.msra.mxu0 %v11430
    %12151 = vmatprep.subr.bf16.mxu0 %v11439
    %12152 = vmatpush1.bf16.msra.mxu0 %v11438
    %12153 = vmatprep.subr.bf16.mxu0 %v11447
    %12154 = vmatpush1.bf16.msra.mxu0 %v11446
    %12155 = vmatprep.subr.bf16.mxu0 %v11455
    %12156 = vmatpush1.bf16.msra.mxu0 %v11454
    %12157 = vmatprep.subr.bf16.mxu0 %v11463
    %12158 = vmatpush1.bf16.msra.mxu0 %v11462
    %12159 = vmatprep.subr.bf16.mxu0 %v11471
    %12160 = vmatpush1.bf16.msra.mxu0 %v11470
    %12161 = vmatprep.mubr.bf16.mxu0 %v11336
    %12162 = vmatmul.mubr.bf16.gmra.mrb[0].mxu0 %v11335
    %v12163 = vpop.f32.mrb[0].mxu0
    %v12164 = vadd.f32 0.0, %v12163
    %v12165 = vpop.f32.mrb[0].mxu0
    %v12166 = vadd.f32 0.0, %v12165
    %v12167 = vpop.f32.mrb[0].mxu0
    %v12168 = vpop.f32.mrb[0].mxu0
    %12169 = vdwg.mxu0
    %12170 = vmatprep.subr.bf16.mxu0 %v11479
    %12171 = vmatpush1.bf16.msra.mxu0 %v11478
    %12172 = vmatprep.subr.bf16.mxu0 %v11487
    %12173 = vmatpush1.bf16.msra.mxu0 %v11486
    %12174 = vmatprep.subr.bf16.mxu0 %v11495
    %12175 = vmatpush1.bf16.msra.mxu0 %v11494
    %12176 = vmatprep.subr.bf16.mxu0 %v11503
    %12177 = vmatpush1.bf16.msra.mxu0 %v11502
    %12178 = vmatprep.subr.bf16.mxu0 %v11511
    %12179 = vmatpush1.bf16.msra.mxu0 %v11510
    %12180 = vmatprep.subr.bf16.mxu0 %v11519
    %12181 = vmatpush1.bf16.msra.mxu0 %v11518
    %12182 = vmatprep.subr.bf16.mxu0 %v11527
    %12183 = vmatpush1.bf16.msra.mxu0 %v11526
    %12184 = vmatprep.subr.bf16.mxu0 %v11535
    %12185 = vmatpush1.bf16.msra.mxu0 %v11534
    %12186 = vmatprep.subr.bf16.mxu0 %v11543
    %12187 = vmatpush1.bf16.msra.mxu0 %v11542
    %12188 = vmatprep.subr.bf16.mxu0 %v11551
    %12189 = vmatpush1.bf16.msra.mxu0 %v11550
    %12190 = vmatprep.subr.bf16.mxu0 %v11559
    %12191 = vmatpush1.bf16.msra.mxu0 %v11558
    %12192 = vmatprep.subr.bf16.mxu0 %v11567
    %12193 = vmatpush1.bf16.msra.mxu0 %v11566
    %12194 = vmatprep.subr.bf16.mxu0 %v11575
    %12195 = vmatpush1.bf16.msra.mxu0 %v11574
    %12196 = vmatprep.subr.bf16.mxu0 %v11583
    %12197 = vmatpush1.bf16.msra.mxu0 %v11582
    %12198 = vmatprep.subr.bf16.mxu0 %v11591
    %12199 = vmatpush1.bf16.msra.mxu0 %v11590
    %12200 = vmatprep.subr.bf16.mxu0 %v11599
    %12201 = vmatpush1.bf16.msra.mxu0 %v11598
    %12202 = vmatprep.mubr.bf16.mxu0 %v11338
    %12203 = vmatmul.mubr.bf16.gmra.mrb[0].mxu0 %v11337
    %v12204 = vpop.f32.mrb[0].mxu0
    %v12205 = vadd.f32 %v12164, %v12204
    %v12206 = vpop.f32.mrb[0].mxu0
    %v12207 = vadd.f32 %v12166, %v12206
    %v12208 = vpop.f32.mrb[0].mxu0
    %v12209 = vpop.f32.mrb[0].mxu0
    %12210 = vdwg.mxu0
    %12211 = vmatprep.subr.bf16.mxu0 %v11607
    %12212 = vmatpush1.bf16.msra.mxu0 %v11606
    %12213 = vmatprep.subr.bf16.mxu0 %v11615
    %12214 = vmatpush1.bf16.msra.mxu0 %v11614
    %12215 = vmatprep.subr.bf16.mxu0 %v11623
    %12216 = vmatpush1.bf16.msra.mxu0 %v11622
    %12217 = vmatprep.subr.bf16.mxu0 %v11631
    %12218 = vmatpush1.bf16.msra.mxu0 %v11630
    %12219 = vmatprep.subr.bf16.mxu0 %v11639
    %12220 = vmatpush1.bf16.msra.mxu0 %v11638
    %12221 = vmatprep.subr.bf16.mxu0 %v11647
    %12222 = vmatpush1.bf16.msra.mxu0 %v11646
    %12223 = vmatprep.subr.bf16.mxu0 %v11655
    %12224 = vmatpush1.bf16.msra.mxu0 %v11654
    %12225 = vmatprep.subr.bf16.mxu0 %v11663
    %12226 = vmatpush1.bf16.msra.mxu0 %v11662
    %12227 = vmatprep.subr.bf16.mxu0 %v11671
    %12228 = vmatpush1.bf16.msra.mxu0 %v11670
    %12229 = vmatprep.subr.bf16.mxu0 %v11679
    %12230 = vmatpush1.bf16.msra.mxu0 %v11678
    %12231 = vmatprep.subr.bf16.mxu0 %v11687
    %12232 = vmatpush1.bf16.msra.mxu0 %v11686
    %12233 = vmatprep.subr.bf16.mxu0 %v11695
    %12234 = vmatpush1.bf16.msra.mxu0 %v11694
    %12235 = vmatprep.subr.bf16.mxu0 %v11703
    %12236 = vmatpush1.bf16.msra.mxu0 %v11702
    %12237 = vmatprep.subr.bf16.mxu0 %v11711
    %12238 = vmatpush1.bf16.msra.mxu0 %v11710
    %12239 = vmatprep.subr.bf16.mxu0 %v11719
    %12240 = vmatpush1.bf16.msra.mxu0 %v11718
    %12241 = vmatprep.subr.bf16.mxu0 %v11727
    %12242 = vmatpush1.bf16.msra.mxu0 %v11726
    %12243 = vmatprep.mubr.bf16.mxu0 %v11340
    %12244 = vmatmul.mubr.bf16.gmra.mrb[0].mxu0 %v11339
    %v12245 = vpop.f32.mrb[0].mxu0
    %v12246 = vadd.f32 %v12205, %v12245
    %v12247 = vpop.f32.mrb[0].mxu0
    %v12248 = vadd.f32 %v12207, %v12247
    %v12249 = vpop.f32.mrb[0].mxu0
    %v12250 = vpop.f32.mrb[0].mxu0
    %12251 = vdwg.mxu0
    %12252 = vmatprep.subr.bf16.mxu0 %v11735
    %12253 = vmatpush1.bf16.msra.mxu0 %v11734
    %12254 = vmatprep.subr.bf16.mxu0 %v11743
    %12255 = vmatpush1.bf16.msra.mxu0 %v11742
    %12256 = vmatprep.subr.bf16.mxu0 %v11751
    %12257 = vmatpush1.bf16.msra.mxu0 %v11750
    %12258 = vmatprep.subr.bf16.mxu0 %v11759
    %12259 = vmatpush1.bf16.msra.mxu0 %v11758
    %12260 = vmatprep.subr.bf16.mxu0 %v11767
    %12261 = vmatpush1.bf16.msra.mxu0 %v11766
    %12262 = vmatprep.subr.bf16.mxu0 %v11775
    %12263 = vmatpush1.bf16.msra.mxu0 %v11774
    %12264 = vmatprep.subr.bf16.mxu0 %v11783
    %12265 = vmatpush1.bf16.msra.mxu0 %v11782
    %12266 = vmatprep.subr.bf16.mxu0 %v11791
    %12267 = vmatpush1.bf16.msra.mxu0 %v11790
    %12268 = vmatprep.subr.bf16.mxu0 %v11799
    %12269 = vmatpush1.bf16.msra.mxu0 %v11798
    %12270 = vmatprep.subr.bf16.mxu0 %v11807
    %12271 = vmatpush1.bf16.msra.mxu0 %v11806
    %12272 = vmatprep.subr.bf16.mxu0 %v11815
    %12273 = vmatpush1.bf16.msra.mxu0 %v11814
    %12274 = vmatprep.subr.bf16.mxu0 %v11823
    %12275 = vmatpush1.bf16.msra.mxu0 %v11822
    %12276 = vmatprep.subr.bf16.mxu0 %v11831
    %12277 = vmatpush1.bf16.msra.mxu0 %v11830
    %12278 = vmatprep.subr.bf16.mxu0 %v11839
    %12279 = vmatpush1.bf16.msra.mxu0 %v11838
    %12280 = vmatprep.subr.bf16.mxu0 %v11847
    %12281 = vmatpush1.bf16.msra.mxu0 %v11846
    %12282 = vmatprep.subr.bf16.mxu0 %v11855
    %12283 = vmatpush1.bf16.msra.mxu0 %v11854
    %12284 = vmatprep.mubr.bf16.mxu0 %v11342
    %12285 = vmatmul.mubr.bf16.gmra.mrb[0].mxu0 %v11341
    %v12286 = vpop.f32.mrb[0].mxu0
    %v12287 = vadd.f32 %v12246, %v12286
    %v12288 = vpop.f32.mrb[0].mxu0
    %v12289 = vadd.f32 %v12248, %v12288
    %v12290 = vpop.f32.mrb[0].mxu0
    %v12291 = vpop.f32.mrb[0].mxu0
    %12292 = vdwg.mxu0
    %12293 = vmatprep.subr.bf16.mxu0 %v11863
    %12294 = vmatpush1.bf16.msra.mxu0 %v11862
    %12295 = vmatprep.subr.bf16.mxu0 %v11871
    %12296 = vmatpush1.bf16.msra.mxu0 %v11870
    %12297 = vmatprep.subr.bf16.mxu0 %v11879
    %12298 = vmatpush1.bf16.msra.mxu0 %v11878
    %12299 = vmatprep.subr.bf16.mxu0 %v11887
    %12300 = vmatpush1.bf16.msra.mxu0 %v11886
    %12301 = vmatprep.subr.bf16.mxu0 %v11895
    %12302 = vmatpush1.bf16.msra.mxu0 %v11894
    %12303 = vmatprep.subr.bf16.mxu0 %v11903
    %12304 = vmatpush1.bf16.msra.mxu0 %v11902
    %12305 = vmatprep.subr.bf16.mxu0 %v11911
    %12306 = vmatpush1.bf16.msra.mxu0 %v11910
    %12307 = vmatprep.subr.bf16.mxu0 %v11919
    %12308 = vmatpush1.bf16.msra.mxu0 %v11918
    %12309 = vmatprep.subr.bf16.mxu0 0
    %12310 = vmatpush1.bf16.msra.mxu0 0
    %12311 = vmatprep.subr.bf16.mxu0 0
    %12312 = vmatpush1.bf16.msra.mxu0 0
    %12313 = vmatprep.subr.bf16.mxu0 0
    %12314 = vmatpush1.bf16.msra.mxu0 0
    %12315 = vmatprep.subr.bf16.mxu0 0
    %12316 = vmatpush1.bf16.msra.mxu0 0
    %12317 = vmatprep.subr.bf16.mxu0 0
    %12318 = vmatpush1.bf16.msra.mxu0 0
    %12319 = vmatprep.subr.bf16.mxu0 0
    %12320 = vmatpush1.bf16.msra.mxu0 0
    %12321 = vmatprep.subr.bf16.mxu0 0
    %12322 = vmatpush1.bf16.msra.mxu0 0
    %12323 = vmatprep.subr.bf16.mxu0 0
    %12324 = vmatpush1.bf16.msra.mxu0 0
    %12325 = vmatprep.mubr.bf16.mxu0 0
    %12326 = vmatmul.mubr.bf16.gmra.mrb[0].mxu0 %v11343
    %v12327 = vpop.f32.mrb[0].mxu0
    %v12328 = vadd.f32 %v12287, %v12327
    %v12329 = vpop.f32.mrb[0].mxu0
    %v12330 = vadd.f32 %v12289, %v12329
    %v12331 = vpop.f32.mrb[0].mxu0
    %v12332 = vpop.f32.mrb[0].mxu0
    %12333 = vdwg.mxu0
    %12334 = vmatprep.subr.bf16.mxu0 %v11353
    %12335 = vmatpush1.bf16.msra.mxu0 %v11352
    %12336 = vmatprep.subr.bf16.mxu0 %v11361
    %12337 = vmatpush1.bf16.msra.mxu0 %v11360
    %12338 = vmatprep.subr.bf16.mxu0 %v11369
    %12339 = vmatpush1.bf16.msra.mxu0 %v11368
    %12340 = vmatprep.subr.bf16.mxu0 %v11377
    %12341 = vmatpush1.bf16.msra.mxu0 %v11376
    %12342 = vmatprep.subr.bf16.mxu0 %v11385
    %12343 = vmatpush1.bf16.msra.mxu0 %v11384
    %12344 = vmatprep.subr.bf16.mxu0 %v11393
    %12345 = vmatpush1.bf16.msra.mxu0 %v11392
    %12346 = vmatprep.subr.bf16.mxu0 %v11401
    %12347 = vmatpush1.bf16.msra.mxu0 %v11400
    %12348 = vmatprep.subr.bf16.mxu0 %v11409
    %12349 = vmatpush1.bf16.msra.mxu0 %v11408
    %12350 = vmatprep.subr.bf16.mxu0 %v11417
    %12351 = vmatpush1.bf16.msra.mxu0 %v11416
    %12352 = vmatprep.subr.bf16.mxu0 %v11425
    %12353 = vmatpush1.bf16.msra.mxu0 %v11424
    %12354 = vmatprep.subr.bf16.mxu0 %v11433
    %12355 = vmatpush1.bf16.msra.mxu0 %v11432
    %12356 = vmatprep.subr.bf16.mxu0 %v11441
    %12357 = vmatpush1.bf16.msra.mxu0 %v11440
    %12358 = vmatprep.subr.bf16.mxu0 %v11449
    %12359 = vmatpush1.bf16.msra.mxu0 %v11448
    %12360 = vmatprep.subr.bf16.mxu0 %v11457
    %12361 = vmatpush1.bf16.msra.mxu0 %v11456
    %12362 = vmatprep.subr.bf16.mxu0 %v11465
    %12363 = vmatpush1.bf16.msra.mxu0 %v11464
    %12364 = vmatprep.subr.bf16.mxu0 %v11473
    %12365 = vmatpush1.bf16.msra.mxu0 %v11472
    %12366 = vmatprep.mubr.bf16.mxu0 %v11336
    %12367 = vmatmul.mubr.bf16.gmra.mrb[0].mxu0 %v11335
    %v12368 = vpop.f32.mrb[0].mxu0
    %v12369 = vadd.f32 0.0, %v12368
    %v12370 = vpop.f32.mrb[0].mxu0
    %v12371 = vadd.f32 0.0, %v12370
    %v12372 = vpop.f32.mrb[0].mxu0
    %v12373 = vpop.f32.mrb[0].mxu0
    %12374 = vdwg.mxu0
    %12375 = vmatprep.subr.bf16.mxu0 %v11481
    %12376 = vmatpush1.bf16.msra.mxu0 %v11480
    %12377 = vmatprep.subr.bf16.mxu0 %v11489
    %12378 = vmatpush1.bf16.msra.mxu0 %v11488
    %12379 = vmatprep.subr.bf16.mxu0 %v11497
    %12380 = vmatpush1.bf16.msra.mxu0 %v11496
    %12381 = vmatprep.subr.bf16.mxu0 %v11505
    %12382 = vmatpush1.bf16.msra.mxu0 %v11504
    %12383 = vmatprep.subr.bf16.mxu0 %v11513
    %12384 = vmatpush1.bf16.msra.mxu0 %v11512
    %12385 = vmatprep.subr.bf16.mxu0 %v11521
    %12386 = vmatpush1.bf16.msra.mxu0 %v11520
    %12387 = vmatprep.subr.bf16.mxu0 %v11529
    %12388 = vmatpush1.bf16.msra.mxu0 %v11528
    %12389 = vmatprep.subr.bf16.mxu0 %v11537
    %12390 = vmatpush1.bf16.msra.mxu0 %v11536
    %12391 = vmatprep.subr.bf16.mxu0 %v11545
    %12392 = vmatpush1.bf16.msra.mxu0 %v11544
    %12393 = vmatprep.subr.bf16.mxu0 %v11553
    %12394 = vmatpush1.bf16.msra.mxu0 %v11552
    %12395 = vmatprep.subr.bf16.mxu0 %v11561
    %12396 = vmatpush1.bf16.msra.mxu0 %v11560
    %12397 = vmatprep.subr.bf16.mxu0 %v11569
    %12398 = vmatpush1.bf16.msra.mxu0 %v11568
    %12399 = vmatprep.subr.bf16.mxu0 %v11577
    %12400 = vmatpush1.bf16.msra.mxu0 %v11576
    %12401 = vmatprep.subr.bf16.mxu0 %v11585
    %12402 = vmatpush1.bf16.msra.mxu0 %v11584
    %12403 = vmatprep.subr.bf16.mxu0 %v11593
    %12404 = vmatpush1.bf16.msra.mxu0 %v11592
    %12405 = vmatprep.subr.bf16.mxu0 %v11601
    %12406 = vmatpush1.bf16.msra.mxu0 %v11600
    %12407 = vmatprep.mubr.bf16.mxu0 %v11338
    %12408 = vmatmul.mubr.bf16.gmra.mrb[0].mxu0 %v11337
    %v12409 = vpop.f32.mrb[0].mxu0
    %v12410 = vadd.f32 %v12369, %v12409
    %v12411 = vpop.f32.mrb[0].mxu0
    %v12412 = vadd.f32 %v12371, %v12411
    %v12413 = vpop.f32.mrb[0].mxu0
    %v12414 = vpop.f32.mrb[0].mxu0
    %12415 = vdwg.mxu0
    %12416 = vmatprep.subr.bf16.mxu0 %v11609
    %12417 = vmatpush1.bf16.msra.mxu0 %v11608
    %12418 = vmatprep.subr.bf16.mxu0 %v11617
    %12419 = vmatpush1.bf16.msra.mxu0 %v11616
    %12420 = vmatprep.subr.bf16.mxu0 %v11625
    %12421 = vmatpush1.bf16.msra.mxu0 %v11624
    %12422 = vmatprep.subr.bf16.mxu0 %v11633
    %12423 = vmatpush1.bf16.msra.mxu0 %v11632
    %12424 = vmatprep.subr.bf16.mxu0 %v11641
    %12425 = vmatpush1.bf16.msra.mxu0 %v11640
    %12426 = vmatprep.subr.bf16.mxu0 %v11649
    %12427 = vmatpush1.bf16.msra.mxu0 %v11648
    %12428 = vmatprep.subr.bf16.mxu0 %v11657
    %12429 = vmatpush1.bf16.msra.mxu0 %v11656
    %12430 = vmatprep.subr.bf16.mxu0 %v11665
    %12431 = vmatpush1.bf16.msra.mxu0 %v11664
    %12432 = vmatprep.subr.bf16.mxu0 %v11673
    %12433 = vmatpush1.bf16.msra.mxu0 %v11672
    %12434 = vmatprep.subr.bf16.mxu0 %v11681
    %12435 = vmatpush1.bf16.msra.mxu0 %v11680
    %12436 = vmatprep.subr.bf16.mxu0 %v11689
    %12437 = vmatpush1.bf16.msra.mxu0 %v11688
    %12438 = vmatprep.subr.bf16.mxu0 %v11697
    %12439 = vmatpush1.bf16.msra.mxu0 %v11696
    %12440 = vmatprep.subr.bf16.mxu0 %v11705
    %12441 = vmatpush1.bf16.msra.mxu0 %v11704
    %12442 = vmatprep.subr.bf16.mxu0 %v11713
    %12443 = vmatpush1.bf16.msra.mxu0 %v11712
    %12444 = vmatprep.subr.bf16.mxu0 %v11721
    %12445 = vmatpush1.bf16.msra.mxu0 %v11720
    %12446 = vmatprep.subr.bf16.mxu0 %v11729
    %12447 = vmatpush1.bf16.msra.mxu0 %v11728
    %12448 = vmatprep.mubr.bf16.mxu0 %v11340
    %12449 = vmatmul.mubr.bf16.gmra.mrb[0].mxu0 %v11339
    %v12450 = vpop.f32.mrb[0].mxu0
    %v12451 = vadd.f32 %v12410, %v12450
    %v12452 = vpop.f32.mrb[0].mxu0
    %v12453 = vadd.f32 %v12412, %v12452
    %v12454 = vpop.f32.mrb[0].mxu0
    %v12455 = vpop.f32.mrb[0].mxu0
    %12456 = vdwg.mxu0
    %12457 = vmatprep.subr.bf16.mxu0 %v11737
    %12458 = vmatpush1.bf16.msra.mxu0 %v11736
    %12459 = vmatprep.subr.bf16.mxu0 %v11745
    %12460 = vmatpush1.bf16.msra.mxu0 %v11744
    %12461 = vmatprep.subr.bf16.mxu0 %v11753
    %12462 = vmatpush1.bf16.msra.mxu0 %v11752
    %12463 = vmatprep.subr.bf16.mxu0 %v11761
    %12464 = vmatpush1.bf16.msra.mxu0 %v11760
    %12465 = vmatprep.subr.bf16.mxu0 %v11769
    %12466 = vmatpush1.bf16.msra.mxu0 %v11768
    %12467 = vmatprep.subr.bf16.mxu0 %v11777
    %12468 = vmatpush1.bf16.msra.mxu0 %v11776
    %12469 = vmatprep.subr.bf16.mxu0 %v11785
    %12470 = vmatpush1.bf16.msra.mxu0 %v11784
    %12471 = vmatprep.subr.bf16.mxu0 %v11793
    %12472 = vmatpush1.bf16.msra.mxu0 %v11792
    %12473 = vmatprep.subr.bf16.mxu0 %v11801
    %12474 = vmatpush1.bf16.msra.mxu0 %v11800
    %12475 = vmatprep.subr.bf16.mxu0 %v11809
    %12476 = vmatpush1.bf16.msra.mxu0 %v11808
    %12477 = vmatprep.subr.bf16.mxu0 %v11817
    %12478 = vmatpush1.bf16.msra.mxu0 %v11816
    %12479 = vmatprep.subr.bf16.mxu0 %v11825
    %12480 = vmatpush1.bf16.msra.mxu0 %v11824
    %12481 = vmatprep.subr.bf16.mxu0 %v11833
    %12482 = vmatpush1.bf16.msra.mxu0 %v11832
    %12483 = vmatprep.subr.bf16.mxu0 %v11841
    %12484 = vmatpush1.bf16.msra.mxu0 %v11840
    %12485 = vmatprep.subr.bf16.mxu0 %v11849
    %12486 = vmatpush1.bf16.msra.mxu0 %v11848
    %12487 = vmatprep.subr.bf16.mxu0 %v11857
    %12488 = vmatpush1.bf16.msra.mxu0 %v11856
    %12489 = vmatprep.mubr.bf16.mxu0 %v11342
    %12490 = vmatmul.mubr.bf16.gmra.mrb[0].mxu0 %v11341
    %v12491 = vpop.f32.mrb[0].mxu0
    %v12492 = vadd.f32 %v12451, %v12491
    %v12493 = vpop.f32.mrb[0].mxu0
    %v12494 = vadd.f32 %v12453, %v12493
    %v12495 = vpop.f32.mrb[0].mxu0
    %v12496 = vpop.f32.mrb[0].mxu0
    %12497 = vdwg.mxu0
    %12498 = vmatprep.subr.bf16.mxu0 %v11865
    %12499 = vmatpush1.bf16.msra.mxu0 %v11864
    %12500 = vmatprep.subr.bf16.mxu0 %v11873
    %12501 = vmatpush1.bf16.msra.mxu0 %v11872
    %12502 = vmatprep.subr.bf16.mxu0 %v11881
    %12503 = vmatpush1.bf16.msra.mxu0 %v11880
    %12504 = vmatprep.subr.bf16.mxu0 %v11889
    %12505 = vmatpush1.bf16.msra.mxu0 %v11888
    %12506 = vmatprep.subr.bf16.mxu0 %v11897
    %12507 = vmatpush1.bf16.msra.mxu0 %v11896
    %12508 = vmatprep.subr.bf16.mxu0 %v11905
    %12509 = vmatpush1.bf16.msra.mxu0 %v11904
    %12510 = vmatprep.subr.bf16.mxu0 %v11913
    %12511 = vmatpush1.bf16.msra.mxu0 %v11912
    %12512 = vmatprep.subr.bf16.mxu0 %v11921
    %12513 = vmatpush1.bf16.msra.mxu0 %v11920
    %12514 = vmatprep.subr.bf16.mxu0 0
    %12515 = vmatpush1.bf16.msra.mxu0 0
    %12516 = vmatprep.subr.bf16.mxu0 0
    %12517 = vmatpush1.bf16.msra.mxu0 0
    %12518 = vmatprep.subr.bf16.mxu0 0
    %12519 = vmatpush1.bf16.msra.mxu0 0
    %12520 = vmatprep.subr.bf16.mxu0 0
    %12521 = vmatpush1.bf16.msra.mxu0 0
    %12522 = vmatprep.subr.bf16.mxu0 0
    %12523 = vmatpush1.bf16.msra.mxu0 0
    %12524 = vmatprep.subr.bf16.mxu0 0
    %12525 = vmatpush1.bf16.msra.mxu0 0
    %12526 = vmatprep.subr.bf16.mxu0 0
    %12527 = vmatpush1.bf16.msra.mxu0 0
    %12528 = vmatprep.subr.bf16.mxu0 0
    %12529 = vmatpush1.bf16.msra.mxu0 0
    %12530 = vmatprep.mubr.bf16.mxu0 0
    %12531 = vmatmul.mubr.bf16.gmra.mrb[0].mxu0 %v11343
    %v12532 = vpop.f32.mrb[0].mxu0
    %v12533 = vadd.f32 %v12492, %v12532
    %v12534 = vpop.f32.mrb[0].mxu0
    %v12535 = vadd.f32 %v12494, %v12534
    %v12536 = vpop.f32.mrb[0].mxu0
    %v12537 = vpop.f32.mrb[0].mxu0
    %12538 = vdwg.mxu0
    %12539 = vmatprep.subr.bf16.mxu0 %v11355
    %12540 = vmatpush1.bf16.msra.mxu0 %v11354
    %12541 = vmatprep.subr.bf16.mxu0 %v11363
    %12542 = vmatpush1.bf16.msra.mxu0 %v11362
    %12543 = vmatprep.subr.bf16.mxu0 %v11371
    %12544 = vmatpush1.bf16.msra.mxu0 %v11370
    %12545 = vmatprep.subr.bf16.mxu0 %v11379
    %12546 = vmatpush1.bf16.msra.mxu0 %v11378
    %12547 = vmatprep.subr.bf16.mxu0 %v11387
    %12548 = vmatpush1.bf16.msra.mxu0 %v11386
    %12549 = vmatprep.subr.bf16.mxu0 %v11395
    %12550 = vmatpush1.bf16.msra.mxu0 %v11394
    %12551 = vmatprep.subr.bf16.mxu0 %v11403
    %12552 = vmatpush1.bf16.msra.mxu0 %v11402
    %12553 = vmatprep.subr.bf16.mxu0 %v11411
    %12554 = vmatpush1.bf16.msra.mxu0 %v11410
    %12555 = vmatprep.subr.bf16.mxu0 %v11419
    %12556 = vmatpush1.bf16.msra.mxu0 %v11418
    %12557 = vmatprep.subr.bf16.mxu0 %v11427
    %12558 = vmatpush1.bf16.msra.mxu0 %v11426
    %12559 = vmatprep.subr.bf16.mxu0 %v11435
    %12560 = vmatpush1.bf16.msra.mxu0 %v11434
    %12561 = vmatprep.subr.bf16.mxu0 %v11443
    %12562 = vmatpush1.bf16.msra.mxu0 %v11442
    %12563 = vmatprep.subr.bf16.mxu0 %v11451
    %12564 = vmatpush1.bf16.msra.mxu0 %v11450
    %12565 = vmatprep.subr.bf16.mxu0 %v11459
    %12566 = vmatpush1.bf16.msra.mxu0 %v11458
    %12567 = vmatprep.subr.bf16.mxu0 %v11467
    %12568 = vmatpush1.bf16.msra.mxu0 %v11466
    %12569 = vmatprep.subr.bf16.mxu0 %v11475
    %12570 = vmatpush1.bf16.msra.mxu0 %v11474
    %12571 = vmatprep.mubr.bf16.mxu0 %v11336
    %12572 = vmatmul.mubr.bf16.gmra.mrb[0].mxu0 %v11335
    %v12573 = vpop.f32.mrb[0].mxu0
    %v12574 = vadd.f32 0.0, %v12573
    %v12575 = vpop.f32.mrb[0].mxu0
    %v12576 = vadd.f32 0.0, %v12575
    %v12577 = vpop.f32.mrb[0].mxu0
    %v12578 = vpop.f32.mrb[0].mxu0
    %12579 = vdwg.mxu0
    %12580 = vmatprep.subr.bf16.mxu0 %v11483
    %12581 = vmatpush1.bf16.msra.mxu0 %v11482
    %12582 = vmatprep.subr.bf16.mxu0 %v11491
    %12583 = vmatpush1.bf16.msra.mxu0 %v11490
    %12584 = vmatprep.subr.bf16.mxu0 %v11499
    %12585 = vmatpush1.bf16.msra.mxu0 %v11498
    %12586 = vmatprep.subr.bf16.mxu0 %v11507
    %12587 = vmatpush1.bf16.msra.mxu0 %v11506
    %12588 = vmatprep.subr.bf16.mxu0 %v11515
    %12589 = vmatpush1.bf16.msra.mxu0 %v11514
    %12590 = vmatprep.subr.bf16.mxu0 %v11523
    %12591 = vmatpush1.bf16.msra.mxu0 %v11522
    %12592 = vmatprep.subr.bf16.mxu0 %v11531
    %12593 = vmatpush1.bf16.msra.mxu0 %v11530
    %12594 = vmatprep.subr.bf16.mxu0 %v11539
    %12595 = vmatpush1.bf16.msra.mxu0 %v11538
    %12596 = vmatprep.subr.bf16.mxu0 %v11547
    %12597 = vmatpush1.bf16.msra.mxu0 %v11546
    %12598 = vmatprep.subr.bf16.mxu0 %v11555
    %12599 = vmatpush1.bf16.msra.mxu0 %v11554
    %12600 = vmatprep.subr.bf16.mxu0 %v11563
    %12601 = vmatpush1.bf16.msra.mxu0 %v11562
    %12602 = vmatprep.subr.bf16.mxu0 %v11571
    %12603 = vmatpush1.bf16.msra.mxu0 %v11570
    %12604 = vmatprep.subr.bf16.mxu0 %v11579
    %12605 = vmatpush1.bf16.msra.mxu0 %v11578
    %12606 = vmatprep.subr.bf16.mxu0 %v11587
    %12607 = vmatpush1.bf16.msra.mxu0 %v11586
    %12608 = vmatprep.subr.bf16.mxu0 %v11595
    %12609 = vmatpush1.bf16.msra.mxu0 %v11594
    %12610 = vmatprep.subr.bf16.mxu0 %v11603
    %12611 = vmatpush1.bf16.msra.mxu0 %v11602
    %12612 = vmatprep.mubr.bf16.mxu0 %v11338
    %12613 = vmatmul.mubr.bf16.gmra.mrb[0].mxu0 %v11337
    %v12614 = vpop.f32.mrb[0].mxu0
    %v12615 = vadd.f32 %v12574, %v12614
    %v12616 = vpop.f32.mrb[0].mxu0
    %v12617 = vadd.f32 %v12576, %v12616
    %v12618 = vpop.f32.mrb[0].mxu0
    %v12619 = vpop.f32.mrb[0].mxu0
    %12620 = vdwg.mxu0
    %12621 = vmatprep.subr.bf16.mxu0 %v11611
    %12622 = vmatpush1.bf16.msra.mxu0 %v11610
    %12623 = vmatprep.subr.bf16.mxu0 %v11619
    %12624 = vmatpush1.bf16.msra.mxu0 %v11618
    %12625 = vmatprep.subr.bf16.mxu0 %v11627
    %12626 = vmatpush1.bf16.msra.mxu0 %v11626
    %12627 = vmatprep.subr.bf16.mxu0 %v11635
    %12628 = vmatpush1.bf16.msra.mxu0 %v11634
    %12629 = vmatprep.subr.bf16.mxu0 %v11643
    %12630 = vmatpush1.bf16.msra.mxu0 %v11642
    %12631 = vmatprep.subr.bf16.mxu0 %v11651
    %12632 = vmatpush1.bf16.msra.mxu0 %v11650
    %12633 = vmatprep.subr.bf16.mxu0 %v11659
    %12634 = vmatpush1.bf16.msra.mxu0 %v11658
    %12635 = vmatprep.subr.bf16.mxu0 %v11667
    %12636 = vmatpush1.bf16.msra.mxu0 %v11666
    %12637 = vmatprep.subr.bf16.mxu0 %v11675
    %12638 = vmatpush1.bf16.msra.mxu0 %v11674
    %12639 = vmatprep.subr.bf16.mxu0 %v11683
    %12640 = vmatpush1.bf16.msra.mxu0 %v11682
    %12641 = vmatprep.subr.bf16.mxu0 %v11691
    %12642 = vmatpush1.bf16.msra.mxu0 %v11690
    %12643 = vmatprep.subr.bf16.mxu0 %v11699
    %12644 = vmatpush1.bf16.msra.mxu0 %v11698
    %12645 = vmatprep.subr.bf16.mxu0 %v11707
    %12646 = vmatpush1.bf16.msra.mxu0 %v11706
    %12647 = vmatprep.subr.bf16.mxu0 %v11715
    %12648 = vmatpush1.bf16.msra.mxu0 %v11714
    %12649 = vmatprep.subr.bf16.mxu0 %v11723
    %12650 = vmatpush1.bf16.msra.mxu0 %v11722
    %12651 = vmatprep.subr.bf16.mxu0 %v11731
    %12652 = vmatpush1.bf16.msra.mxu0 %v11730
    %12653 = vmatprep.mubr.bf16.mxu0 %v11340
    %12654 = vmatmul.mubr.bf16.gmra.mrb[0].mxu0 %v11339
    %v12655 = vpop.f32.mrb[0].mxu0
    %v12656 = vadd.f32 %v12615, %v12655
    %v12657 = vpop.f32.mrb[0].mxu0
    %v12658 = vadd.f32 %v12617, %v12657
    %v12659 = vpop.f32.mrb[0].mxu0
    %v12660 = vpop.f32.mrb[0].mxu0
    %12661 = vdwg.mxu0
    %12662 = vmatprep.subr.bf16.mxu0 %v11739
    %12663 = vmatpush1.bf16.msra.mxu0 %v11738
    %12664 = vmatprep.subr.bf16.mxu0 %v11747
    %12665 = vmatpush1.bf16.msra.mxu0 %v11746
    %12666 = vmatprep.subr.bf16.mxu0 %v11755
    %12667 = vmatpush1.bf16.msra.mxu0 %v11754
    %12668 = vmatprep.subr.bf16.mxu0 %v11763
    %12669 = vmatpush1.bf16.msra.mxu0 %v11762
    %12670 = vmatprep.subr.bf16.mxu0 %v11771
    %12671 = vmatpush1.bf16.msra.mxu0 %v11770
    %12672 = vmatprep.subr.bf16.mxu0 %v11779
    %12673 = vmatpush1.bf16.msra.mxu0 %v11778
    %12674 = vmatprep.subr.bf16.mxu0 %v11787
    %12675 = vmatpush1.bf16.msra.mxu0 %v11786
    %12676 = vmatprep.subr.bf16.mxu0 %v11795
    %12677 = vmatpush1.bf16.msra.mxu0 %v11794
    %12678 = vmatprep.subr.bf16.mxu0 %v11803
    %12679 = vmatpush1.bf16.msra.mxu0 %v11802
    %12680 = vmatprep.subr.bf16.mxu0 %v11811
    %12681 = vmatpush1.bf16.msra.mxu0 %v11810
    %12682 = vmatprep.subr.bf16.mxu0 %v11819
    %12683 = vmatpush1.bf16.msra.mxu0 %v11818
    %12684 = vmatprep.subr.bf16.mxu0 %v11827
    %12685 = vmatpush1.bf16.msra.mxu0 %v11826
    %12686 = vmatprep.subr.bf16.mxu0 %v11835
    %12687 = vmatpush1.bf16.msra.mxu0 %v11834
    %12688 = vmatprep.subr.bf16.mxu0 %v11843
    %12689 = vmatpush1.bf16.msra.mxu0 %v11842
    %12690 = vmatprep.subr.bf16.mxu0 %v11851
    %12691 = vmatpush1.bf16.msra.mxu0 %v11850
    %12692 = vmatprep.subr.bf16.mxu0 %v11859
    %12693 = vmatpush1.bf16.msra.mxu0 %v11858
    %12694 = vmatprep.mubr.bf16.mxu0 %v11342
    %12695 = vmatmul.mubr.bf16.gmra.mrb[0].mxu0 %v11341
    %v12696 = vpop.f32.mrb[0].mxu0
    %v12697 = vadd.f32 %v12656, %v12696
    %v12698 = vpop.f32.mrb[0].mxu0
    %v12699 = vadd.f32 %v12658, %v12698
    %v12700 = vpop.f32.mrb[0].mxu0
    %v12701 = vpop.f32.mrb[0].mxu0
    %12702 = vdwg.mxu0
    %12703 = vmatprep.subr.bf16.mxu0 %v11867
    %12704 = vmatpush1.bf16.msra.mxu0 %v11866
    %12705 = vmatprep.subr.bf16.mxu0 %v11875
    %12706 = vmatpush1.bf16.msra.mxu0 %v11874
    %12707 = vmatprep.subr.bf16.mxu0 %v11883
    %12708 = vmatpush1.bf16.msra.mxu0 %v11882
    %12709 = vmatprep.subr.bf16.mxu0 %v11891
    %12710 = vmatpush1.bf16.msra.mxu0 %v11890
    %12711 = vmatprep.subr.bf16.mxu0 %v11899
    %12712 = vmatpush1.bf16.msra.mxu0 %v11898
    %12713 = vmatprep.subr.bf16.mxu0 %v11907
    %12714 = vmatpush1.bf16.msra.mxu0 %v11906
    %12715 = vmatprep.subr.bf16.mxu0 %v11915
    %12716 = vmatpush1.bf16.msra.mxu0 %v11914
    %12717 = vmatprep.subr.bf16.mxu0 %v11923
    %12718 = vmatpush1.bf16.msra.mxu0 %v11922
    %12719 = vmatprep.subr.bf16.mxu0 0
    %12720 = vmatpush1.bf16.msra.mxu0 0
    %12721 = vmatprep.subr.bf16.mxu0 0
    %12722 = vmatpush1.bf16.msra.mxu0 0
    %12723 = vmatprep.subr.bf16.mxu0 0
    %12724 = vmatpush1.bf16.msra.mxu0 0
    %12725 = vmatprep.subr.bf16.mxu0 0
    %12726 = vmatpush1.bf16.msra.mxu0 0
    %12727 = vmatprep.subr.bf16.mxu0 0
    %12728 = vmatpush1.bf16.msra.mxu0 0
    %12729 = vmatprep.subr.bf16.mxu0 0
    %12730 = vmatpush1.bf16.msra.mxu0 0
    %12731 = vmatprep.subr.bf16.mxu0 0
    %12732 = vmatpush1.bf16.msra.mxu0 0
    %12733 = vmatprep.subr.bf16.mxu0 0
    %12734 = vmatpush1.bf16.msra.mxu0 0
    %12735 = vmatprep.mubr.bf16.mxu0 0
    %12736 = vmatmul.mubr.bf16.gmra.mrb[0].mxu0 %v11343
    %v12737 = vpop.f32.mrb[0].mxu0
    %v12738 = vadd.f32 %v12697, %v12737
    %v12739 = vpop.f32.mrb[0].mxu0
    %v12740 = vadd.f32 %v12699, %v12739
    %v12741 = vpop.f32.mrb[0].mxu0
    %v12742 = vpop.f32.mrb[0].mxu0
    %12743 = vdwg.mxu0
    %v12745 = vrot.slane %v12125, 1
    %v12747 = vadd.f32 %v12123, %v12745
    %v12749 = vrot.slane %v12328, 2
    %v12751 = vadd.f32 %v12747, %v12749
    %v12753 = vrot.slane %v12330, 3
    %v12755 = vadd.f32 %v12751, %v12753
    %v12757 = vrot.slane %v12533, 4
    %v12759 = vadd.f32 %v12755, %v12757
    %v12761 = vrot.slane %v12535, 5
    %v12763 = vadd.f32 %v12759, %v12761
    %v12765 = vrot.slane %v12738, 6
    %v12767 = vadd.f32 %v12763, %v12765
    %v12769 = vrot.slane %v12740, 7
    %v12771 = vadd.f32 %v12767, %v12769
    %v12772 = vld [vmem:[%s11] sm:$0x1]
    %v12773 = vadd.f32 %v12771, %v12772
    %v12774 = vmax.f32 %v12773, 0.0
    %v12775 = vpack.c.bf16 %v12774, %v12774
    %v12776 = vld [vmem:[%s12] sm:$0xf]
    %v12777 = vld [vmem:[%s12 + $0x4] sm:$0xf]
    %v12778 = vld [vmem:[%s12 + $0x8] sm:$0xf]
    %v12779 = vld [vmem:[%s12 + $0xc] sm:$0xf]
    %v12780 = vld [vmem:[%s12 + $0x10] sm:$0xf]
    %v12781 = vld [vmem:[%s12 + $0x14] sm:$0xf]
    %v12782 = vld [vmem:[%s12 + $0x18] sm:$0xf]
    %v12783 = vld [vmem:[%s12 + $0x1c] sm:$0xf]
    %v12784 = vld [vmem:[%s12 + $0x20] sm:$0xf]
    %v12785 = vld [vmem:[%s12 + $0x24] sm:$0xf]
    %v12786 = vld [vmem:[%s12 + $0x28] sm:$0xf]
    %v12787 = vld [vmem:[%s12 + $0x2c] sm:$0xf]
    %v12788 = vld [vmem:[%s12 + $0x30] sm:$0xf]
    %v12789 = vld [vmem:[%s12 + $0x34] sm:$0xf]
    %v12790 = vld [vmem:[%s12 + $0x38] sm:$0xf]
    %v12791 = vld [vmem:[%s12 + $0x3c] sm:$0xf]
    %v12792 = vld [vmem:[%s13] sm:$0x1]
    %v12809 = vunpack.c.l.b16 %v12776
    %v12810 = vunpack.c.l.b16 %v12777
    %v12811 = vunpack.c.l.b16 %v12778
    %v12812 = vunpack.c.l.b16 %v12779
    %v12813 = vunpack.c.l.b16 %v12780
    %v12814 = vunpack.c.l.b16 %v12781
    %v12815 = vunpack.c.l.b16 %v12782
    %v12816 = vunpack.c.l.b16 %v12783
    %v12817 = vunpack.c.l.b16 %v12784
    %v12818 = vunpack.c.l.b16 %v12785
    %v12819 = vunpack.c.l.b16 %v12786
    %v12820 = vunpack.c.l.b16 %v12787
    %v12821 = vunpack.c.l.b16 %v12788
    %v12822 = vunpack.c.l.b16 %v12789
    %v12823 = vunpack.c.l.b16 %v12790
    %v12824 = vunpack.c.l.b16 %v12791
    %v12825 = vpack.c.b16 %v12810, %v12809
    %v12826 = vpack.c.b16 %v12812, %v12811
    %v12827 = vpack.c.b16 %v12814, %v12813
    %v12828 = vpack.c.b16 %v12816, %v12815
    %v12829 = vpack.c.b16 %v12818, %v12817
    %v12830 = vpack.c.b16 %v12820, %v12819
    %v12831 = vpack.c.b16 %v12822, %v12821
    %v12832 = vpack.c.b16 %v12824, %v12823
    %12841 = vmatprep.subr.bf16.mxu0 0
    %12842 = vmatpush1.bf16.msra.mxu0 %v12825
    %12843 = vmatprep.subr.bf16.mxu0 0
    %12844 = vmatpush1.bf16.msra.mxu0 %v12826
    %12845 = vmatprep.subr.bf16.mxu0 0
    %12846 = vmatpush1.bf16.msra.mxu0 %v12827
    %12847 = vmatprep.subr.bf16.mxu0 0
    %12848 = vmatpush1.bf16.msra.mxu0 %v12828
    %12849 = vmatprep.subr.bf16.mxu0 0
    %12850 = vmatpush1.bf16.msra.mxu0 %v12829
    %12851 = vmatprep.subr.bf16.mxu0 0
    %12852 = vmatpush1.bf16.msra.mxu0 %v12830
    %12853 = vmatprep.subr.bf16.mxu0 0
    %12854 = vmatpush1.bf16.msra.mxu0 %v12831
    %12855 = vmatprep.subr.bf16.mxu0 0
    %12856 = vmatpush1.bf16.msra.mxu0 %v12832
    %12857 = vmatprep.subr.bf16.mxu0 0
    %12858 = vmatpush1.bf16.msra.mxu0 0
    %12859 = vmatprep.subr.bf16.mxu0 0
    %12860 = vmatpush1.bf16.msra.mxu0 0
    %12861 = vmatprep.subr.bf16.mxu0 0
    %12862 = vmatpush1.bf16.msra.mxu0 0
    %12863 = vmatprep.subr.bf16.mxu0 0
    %12864 = vmatpush1.bf16.msra.mxu0 0
    %12865 = vmatprep.subr.bf16.mxu0 0
    %12866 = vmatpush1.bf16.msra.mxu0 0
    %12867 = vmatprep.subr.bf16.mxu0 0
    %12868 = vmatpush1.bf16.msra.mxu0 0
    %12869 = vmatprep.subr.bf16.mxu0 0
    %12870 = vmatpush1.bf16.msra.mxu0 0
    %12871 = vmatprep.subr.bf16.mxu0 0
    %12872 = vmatpush1.bf16.msra.mxu0 0
    %12873 = vmatprep.mubr.bf16.mxu0 0
    %12874 = vmatmul.mubr.bf16.gmra.mrb[0].mxu0 %v12775
    %v12875 = vpop.f32.mrb[0].mxu0
    %v12876 = vadd.f32 %v12792, %v12875
    %v12877 = vpop.f32.mrb[0].mxu0
    %v12878 = vpop.f32.mrb[0].mxu0
    %v12879 = vpop.f32.mrb[0].mxu0
    %12880 = vdwg.mxu0
    %vm12881 = vcmask 73728
    %v12882 = vsel %vm12881, %v12876, -inf
    %12883 = vmax.xlane.f32.xlu0 %v12882
    %v12884 = vpop.xlane.xlu0 %12883
    %v12885 = vsub.f32 %v12876, %v12884
    %v12886 = vmul.f32 %v12885, 1.442695
    %v12887 = vpow.pop %v12886
    %v12888 = vsel %vm12881, %v12887, 0.0
    %12889 = vadd.xlane.f32.xlu0 %v12888
    %v12890 = vpop.xlane.xlu0 %12889
    %v12891 = vrcp.pop %v12890
    %v12892 = vmul.f32 %v12887, %v12891
    %12893 = vst.msk [vmem:[#allocation11] sm:$0x1] %vm12881, %v12892
    // Predicated region
    $region54: #{net_forward.1} parent=1 // pred_check
      _
    $region55: #{net_forward.1} parent=1 // pred_check_branch
      %12895 = sbr.rel (0) target = $region57
    $region56: #{net_forward.1} parent=1 // pred_region
      %s12897 = ssub.s32 16, 16
      %12898 = vsyncadd [#allocation12], %s12897
      %s12900 = sshll.u32 [#allocation11], 4
      %s12901 = int_to_ptr.vmem [resolvable:$true] %s12900
      %12903 = dma.vmem_to_hbm [thread:$0]  %s12901, 16, %s14, [#allocation12]
    $region57: #{net_forward.1} parent=1 // pred_fallthru
      _
    // Predicated region
    $region58: #{net_forward.1} parent=1 // pred_check
      _
    $region59: #{net_forward.1} parent=1 // pred_check_branch
      %12905 = sbr.rel (0) target = $region61
    $region60: #{net_forward.1} parent=1 // pred_region
      %12906 = dma.done [#allocation12], 16
    $region61: #{net_forward.1} parent=1 // pred_fallthru
      _
    %12907 = vsyncpa [#allocation12], 1
  %12908 = vsyncmov [#allocation10]
  %s12909 = vpop.sfrf %12908
  %p12910 = scmp.eq.s32.totalorder %s12909, 0
  %p12911 = pneg %p12910
  %12913 = shalt.err (%p12911)

</llo_original>
